<compile_context>
chip_gen: v7x
topology: tpu7x:2x2x1
jax: 0.10.0
libtpu: 0.0.40
codegen_flags: <defaults>
</compile_context>

<pallas_src>
import functools
import numpy as np

import jax
import jax.numpy as jnp
from jax.experimental import pallas as pl
from jax.experimental.pallas import tpu as pltpu

NQ = 4            # n_qubits (the QLSTM default; n_qubits=0 wrapper default is degenerate)
NQL = 1           # n_qlayers
DIM = 2 ** NQ     # 16 = statevector dimension


# --------------------------- in-kernel trig helpers -------------------------------

def _sincos(x):
    """cos(x), sin(x) via quadrant reduction + Taylor polynomials on |r| <= pi/4.

    Uses only ops that lower cleanly in Mosaic (mul/add/cmp/select/int casts).
    Accuracy ~1e-7 for the small arguments seen here (|x| = |y|/2, a few at most).
    """
    # TODO(synk): Mosaic has no native sin/cos lowering; this polynomial matches
    # libm float32 sin/cos to ~1 ulp for the argument range of this model.
    two_over_pi = 0.6366197723675814
    half_pi = 1.5707963267948966

    t = x * two_over_pi + 0.5
    ki = t.astype(jnp.int32)                                   # trunc toward zero
    ki = jnp.where(t < ki.astype(jnp.float32), ki - 1, ki)     # floor
    kf = ki.astype(jnp.float32)
    r = x - kf * half_pi                                       # |r| <= pi/4 (+eps)
    q = jnp.bitwise_and(ki, 3)                                 # k mod 4

    r2 = r * r
    s = r * (1.0 + r2 * (-1.0 / 6.0 + r2 * (1.0 / 120.0
              + r2 * (-1.0 / 5040.0 + r2 * (1.0 / 362880.0)))))
    c = 1.0 + r2 * (-0.5 + r2 * (1.0 / 24.0
              + r2 * (-1.0 / 720.0 + r2 * (1.0 / 40320.0))))

    q0 = q == 0
    q1 = q == 1
    q2 = q == 2
    sin_x = jnp.where(q0, s, jnp.where(q1, c, jnp.where(q2, -s, -c)))
    cos_x = jnp.where(q0, c, jnp.where(q1, -s, jnp.where(q2, -c, s)))
    return cos_x, sin_x


# ------------------------------ fused Pallas kernel -------------------------------

def _fused_qlstm_kernel(x_ref, wh_ref, wx_ref, bin_ref, ua_ref, ub_ref,
                        bit_ref, zw_ref, bout_ref, wlin_ref, blin_ref,
                        out_ref, *, T, Bp, H):
    # ---- hoist the x-dependent half of clayer_in out of the recurrence ----------
    # xw[t*Bp + b, :] = x[b, t, :] @ W_in[:, H:]^T + b_in   (one batched dot)
    xw = (jnp.dot(x_ref[...], wx_ref[...], preferred_element_type=jnp.float32)
          + bin_ref[...])                                    # (T*Bp, NQ)

    # weights loaded once, reused across the unrolled recurrence
    wh = wh_ref[...]                                         # (H, NQ)
    ua = ua_ref[...]                                         # (16, 128) = [Ur^T | Ui^T]
    ub = ub_ref[...]                                         # (16, 128) = [-Ui^T | Ur^T]
    zw = zw_ref[...]                                         # (64, 4H)
    bout = bout_ref[...]                                     # (1, 4H)
    bits = bit_ref[...]                                      # (NQ, 16)
    sel = [bits[q:q + 1, :] for q in range(NQ)]              # hoisted (1,16) broadcasts

    inv_sqrt2 = 0.7071067811865476

    h = jnp.zeros((Bp, H), jnp.float32)
    c = jnp.zeros((Bp, H), jnp.float32)

    # T is static & tiny -> fully-unrolled recurrence (all slices static).
    for t in range(T):
        # ---- clayer_in: y_t = W_in @ cat(h_t, x_t) + b_in  (cat order is (h, x)) -
        y = (jnp.dot(h, wh, preferred_element_type=jnp.float32)
             + xw[t * Bp:(t + 1) * Bp, :])                   # (Bp, NQ)

        # ---- angle embedding: RX(y)|0>, Hadamard, RY(theta), RZ(theta) ----------
        ca, sa = _sincos(0.5 * y)                            # cos(y/2), sin(y/2)
        u0r = ca * inv_sqrt2
        u0i = -sa * inv_sqrt2
        u1r = ca * inv_sqrt2
        u1i = sa * inv_sqrt2

        # theta = arctan(y[0]): batch row 0, per the reference (batched TorchLayer
        # semantics -- the angle is shared across the batch); half-angle identities
        # give cos(theta/2), sin(theta/2) exactly without an atan op.
        y0 = y[0:1, :]                                       # (1, NQ)
        c0 = jax.lax.rsqrt(1.0 + y0 * y0)                    # cos(theta)
        ch = jnp.sqrt(0.5 * (1.0 + c0))                      # cos(theta/2) > 0
        sh = (jnp.where(y0 >= 0.0, 1.0, -1.0)
              * jnp.sqrt(jnp.maximum(0.5 * (1.0 - c0), 0.0)))  # sin(theta/2)

        # RY(theta)
        w0r = ch * u0r - sh * u1r
        w0i = ch * u0i - sh * u1i
        w1r = sh * u0r + ch * u1r
        w1i = sh * u0i + ch * u1i
        # RZ(theta)  (the source reuses ry_params for the RZ angle)
        v0r = ch * w0r + sh * w0i
        v0i = ch * w0i - sh * w0r
        v1r = ch * w1r - sh * w1i
        v1i = ch * w1i + sh * w1r

        # ---- Kron over the 4 wires -> product state (Bp, 16); wire 0 = MSB ------
        pr = pim = None
        for q in range(NQ):
            a0r = v0r[:, q:q + 1]
            a0i = v0i[:, q:q + 1]
            a_r = a0r + (v1r[:, q:q + 1] - a0r) * sel[q]     # (Bp, 16)
            a_i = a0i + (v1i[:, q:q + 1] - a0i) * sel[q]
            if q == 0:
                pr, pim = a_r, a_i
            else:
                pr, pim = pr * a_r - pim * a_i, pr * a_i + pim * a_r

        # ---- packed ansatz unitaries: psi = [Re | Im] of all 4 gates, 128 lanes --
        psi = (jnp.dot(pr, ua, preferred_element_type=jnp.float32)
               + jnp.dot(pim, ub, preferred_element_type=jnp.float32))  # (Bp, 128)
        psir = psi[:, :4 * DIM]
        psii = psi[:, 4 * DIM:]
        probs = psir * psir + psii * psii                    # (Bp, 64); gate g = cols 16g:16g+16

        # ---- PauliZ expvals folded into clayer_out (block-diagonal), all 4 gates -
        pre = (jnp.dot(probs, zw, preferred_element_type=jnp.float32)
               + bout)                                       # (Bp, 4H)

        f_t = jax.nn.sigmoid(pre[:, 0:H])
        i_t = jax.nn.sigmoid(pre[:, H:2 * H])
        g_t = jnp.tanh(pre[:, 2 * H:3 * H])
        o_t = jax.nn.sigmoid(pre[:, 3 * H:4 * H])

        c = f_t * c + i_t * g_t
        h = o_t * jnp.tanh(c)

    # ---- linear head, computed once after the recurrence -------------------------
    out_ref[...] = (jnp.dot(h, wlin_ref[...], preferred_element_type=jnp.float32)
                    + blin_ref[...])


# -------------------- fixed ansatz unitaries (host-side setup) --------------------

def _kron_all(mats):
    return functools.reduce(np.kron, mats)


def _single(gate, wire):
    mats = [np.eye(2, dtype=np.complex128) for _ in range(NQ)]
    mats[wire] = gate
    return _kron_all(mats)


def _rx(a):
    c, s = np.cos(a / 2.0), np.sin(a / 2.0)
    return np.array([[c, -1j * s], [-1j * s, c]], dtype=np.complex128)


def _ry(a):
    c, s = np.cos(a / 2.0), np.sin(a / 2.0)
    return np.array([[c, -s], [s, c]], dtype=np.complex128)


def _rz(a):
    return np.array([[np.exp(-1j * a / 2.0), 0.0],
                     [0.0, np.exp(1j * a / 2.0)]], dtype=np.complex128)


def _cnot(ctrl, tgt):
    M = np.zeros((DIM, DIM), dtype=np.complex128)
    for s in range(DIM):
        bits = [(s >> (NQ - 1 - w)) & 1 for w in range(NQ)]
        if bits[ctrl]:
            bits[tgt] ^= 1
        s2 = sum(b << (NQ - 1 - w) for w, b in enumerate(bits))
        M[s2, s] = 1.0
    return M


def _ansatz_unitary(weights):
    """weights: (n_qlayers, 3, NQ) -> 16x16 unitary of qml.layer(ansatz, ...)."""
    U = np.eye(DIM, dtype=np.complex128)
    for layer in range(weights.shape[0]):
        p = weights[layer]
        for i in (1, 2):
            for j in range(NQ):
                U = _cnot(j, (j + i) % NQ) @ U
        for q in range(NQ):
            U = _single(_rx(p[0, q]), q) @ U
            U = _single(_ry(p[1, q]), q) @ U
            U = _single(_rz(p[2, q]), q) @ U
    return U


# ---------------------------------- parameters ------------------------------------

def init_params(key, num_sensors, hidden_units):
    concat = num_sensors + hidden_units
    H = hidden_units
    ks = jax.random.split(key, 7)

    b_in_bound = 1.0 / np.sqrt(concat)
    w_in = jax.random.uniform(ks[0], (NQ, concat), jnp.float32, -b_in_bound, b_in_bound)
    b_in = jax.random.uniform(ks[1], (1, NQ), jnp.float32, -b_in_bound, b_in_bound)

    b_out_bound = 1.0 / np.sqrt(NQ)
    w_out = jax.random.uniform(ks[2], (H, NQ), jnp.float32, -b_out_bound, b_out_bound)
    b_out = jax.random.uniform(ks[3], (1, H), jnp.float32, -b_out_bound, b_out_bound)

    b_lin_bound = 1.0 / np.sqrt(H)
    w_lin = jax.random.uniform(ks[4], (1, H), jnp.float32, -b_lin_bound, b_lin_bound)
    b_lin = jax.random.uniform(ks[5], (1, 1), jnp.float32, -b_lin_bound, b_lin_bound)

    # TorchLayer default init: uniform over [0, 2*pi)
    vqc_w = jax.random.uniform(ks[6], (4, NQL, 3, NQ), jnp.float32, 0.0, 2.0 * np.pi)
    vqc_w_np = np.asarray(vqc_w, dtype=np.float64)

    # Stack the 4 gate unitaries (pre-transposed) along lanes: (16, 64) each,
    # then pack them so one pair of (16, 128) matmuls produces [Re | Im] of all
    # four statevectors in a single unmasked 128-lane tile.
    urt_all = np.zeros((DIM, 4 * DIM), np.float32)
    uit_all = np.zeros((DIM, 4 * DIM), np.float32)
    for g in range(4):
        U = _ansatz_unitary(vqc_w_np[g])
        urt_all[:, g * DIM:(g + 1) * DIM] = np.real(U).T.astype(np.float32)
        uit_all[:, g * DIM:(g + 1) * DIM] = np.imag(U).T.astype(np.float32)
    u_a = np.concatenate([urt_all, uit_all], axis=1)        # (16, 128)
    u_b = np.concatenate([-uit_all, urt_all], axis=1)       # (16, 128)

    # PauliZ signs and the per-wire bit selector masks (wire 0 = MSB).
    zsgn = np.zeros((DIM, NQ), np.float32)
    bitsel = np.zeros((NQ, DIM), np.float32)
    for s in range(DIM):
        for i in range(NQ):
            bit = (s >> (NQ - 1 - i)) & 1
            zsgn[s, i] = 1.0 - 2.0 * bit
            bitsel[i, s] = float(bit)

    # Fold PauliZ signs into clayer_out and make a block-diagonal (64, 4H) matrix
    # so all four gate pre-activations come out of one lane-dense matmul.
    w_out_np = np.asarray(w_out, np.float32)                 # (H, NQ)
    b_out_np = np.asarray(b_out, np.float32)                 # (1, H)
    zw = zsgn @ w_out_np.T                                   # (16, H)
    zw_blk = np.zeros((4 * DIM, 4 * H), np.float32)
    for g in range(4):
        zw_blk[g * DIM:(g + 1) * DIM, g * H:(g + 1) * H] = zw
    b_out4 = np.tile(b_out_np, (1, 4))                       # (1, 4H)

    w_in_np = np.asarray(w_in, np.float32)
    return {
        "wh_t": jnp.asarray(w_in_np[:, :H].T),               # (H, NQ) -- cat order (h_t, x_t)
        "wx_t": jnp.asarray(w_in_np[:, H:].T),               # (F, NQ)
        "b_in": jnp.asarray(np.asarray(b_in, np.float32)),   # (1, NQ)
        "u_a": jnp.asarray(u_a),                             # (16, 128)
        "u_b": jnp.asarray(u_b),                             # (16, 128)
        "bitsel": jnp.asarray(bitsel),                       # (NQ, 16)
        "zw_blk": jnp.asarray(zw_blk),                       # (64, 4H)
        "b_out4": jnp.asarray(b_out4),                       # (1, 4H)
        "wlin_t": jnp.asarray(np.asarray(w_lin, np.float32).T),  # (H, 1)
        "b_lin": jnp.asarray(np.asarray(b_lin, np.float32)),     # (1, 1)
    }


# --------------------------------- forward pass ------------------------------------

def qshallow_regression_lstm_forward(x, params):
    """x: (B, T, F) float32, batch_first.  Returns (B,) like out.flatten()."""
    B, T, F = x.shape
    H = params["zw_blk"].shape[1] // 4

    # Pad the batch/sublane dim to a multiple of 8 (padded rows are dead weight,
    # discarded at the end) and lay x out time-major 2D so the kernel can compute
    # the x-contribution of clayer_in for ALL timesteps with one batched dot.
    Bp = ((B + 7) // 8) * 8
    xp = jnp.pad(x, ((0, Bp - B), (0, 0), (0, 0)))
    xs2d = jnp.transpose(xp, (1, 0, 2)).reshape(T * Bp, F)   # (T*Bp, F)

    kernel = functools.partial(_fused_qlstm_kernel, T=T, Bp=Bp, H=H)

    # Single kernel invocation (no grid): total VMEM footprint (x + weights +
    # intermediates) is a few tens of KiB, far below any VMEM limit, and the
    # T-step recurrence runs fully unrolled inside the body.
    out = pl.pallas_call(
        kernel,
        out_shape=jax.ShapeDtypeStruct((Bp, 1), jnp.float32),
    )(xs2d, params["wh_t"], params["wx_t"], params["b_in"],
      params["u_a"], params["u_b"], params["bitsel"],
      params["zw_blk"], params["b_out4"], params["wlin_t"], params["b_lin"])

    return out.reshape(-1)[:B]


# ------------------------------------- main ----------------------------------------

if __name__ == "__main__":
    num_sensors = 8      # input_size / num_sensors
    hidden_units = 32    # hidden_size  (4*H = 128 lanes for the gate matmul)
    batch, seq = 2, 8

    key = jax.random.PRNGKey(0)
    pkey, xkey = jax.random.split(key)
    params = init_params(pkey, num_sensors, hidden_units)
    x = jax.random.normal(xkey, (batch, seq, num_sensors), dtype=jnp.float32)

    fwd = jax.jit(qshallow_regression_lstm_forward)
    out = jax.block_until_ready(fwd(x, params))
    assert out.shape == (batch,) and out.dtype == jnp.float32
    assert bool(jnp.all(jnp.isfinite(out)))

    print("KERNEL_OK")
</pallas_src>

<mosaic_0001>
module attributes {stable_mosaic.version = 11 : i64} {
  func.func @_fused_qlstm_kernel(%arg0: memref<64x8xf32, #tpu.memory_space<vmem>>, %arg1: memref<32x4xf32, #tpu.memory_space<vmem>>, %arg2: memref<8x4xf32, #tpu.memory_space<vmem>>, %arg3: memref<1x4xf32, #tpu.memory_space<vmem>>, %arg4: memref<16x128xf32, #tpu.memory_space<vmem>>, %arg5: memref<16x128xf32, #tpu.memory_space<vmem>>, %arg6: memref<4x16xf32, #tpu.memory_space<vmem>>, %arg7: memref<64x128xf32, #tpu.memory_space<vmem>>, %arg8: memref<1x128xf32, #tpu.memory_space<vmem>>, %arg9: memref<32x1xf32, #tpu.memory_space<vmem>>, %arg10: memref<1x1xf32, #tpu.memory_space<vmem>>, %arg11: memref<8x1xf32, #tpu.memory_space<vmem>>) attributes {dimension_semantics = [], scalar_prefetch = 0 : i64, scratch_operands = 0 : i64, tpu.core_type = #tpu.core_type<tc>} {
    %c0 = arith.constant 0 : index
    %c0_0 = arith.constant 0 : index
    %0 = vector.load %arg0[%c0, %c0_0] : memref<64x8xf32, #tpu.memory_space<vmem>>, vector<64x8xf32>
    %c0_1 = arith.constant 0 : index
    %c0_2 = arith.constant 0 : index
    %1 = vector.load %arg2[%c0_1, %c0_2] : memref<8x4xf32, #tpu.memory_space<vmem>>, vector<8x4xf32>
    %cst = arith.constant dense<0.000000e+00> : vector<64x4xf32>
    %2 = tpu.matmul %0, %1, %cst {dimension_numbers = #tpu.dot_dimension_numbers<[1], [0], [0], [1], [0, 0, 1, 1], [], []>} : vector<64x8xf32>, vector<8x4xf32>, vector<64x4xf32> -> vector<64x4xf32>
    %c0_3 = arith.constant 0 : index
    %c0_4 = arith.constant 0 : index
    %3 = vector.load %arg3[%c0_3, %c0_4] : memref<1x4xf32, #tpu.memory_space<vmem>>, vector<1x4xf32>
    %4 = vector.broadcast %3 : vector<1x4xf32> to vector<64x4xf32>
    %5 = arith.addf %2, %4 : vector<64x4xf32>
    %c0_5 = arith.constant 0 : index
    %c0_6 = arith.constant 0 : index
    %6 = vector.load %arg1[%c0_5, %c0_6] : memref<32x4xf32, #tpu.memory_space<vmem>>, vector<32x4xf32>
    %c0_7 = arith.constant 0 : index
    %c0_8 = arith.constant 0 : index
    %7 = vector.load %arg4[%c0_7, %c0_8] : memref<16x128xf32, #tpu.memory_space<vmem>>, vector<16x128xf32>
    %c0_9 = arith.constant 0 : index
    %c0_10 = arith.constant 0 : index
    %8 = vector.load %arg5[%c0_9, %c0_10] : memref<16x128xf32, #tpu.memory_space<vmem>>, vector<16x128xf32>
    %c0_11 = arith.constant 0 : index
    %c0_12 = arith.constant 0 : index
    %9 = vector.load %arg7[%c0_11, %c0_12] : memref<64x128xf32, #tpu.memory_space<vmem>>, vector<64x128xf32>
    %c0_13 = arith.constant 0 : index
    %c0_14 = arith.constant 0 : index
    %10 = vector.load %arg8[%c0_13, %c0_14] : memref<1x128xf32, #tpu.memory_space<vmem>>, vector<1x128xf32>
    %c0_15 = arith.constant 0 : index
    %c0_16 = arith.constant 0 : index
    %11 = vector.load %arg6[%c0_15, %c0_16] : memref<4x16xf32, #tpu.memory_space<vmem>>, vector<4x16xf32>
    %12 = vector.extract_strided_slice %11 {offsets = [0, 0], sizes = [1, 16], strides = [1, 1]} : vector<4x16xf32> to vector<1x16xf32>
    %13 = vector.extract_strided_slice %11 {offsets = [1, 0], sizes = [1, 16], strides = [1, 1]} : vector<4x16xf32> to vector<1x16xf32>
    %14 = vector.extract_strided_slice %11 {offsets = [2, 0], sizes = [1, 16], strides = [1, 1]} : vector<4x16xf32> to vector<1x16xf32>
    %15 = vector.extract_strided_slice %11 {offsets = [3, 0], sizes = [1, 16], strides = [1, 1]} : vector<4x16xf32> to vector<1x16xf32>
    %cst_17 = arith.constant 0.000000e+00 : f32
    %16 = vector.broadcast %cst_17 : f32 to vector<8x32xf32>
    %cst_18 = arith.constant 0.000000e+00 : f32
    %17 = vector.broadcast %cst_18 : f32 to vector<8x32xf32>
    %cst_19 = arith.constant dense<0.000000e+00> : vector<8x4xf32>
    %18 = tpu.matmul %16, %6, %cst_19 {dimension_numbers = #tpu.dot_dimension_numbers<[1], [0], [0], [1], [0, 0, 1, 1], [], []>} : vector<8x32xf32>, vector<32x4xf32>, vector<8x4xf32> -> vector<8x4xf32>
    %19 = vector.extract_strided_slice %5 {offsets = [0, 0], sizes = [8, 4], strides = [1, 1]} : vector<64x4xf32> to vector<8x4xf32>
    %20 = arith.addf %18, %19 : vector<8x4xf32>
    %cst_20 = arith.constant 5.000000e-01 : f32
    %21 = vector.broadcast %cst_20 : f32 to vector<8x4xf32>
    %22 = arith.mulf %21, %20 : vector<8x4xf32>
    %cst_21 = arith.constant 0.636619746 : f32
    %23 = vector.broadcast %cst_21 : f32 to vector<8x4xf32>
    %24 = arith.mulf %22, %23 : vector<8x4xf32>
    %cst_22 = arith.constant 5.000000e-01 : f32
    %25 = vector.broadcast %cst_22 : f32 to vector<8x4xf32>
    %26 = arith.addf %24, %25 : vector<8x4xf32>
    %27 = arith.fptosi %26 : vector<8x4xf32> to vector<8x4xi32>
    %28 = arith.sitofp %27 : vector<8x4xi32> to vector<8x4xf32>
    %29 = arith.cmpf olt, %26, %28 : vector<8x4xf32>
    %c1_i32 = arith.constant 1 : i32
    %30 = vector.broadcast %c1_i32 : i32 to vector<8x4xi32>
    %31 = arith.subi %27, %30 : vector<8x4xi32>
    %32 = arith.select %29, %31, %27 : vector<8x4xi1>, vector<8x4xi32>
    %33 = arith.sitofp %32 : vector<8x4xi32> to vector<8x4xf32>
    %cst_23 = arith.constant 1.57079637 : f32
    %34 = vector.broadcast %cst_23 : f32 to vector<8x4xf32>
    %35 = arith.mulf %33, %34 : vector<8x4xf32>
    %36 = arith.subf %22, %35 : vector<8x4xf32>
    %c3_i32 = arith.constant 3 : i32
    %37 = vector.broadcast %c3_i32 : i32 to vector<8x4xi32>
    %38 = arith.andi %32, %37 : vector<8x4xi32>
    %39 = arith.mulf %36, %36 : vector<8x4xf32>
    %cst_24 = arith.constant 2.75573188E-6 : f32
    %40 = vector.broadcast %cst_24 : f32 to vector<8x4xf32>
    %41 = arith.mulf %39, %40 : vector<8x4xf32>
    %cst_25 = arith.constant -1.98412701E-4 : f32
    %42 = vector.broadcast %cst_25 : f32 to vector<8x4xf32>
    %43 = arith.addf %42, %41 : vector<8x4xf32>
    %44 = arith.mulf %39, %43 : vector<8x4xf32>
    %cst_26 = arith.constant 0.00833333377 : f32
    %45 = vector.broadcast %cst_26 : f32 to vector<8x4xf32>
    %46 = arith.addf %45, %44 : vector<8x4xf32>
    %47 = arith.mulf %39, %46 : vector<8x4xf32>
    %cst_27 = arith.constant -0.166666672 : f32
    %48 = vector.broadcast %cst_27 : f32 to vector<8x4xf32>
    %49 = arith.addf %48, %47 : vector<8x4xf32>
    %50 = arith.mulf %39, %49 : vector<8x4xf32>
    %cst_28 = arith.constant 1.000000e+00 : f32
    %51 = vector.broadcast %cst_28 : f32 to vector<8x4xf32>
    %52 = arith.addf %51, %50 : vector<8x4xf32>
    %53 = arith.mulf %36, %52 : vector<8x4xf32>
    %cst_29 = arith.constant 2.48015876E-5 : f32
    %54 = vector.broadcast %cst_29 : f32 to vector<8x4xf32>
    %55 = arith.mulf %39, %54 : vector<8x4xf32>
    %cst_30 = arith.constant -0.00138888892 : f32
    %56 = vector.broadcast %cst_30 : f32 to vector<8x4xf32>
    %57 = arith.addf %56, %55 : vector<8x4xf32>
    %58 = arith.mulf %39, %57 : vector<8x4xf32>
    %cst_31 = arith.constant 0.0416666679 : f32
    %59 = vector.broadcast %cst_31 : f32 to vector<8x4xf32>
    %60 = arith.addf %59, %58 : vector<8x4xf32>
    %61 = arith.mulf %39, %60 : vector<8x4xf32>
    %cst_32 = arith.constant -5.000000e-01 : f32
    %62 = vector.broadcast %cst_32 : f32 to vector<8x4xf32>
    %63 = arith.addf %62, %61 : vector<8x4xf32>
    %64 = arith.mulf %39, %63 : vector<8x4xf32>
    %cst_33 = arith.constant 1.000000e+00 : f32
    %65 = vector.broadcast %cst_33 : f32 to vector<8x4xf32>
    %66 = arith.addf %65, %64 : vector<8x4xf32>
    %c0_i32 = arith.constant 0 : i32
    %67 = vector.broadcast %c0_i32 : i32 to vector<8x4xi32>
    %68 = arith.cmpi eq, %38, %67 : vector<8x4xi32>
    %c1_i32_34 = arith.constant 1 : i32
    %69 = vector.broadcast %c1_i32_34 : i32 to vector<8x4xi32>
    %70 = arith.cmpi eq, %38, %69 : vector<8x4xi32>
    %c2_i32 = arith.constant 2 : i32
    %71 = vector.broadcast %c2_i32 : i32 to vector<8x4xi32>
    %72 = arith.cmpi eq, %38, %71 : vector<8x4xi32>
    %cst_35 = arith.constant 0.000000e+00 : f32
    %73 = vector.broadcast %cst_35 : f32 to vector<8x4xf32>
    %74 = arith.subf %73, %53 : vector<8x4xf32>
    %cst_36 = arith.constant 0.000000e+00 : f32
    %75 = vector.broadcast %cst_36 : f32 to vector<8x4xf32>
    %76 = arith.subf %75, %66 : vector<8x4xf32>
    %77 = arith.select %72, %74, %76 : vector<8x4xi1>, vector<8x4xf32>
    %78 = arith.select %70, %66, %77 : vector<8x4xi1>, vector<8x4xf32>
    %79 = arith.select %68, %53, %78 : vector<8x4xi1>, vector<8x4xf32>
    %cst_37 = arith.constant 0.000000e+00 : f32
    %80 = vector.broadcast %cst_37 : f32 to vector<8x4xf32>
    %81 = arith.subf %80, %53 : vector<8x4xf32>
    %cst_38 = arith.constant 0.000000e+00 : f32
    %82 = vector.broadcast %cst_38 : f32 to vector<8x4xf32>
    %83 = arith.subf %82, %66 : vector<8x4xf32>
    %84 = arith.select %72, %83, %53 : vector<8x4xi1>, vector<8x4xf32>
    %85 = arith.select %70, %81, %84 : vector<8x4xi1>, vector<8x4xf32>
    %86 = arith.select %68, %66, %85 : vector<8x4xi1>, vector<8x4xf32>
    %cst_39 = arith.constant 0.707106769 : f32
    %87 = vector.broadcast %cst_39 : f32 to vector<8x4xf32>
    %88 = arith.mulf %86, %87 : vector<8x4xf32>
    %cst_40 = arith.constant 0.000000e+00 : f32
    %89 = vector.broadcast %cst_40 : f32 to vector<8x4xf32>
    %90 = arith.subf %89, %79 : vector<8x4xf32>
    %cst_41 = arith.constant 0.707106769 : f32
    %91 = vector.broadcast %cst_41 : f32 to vector<8x4xf32>
    %92 = arith.mulf %90, %91 : vector<8x4xf32>
    %cst_42 = arith.constant 0.707106769 : f32
    %93 = vector.broadcast %cst_42 : f32 to vector<8x4xf32>
    %94 = arith.mulf %86, %93 : vector<8x4xf32>
    %cst_43 = arith.constant 0.707106769 : f32
    %95 = vector.broadcast %cst_43 : f32 to vector<8x4xf32>
    %96 = arith.mulf %79, %95 : vector<8x4xf32>
    %97 = vector.extract_strided_slice %20 {offsets = [0, 0], sizes = [1, 4], strides = [1, 1]} : vector<8x4xf32> to vector<1x4xf32>
    %98 = arith.mulf %97, %97 : vector<1x4xf32>
    %cst_44 = arith.constant 1.000000e+00 : f32
    %99 = vector.broadcast %cst_44 : f32 to vector<1x4xf32>
    %100 = arith.addf %99, %98 : vector<1x4xf32>
    %101 = math.rsqrt %100 : vector<1x4xf32>
    %cst_45 = arith.constant 1.000000e+00 : f32
    %102 = vector.broadcast %cst_45 : f32 to vector<1x4xf32>
    %103 = arith.addf %102, %101 : vector<1x4xf32>
    %cst_46 = arith.constant 5.000000e-01 : f32
    %104 = vector.broadcast %cst_46 : f32 to vector<1x4xf32>
    %105 = arith.mulf %104, %103 : vector<1x4xf32>
    %106 = math.sqrt %105 : vector<1x4xf32>
    %cst_47 = arith.constant 0.000000e+00 : f32
    %107 = vector.broadcast %cst_47 : f32 to vector<1x4xf32>
    %108 = arith.cmpf oge, %97, %107 : vector<1x4xf32>
    %cst_48 = arith.constant 1.000000e+00 : f32
    %cst_49 = arith.constant -1.000000e+00 : f32
    %109 = vector.broadcast %cst_48 : f32 to vector<1x4xf32>
    %110 = vector.broadcast %cst_49 : f32 to vector<1x4xf32>
    %111 = arith.select %108, %109, %110 : vector<1x4xi1>, vector<1x4xf32>
    %cst_50 = arith.constant 1.000000e+00 : f32
    %112 = vector.broadcast %cst_50 : f32 to vector<1x4xf32>
    %113 = arith.subf %112, %101 : vector<1x4xf32>
    %cst_51 = arith.constant 5.000000e-01 : f32
    %114 = vector.broadcast %cst_51 : f32 to vector<1x4xf32>
    %115 = arith.mulf %114, %113 : vector<1x4xf32>
    %cst_52 = arith.constant 0.000000e+00 : f32
    %116 = vector.broadcast %cst_52 : f32 to vector<1x4xf32>
    %117 = arith.maximumf %115, %116 : vector<1x4xf32>
    %118 = math.sqrt %117 : vector<1x4xf32>
    %119 = arith.mulf %111, %118 : vector<1x4xf32>
    %120 = vector.broadcast %106 : vector<1x4xf32> to vector<8x4xf32>
    %121 = arith.mulf %120, %88 : vector<8x4xf32>
    %122 = vector.broadcast %119 : vector<1x4xf32> to vector<8x4xf32>
    %123 = arith.mulf %122, %94 : vector<8x4xf32>
    %124 = arith.subf %121, %123 : vector<8x4xf32>
    %125 = vector.broadcast %106 : vector<1x4xf32> to vector<8x4xf32>
    %126 = arith.mulf %125, %92 : vector<8x4xf32>
    %127 = vector.broadcast %119 : vector<1x4xf32> to vector<8x4xf32>
    %128 = arith.mulf %127, %96 : vector<8x4xf32>
    %129 = arith.subf %126, %128 : vector<8x4xf32>
    %130 = vector.broadcast %119 : vector<1x4xf32> to vector<8x4xf32>
    %131 = arith.mulf %130, %88 : vector<8x4xf32>
    %132 = vector.broadcast %106 : vector<1x4xf32> to vector<8x4xf32>
    %133 = arith.mulf %132, %94 : vector<8x4xf32>
    %134 = arith.addf %131, %133 : vector<8x4xf32>
    %135 = vector.broadcast %119 : vector<1x4xf32> to vector<8x4xf32>
    %136 = arith.mulf %135, %92 : vector<8x4xf32>
    %137 = vector.broadcast %106 : vector<1x4xf32> to vector<8x4xf32>
    %138 = arith.mulf %137, %96 : vector<8x4xf32>
    %139 = arith.addf %136, %138 : vector<8x4xf32>
    %140 = vector.broadcast %106 : vector<1x4xf32> to vector<8x4xf32>
    %141 = arith.mulf %140, %124 : vector<8x4xf32>
    %142 = vector.broadcast %119 : vector<1x4xf32> to vector<8x4xf32>
    %143 = arith.mulf %142, %129 : vector<8x4xf32>
    %144 = arith.addf %141, %143 : vector<8x4xf32>
    %145 = vector.broadcast %106 : vector<1x4xf32> to vector<8x4xf32>
    %146 = arith.mulf %145, %129 : vector<8x4xf32>
    %147 = vector.broadcast %119 : vector<1x4xf32> to vector<8x4xf32>
    %148 = arith.mulf %147, %124 : vector<8x4xf32>
    %149 = arith.subf %146, %148 : vector<8x4xf32>
    %150 = vector.broadcast %106 : vector<1x4xf32> to vector<8x4xf32>
    %151 = arith.mulf %150, %134 : vector<8x4xf32>
    %152 = vector.broadcast %119 : vector<1x4xf32> to vector<8x4xf32>
    %153 = arith.mulf %152, %139 : vector<8x4xf32>
    %154 = arith.subf %151, %153 : vector<8x4xf32>
    %155 = vector.broadcast %106 : vector<1x4xf32> to vector<8x4xf32>
    %156 = arith.mulf %155, %139 : vector<8x4xf32>
    %157 = vector.broadcast %119 : vector<1x4xf32> to vector<8x4xf32>
    %158 = arith.mulf %157, %134 : vector<8x4xf32>
    %159 = arith.addf %156, %158 : vector<8x4xf32>
    %160 = vector.extract_strided_slice %144 {offsets = [0, 0], sizes = [8, 1], strides = [1, 1]} : vector<8x4xf32> to vector<8x1xf32>
    %161 = vector.extract_strided_slice %149 {offsets = [0, 0], sizes = [8, 1], strides = [1, 1]} : vector<8x4xf32> to vector<8x1xf32>
    %162 = vector.extract_strided_slice %154 {offsets = [0, 0], sizes = [8, 1], strides = [1, 1]} : vector<8x4xf32> to vector<8x1xf32>
    %163 = arith.subf %162, %160 : vector<8x1xf32>
    %164 = vector.broadcast %163 : vector<8x1xf32> to vector<8x16xf32>
    %165 = vector.broadcast %12 : vector<1x16xf32> to vector<8x16xf32>
    %166 = arith.mulf %164, %165 : vector<8x16xf32>
    %167 = vector.broadcast %160 : vector<8x1xf32> to vector<8x16xf32>
    %168 = arith.addf %167, %166 : vector<8x16xf32>
    %169 = vector.extract_strided_slice %159 {offsets = [0, 0], sizes = [8, 1], strides = [1, 1]} : vector<8x4xf32> to vector<8x1xf32>
    %170 = arith.subf %169, %161 : vector<8x1xf32>
    %171 = vector.broadcast %170 : vector<8x1xf32> to vector<8x16xf32>
    %172 = vector.broadcast %12 : vector<1x16xf32> to vector<8x16xf32>
    %173 = arith.mulf %171, %172 : vector<8x16xf32>
    %174 = vector.broadcast %161 : vector<8x1xf32> to vector<8x16xf32>
    %175 = arith.addf %174, %173 : vector<8x16xf32>
    %176 = vector.extract_strided_slice %144 {offsets = [0, 1], sizes = [8, 1], strides = [1, 1]} : vector<8x4xf32> to vector<8x1xf32>
    %177 = vector.extract_strided_slice %149 {offsets = [0, 1], sizes = [8, 1], strides = [1, 1]} : vector<8x4xf32> to vector<8x1xf32>
    %178 = vector.extract_strided_slice %154 {offsets = [0, 1], sizes = [8, 1], strides = [1, 1]} : vector<8x4xf32> to vector<8x1xf32>
    %179 = arith.subf %178, %176 : vector<8x1xf32>
    %180 = vector.broadcast %179 : vector<8x1xf32> to vector<8x16xf32>
    %181 = vector.broadcast %13 : vector<1x16xf32> to vector<8x16xf32>
    %182 = arith.mulf %180, %181 : vector<8x16xf32>
    %183 = vector.broadcast %176 : vector<8x1xf32> to vector<8x16xf32>
    %184 = arith.addf %183, %182 : vector<8x16xf32>
    %185 = vector.extract_strided_slice %159 {offsets = [0, 1], sizes = [8, 1], strides = [1, 1]} : vector<8x4xf32> to vector<8x1xf32>
    %186 = arith.subf %185, %177 : vector<8x1xf32>
    %187 = vector.broadcast %186 : vector<8x1xf32> to vector<8x16xf32>
    %188 = vector.broadcast %13 : vector<1x16xf32> to vector<8x16xf32>
    %189 = arith.mulf %187, %188 : vector<8x16xf32>
    %190 = vector.broadcast %177 : vector<8x1xf32> to vector<8x16xf32>
    %191 = arith.addf %190, %189 : vector<8x16xf32>
    %192 = arith.mulf %168, %184 : vector<8x16xf32>
    %193 = arith.mulf %175, %191 : vector<8x16xf32>
    %194 = arith.subf %192, %193 : vector<8x16xf32>
    %195 = arith.mulf %168, %191 : vector<8x16xf32>
    %196 = arith.mulf %175, %184 : vector<8x16xf32>
    %197 = arith.addf %195, %196 : vector<8x16xf32>
    %198 = vector.extract_strided_slice %144 {offsets = [0, 2], sizes = [8, 1], strides = [1, 1]} : vector<8x4xf32> to vector<8x1xf32>
    %199 = vector.extract_strided_slice %149 {offsets = [0, 2], sizes = [8, 1], strides = [1, 1]} : vector<8x4xf32> to vector<8x1xf32>
    %200 = vector.extract_strided_slice %154 {offsets = [0, 2], sizes = [8, 1], strides = [1, 1]} : vector<8x4xf32> to vector<8x1xf32>
    %201 = arith.subf %200, %198 : vector<8x1xf32>
    %202 = vector.broadcast %201 : vector<8x1xf32> to vector<8x16xf32>
    %203 = vector.broadcast %14 : vector<1x16xf32> to vector<8x16xf32>
    %204 = arith.mulf %202, %203 : vector<8x16xf32>
    %205 = vector.broadcast %198 : vector<8x1xf32> to vector<8x16xf32>
    %206 = arith.addf %205, %204 : vector<8x16xf32>
    %207 = vector.extract_strided_slice %159 {offsets = [0, 2], sizes = [8, 1], strides = [1, 1]} : vector<8x4xf32> to vector<8x1xf32>
    %208 = arith.subf %207, %199 : vector<8x1xf32>
    %209 = vector.broadcast %208 : vector<8x1xf32> to vector<8x16xf32>
    %210 = vector.broadcast %14 : vector<1x16xf32> to vector<8x16xf32>
    %211 = arith.mulf %209, %210 : vector<8x16xf32>
    %212 = vector.broadcast %199 : vector<8x1xf32> to vector<8x16xf32>
    %213 = arith.addf %212, %211 : vector<8x16xf32>
    %214 = arith.mulf %194, %206 : vector<8x16xf32>
    %215 = arith.mulf %197, %213 : vector<8x16xf32>
    %216 = arith.subf %214, %215 : vector<8x16xf32>
    %217 = arith.mulf %194, %213 : vector<8x16xf32>
    %218 = arith.mulf %197, %206 : vector<8x16xf32>
    %219 = arith.addf %217, %218 : vector<8x16xf32>
    %220 = vector.extract_strided_slice %144 {offsets = [0, 3], sizes = [8, 1], strides = [1, 1]} : vector<8x4xf32> to vector<8x1xf32>
    %221 = vector.extract_strided_slice %149 {offsets = [0, 3], sizes = [8, 1], strides = [1, 1]} : vector<8x4xf32> to vector<8x1xf32>
    %222 = vector.extract_strided_slice %154 {offsets = [0, 3], sizes = [8, 1], strides = [1, 1]} : vector<8x4xf32> to vector<8x1xf32>
    %223 = arith.subf %222, %220 : vector<8x1xf32>
    %224 = vector.broadcast %223 : vector<8x1xf32> to vector<8x16xf32>
    %225 = vector.broadcast %15 : vector<1x16xf32> to vector<8x16xf32>
    %226 = arith.mulf %224, %225 : vector<8x16xf32>
    %227 = vector.broadcast %220 : vector<8x1xf32> to vector<8x16xf32>
    %228 = arith.addf %227, %226 : vector<8x16xf32>
    %229 = vector.extract_strided_slice %159 {offsets = [0, 3], sizes = [8, 1], strides = [1, 1]} : vector<8x4xf32> to vector<8x1xf32>
    %230 = arith.subf %229, %221 : vector<8x1xf32>
    %231 = vector.broadcast %230 : vector<8x1xf32> to vector<8x16xf32>
    %232 = vector.broadcast %15 : vector<1x16xf32> to vector<8x16xf32>
    %233 = arith.mulf %231, %232 : vector<8x16xf32>
    %234 = vector.broadcast %221 : vector<8x1xf32> to vector<8x16xf32>
    %235 = arith.addf %234, %233 : vector<8x16xf32>
    %236 = arith.mulf %216, %228 : vector<8x16xf32>
    %237 = arith.mulf %219, %235 : vector<8x16xf32>
    %238 = arith.subf %236, %237 : vector<8x16xf32>
    %239 = arith.mulf %216, %235 : vector<8x16xf32>
    %240 = arith.mulf %219, %228 : vector<8x16xf32>
    %241 = arith.addf %239, %240 : vector<8x16xf32>
    %cst_53 = arith.constant dense<0.000000e+00> : vector<8x128xf32>
    %242 = tpu.matmul %238, %7, %cst_53 {dimension_numbers = #tpu.dot_dimension_numbers<[1], [0], [0], [1], [0, 0, 1, 1], [], []>} : vector<8x16xf32>, vector<16x128xf32>, vector<8x128xf32> -> vector<8x128xf32>
    %cst_54 = arith.constant dense<0.000000e+00> : vector<8x128xf32>
    %243 = tpu.matmul %241, %8, %cst_54 {dimension_numbers = #tpu.dot_dimension_numbers<[1], [0], [0], [1], [0, 0, 1, 1], [], []>} : vector<8x16xf32>, vector<16x128xf32>, vector<8x128xf32> -> vector<8x128xf32>
    %244 = arith.addf %242, %243 : vector<8x128xf32>
    %245 = vector.extract_strided_slice %244 {offsets = [0, 0], sizes = [8, 64], strides = [1, 1]} : vector<8x128xf32> to vector<8x64xf32>
    %246 = vector.extract_strided_slice %244 {offsets = [0, 64], sizes = [8, 64], strides = [1, 1]} : vector<8x128xf32> to vector<8x64xf32>
    %247 = arith.mulf %245, %245 : vector<8x64xf32>
    %248 = arith.mulf %246, %246 : vector<8x64xf32>
    %249 = arith.addf %247, %248 : vector<8x64xf32>
    %cst_55 = arith.constant dense<0.000000e+00> : vector<8x128xf32>
    %250 = tpu.matmul %249, %9, %cst_55 {dimension_numbers = #tpu.dot_dimension_numbers<[1], [0], [0], [1], [0, 0, 1, 1], [], []>} : vector<8x64xf32>, vector<64x128xf32>, vector<8x128xf32> -> vector<8x128xf32>
    %251 = vector.broadcast %10 : vector<1x128xf32> to vector<8x128xf32>
    %252 = arith.addf %250, %251 : vector<8x128xf32>
    %253 = vector.extract_strided_slice %252 {offsets = [0, 0], sizes = [8, 32], strides = [1, 1]} : vector<8x128xf32> to vector<8x32xf32>
    %254 = arith.negf %253 : vector<8x32xf32>
    %255 = math.exp %254 : vector<8x32xf32>
    %cst_56 = arith.constant 1.000000e+00 : f32
    %256 = vector.broadcast %cst_56 : f32 to vector<8x32xf32>
    %257 = arith.addf %256, %255 : vector<8x32xf32>
    %258 = arith.divf %256, %257 : vector<8x32xf32>
    %259 = vector.extract_strided_slice %252 {offsets = [0, 32], sizes = [8, 32], strides = [1, 1]} : vector<8x128xf32> to vector<8x32xf32>
    %260 = arith.negf %259 : vector<8x32xf32>
    %261 = math.exp %260 : vector<8x32xf32>
    %cst_57 = arith.constant 1.000000e+00 : f32
    %262 = vector.broadcast %cst_57 : f32 to vector<8x32xf32>
    %263 = arith.addf %262, %261 : vector<8x32xf32>
    %264 = arith.divf %262, %263 : vector<8x32xf32>
    %265 = vector.extract_strided_slice %252 {offsets = [0, 64], sizes = [8, 32], strides = [1, 1]} : vector<8x128xf32> to vector<8x32xf32>
    %266 = math.tanh %265 : vector<8x32xf32>
    %267 = vector.extract_strided_slice %252 {offsets = [0, 96], sizes = [8, 32], strides = [1, 1]} : vector<8x128xf32> to vector<8x32xf32>
    %268 = arith.negf %267 : vector<8x32xf32>
    %269 = math.exp %268 : vector<8x32xf32>
    %cst_58 = arith.constant 1.000000e+00 : f32
    %270 = vector.broadcast %cst_58 : f32 to vector<8x32xf32>
    %271 = arith.addf %270, %269 : vector<8x32xf32>
    %272 = arith.divf %270, %271 : vector<8x32xf32>
    %273 = arith.mulf %258, %17 : vector<8x32xf32>
    %274 = arith.mulf %264, %266 : vector<8x32xf32>
    %275 = arith.addf %273, %274 : vector<8x32xf32>
    %276 = math.tanh %275 : vector<8x32xf32>
    %277 = arith.mulf %272, %276 : vector<8x32xf32>
    %cst_59 = arith.constant dense<0.000000e+00> : vector<8x4xf32>
    %278 = tpu.matmul %277, %6, %cst_59 {dimension_numbers = #tpu.dot_dimension_numbers<[1], [0], [0], [1], [0, 0, 1, 1], [], []>} : vector<8x32xf32>, vector<32x4xf32>, vector<8x4xf32> -> vector<8x4xf32>
    %279 = vector.extract_strided_slice %5 {offsets = [8, 0], sizes = [8, 4], strides = [1, 1]} : vector<64x4xf32> to vector<8x4xf32>
    %280 = arith.addf %278, %279 : vector<8x4xf32>
    %cst_60 = arith.constant 5.000000e-01 : f32
    %281 = vector.broadcast %cst_60 : f32 to vector<8x4xf32>
    %282 = arith.mulf %281, %280 : vector<8x4xf32>
    %cst_61 = arith.constant 0.636619746 : f32
    %283 = vector.broadcast %cst_61 : f32 to vector<8x4xf32>
    %284 = arith.mulf %282, %283 : vector<8x4xf32>
    %cst_62 = arith.constant 5.000000e-01 : f32
    %285 = vector.broadcast %cst_62 : f32 to vector<8x4xf32>
    %286 = arith.addf %284, %285 : vector<8x4xf32>
    %287 = arith.fptosi %286 : vector<8x4xf32> to vector<8x4xi32>
    %288 = arith.sitofp %287 : vector<8x4xi32> to vector<8x4xf32>
    %289 = arith.cmpf olt, %286, %288 : vector<8x4xf32>
    %c1_i32_63 = arith.constant 1 : i32
    %290 = vector.broadcast %c1_i32_63 : i32 to vector<8x4xi32>
    %291 = arith.subi %287, %290 : vector<8x4xi32>
    %292 = arith.select %289, %291, %287 : vector<8x4xi1>, vector<8x4xi32>
    %293 = arith.sitofp %292 : vector<8x4xi32> to vector<8x4xf32>
    %cst_64 = arith.constant 1.57079637 : f32
    %294 = vector.broadcast %cst_64 : f32 to vector<8x4xf32>
    %295 = arith.mulf %293, %294 : vector<8x4xf32>
    %296 = arith.subf %282, %295 : vector<8x4xf32>
    %c3_i32_65 = arith.constant 3 : i32
    %297 = vector.broadcast %c3_i32_65 : i32 to vector<8x4xi32>
    %298 = arith.andi %292, %297 : vector<8x4xi32>
    %299 = arith.mulf %296, %296 : vector<8x4xf32>
    %cst_66 = arith.constant 2.75573188E-6 : f32
    %300 = vector.broadcast %cst_66 : f32 to vector<8x4xf32>
    %301 = arith.mulf %299, %300 : vector<8x4xf32>
    %cst_67 = arith.constant -1.98412701E-4 : f32
    %302 = vector.broadcast %cst_67 : f32 to vector<8x4xf32>
    %303 = arith.addf %302, %301 : vector<8x4xf32>
    %304 = arith.mulf %299, %303 : vector<8x4xf32>
    %cst_68 = arith.constant 0.00833333377 : f32
    %305 = vector.broadcast %cst_68 : f32 to vector<8x4xf32>
    %306 = arith.addf %305, %304 : vector<8x4xf32>
    %307 = arith.mulf %299, %306 : vector<8x4xf32>
    %cst_69 = arith.constant -0.166666672 : f32
    %308 = vector.broadcast %cst_69 : f32 to vector<8x4xf32>
    %309 = arith.addf %308, %307 : vector<8x4xf32>
    %310 = arith.mulf %299, %309 : vector<8x4xf32>
    %cst_70 = arith.constant 1.000000e+00 : f32
    %311 = vector.broadcast %cst_70 : f32 to vector<8x4xf32>
    %312 = arith.addf %311, %310 : vector<8x4xf32>
    %313 = arith.mulf %296, %312 : vector<8x4xf32>
    %cst_71 = arith.constant 2.48015876E-5 : f32
    %314 = vector.broadcast %cst_71 : f32 to vector<8x4xf32>
    %315 = arith.mulf %299, %314 : vector<8x4xf32>
    %cst_72 = arith.constant -0.00138888892 : f32
    %316 = vector.broadcast %cst_72 : f32 to vector<8x4xf32>
    %317 = arith.addf %316, %315 : vector<8x4xf32>
    %318 = arith.mulf %299, %317 : vector<8x4xf32>
    %cst_73 = arith.constant 0.0416666679 : f32
    %319 = vector.broadcast %cst_73 : f32 to vector<8x4xf32>
    %320 = arith.addf %319, %318 : vector<8x4xf32>
    %321 = arith.mulf %299, %320 : vector<8x4xf32>
    %cst_74 = arith.constant -5.000000e-01 : f32
    %322 = vector.broadcast %cst_74 : f32 to vector<8x4xf32>
    %323 = arith.addf %322, %321 : vector<8x4xf32>
    %324 = arith.mulf %299, %323 : vector<8x4xf32>
    %cst_75 = arith.constant 1.000000e+00 : f32
    %325 = vector.broadcast %cst_75 : f32 to vector<8x4xf32>
    %326 = arith.addf %325, %324 : vector<8x4xf32>
    %c0_i32_76 = arith.constant 0 : i32
    %327 = vector.broadcast %c0_i32_76 : i32 to vector<8x4xi32>
    %328 = arith.cmpi eq, %298, %327 : vector<8x4xi32>
    %c1_i32_77 = arith.constant 1 : i32
    %329 = vector.broadcast %c1_i32_77 : i32 to vector<8x4xi32>
    %330 = arith.cmpi eq, %298, %329 : vector<8x4xi32>
    %c2_i32_78 = arith.constant 2 : i32
    %331 = vector.broadcast %c2_i32_78 : i32 to vector<8x4xi32>
    %332 = arith.cmpi eq, %298, %331 : vector<8x4xi32>
    %cst_79 = arith.constant 0.000000e+00 : f32
    %333 = vector.broadcast %cst_79 : f32 to vector<8x4xf32>
    %334 = arith.subf %333, %313 : vector<8x4xf32>
    %cst_80 = arith.constant 0.000000e+00 : f32
    %335 = vector.broadcast %cst_80 : f32 to vector<8x4xf32>
    %336 = arith.subf %335, %326 : vector<8x4xf32>
    %337 = arith.select %332, %334, %336 : vector<8x4xi1>, vector<8x4xf32>
    %338 = arith.select %330, %326, %337 : vector<8x4xi1>, vector<8x4xf32>
    %339 = arith.select %328, %313, %338 : vector<8x4xi1>, vector<8x4xf32>
    %cst_81 = arith.constant 0.000000e+00 : f32
    %340 = vector.broadcast %cst_81 : f32 to vector<8x4xf32>
    %341 = arith.subf %340, %313 : vector<8x4xf32>
    %cst_82 = arith.constant 0.000000e+00 : f32
    %342 = vector.broadcast %cst_82 : f32 to vector<8x4xf32>
    %343 = arith.subf %342, %326 : vector<8x4xf32>
    %344 = arith.select %332, %343, %313 : vector<8x4xi1>, vector<8x4xf32>
    %345 = arith.select %330, %341, %344 : vector<8x4xi1>, vector<8x4xf32>
    %346 = arith.select %328, %326, %345 : vector<8x4xi1>, vector<8x4xf32>
    %cst_83 = arith.constant 0.707106769 : f32
    %347 = vector.broadcast %cst_83 : f32 to vector<8x4xf32>
    %348 = arith.mulf %346, %347 : vector<8x4xf32>
    %cst_84 = arith.constant 0.000000e+00 : f32
    %349 = vector.broadcast %cst_84 : f32 to vector<8x4xf32>
    %350 = arith.subf %349, %339 : vector<8x4xf32>
    %cst_85 = arith.constant 0.707106769 : f32
    %351 = vector.broadcast %cst_85 : f32 to vector<8x4xf32>
    %352 = arith.mulf %350, %351 : vector<8x4xf32>
    %cst_86 = arith.constant 0.707106769 : f32
    %353 = vector.broadcast %cst_86 : f32 to vector<8x4xf32>
    %354 = arith.mulf %346, %353 : vector<8x4xf32>
    %cst_87 = arith.constant 0.707106769 : f32
    %355 = vector.broadcast %cst_87 : f32 to vector<8x4xf32>
    %356 = arith.mulf %339, %355 : vector<8x4xf32>
    %357 = vector.extract_strided_slice %280 {offsets = [0, 0], sizes = [1, 4], strides = [1, 1]} : vector<8x4xf32> to vector<1x4xf32>
    %358 = arith.mulf %357, %357 : vector<1x4xf32>
    %cst_88 = arith.constant 1.000000e+00 : f32
    %359 = vector.broadcast %cst_88 : f32 to vector<1x4xf32>
    %360 = arith.addf %359, %358 : vector<1x4xf32>
    %361 = math.rsqrt %360 : vector<1x4xf32>
    %cst_89 = arith.constant 1.000000e+00 : f32
    %362 = vector.broadcast %cst_89 : f32 to vector<1x4xf32>
    %363 = arith.addf %362, %361 : vector<1x4xf32>
    %cst_90 = arith.constant 5.000000e-01 : f32
    %364 = vector.broadcast %cst_90 : f32 to vector<1x4xf32>
    %365 = arith.mulf %364, %363 : vector<1x4xf32>
    %366 = math.sqrt %365 : vector<1x4xf32>
    %cst_91 = arith.constant 0.000000e+00 : f32
    %367 = vector.broadcast %cst_91 : f32 to vector<1x4xf32>
    %368 = arith.cmpf oge, %357, %367 : vector<1x4xf32>
    %cst_92 = arith.constant 1.000000e+00 : f32
    %cst_93 = arith.constant -1.000000e+00 : f32
    %369 = vector.broadcast %cst_92 : f32 to vector<1x4xf32>
    %370 = vector.broadcast %cst_93 : f32 to vector<1x4xf32>
    %371 = arith.select %368, %369, %370 : vector<1x4xi1>, vector<1x4xf32>
    %cst_94 = arith.constant 1.000000e+00 : f32
    %372 = vector.broadcast %cst_94 : f32 to vector<1x4xf32>
    %373 = arith.subf %372, %361 : vector<1x4xf32>
    %cst_95 = arith.constant 5.000000e-01 : f32
    %374 = vector.broadcast %cst_95 : f32 to vector<1x4xf32>
    %375 = arith.mulf %374, %373 : vector<1x4xf32>
    %cst_96 = arith.constant 0.000000e+00 : f32
    %376 = vector.broadcast %cst_96 : f32 to vector<1x4xf32>
    %377 = arith.maximumf %375, %376 : vector<1x4xf32>
    %378 = math.sqrt %377 : vector<1x4xf32>
    %379 = arith.mulf %371, %378 : vector<1x4xf32>
    %380 = vector.broadcast %366 : vector<1x4xf32> to vector<8x4xf32>
    %381 = arith.mulf %380, %348 : vector<8x4xf32>
    %382 = vector.broadcast %379 : vector<1x4xf32> to vector<8x4xf32>
    %383 = arith.mulf %382, %354 : vector<8x4xf32>
    %384 = arith.subf %381, %383 : vector<8x4xf32>
    %385 = vector.broadcast %366 : vector<1x4xf32> to vector<8x4xf32>
    %386 = arith.mulf %385, %352 : vector<8x4xf32>
    %387 = vector.broadcast %379 : vector<1x4xf32> to vector<8x4xf32>
    %388 = arith.mulf %387, %356 : vector<8x4xf32>
    %389 = arith.subf %386, %388 : vector<8x4xf32>
    %390 = vector.broadcast %379 : vector<1x4xf32> to vector<8x4xf32>
    %391 = arith.mulf %390, %348 : vector<8x4xf32>
    %392 = vector.broadcast %366 : vector<1x4xf32> to vector<8x4xf32>
    %393 = arith.mulf %392, %354 : vector<8x4xf32>
    %394 = arith.addf %391, %393 : vector<8x4xf32>
    %395 = vector.broadcast %379 : vector<1x4xf32> to vector<8x4xf32>
    %396 = arith.mulf %395, %352 : vector<8x4xf32>
    %397 = vector.broadcast %366 : vector<1x4xf32> to vector<8x4xf32>
    %398 = arith.mulf %397, %356 : vector<8x4xf32>
    %399 = arith.addf %396, %398 : vector<8x4xf32>
    %400 = vector.broadcast %366 : vector<1x4xf32> to vector<8x4xf32>
    %401 = arith.mulf %400, %384 : vector<8x4xf32>
    %402 = vector.broadcast %379 : vector<1x4xf32> to vector<8x4xf32>
    %403 = arith.mulf %402, %389 : vector<8x4xf32>
    %404 = arith.addf %401, %403 : vector<8x4xf32>
    %405 = vector.broadcast %366 : vector<1x4xf32> to vector<8x4xf32>
    %406 = arith.mulf %405, %389 : vector<8x4xf32>
    %407 = vector.broadcast %379 : vector<1x4xf32> to vector<8x4xf32>
    %408 = arith.mulf %407, %384 : vector<8x4xf32>
    %409 = arith.subf %406, %408 : vector<8x4xf32>
    %410 = vector.broadcast %366 : vector<1x4xf32> to vector<8x4xf32>
    %411 = arith.mulf %410, %394 : vector<8x4xf32>
    %412 = vector.broadcast %379 : vector<1x4xf32> to vector<8x4xf32>
    %413 = arith.mulf %412, %399 : vector<8x4xf32>
    %414 = arith.subf %411, %413 : vector<8x4xf32>
    %415 = vector.broadcast %366 : vector<1x4xf32> to vector<8x4xf32>
    %416 = arith.mulf %415, %399 : vector<8x4xf32>
    %417 = vector.broadcast %379 : vector<1x4xf32> to vector<8x4xf32>
    %418 = arith.mulf %417, %394 : vector<8x4xf32>
    %419 = arith.addf %416, %418 : vector<8x4xf32>
    %420 = vector.extract_strided_slice %404 {offsets = [0, 0], sizes = [8, 1], strides = [1, 1]} : vector<8x4xf32> to vector<8x1xf32>
    %421 = vector.extract_strided_slice %409 {offsets = [0, 0], sizes = [8, 1], strides = [1, 1]} : vector<8x4xf32> to vector<8x1xf32>
    %422 = vector.extract_strided_slice %414 {offsets = [0, 0], sizes = [8, 1], strides = [1, 1]} : vector<8x4xf32> to vector<8x1xf32>
    %423 = arith.subf %422, %420 : vector<8x1xf32>
    %424 = vector.broadcast %423 : vector<8x1xf32> to vector<8x16xf32>
    %425 = vector.broadcast %12 : vector<1x16xf32> to vector<8x16xf32>
    %426 = arith.mulf %424, %425 : vector<8x16xf32>
    %427 = vector.broadcast %420 : vector<8x1xf32> to vector<8x16xf32>
    %428 = arith.addf %427, %426 : vector<8x16xf32>
    %429 = vector.extract_strided_slice %419 {offsets = [0, 0], sizes = [8, 1], strides = [1, 1]} : vector<8x4xf32> to vector<8x1xf32>
    %430 = arith.subf %429, %421 : vector<8x1xf32>
    %431 = vector.broadcast %430 : vector<8x1xf32> to vector<8x16xf32>
    %432 = vector.broadcast %12 : vector<1x16xf32> to vector<8x16xf32>
    %433 = arith.mulf %431, %432 : vector<8x16xf32>
    %434 = vector.broadcast %421 : vector<8x1xf32> to vector<8x16xf32>
    %435 = arith.addf %434, %433 : vector<8x16xf32>
    %436 = vector.extract_strided_slice %404 {offsets = [0, 1], sizes = [8, 1], strides = [1, 1]} : vector<8x4xf32> to vector<8x1xf32>
    %437 = vector.extract_strided_slice %409 {offsets = [0, 1], sizes = [8, 1], strides = [1, 1]} : vector<8x4xf32> to vector<8x1xf32>
    %438 = vector.extract_strided_slice %414 {offsets = [0, 1], sizes = [8, 1], strides = [1, 1]} : vector<8x4xf32> to vector<8x1xf32>
    %439 = arith.subf %438, %436 : vector<8x1xf32>
    %440 = vector.broadcast %439 : vector<8x1xf32> to vector<8x16xf32>
    %441 = vector.broadcast %13 : vector<1x16xf32> to vector<8x16xf32>
    %442 = arith.mulf %440, %441 : vector<8x16xf32>
    %443 = vector.broadcast %436 : vector<8x1xf32> to vector<8x16xf32>
    %444 = arith.addf %443, %442 : vector<8x16xf32>
    %445 = vector.extract_strided_slice %419 {offsets = [0, 1], sizes = [8, 1], strides = [1, 1]} : vector<8x4xf32> to vector<8x1xf32>
    %446 = arith.subf %445, %437 : vector<8x1xf32>
    %447 = vector.broadcast %446 : vector<8x1xf32> to vector<8x16xf32>
    %448 = vector.broadcast %13 : vector<1x16xf32> to vector<8x16xf32>
    %449 = arith.mulf %447, %448 : vector<8x16xf32>
    %450 = vector.broadcast %437 : vector<8x1xf32> to vector<8x16xf32>
    %451 = arith.addf %450, %449 : vector<8x16xf32>
    %452 = arith.mulf %428, %444 : vector<8x16xf32>
    %453 = arith.mulf %435, %451 : vector<8x16xf32>
    %454 = arith.subf %452, %453 : vector<8x16xf32>
    %455 = arith.mulf %428, %451 : vector<8x16xf32>
    %456 = arith.mulf %435, %444 : vector<8x16xf32>
    %457 = arith.addf %455, %456 : vector<8x16xf32>
    %458 = vector.extract_strided_slice %404 {offsets = [0, 2], sizes = [8, 1], strides = [1, 1]} : vector<8x4xf32> to vector<8x1xf32>
    %459 = vector.extract_strided_slice %409 {offsets = [0, 2], sizes = [8, 1], strides = [1, 1]} : vector<8x4xf32> to vector<8x1xf32>
    %460 = vector.extract_strided_slice %414 {offsets = [0, 2], sizes = [8, 1], strides = [1, 1]} : vector<8x4xf32> to vector<8x1xf32>
    %461 = arith.subf %460, %458 : vector<8x1xf32>
    %462 = vector.broadcast %461 : vector<8x1xf32> to vector<8x16xf32>
    %463 = vector.broadcast %14 : vector<1x16xf32> to vector<8x16xf32>
    %464 = arith.mulf %462, %463 : vector<8x16xf32>
    %465 = vector.broadcast %458 : vector<8x1xf32> to vector<8x16xf32>
    %466 = arith.addf %465, %464 : vector<8x16xf32>
    %467 = vector.extract_strided_slice %419 {offsets = [0, 2], sizes = [8, 1], strides = [1, 1]} : vector<8x4xf32> to vector<8x1xf32>
    %468 = arith.subf %467, %459 : vector<8x1xf32>
    %469 = vector.broadcast %468 : vector<8x1xf32> to vector<8x16xf32>
    %470 = vector.broadcast %14 : vector<1x16xf32> to vector<8x16xf32>
    %471 = arith.mulf %469, %470 : vector<8x16xf32>
    %472 = vector.broadcast %459 : vector<8x1xf32> to vector<8x16xf32>
    %473 = arith.addf %472, %471 : vector<8x16xf32>
    %474 = arith.mulf %454, %466 : vector<8x16xf32>
    %475 = arith.mulf %457, %473 : vector<8x16xf32>
    %476 = arith.subf %474, %475 : vector<8x16xf32>
    %477 = arith.mulf %454, %473 : vector<8x16xf32>
    %478 = arith.mulf %457, %466 : vector<8x16xf32>
    %479 = arith.addf %477, %478 : vector<8x16xf32>
    %480 = vector.extract_strided_slice %404 {offsets = [0, 3], sizes = [8, 1], strides = [1, 1]} : vector<8x4xf32> to vector<8x1xf32>
    %481 = vector.extract_strided_slice %409 {offsets = [0, 3], sizes = [8, 1], strides = [1, 1]} : vector<8x4xf32> to vector<8x1xf32>
    %482 = vector.extract_strided_slice %414 {offsets = [0, 3], sizes = [8, 1], strides = [1, 1]} : vector<8x4xf32> to vector<8x1xf32>
    %483 = arith.subf %482, %480 : vector<8x1xf32>
    %484 = vector.broadcast %483 : vector<8x1xf32> to vector<8x16xf32>
    %485 = vector.broadcast %15 : vector<1x16xf32> to vector<8x16xf32>
    %486 = arith.mulf %484, %485 : vector<8x16xf32>
    %487 = vector.broadcast %480 : vector<8x1xf32> to vector<8x16xf32>
    %488 = arith.addf %487, %486 : vector<8x16xf32>
    %489 = vector.extract_strided_slice %419 {offsets = [0, 3], sizes = [8, 1], strides = [1, 1]} : vector<8x4xf32> to vector<8x1xf32>
    %490 = arith.subf %489, %481 : vector<8x1xf32>
    %491 = vector.broadcast %490 : vector<8x1xf32> to vector<8x16xf32>
    %492 = vector.broadcast %15 : vector<1x16xf32> to vector<8x16xf32>
    %493 = arith.mulf %491, %492 : vector<8x16xf32>
    %494 = vector.broadcast %481 : vector<8x1xf32> to vector<8x16xf32>
    %495 = arith.addf %494, %493 : vector<8x16xf32>
    %496 = arith.mulf %476, %488 : vector<8x16xf32>
    %497 = arith.mulf %479, %495 : vector<8x16xf32>
    %498 = arith.subf %496, %497 : vector<8x16xf32>
    %499 = arith.mulf %476, %495 : vector<8x16xf32>
    %500 = arith.mulf %479, %488 : vector<8x16xf32>
    %501 = arith.addf %499, %500 : vector<8x16xf32>
    %cst_97 = arith.constant dense<0.000000e+00> : vector<8x128xf32>
    %502 = tpu.matmul %498, %7, %cst_97 {dimension_numbers = #tpu.dot_dimension_numbers<[1], [0], [0], [1], [0, 0, 1, 1], [], []>} : vector<8x16xf32>, vector<16x128xf32>, vector<8x128xf32> -> vector<8x128xf32>
    %cst_98 = arith.constant dense<0.000000e+00> : vector<8x128xf32>
    %503 = tpu.matmul %501, %8, %cst_98 {dimension_numbers = #tpu.dot_dimension_numbers<[1], [0], [0], [1], [0, 0, 1, 1], [], []>} : vector<8x16xf32>, vector<16x128xf32>, vector<8x128xf32> -> vector<8x128xf32>
    %504 = arith.addf %502, %503 : vector<8x128xf32>
    %505 = vector.extract_strided_slice %504 {offsets = [0, 0], sizes = [8, 64], strides = [1, 1]} : vector<8x128xf32> to vector<8x64xf32>
    %506 = vector.extract_strided_slice %504 {offsets = [0, 64], sizes = [8, 64], strides = [1, 1]} : vector<8x128xf32> to vector<8x64xf32>
    %507 = arith.mulf %505, %505 : vector<8x64xf32>
    %508 = arith.mulf %506, %506 : vector<8x64xf32>
    %509 = arith.addf %507, %508 : vector<8x64xf32>
    %cst_99 = arith.constant dense<0.000000e+00> : vector<8x128xf32>
    %510 = tpu.matmul %509, %9, %cst_99 {dimension_numbers = #tpu.dot_dimension_numbers<[1], [0], [0], [1], [0, 0, 1, 1], [], []>} : vector<8x64xf32>, vector<64x128xf32>, vector<8x128xf32> -> vector<8x128xf32>
    %511 = vector.broadcast %10 : vector<1x128xf32> to vector<8x128xf32>
    %512 = arith.addf %510, %511 : vector<8x128xf32>
    %513 = vector.extract_strided_slice %512 {offsets = [0, 0], sizes = [8, 32], strides = [1, 1]} : vector<8x128xf32> to vector<8x32xf32>
    %514 = arith.negf %513 : vector<8x32xf32>
    %515 = math.exp %514 : vector<8x32xf32>
    %cst_100 = arith.constant 1.000000e+00 : f32
    %516 = vector.broadcast %cst_100 : f32 to vector<8x32xf32>
    %517 = arith.addf %516, %515 : vector<8x32xf32>
    %518 = arith.divf %516, %517 : vector<8x32xf32>
    %519 = vector.extract_strided_slice %512 {offsets = [0, 32], sizes = [8, 32], strides = [1, 1]} : vector<8x128xf32> to vector<8x32xf32>
    %520 = arith.negf %519 : vector<8x32xf32>
    %521 = math.exp %520 : vector<8x32xf32>
    %cst_101 = arith.constant 1.000000e+00 : f32
    %522 = vector.broadcast %cst_101 : f32 to vector<8x32xf32>
    %523 = arith.addf %522, %521 : vector<8x32xf32>
    %524 = arith.divf %522, %523 : vector<8x32xf32>
    %525 = vector.extract_strided_slice %512 {offsets = [0, 64], sizes = [8, 32], strides = [1, 1]} : vector<8x128xf32> to vector<8x32xf32>
    %526 = math.tanh %525 : vector<8x32xf32>
    %527 = vector.extract_strided_slice %512 {offsets = [0, 96], sizes = [8, 32], strides = [1, 1]} : vector<8x128xf32> to vector<8x32xf32>
    %528 = arith.negf %527 : vector<8x32xf32>
    %529 = math.exp %528 : vector<8x32xf32>
    %cst_102 = arith.constant 1.000000e+00 : f32
    %530 = vector.broadcast %cst_102 : f32 to vector<8x32xf32>
    %531 = arith.addf %530, %529 : vector<8x32xf32>
    %532 = arith.divf %530, %531 : vector<8x32xf32>
    %533 = arith.mulf %518, %275 : vector<8x32xf32>
    %534 = arith.mulf %524, %526 : vector<8x32xf32>
    %535 = arith.addf %533, %534 : vector<8x32xf32>
    %536 = math.tanh %535 : vector<8x32xf32>
    %537 = arith.mulf %532, %536 : vector<8x32xf32>
    %cst_103 = arith.constant dense<0.000000e+00> : vector<8x4xf32>
    %538 = tpu.matmul %537, %6, %cst_103 {dimension_numbers = #tpu.dot_dimension_numbers<[1], [0], [0], [1], [0, 0, 1, 1], [], []>} : vector<8x32xf32>, vector<32x4xf32>, vector<8x4xf32> -> vector<8x4xf32>
    %539 = vector.extract_strided_slice %5 {offsets = [16, 0], sizes = [8, 4], strides = [1, 1]} : vector<64x4xf32> to vector<8x4xf32>
    %540 = arith.addf %538, %539 : vector<8x4xf32>
    %cst_104 = arith.constant 5.000000e-01 : f32
    %541 = vector.broadcast %cst_104 : f32 to vector<8x4xf32>
    %542 = arith.mulf %541, %540 : vector<8x4xf32>
    %cst_105 = arith.constant 0.636619746 : f32
    %543 = vector.broadcast %cst_105 : f32 to vector<8x4xf32>
    %544 = arith.mulf %542, %543 : vector<8x4xf32>
    %cst_106 = arith.constant 5.000000e-01 : f32
    %545 = vector.broadcast %cst_106 : f32 to vector<8x4xf32>
    %546 = arith.addf %544, %545 : vector<8x4xf32>
    %547 = arith.fptosi %546 : vector<8x4xf32> to vector<8x4xi32>
    %548 = arith.sitofp %547 : vector<8x4xi32> to vector<8x4xf32>
    %549 = arith.cmpf olt, %546, %548 : vector<8x4xf32>
    %c1_i32_107 = arith.constant 1 : i32
    %550 = vector.broadcast %c1_i32_107 : i32 to vector<8x4xi32>
    %551 = arith.subi %547, %550 : vector<8x4xi32>
    %552 = arith.select %549, %551, %547 : vector<8x4xi1>, vector<8x4xi32>
    %553 = arith.sitofp %552 : vector<8x4xi32> to vector<8x4xf32>
    %cst_108 = arith.constant 1.57079637 : f32
    %554 = vector.broadcast %cst_108 : f32 to vector<8x4xf32>
    %555 = arith.mulf %553, %554 : vector<8x4xf32>
    %556 = arith.subf %542, %555 : vector<8x4xf32>
    %c3_i32_109 = arith.constant 3 : i32
    %557 = vector.broadcast %c3_i32_109 : i32 to vector<8x4xi32>
    %558 = arith.andi %552, %557 : vector<8x4xi32>
    %559 = arith.mulf %556, %556 : vector<8x4xf32>
    %cst_110 = arith.constant 2.75573188E-6 : f32
    %560 = vector.broadcast %cst_110 : f32 to vector<8x4xf32>
    %561 = arith.mulf %559, %560 : vector<8x4xf32>
    %cst_111 = arith.constant -1.98412701E-4 : f32
    %562 = vector.broadcast %cst_111 : f32 to vector<8x4xf32>
    %563 = arith.addf %562, %561 : vector<8x4xf32>
    %564 = arith.mulf %559, %563 : vector<8x4xf32>
    %cst_112 = arith.constant 0.00833333377 : f32
    %565 = vector.broadcast %cst_112 : f32 to vector<8x4xf32>
    %566 = arith.addf %565, %564 : vector<8x4xf32>
    %567 = arith.mulf %559, %566 : vector<8x4xf32>
    %cst_113 = arith.constant -0.166666672 : f32
    %568 = vector.broadcast %cst_113 : f32 to vector<8x4xf32>
    %569 = arith.addf %568, %567 : vector<8x4xf32>
    %570 = arith.mulf %559, %569 : vector<8x4xf32>
    %cst_114 = arith.constant 1.000000e+00 : f32
    %571 = vector.broadcast %cst_114 : f32 to vector<8x4xf32>
    %572 = arith.addf %571, %570 : vector<8x4xf32>
    %573 = arith.mulf %556, %572 : vector<8x4xf32>
    %cst_115 = arith.constant 2.48015876E-5 : f32
    %574 = vector.broadcast %cst_115 : f32 to vector<8x4xf32>
    %575 = arith.mulf %559, %574 : vector<8x4xf32>
    %cst_116 = arith.constant -0.00138888892 : f32
    %576 = vector.broadcast %cst_116 : f32 to vector<8x4xf32>
    %577 = arith.addf %576, %575 : vector<8x4xf32>
    %578 = arith.mulf %559, %577 : vector<8x4xf32>
    %cst_117 = arith.constant 0.0416666679 : f32
    %579 = vector.broadcast %cst_117 : f32 to vector<8x4xf32>
    %580 = arith.addf %579, %578 : vector<8x4xf32>
    %581 = arith.mulf %559, %580 : vector<8x4xf32>
    %cst_118 = arith.constant -5.000000e-01 : f32
    %582 = vector.broadcast %cst_118 : f32 to vector<8x4xf32>
    %583 = arith.addf %582, %581 : vector<8x4xf32>
    %584 = arith.mulf %559, %583 : vector<8x4xf32>
    %cst_119 = arith.constant 1.000000e+00 : f32
    %585 = vector.broadcast %cst_119 : f32 to vector<8x4xf32>
    %586 = arith.addf %585, %584 : vector<8x4xf32>
    %c0_i32_120 = arith.constant 0 : i32
    %587 = vector.broadcast %c0_i32_120 : i32 to vector<8x4xi32>
    %588 = arith.cmpi eq, %558, %587 : vector<8x4xi32>
    %c1_i32_121 = arith.constant 1 : i32
    %589 = vector.broadcast %c1_i32_121 : i32 to vector<8x4xi32>
    %590 = arith.cmpi eq, %558, %589 : vector<8x4xi32>
    %c2_i32_122 = arith.constant 2 : i32
    %591 = vector.broadcast %c2_i32_122 : i32 to vector<8x4xi32>
    %592 = arith.cmpi eq, %558, %591 : vector<8x4xi32>
    %cst_123 = arith.constant 0.000000e+00 : f32
    %593 = vector.broadcast %cst_123 : f32 to vector<8x4xf32>
    %594 = arith.subf %593, %573 : vector<8x4xf32>
    %cst_124 = arith.constant 0.000000e+00 : f32
    %595 = vector.broadcast %cst_124 : f32 to vector<8x4xf32>
    %596 = arith.subf %595, %586 : vector<8x4xf32>
    %597 = arith.select %592, %594, %596 : vector<8x4xi1>, vector<8x4xf32>
    %598 = arith.select %590, %586, %597 : vector<8x4xi1>, vector<8x4xf32>
    %599 = arith.select %588, %573, %598 : vector<8x4xi1>, vector<8x4xf32>
    %cst_125 = arith.constant 0.000000e+00 : f32
    %600 = vector.broadcast %cst_125 : f32 to vector<8x4xf32>
    %601 = arith.subf %600, %573 : vector<8x4xf32>
    %cst_126 = arith.constant 0.000000e+00 : f32
    %602 = vector.broadcast %cst_126 : f32 to vector<8x4xf32>
    %603 = arith.subf %602, %586 : vector<8x4xf32>
    %604 = arith.select %592, %603, %573 : vector<8x4xi1>, vector<8x4xf32>
    %605 = arith.select %590, %601, %604 : vector<8x4xi1>, vector<8x4xf32>
    %606 = arith.select %588, %586, %605 : vector<8x4xi1>, vector<8x4xf32>
    %cst_127 = arith.constant 0.707106769 : f32
    %607 = vector.broadcast %cst_127 : f32 to vector<8x4xf32>
    %608 = arith.mulf %606, %607 : vector<8x4xf32>
    %cst_128 = arith.constant 0.000000e+00 : f32
    %609 = vector.broadcast %cst_128 : f32 to vector<8x4xf32>
    %610 = arith.subf %609, %599 : vector<8x4xf32>
    %cst_129 = arith.constant 0.707106769 : f32
    %611 = vector.broadcast %cst_129 : f32 to vector<8x4xf32>
    %612 = arith.mulf %610, %611 : vector<8x4xf32>
    %cst_130 = arith.constant 0.707106769 : f32
    %613 = vector.broadcast %cst_130 : f32 to vector<8x4xf32>
    %614 = arith.mulf %606, %613 : vector<8x4xf32>
    %cst_131 = arith.constant 0.707106769 : f32
    %615 = vector.broadcast %cst_131 : f32 to vector<8x4xf32>
    %616 = arith.mulf %599, %615 : vector<8x4xf32>
    %617 = vector.extract_strided_slice %540 {offsets = [0, 0], sizes = [1, 4], strides = [1, 1]} : vector<8x4xf32> to vector<1x4xf32>
    %618 = arith.mulf %617, %617 : vector<1x4xf32>
    %cst_132 = arith.constant 1.000000e+00 : f32
    %619 = vector.broadcast %cst_132 : f32 to vector<1x4xf32>
    %620 = arith.addf %619, %618 : vector<1x4xf32>
    %621 = math.rsqrt %620 : vector<1x4xf32>
    %cst_133 = arith.constant 1.000000e+00 : f32
    %622 = vector.broadcast %cst_133 : f32 to vector<1x4xf32>
    %623 = arith.addf %622, %621 : vector<1x4xf32>
    %cst_134 = arith.constant 5.000000e-01 : f32
    %624 = vector.broadcast %cst_134 : f32 to vector<1x4xf32>
    %625 = arith.mulf %624, %623 : vector<1x4xf32>
    %626 = math.sqrt %625 : vector<1x4xf32>
    %cst_135 = arith.constant 0.000000e+00 : f32
    %627 = vector.broadcast %cst_135 : f32 to vector<1x4xf32>
    %628 = arith.cmpf oge, %617, %627 : vector<1x4xf32>
    %cst_136 = arith.constant 1.000000e+00 : f32
    %cst_137 = arith.constant -1.000000e+00 : f32
    %629 = vector.broadcast %cst_136 : f32 to vector<1x4xf32>
    %630 = vector.broadcast %cst_137 : f32 to vector<1x4xf32>
    %631 = arith.select %628, %629, %630 : vector<1x4xi1>, vector<1x4xf32>
    %cst_138 = arith.constant 1.000000e+00 : f32
    %632 = vector.broadcast %cst_138 : f32 to vector<1x4xf32>
    %633 = arith.subf %632, %621 : vector<1x4xf32>
    %cst_139 = arith.constant 5.000000e-01 : f32
    %634 = vector.broadcast %cst_139 : f32 to vector<1x4xf32>
    %635 = arith.mulf %634, %633 : vector<1x4xf32>
    %cst_140 = arith.constant 0.000000e+00 : f32
    %636 = vector.broadcast %cst_140 : f32 to vector<1x4xf32>
    %637 = arith.maximumf %635, %636 : vector<1x4xf32>
    %638 = math.sqrt %637 : vector<1x4xf32>
    %639 = arith.mulf %631, %638 : vector<1x4xf32>
    %640 = vector.broadcast %626 : vector<1x4xf32> to vector<8x4xf32>
    %641 = arith.mulf %640, %608 : vector<8x4xf32>
    %642 = vector.broadcast %639 : vector<1x4xf32> to vector<8x4xf32>
    %643 = arith.mulf %642, %614 : vector<8x4xf32>
    %644 = arith.subf %641, %643 : vector<8x4xf32>
    %645 = vector.broadcast %626 : vector<1x4xf32> to vector<8x4xf32>
    %646 = arith.mulf %645, %612 : vector<8x4xf32>
    %647 = vector.broadcast %639 : vector<1x4xf32> to vector<8x4xf32>
    %648 = arith.mulf %647, %616 : vector<8x4xf32>
    %649 = arith.subf %646, %648 : vector<8x4xf32>
    %650 = vector.broadcast %639 : vector<1x4xf32> to vector<8x4xf32>
    %651 = arith.mulf %650, %608 : vector<8x4xf32>
    %652 = vector.broadcast %626 : vector<1x4xf32> to vector<8x4xf32>
    %653 = arith.mulf %652, %614 : vector<8x4xf32>
    %654 = arith.addf %651, %653 : vector<8x4xf32>
    %655 = vector.broadcast %639 : vector<1x4xf32> to vector<8x4xf32>
    %656 = arith.mulf %655, %612 : vector<8x4xf32>
    %657 = vector.broadcast %626 : vector<1x4xf32> to vector<8x4xf32>
    %658 = arith.mulf %657, %616 : vector<8x4xf32>
    %659 = arith.addf %656, %658 : vector<8x4xf32>
    %660 = vector.broadcast %626 : vector<1x4xf32> to vector<8x4xf32>
    %661 = arith.mulf %660, %644 : vector<8x4xf32>
    %662 = vector.broadcast %639 : vector<1x4xf32> to vector<8x4xf32>
    %663 = arith.mulf %662, %649 : vector<8x4xf32>
    %664 = arith.addf %661, %663 : vector<8x4xf32>
    %665 = vector.broadcast %626 : vector<1x4xf32> to vector<8x4xf32>
    %666 = arith.mulf %665, %649 : vector<8x4xf32>
    %667 = vector.broadcast %639 : vector<1x4xf32> to vector<8x4xf32>
    %668 = arith.mulf %667, %644 : vector<8x4xf32>
    %669 = arith.subf %666, %668 : vector<8x4xf32>
    %670 = vector.broadcast %626 : vector<1x4xf32> to vector<8x4xf32>
    %671 = arith.mulf %670, %654 : vector<8x4xf32>
    %672 = vector.broadcast %639 : vector<1x4xf32> to vector<8x4xf32>
    %673 = arith.mulf %672, %659 : vector<8x4xf32>
    %674 = arith.subf %671, %673 : vector<8x4xf32>
    %675 = vector.broadcast %626 : vector<1x4xf32> to vector<8x4xf32>
    %676 = arith.mulf %675, %659 : vector<8x4xf32>
    %677 = vector.broadcast %639 : vector<1x4xf32> to vector<8x4xf32>
    %678 = arith.mulf %677, %654 : vector<8x4xf32>
    %679 = arith.addf %676, %678 : vector<8x4xf32>
    %680 = vector.extract_strided_slice %664 {offsets = [0, 0], sizes = [8, 1], strides = [1, 1]} : vector<8x4xf32> to vector<8x1xf32>
    %681 = vector.extract_strided_slice %669 {offsets = [0, 0], sizes = [8, 1], strides = [1, 1]} : vector<8x4xf32> to vector<8x1xf32>
    %682 = vector.extract_strided_slice %674 {offsets = [0, 0], sizes = [8, 1], strides = [1, 1]} : vector<8x4xf32> to vector<8x1xf32>
    %683 = arith.subf %682, %680 : vector<8x1xf32>
    %684 = vector.broadcast %683 : vector<8x1xf32> to vector<8x16xf32>
    %685 = vector.broadcast %12 : vector<1x16xf32> to vector<8x16xf32>
    %686 = arith.mulf %684, %685 : vector<8x16xf32>
    %687 = vector.broadcast %680 : vector<8x1xf32> to vector<8x16xf32>
    %688 = arith.addf %687, %686 : vector<8x16xf32>
    %689 = vector.extract_strided_slice %679 {offsets = [0, 0], sizes = [8, 1], strides = [1, 1]} : vector<8x4xf32> to vector<8x1xf32>
    %690 = arith.subf %689, %681 : vector<8x1xf32>
    %691 = vector.broadcast %690 : vector<8x1xf32> to vector<8x16xf32>
    %692 = vector.broadcast %12 : vector<1x16xf32> to vector<8x16xf32>
    %693 = arith.mulf %691, %692 : vector<8x16xf32>
    %694 = vector.broadcast %681 : vector<8x1xf32> to vector<8x16xf32>
    %695 = arith.addf %694, %693 : vector<8x16xf32>
    %696 = vector.extract_strided_slice %664 {offsets = [0, 1], sizes = [8, 1], strides = [1, 1]} : vector<8x4xf32> to vector<8x1xf32>
    %697 = vector.extract_strided_slice %669 {offsets = [0, 1], sizes = [8, 1], strides = [1, 1]} : vector<8x4xf32> to vector<8x1xf32>
    %698 = vector.extract_strided_slice %674 {offsets = [0, 1], sizes = [8, 1], strides = [1, 1]} : vector<8x4xf32> to vector<8x1xf32>
    %699 = arith.subf %698, %696 : vector<8x1xf32>
    %700 = vector.broadcast %699 : vector<8x1xf32> to vector<8x16xf32>
    %701 = vector.broadcast %13 : vector<1x16xf32> to vector<8x16xf32>
    %702 = arith.mulf %700, %701 : vector<8x16xf32>
    %703 = vector.broadcast %696 : vector<8x1xf32> to vector<8x16xf32>
    %704 = arith.addf %703, %702 : vector<8x16xf32>
    %705 = vector.extract_strided_slice %679 {offsets = [0, 1], sizes = [8, 1], strides = [1, 1]} : vector<8x4xf32> to vector<8x1xf32>
    %706 = arith.subf %705, %697 : vector<8x1xf32>
    %707 = vector.broadcast %706 : vector<8x1xf32> to vector<8x16xf32>
    %708 = vector.broadcast %13 : vector<1x16xf32> to vector<8x16xf32>
    %709 = arith.mulf %707, %708 : vector<8x16xf32>
    %710 = vector.broadcast %697 : vector<8x1xf32> to vector<8x16xf32>
    %711 = arith.addf %710, %709 : vector<8x16xf32>
    %712 = arith.mulf %688, %704 : vector<8x16xf32>
    %713 = arith.mulf %695, %711 : vector<8x16xf32>
    %714 = arith.subf %712, %713 : vector<8x16xf32>
    %715 = arith.mulf %688, %711 : vector<8x16xf32>
    %716 = arith.mulf %695, %704 : vector<8x16xf32>
    %717 = arith.addf %715, %716 : vector<8x16xf32>
    %718 = vector.extract_strided_slice %664 {offsets = [0, 2], sizes = [8, 1], strides = [1, 1]} : vector<8x4xf32> to vector<8x1xf32>
    %719 = vector.extract_strided_slice %669 {offsets = [0, 2], sizes = [8, 1], strides = [1, 1]} : vector<8x4xf32> to vector<8x1xf32>
    %720 = vector.extract_strided_slice %674 {offsets = [0, 2], sizes = [8, 1], strides = [1, 1]} : vector<8x4xf32> to vector<8x1xf32>
    %721 = arith.subf %720, %718 : vector<8x1xf32>
    %722 = vector.broadcast %721 : vector<8x1xf32> to vector<8x16xf32>
    %723 = vector.broadcast %14 : vector<1x16xf32> to vector<8x16xf32>
    %724 = arith.mulf %722, %723 : vector<8x16xf32>
    %725 = vector.broadcast %718 : vector<8x1xf32> to vector<8x16xf32>
    %726 = arith.addf %725, %724 : vector<8x16xf32>
    %727 = vector.extract_strided_slice %679 {offsets = [0, 2], sizes = [8, 1], strides = [1, 1]} : vector<8x4xf32> to vector<8x1xf32>
    %728 = arith.subf %727, %719 : vector<8x1xf32>
    %729 = vector.broadcast %728 : vector<8x1xf32> to vector<8x16xf32>
    %730 = vector.broadcast %14 : vector<1x16xf32> to vector<8x16xf32>
    %731 = arith.mulf %729, %730 : vector<8x16xf32>
    %732 = vector.broadcast %719 : vector<8x1xf32> to vector<8x16xf32>
    %733 = arith.addf %732, %731 : vector<8x16xf32>
    %734 = arith.mulf %714, %726 : vector<8x16xf32>
    %735 = arith.mulf %717, %733 : vector<8x16xf32>
    %736 = arith.subf %734, %735 : vector<8x16xf32>
    %737 = arith.mulf %714, %733 : vector<8x16xf32>
    %738 = arith.mulf %717, %726 : vector<8x16xf32>
    %739 = arith.addf %737, %738 : vector<8x16xf32>
    %740 = vector.extract_strided_slice %664 {offsets = [0, 3], sizes = [8, 1], strides = [1, 1]} : vector<8x4xf32> to vector<8x1xf32>
    %741 = vector.extract_strided_slice %669 {offsets = [0, 3], sizes = [8, 1], strides = [1, 1]} : vector<8x4xf32> to vector<8x1xf32>
    %742 = vector.extract_strided_slice %674 {offsets = [0, 3], sizes = [8, 1], strides = [1, 1]} : vector<8x4xf32> to vector<8x1xf32>
    %743 = arith.subf %742, %740 : vector<8x1xf32>
    %744 = vector.broadcast %743 : vector<8x1xf32> to vector<8x16xf32>
    %745 = vector.broadcast %15 : vector<1x16xf32> to vector<8x16xf32>
    %746 = arith.mulf %744, %745 : vector<8x16xf32>
    %747 = vector.broadcast %740 : vector<8x1xf32> to vector<8x16xf32>
    %748 = arith.addf %747, %746 : vector<8x16xf32>
    %749 = vector.extract_strided_slice %679 {offsets = [0, 3], sizes = [8, 1], strides = [1, 1]} : vector<8x4xf32> to vector<8x1xf32>
    %750 = arith.subf %749, %741 : vector<8x1xf32>
    %751 = vector.broadcast %750 : vector<8x1xf32> to vector<8x16xf32>
    %752 = vector.broadcast %15 : vector<1x16xf32> to vector<8x16xf32>
    %753 = arith.mulf %751, %752 : vector<8x16xf32>
    %754 = vector.broadcast %741 : vector<8x1xf32> to vector<8x16xf32>
    %755 = arith.addf %754, %753 : vector<8x16xf32>
    %756 = arith.mulf %736, %748 : vector<8x16xf32>
    %757 = arith.mulf %739, %755 : vector<8x16xf32>
    %758 = arith.subf %756, %757 : vector<8x16xf32>
    %759 = arith.mulf %736, %755 : vector<8x16xf32>
    %760 = arith.mulf %739, %748 : vector<8x16xf32>
    %761 = arith.addf %759, %760 : vector<8x16xf32>
    %cst_141 = arith.constant dense<0.000000e+00> : vector<8x128xf32>
    %762 = tpu.matmul %758, %7, %cst_141 {dimension_numbers = #tpu.dot_dimension_numbers<[1], [0], [0], [1], [0, 0, 1, 1], [], []>} : vector<8x16xf32>, vector<16x128xf32>, vector<8x128xf32> -> vector<8x128xf32>
    %cst_142 = arith.constant dense<0.000000e+00> : vector<8x128xf32>
    %763 = tpu.matmul %761, %8, %cst_142 {dimension_numbers = #tpu.dot_dimension_numbers<[1], [0], [0], [1], [0, 0, 1, 1], [], []>} : vector<8x16xf32>, vector<16x128xf32>, vector<8x128xf32> -> vector<8x128xf32>
    %764 = arith.addf %762, %763 : vector<8x128xf32>
    %765 = vector.extract_strided_slice %764 {offsets = [0, 0], sizes = [8, 64], strides = [1, 1]} : vector<8x128xf32> to vector<8x64xf32>
    %766 = vector.extract_strided_slice %764 {offsets = [0, 64], sizes = [8, 64], strides = [1, 1]} : vector<8x128xf32> to vector<8x64xf32>
    %767 = arith.mulf %765, %765 : vector<8x64xf32>
    %768 = arith.mulf %766, %766 : vector<8x64xf32>
    %769 = arith.addf %767, %768 : vector<8x64xf32>
    %cst_143 = arith.constant dense<0.000000e+00> : vector<8x128xf32>
    %770 = tpu.matmul %769, %9, %cst_143 {dimension_numbers = #tpu.dot_dimension_numbers<[1], [0], [0], [1], [0, 0, 1, 1], [], []>} : vector<8x64xf32>, vector<64x128xf32>, vector<8x128xf32> -> vector<8x128xf32>
    %771 = vector.broadcast %10 : vector<1x128xf32> to vector<8x128xf32>
    %772 = arith.addf %770, %771 : vector<8x128xf32>
    %773 = vector.extract_strided_slice %772 {offsets = [0, 0], sizes = [8, 32], strides = [1, 1]} : vector<8x128xf32> to vector<8x32xf32>
    %774 = arith.negf %773 : vector<8x32xf32>
    %775 = math.exp %774 : vector<8x32xf32>
    %cst_144 = arith.constant 1.000000e+00 : f32
    %776 = vector.broadcast %cst_144 : f32 to vector<8x32xf32>
    %777 = arith.addf %776, %775 : vector<8x32xf32>
    %778 = arith.divf %776, %777 : vector<8x32xf32>
    %779 = vector.extract_strided_slice %772 {offsets = [0, 32], sizes = [8, 32], strides = [1, 1]} : vector<8x128xf32> to vector<8x32xf32>
    %780 = arith.negf %779 : vector<8x32xf32>
    %781 = math.exp %780 : vector<8x32xf32>
    %cst_145 = arith.constant 1.000000e+00 : f32
    %782 = vector.broadcast %cst_145 : f32 to vector<8x32xf32>
    %783 = arith.addf %782, %781 : vector<8x32xf32>
    %784 = arith.divf %782, %783 : vector<8x32xf32>
    %785 = vector.extract_strided_slice %772 {offsets = [0, 64], sizes = [8, 32], strides = [1, 1]} : vector<8x128xf32> to vector<8x32xf32>
    %786 = math.tanh %785 : vector<8x32xf32>
    %787 = vector.extract_strided_slice %772 {offsets = [0, 96], sizes = [8, 32], strides = [1, 1]} : vector<8x128xf32> to vector<8x32xf32>
    %788 = arith.negf %787 : vector<8x32xf32>
    %789 = math.exp %788 : vector<8x32xf32>
    %cst_146 = arith.constant 1.000000e+00 : f32
    %790 = vector.broadcast %cst_146 : f32 to vector<8x32xf32>
    %791 = arith.addf %790, %789 : vector<8x32xf32>
    %792 = arith.divf %790, %791 : vector<8x32xf32>
    %793 = arith.mulf %778, %535 : vector<8x32xf32>
    %794 = arith.mulf %784, %786 : vector<8x32xf32>
    %795 = arith.addf %793, %794 : vector<8x32xf32>
    %796 = math.tanh %795 : vector<8x32xf32>
    %797 = arith.mulf %792, %796 : vector<8x32xf32>
    %cst_147 = arith.constant dense<0.000000e+00> : vector<8x4xf32>
    %798 = tpu.matmul %797, %6, %cst_147 {dimension_numbers = #tpu.dot_dimension_numbers<[1], [0], [0], [1], [0, 0, 1, 1], [], []>} : vector<8x32xf32>, vector<32x4xf32>, vector<8x4xf32> -> vector<8x4xf32>
    %799 = vector.extract_strided_slice %5 {offsets = [24, 0], sizes = [8, 4], strides = [1, 1]} : vector<64x4xf32> to vector<8x4xf32>
    %800 = arith.addf %798, %799 : vector<8x4xf32>
    %cst_148 = arith.constant 5.000000e-01 : f32
    %801 = vector.broadcast %cst_148 : f32 to vector<8x4xf32>
    %802 = arith.mulf %801, %800 : vector<8x4xf32>
    %cst_149 = arith.constant 0.636619746 : f32
    %803 = vector.broadcast %cst_149 : f32 to vector<8x4xf32>
    %804 = arith.mulf %802, %803 : vector<8x4xf32>
    %cst_150 = arith.constant 5.000000e-01 : f32
    %805 = vector.broadcast %cst_150 : f32 to vector<8x4xf32>
    %806 = arith.addf %804, %805 : vector<8x4xf32>
    %807 = arith.fptosi %806 : vector<8x4xf32> to vector<8x4xi32>
    %808 = arith.sitofp %807 : vector<8x4xi32> to vector<8x4xf32>
    %809 = arith.cmpf olt, %806, %808 : vector<8x4xf32>
    %c1_i32_151 = arith.constant 1 : i32
    %810 = vector.broadcast %c1_i32_151 : i32 to vector<8x4xi32>
    %811 = arith.subi %807, %810 : vector<8x4xi32>
    %812 = arith.select %809, %811, %807 : vector<8x4xi1>, vector<8x4xi32>
    %813 = arith.sitofp %812 : vector<8x4xi32> to vector<8x4xf32>
    %cst_152 = arith.constant 1.57079637 : f32
    %814 = vector.broadcast %cst_152 : f32 to vector<8x4xf32>
    %815 = arith.mulf %813, %814 : vector<8x4xf32>
    %816 = arith.subf %802, %815 : vector<8x4xf32>
    %c3_i32_153 = arith.constant 3 : i32
    %817 = vector.broadcast %c3_i32_153 : i32 to vector<8x4xi32>
    %818 = arith.andi %812, %817 : vector<8x4xi32>
    %819 = arith.mulf %816, %816 : vector<8x4xf32>
    %cst_154 = arith.constant 2.75573188E-6 : f32
    %820 = vector.broadcast %cst_154 : f32 to vector<8x4xf32>
    %821 = arith.mulf %819, %820 : vector<8x4xf32>
    %cst_155 = arith.constant -1.98412701E-4 : f32
    %822 = vector.broadcast %cst_155 : f32 to vector<8x4xf32>
    %823 = arith.addf %822, %821 : vector<8x4xf32>
    %824 = arith.mulf %819, %823 : vector<8x4xf32>
    %cst_156 = arith.constant 0.00833333377 : f32
    %825 = vector.broadcast %cst_156 : f32 to vector<8x4xf32>
    %826 = arith.addf %825, %824 : vector<8x4xf32>
    %827 = arith.mulf %819, %826 : vector<8x4xf32>
    %cst_157 = arith.constant -0.166666672 : f32
    %828 = vector.broadcast %cst_157 : f32 to vector<8x4xf32>
    %829 = arith.addf %828, %827 : vector<8x4xf32>
    %830 = arith.mulf %819, %829 : vector<8x4xf32>
    %cst_158 = arith.constant 1.000000e+00 : f32
    %831 = vector.broadcast %cst_158 : f32 to vector<8x4xf32>
    %832 = arith.addf %831, %830 : vector<8x4xf32>
    %833 = arith.mulf %816, %832 : vector<8x4xf32>
    %cst_159 = arith.constant 2.48015876E-5 : f32
    %834 = vector.broadcast %cst_159 : f32 to vector<8x4xf32>
    %835 = arith.mulf %819, %834 : vector<8x4xf32>
    %cst_160 = arith.constant -0.00138888892 : f32
    %836 = vector.broadcast %cst_160 : f32 to vector<8x4xf32>
    %837 = arith.addf %836, %835 : vector<8x4xf32>
    %838 = arith.mulf %819, %837 : vector<8x4xf32>
    %cst_161 = arith.constant 0.0416666679 : f32
    %839 = vector.broadcast %cst_161 : f32 to vector<8x4xf32>
    %840 = arith.addf %839, %838 : vector<8x4xf32>
    %841 = arith.mulf %819, %840 : vector<8x4xf32>
    %cst_162 = arith.constant -5.000000e-01 : f32
    %842 = vector.broadcast %cst_162 : f32 to vector<8x4xf32>
    %843 = arith.addf %842, %841 : vector<8x4xf32>
    %844 = arith.mulf %819, %843 : vector<8x4xf32>
    %cst_163 = arith.constant 1.000000e+00 : f32
    %845 = vector.broadcast %cst_163 : f32 to vector<8x4xf32>
    %846 = arith.addf %845, %844 : vector<8x4xf32>
    %c0_i32_164 = arith.constant 0 : i32
    %847 = vector.broadcast %c0_i32_164 : i32 to vector<8x4xi32>
    %848 = arith.cmpi eq, %818, %847 : vector<8x4xi32>
    %c1_i32_165 = arith.constant 1 : i32
    %849 = vector.broadcast %c1_i32_165 : i32 to vector<8x4xi32>
    %850 = arith.cmpi eq, %818, %849 : vector<8x4xi32>
    %c2_i32_166 = arith.constant 2 : i32
    %851 = vector.broadcast %c2_i32_166 : i32 to vector<8x4xi32>
    %852 = arith.cmpi eq, %818, %851 : vector<8x4xi32>
    %cst_167 = arith.constant 0.000000e+00 : f32
    %853 = vector.broadcast %cst_167 : f32 to vector<8x4xf32>
    %854 = arith.subf %853, %833 : vector<8x4xf32>
    %cst_168 = arith.constant 0.000000e+00 : f32
    %855 = vector.broadcast %cst_168 : f32 to vector<8x4xf32>
    %856 = arith.subf %855, %846 : vector<8x4xf32>
    %857 = arith.select %852, %854, %856 : vector<8x4xi1>, vector<8x4xf32>
    %858 = arith.select %850, %846, %857 : vector<8x4xi1>, vector<8x4xf32>
    %859 = arith.select %848, %833, %858 : vector<8x4xi1>, vector<8x4xf32>
    %cst_169 = arith.constant 0.000000e+00 : f32
    %860 = vector.broadcast %cst_169 : f32 to vector<8x4xf32>
    %861 = arith.subf %860, %833 : vector<8x4xf32>
    %cst_170 = arith.constant 0.000000e+00 : f32
    %862 = vector.broadcast %cst_170 : f32 to vector<8x4xf32>
    %863 = arith.subf %862, %846 : vector<8x4xf32>
    %864 = arith.select %852, %863, %833 : vector<8x4xi1>, vector<8x4xf32>
    %865 = arith.select %850, %861, %864 : vector<8x4xi1>, vector<8x4xf32>
    %866 = arith.select %848, %846, %865 : vector<8x4xi1>, vector<8x4xf32>
    %cst_171 = arith.constant 0.707106769 : f32
    %867 = vector.broadcast %cst_171 : f32 to vector<8x4xf32>
    %868 = arith.mulf %866, %867 : vector<8x4xf32>
    %cst_172 = arith.constant 0.000000e+00 : f32
    %869 = vector.broadcast %cst_172 : f32 to vector<8x4xf32>
    %870 = arith.subf %869, %859 : vector<8x4xf32>
    %cst_173 = arith.constant 0.707106769 : f32
    %871 = vector.broadcast %cst_173 : f32 to vector<8x4xf32>
    %872 = arith.mulf %870, %871 : vector<8x4xf32>
    %cst_174 = arith.constant 0.707106769 : f32
    %873 = vector.broadcast %cst_174 : f32 to vector<8x4xf32>
    %874 = arith.mulf %866, %873 : vector<8x4xf32>
    %cst_175 = arith.constant 0.707106769 : f32
    %875 = vector.broadcast %cst_175 : f32 to vector<8x4xf32>
    %876 = arith.mulf %859, %875 : vector<8x4xf32>
    %877 = vector.extract_strided_slice %800 {offsets = [0, 0], sizes = [1, 4], strides = [1, 1]} : vector<8x4xf32> to vector<1x4xf32>
    %878 = arith.mulf %877, %877 : vector<1x4xf32>
    %cst_176 = arith.constant 1.000000e+00 : f32
    %879 = vector.broadcast %cst_176 : f32 to vector<1x4xf32>
    %880 = arith.addf %879, %878 : vector<1x4xf32>
    %881 = math.rsqrt %880 : vector<1x4xf32>
    %cst_177 = arith.constant 1.000000e+00 : f32
    %882 = vector.broadcast %cst_177 : f32 to vector<1x4xf32>
    %883 = arith.addf %882, %881 : vector<1x4xf32>
    %cst_178 = arith.constant 5.000000e-01 : f32
    %884 = vector.broadcast %cst_178 : f32 to vector<1x4xf32>
    %885 = arith.mulf %884, %883 : vector<1x4xf32>
    %886 = math.sqrt %885 : vector<1x4xf32>
    %cst_179 = arith.constant 0.000000e+00 : f32
    %887 = vector.broadcast %cst_179 : f32 to vector<1x4xf32>
    %888 = arith.cmpf oge, %877, %887 : vector<1x4xf32>
    %cst_180 = arith.constant 1.000000e+00 : f32
    %cst_181 = arith.constant -1.000000e+00 : f32
    %889 = vector.broadcast %cst_180 : f32 to vector<1x4xf32>
    %890 = vector.broadcast %cst_181 : f32 to vector<1x4xf32>
    %891 = arith.select %888, %889, %890 : vector<1x4xi1>, vector<1x4xf32>
    %cst_182 = arith.constant 1.000000e+00 : f32
    %892 = vector.broadcast %cst_182 : f32 to vector<1x4xf32>
    %893 = arith.subf %892, %881 : vector<1x4xf32>
    %cst_183 = arith.constant 5.000000e-01 : f32
    %894 = vector.broadcast %cst_183 : f32 to vector<1x4xf32>
    %895 = arith.mulf %894, %893 : vector<1x4xf32>
    %cst_184 = arith.constant 0.000000e+00 : f32
    %896 = vector.broadcast %cst_184 : f32 to vector<1x4xf32>
    %897 = arith.maximumf %895, %896 : vector<1x4xf32>
    %898 = math.sqrt %897 : vector<1x4xf32>
    %899 = arith.mulf %891, %898 : vector<1x4xf32>
    %900 = vector.broadcast %886 : vector<1x4xf32> to vector<8x4xf32>
    %901 = arith.mulf %900, %868 : vector<8x4xf32>
    %902 = vector.broadcast %899 : vector<1x4xf32> to vector<8x4xf32>
    %903 = arith.mulf %902, %874 : vector<8x4xf32>
    %904 = arith.subf %901, %903 : vector<8x4xf32>
    %905 = vector.broadcast %886 : vector<1x4xf32> to vector<8x4xf32>
    %906 = arith.mulf %905, %872 : vector<8x4xf32>
    %907 = vector.broadcast %899 : vector<1x4xf32> to vector<8x4xf32>
    %908 = arith.mulf %907, %876 : vector<8x4xf32>
    %909 = arith.subf %906, %908 : vector<8x4xf32>
    %910 = vector.broadcast %899 : vector<1x4xf32> to vector<8x4xf32>
    %911 = arith.mulf %910, %868 : vector<8x4xf32>
    %912 = vector.broadcast %886 : vector<1x4xf32> to vector<8x4xf32>
    %913 = arith.mulf %912, %874 : vector<8x4xf32>
    %914 = arith.addf %911, %913 : vector<8x4xf32>
    %915 = vector.broadcast %899 : vector<1x4xf32> to vector<8x4xf32>
    %916 = arith.mulf %915, %872 : vector<8x4xf32>
    %917 = vector.broadcast %886 : vector<1x4xf32> to vector<8x4xf32>
    %918 = arith.mulf %917, %876 : vector<8x4xf32>
    %919 = arith.addf %916, %918 : vector<8x4xf32>
    %920 = vector.broadcast %886 : vector<1x4xf32> to vector<8x4xf32>
    %921 = arith.mulf %920, %904 : vector<8x4xf32>
    %922 = vector.broadcast %899 : vector<1x4xf32> to vector<8x4xf32>
    %923 = arith.mulf %922, %909 : vector<8x4xf32>
    %924 = arith.addf %921, %923 : vector<8x4xf32>
    %925 = vector.broadcast %886 : vector<1x4xf32> to vector<8x4xf32>
    %926 = arith.mulf %925, %909 : vector<8x4xf32>
    %927 = vector.broadcast %899 : vector<1x4xf32> to vector<8x4xf32>
    %928 = arith.mulf %927, %904 : vector<8x4xf32>
    %929 = arith.subf %926, %928 : vector<8x4xf32>
    %930 = vector.broadcast %886 : vector<1x4xf32> to vector<8x4xf32>
    %931 = arith.mulf %930, %914 : vector<8x4xf32>
    %932 = vector.broadcast %899 : vector<1x4xf32> to vector<8x4xf32>
    %933 = arith.mulf %932, %919 : vector<8x4xf32>
    %934 = arith.subf %931, %933 : vector<8x4xf32>
    %935 = vector.broadcast %886 : vector<1x4xf32> to vector<8x4xf32>
    %936 = arith.mulf %935, %919 : vector<8x4xf32>
    %937 = vector.broadcast %899 : vector<1x4xf32> to vector<8x4xf32>
    %938 = arith.mulf %937, %914 : vector<8x4xf32>
    %939 = arith.addf %936, %938 : vector<8x4xf32>
    %940 = vector.extract_strided_slice %924 {offsets = [0, 0], sizes = [8, 1], strides = [1, 1]} : vector<8x4xf32> to vector<8x1xf32>
    %941 = vector.extract_strided_slice %929 {offsets = [0, 0], sizes = [8, 1], strides = [1, 1]} : vector<8x4xf32> to vector<8x1xf32>
    %942 = vector.extract_strided_slice %934 {offsets = [0, 0], sizes = [8, 1], strides = [1, 1]} : vector<8x4xf32> to vector<8x1xf32>
    %943 = arith.subf %942, %940 : vector<8x1xf32>
    %944 = vector.broadcast %943 : vector<8x1xf32> to vector<8x16xf32>
    %945 = vector.broadcast %12 : vector<1x16xf32> to vector<8x16xf32>
    %946 = arith.mulf %944, %945 : vector<8x16xf32>
    %947 = vector.broadcast %940 : vector<8x1xf32> to vector<8x16xf32>
    %948 = arith.addf %947, %946 : vector<8x16xf32>
    %949 = vector.extract_strided_slice %939 {offsets = [0, 0], sizes = [8, 1], strides = [1, 1]} : vector<8x4xf32> to vector<8x1xf32>
    %950 = arith.subf %949, %941 : vector<8x1xf32>
    %951 = vector.broadcast %950 : vector<8x1xf32> to vector<8x16xf32>
    %952 = vector.broadcast %12 : vector<1x16xf32> to vector<8x16xf32>
    %953 = arith.mulf %951, %952 : vector<8x16xf32>
    %954 = vector.broadcast %941 : vector<8x1xf32> to vector<8x16xf32>
    %955 = arith.addf %954, %953 : vector<8x16xf32>
    %956 = vector.extract_strided_slice %924 {offsets = [0, 1], sizes = [8, 1], strides = [1, 1]} : vector<8x4xf32> to vector<8x1xf32>
    %957 = vector.extract_strided_slice %929 {offsets = [0, 1], sizes = [8, 1], strides = [1, 1]} : vector<8x4xf32> to vector<8x1xf32>
    %958 = vector.extract_strided_slice %934 {offsets = [0, 1], sizes = [8, 1], strides = [1, 1]} : vector<8x4xf32> to vector<8x1xf32>
    %959 = arith.subf %958, %956 : vector<8x1xf32>
    %960 = vector.broadcast %959 : vector<8x1xf32> to vector<8x16xf32>
    %961 = vector.broadcast %13 : vector<1x16xf32> to vector<8x16xf32>
    %962 = arith.mulf %960, %961 : vector<8x16xf32>
    %963 = vector.broadcast %956 : vector<8x1xf32> to vector<8x16xf32>
    %964 = arith.addf %963, %962 : vector<8x16xf32>
    %965 = vector.extract_strided_slice %939 {offsets = [0, 1], sizes = [8, 1], strides = [1, 1]} : vector<8x4xf32> to vector<8x1xf32>
    %966 = arith.subf %965, %957 : vector<8x1xf32>
    %967 = vector.broadcast %966 : vector<8x1xf32> to vector<8x16xf32>
    %968 = vector.broadcast %13 : vector<1x16xf32> to vector<8x16xf32>
    %969 = arith.mulf %967, %968 : vector<8x16xf32>
    %970 = vector.broadcast %957 : vector<8x1xf32> to vector<8x16xf32>
    %971 = arith.addf %970, %969 : vector<8x16xf32>
    %972 = arith.mulf %948, %964 : vector<8x16xf32>
    %973 = arith.mulf %955, %971 : vector<8x16xf32>
    %974 = arith.subf %972, %973 : vector<8x16xf32>
    %975 = arith.mulf %948, %971 : vector<8x16xf32>
    %976 = arith.mulf %955, %964 : vector<8x16xf32>
    %977 = arith.addf %975, %976 : vector<8x16xf32>
    %978 = vector.extract_strided_slice %924 {offsets = [0, 2], sizes = [8, 1], strides = [1, 1]} : vector<8x4xf32> to vector<8x1xf32>
    %979 = vector.extract_strided_slice %929 {offsets = [0, 2], sizes = [8, 1], strides = [1, 1]} : vector<8x4xf32> to vector<8x1xf32>
    %980 = vector.extract_strided_slice %934 {offsets = [0, 2], sizes = [8, 1], strides = [1, 1]} : vector<8x4xf32> to vector<8x1xf32>
    %981 = arith.subf %980, %978 : vector<8x1xf32>
    %982 = vector.broadcast %981 : vector<8x1xf32> to vector<8x16xf32>
    %983 = vector.broadcast %14 : vector<1x16xf32> to vector<8x16xf32>
    %984 = arith.mulf %982, %983 : vector<8x16xf32>
    %985 = vector.broadcast %978 : vector<8x1xf32> to vector<8x16xf32>
    %986 = arith.addf %985, %984 : vector<8x16xf32>
    %987 = vector.extract_strided_slice %939 {offsets = [0, 2], sizes = [8, 1], strides = [1, 1]} : vector<8x4xf32> to vector<8x1xf32>
    %988 = arith.subf %987, %979 : vector<8x1xf32>
    %989 = vector.broadcast %988 : vector<8x1xf32> to vector<8x16xf32>
    %990 = vector.broadcast %14 : vector<1x16xf32> to vector<8x16xf32>
    %991 = arith.mulf %989, %990 : vector<8x16xf32>
    %992 = vector.broadcast %979 : vector<8x1xf32> to vector<8x16xf32>
    %993 = arith.addf %992, %991 : vector<8x16xf32>
    %994 = arith.mulf %974, %986 : vector<8x16xf32>
    %995 = arith.mulf %977, %993 : vector<8x16xf32>
    %996 = arith.subf %994, %995 : vector<8x16xf32>
    %997 = arith.mulf %974, %993 : vector<8x16xf32>
    %998 = arith.mulf %977, %986 : vector<8x16xf32>
    %999 = arith.addf %997, %998 : vector<8x16xf32>
    %1000 = vector.extract_strided_slice %924 {offsets = [0, 3], sizes = [8, 1], strides = [1, 1]} : vector<8x4xf32> to vector<8x1xf32>
    %1001 = vector.extract_strided_slice %929 {offsets = [0, 3], sizes = [8, 1], strides = [1, 1]} : vector<8x4xf32> to vector<8x1xf32>
    %1002 = vector.extract_strided_slice %934 {offsets = [0, 3], sizes = [8, 1], strides = [1, 1]} : vector<8x4xf32> to vector<8x1xf32>
    %1003 = arith.subf %1002, %1000 : vector<8x1xf32>
    %1004 = vector.broadcast %1003 : vector<8x1xf32> to vector<8x16xf32>
    %1005 = vector.broadcast %15 : vector<1x16xf32> to vector<8x16xf32>
    %1006 = arith.mulf %1004, %1005 : vector<8x16xf32>
    %1007 = vector.broadcast %1000 : vector<8x1xf32> to vector<8x16xf32>
    %1008 = arith.addf %1007, %1006 : vector<8x16xf32>
    %1009 = vector.extract_strided_slice %939 {offsets = [0, 3], sizes = [8, 1], strides = [1, 1]} : vector<8x4xf32> to vector<8x1xf32>
    %1010 = arith.subf %1009, %1001 : vector<8x1xf32>
    %1011 = vector.broadcast %1010 : vector<8x1xf32> to vector<8x16xf32>
    %1012 = vector.broadcast %15 : vector<1x16xf32> to vector<8x16xf32>
    %1013 = arith.mulf %1011, %1012 : vector<8x16xf32>
    %1014 = vector.broadcast %1001 : vector<8x1xf32> to vector<8x16xf32>
    %1015 = arith.addf %1014, %1013 : vector<8x16xf32>
    %1016 = arith.mulf %996, %1008 : vector<8x16xf32>
    %1017 = arith.mulf %999, %1015 : vector<8x16xf32>
    %1018 = arith.subf %1016, %1017 : vector<8x16xf32>
    %1019 = arith.mulf %996, %1015 : vector<8x16xf32>
    %1020 = arith.mulf %999, %1008 : vector<8x16xf32>
    %1021 = arith.addf %1019, %1020 : vector<8x16xf32>
    %cst_185 = arith.constant dense<0.000000e+00> : vector<8x128xf32>
    %1022 = tpu.matmul %1018, %7, %cst_185 {dimension_numbers = #tpu.dot_dimension_numbers<[1], [0], [0], [1], [0, 0, 1, 1], [], []>} : vector<8x16xf32>, vector<16x128xf32>, vector<8x128xf32> -> vector<8x128xf32>
    %cst_186 = arith.constant dense<0.000000e+00> : vector<8x128xf32>
    %1023 = tpu.matmul %1021, %8, %cst_186 {dimension_numbers = #tpu.dot_dimension_numbers<[1], [0], [0], [1], [0, 0, 1, 1], [], []>} : vector<8x16xf32>, vector<16x128xf32>, vector<8x128xf32> -> vector<8x128xf32>
    %1024 = arith.addf %1022, %1023 : vector<8x128xf32>
    %1025 = vector.extract_strided_slice %1024 {offsets = [0, 0], sizes = [8, 64], strides = [1, 1]} : vector<8x128xf32> to vector<8x64xf32>
    %1026 = vector.extract_strided_slice %1024 {offsets = [0, 64], sizes = [8, 64], strides = [1, 1]} : vector<8x128xf32> to vector<8x64xf32>
    %1027 = arith.mulf %1025, %1025 : vector<8x64xf32>
    %1028 = arith.mulf %1026, %1026 : vector<8x64xf32>
    %1029 = arith.addf %1027, %1028 : vector<8x64xf32>
    %cst_187 = arith.constant dense<0.000000e+00> : vector<8x128xf32>
    %1030 = tpu.matmul %1029, %9, %cst_187 {dimension_numbers = #tpu.dot_dimension_numbers<[1], [0], [0], [1], [0, 0, 1, 1], [], []>} : vector<8x64xf32>, vector<64x128xf32>, vector<8x128xf32> -> vector<8x128xf32>
    %1031 = vector.broadcast %10 : vector<1x128xf32> to vector<8x128xf32>
    %1032 = arith.addf %1030, %1031 : vector<8x128xf32>
    %1033 = vector.extract_strided_slice %1032 {offsets = [0, 0], sizes = [8, 32], strides = [1, 1]} : vector<8x128xf32> to vector<8x32xf32>
    %1034 = arith.negf %1033 : vector<8x32xf32>
    %1035 = math.exp %1034 : vector<8x32xf32>
    %cst_188 = arith.constant 1.000000e+00 : f32
    %1036 = vector.broadcast %cst_188 : f32 to vector<8x32xf32>
    %1037 = arith.addf %1036, %1035 : vector<8x32xf32>
    %1038 = arith.divf %1036, %1037 : vector<8x32xf32>
    %1039 = vector.extract_strided_slice %1032 {offsets = [0, 32], sizes = [8, 32], strides = [1, 1]} : vector<8x128xf32> to vector<8x32xf32>
    %1040 = arith.negf %1039 : vector<8x32xf32>
    %1041 = math.exp %1040 : vector<8x32xf32>
    %cst_189 = arith.constant 1.000000e+00 : f32
    %1042 = vector.broadcast %cst_189 : f32 to vector<8x32xf32>
    %1043 = arith.addf %1042, %1041 : vector<8x32xf32>
    %1044 = arith.divf %1042, %1043 : vector<8x32xf32>
    %1045 = vector.extract_strided_slice %1032 {offsets = [0, 64], sizes = [8, 32], strides = [1, 1]} : vector<8x128xf32> to vector<8x32xf32>
    %1046 = math.tanh %1045 : vector<8x32xf32>
    %1047 = vector.extract_strided_slice %1032 {offsets = [0, 96], sizes = [8, 32], strides = [1, 1]} : vector<8x128xf32> to vector<8x32xf32>
    %1048 = arith.negf %1047 : vector<8x32xf32>
    %1049 = math.exp %1048 : vector<8x32xf32>
    %cst_190 = arith.constant 1.000000e+00 : f32
    %1050 = vector.broadcast %cst_190 : f32 to vector<8x32xf32>
    %1051 = arith.addf %1050, %1049 : vector<8x32xf32>
    %1052 = arith.divf %1050, %1051 : vector<8x32xf32>
    %1053 = arith.mulf %1038, %795 : vector<8x32xf32>
    %1054 = arith.mulf %1044, %1046 : vector<8x32xf32>
    %1055 = arith.addf %1053, %1054 : vector<8x32xf32>
    %1056 = math.tanh %1055 : vector<8x32xf32>
    %1057 = arith.mulf %1052, %1056 : vector<8x32xf32>
    %cst_191 = arith.constant dense<0.000000e+00> : vector<8x4xf32>
    %1058 = tpu.matmul %1057, %6, %cst_191 {dimension_numbers = #tpu.dot_dimension_numbers<[1], [0], [0], [1], [0, 0, 1, 1], [], []>} : vector<8x32xf32>, vector<32x4xf32>, vector<8x4xf32> -> vector<8x4xf32>
    %1059 = vector.extract_strided_slice %5 {offsets = [32, 0], sizes = [8, 4], strides = [1, 1]} : vector<64x4xf32> to vector<8x4xf32>
    %1060 = arith.addf %1058, %1059 : vector<8x4xf32>
    %cst_192 = arith.constant 5.000000e-01 : f32
    %1061 = vector.broadcast %cst_192 : f32 to vector<8x4xf32>
    %1062 = arith.mulf %1061, %1060 : vector<8x4xf32>
    %cst_193 = arith.constant 0.636619746 : f32
    %1063 = vector.broadcast %cst_193 : f32 to vector<8x4xf32>
    %1064 = arith.mulf %1062, %1063 : vector<8x4xf32>
    %cst_194 = arith.constant 5.000000e-01 : f32
    %1065 = vector.broadcast %cst_194 : f32 to vector<8x4xf32>
    %1066 = arith.addf %1064, %1065 : vector<8x4xf32>
    %1067 = arith.fptosi %1066 : vector<8x4xf32> to vector<8x4xi32>
    %1068 = arith.sitofp %1067 : vector<8x4xi32> to vector<8x4xf32>
    %1069 = arith.cmpf olt, %1066, %1068 : vector<8x4xf32>
    %c1_i32_195 = arith.constant 1 : i32
    %1070 = vector.broadcast %c1_i32_195 : i32 to vector<8x4xi32>
    %1071 = arith.subi %1067, %1070 : vector<8x4xi32>
    %1072 = arith.select %1069, %1071, %1067 : vector<8x4xi1>, vector<8x4xi32>
    %1073 = arith.sitofp %1072 : vector<8x4xi32> to vector<8x4xf32>
    %cst_196 = arith.constant 1.57079637 : f32
    %1074 = vector.broadcast %cst_196 : f32 to vector<8x4xf32>
    %1075 = arith.mulf %1073, %1074 : vector<8x4xf32>
    %1076 = arith.subf %1062, %1075 : vector<8x4xf32>
    %c3_i32_197 = arith.constant 3 : i32
    %1077 = vector.broadcast %c3_i32_197 : i32 to vector<8x4xi32>
    %1078 = arith.andi %1072, %1077 : vector<8x4xi32>
    %1079 = arith.mulf %1076, %1076 : vector<8x4xf32>
    %cst_198 = arith.constant 2.75573188E-6 : f32
    %1080 = vector.broadcast %cst_198 : f32 to vector<8x4xf32>
    %1081 = arith.mulf %1079, %1080 : vector<8x4xf32>
    %cst_199 = arith.constant -1.98412701E-4 : f32
    %1082 = vector.broadcast %cst_199 : f32 to vector<8x4xf32>
    %1083 = arith.addf %1082, %1081 : vector<8x4xf32>
    %1084 = arith.mulf %1079, %1083 : vector<8x4xf32>
    %cst_200 = arith.constant 0.00833333377 : f32
    %1085 = vector.broadcast %cst_200 : f32 to vector<8x4xf32>
    %1086 = arith.addf %1085, %1084 : vector<8x4xf32>
    %1087 = arith.mulf %1079, %1086 : vector<8x4xf32>
    %cst_201 = arith.constant -0.166666672 : f32
    %1088 = vector.broadcast %cst_201 : f32 to vector<8x4xf32>
    %1089 = arith.addf %1088, %1087 : vector<8x4xf32>
    %1090 = arith.mulf %1079, %1089 : vector<8x4xf32>
    %cst_202 = arith.constant 1.000000e+00 : f32
    %1091 = vector.broadcast %cst_202 : f32 to vector<8x4xf32>
    %1092 = arith.addf %1091, %1090 : vector<8x4xf32>
    %1093 = arith.mulf %1076, %1092 : vector<8x4xf32>
    %cst_203 = arith.constant 2.48015876E-5 : f32
    %1094 = vector.broadcast %cst_203 : f32 to vector<8x4xf32>
    %1095 = arith.mulf %1079, %1094 : vector<8x4xf32>
    %cst_204 = arith.constant -0.00138888892 : f32
    %1096 = vector.broadcast %cst_204 : f32 to vector<8x4xf32>
    %1097 = arith.addf %1096, %1095 : vector<8x4xf32>
    %1098 = arith.mulf %1079, %1097 : vector<8x4xf32>
    %cst_205 = arith.constant 0.0416666679 : f32
    %1099 = vector.broadcast %cst_205 : f32 to vector<8x4xf32>
    %1100 = arith.addf %1099, %1098 : vector<8x4xf32>
    %1101 = arith.mulf %1079, %1100 : vector<8x4xf32>
    %cst_206 = arith.constant -5.000000e-01 : f32
    %1102 = vector.broadcast %cst_206 : f32 to vector<8x4xf32>
    %1103 = arith.addf %1102, %1101 : vector<8x4xf32>
    %1104 = arith.mulf %1079, %1103 : vector<8x4xf32>
    %cst_207 = arith.constant 1.000000e+00 : f32
    %1105 = vector.broadcast %cst_207 : f32 to vector<8x4xf32>
    %1106 = arith.addf %1105, %1104 : vector<8x4xf32>
    %c0_i32_208 = arith.constant 0 : i32
    %1107 = vector.broadcast %c0_i32_208 : i32 to vector<8x4xi32>
    %1108 = arith.cmpi eq, %1078, %1107 : vector<8x4xi32>
    %c1_i32_209 = arith.constant 1 : i32
    %1109 = vector.broadcast %c1_i32_209 : i32 to vector<8x4xi32>
    %1110 = arith.cmpi eq, %1078, %1109 : vector<8x4xi32>
    %c2_i32_210 = arith.constant 2 : i32
    %1111 = vector.broadcast %c2_i32_210 : i32 to vector<8x4xi32>
    %1112 = arith.cmpi eq, %1078, %1111 : vector<8x4xi32>
    %cst_211 = arith.constant 0.000000e+00 : f32
    %1113 = vector.broadcast %cst_211 : f32 to vector<8x4xf32>
    %1114 = arith.subf %1113, %1093 : vector<8x4xf32>
    %cst_212 = arith.constant 0.000000e+00 : f32
    %1115 = vector.broadcast %cst_212 : f32 to vector<8x4xf32>
    %1116 = arith.subf %1115, %1106 : vector<8x4xf32>
    %1117 = arith.select %1112, %1114, %1116 : vector<8x4xi1>, vector<8x4xf32>
    %1118 = arith.select %1110, %1106, %1117 : vector<8x4xi1>, vector<8x4xf32>
    %1119 = arith.select %1108, %1093, %1118 : vector<8x4xi1>, vector<8x4xf32>
    %cst_213 = arith.constant 0.000000e+00 : f32
    %1120 = vector.broadcast %cst_213 : f32 to vector<8x4xf32>
    %1121 = arith.subf %1120, %1093 : vector<8x4xf32>
    %cst_214 = arith.constant 0.000000e+00 : f32
    %1122 = vector.broadcast %cst_214 : f32 to vector<8x4xf32>
    %1123 = arith.subf %1122, %1106 : vector<8x4xf32>
    %1124 = arith.select %1112, %1123, %1093 : vector<8x4xi1>, vector<8x4xf32>
    %1125 = arith.select %1110, %1121, %1124 : vector<8x4xi1>, vector<8x4xf32>
    %1126 = arith.select %1108, %1106, %1125 : vector<8x4xi1>, vector<8x4xf32>
    %cst_215 = arith.constant 0.707106769 : f32
    %1127 = vector.broadcast %cst_215 : f32 to vector<8x4xf32>
    %1128 = arith.mulf %1126, %1127 : vector<8x4xf32>
    %cst_216 = arith.constant 0.000000e+00 : f32
    %1129 = vector.broadcast %cst_216 : f32 to vector<8x4xf32>
    %1130 = arith.subf %1129, %1119 : vector<8x4xf32>
    %cst_217 = arith.constant 0.707106769 : f32
    %1131 = vector.broadcast %cst_217 : f32 to vector<8x4xf32>
    %1132 = arith.mulf %1130, %1131 : vector<8x4xf32>
    %cst_218 = arith.constant 0.707106769 : f32
    %1133 = vector.broadcast %cst_218 : f32 to vector<8x4xf32>
    %1134 = arith.mulf %1126, %1133 : vector<8x4xf32>
    %cst_219 = arith.constant 0.707106769 : f32
    %1135 = vector.broadcast %cst_219 : f32 to vector<8x4xf32>
    %1136 = arith.mulf %1119, %1135 : vector<8x4xf32>
    %1137 = vector.extract_strided_slice %1060 {offsets = [0, 0], sizes = [1, 4], strides = [1, 1]} : vector<8x4xf32> to vector<1x4xf32>
    %1138 = arith.mulf %1137, %1137 : vector<1x4xf32>
    %cst_220 = arith.constant 1.000000e+00 : f32
    %1139 = vector.broadcast %cst_220 : f32 to vector<1x4xf32>
    %1140 = arith.addf %1139, %1138 : vector<1x4xf32>
    %1141 = math.rsqrt %1140 : vector<1x4xf32>
    %cst_221 = arith.constant 1.000000e+00 : f32
    %1142 = vector.broadcast %cst_221 : f32 to vector<1x4xf32>
    %1143 = arith.addf %1142, %1141 : vector<1x4xf32>
    %cst_222 = arith.constant 5.000000e-01 : f32
    %1144 = vector.broadcast %cst_222 : f32 to vector<1x4xf32>
    %1145 = arith.mulf %1144, %1143 : vector<1x4xf32>
    %1146 = math.sqrt %1145 : vector<1x4xf32>
    %cst_223 = arith.constant 0.000000e+00 : f32
    %1147 = vector.broadcast %cst_223 : f32 to vector<1x4xf32>
    %1148 = arith.cmpf oge, %1137, %1147 : vector<1x4xf32>
    %cst_224 = arith.constant 1.000000e+00 : f32
    %cst_225 = arith.constant -1.000000e+00 : f32
    %1149 = vector.broadcast %cst_224 : f32 to vector<1x4xf32>
    %1150 = vector.broadcast %cst_225 : f32 to vector<1x4xf32>
    %1151 = arith.select %1148, %1149, %1150 : vector<1x4xi1>, vector<1x4xf32>
    %cst_226 = arith.constant 1.000000e+00 : f32
    %1152 = vector.broadcast %cst_226 : f32 to vector<1x4xf32>
    %1153 = arith.subf %1152, %1141 : vector<1x4xf32>
    %cst_227 = arith.constant 5.000000e-01 : f32
    %1154 = vector.broadcast %cst_227 : f32 to vector<1x4xf32>
    %1155 = arith.mulf %1154, %1153 : vector<1x4xf32>
    %cst_228 = arith.constant 0.000000e+00 : f32
    %1156 = vector.broadcast %cst_228 : f32 to vector<1x4xf32>
    %1157 = arith.maximumf %1155, %1156 : vector<1x4xf32>
    %1158 = math.sqrt %1157 : vector<1x4xf32>
    %1159 = arith.mulf %1151, %1158 : vector<1x4xf32>
    %1160 = vector.broadcast %1146 : vector<1x4xf32> to vector<8x4xf32>
    %1161 = arith.mulf %1160, %1128 : vector<8x4xf32>
    %1162 = vector.broadcast %1159 : vector<1x4xf32> to vector<8x4xf32>
    %1163 = arith.mulf %1162, %1134 : vector<8x4xf32>
    %1164 = arith.subf %1161, %1163 : vector<8x4xf32>
    %1165 = vector.broadcast %1146 : vector<1x4xf32> to vector<8x4xf32>
    %1166 = arith.mulf %1165, %1132 : vector<8x4xf32>
    %1167 = vector.broadcast %1159 : vector<1x4xf32> to vector<8x4xf32>
    %1168 = arith.mulf %1167, %1136 : vector<8x4xf32>
    %1169 = arith.subf %1166, %1168 : vector<8x4xf32>
    %1170 = vector.broadcast %1159 : vector<1x4xf32> to vector<8x4xf32>
    %1171 = arith.mulf %1170, %1128 : vector<8x4xf32>
    %1172 = vector.broadcast %1146 : vector<1x4xf32> to vector<8x4xf32>
    %1173 = arith.mulf %1172, %1134 : vector<8x4xf32>
    %1174 = arith.addf %1171, %1173 : vector<8x4xf32>
    %1175 = vector.broadcast %1159 : vector<1x4xf32> to vector<8x4xf32>
    %1176 = arith.mulf %1175, %1132 : vector<8x4xf32>
    %1177 = vector.broadcast %1146 : vector<1x4xf32> to vector<8x4xf32>
    %1178 = arith.mulf %1177, %1136 : vector<8x4xf32>
    %1179 = arith.addf %1176, %1178 : vector<8x4xf32>
    %1180 = vector.broadcast %1146 : vector<1x4xf32> to vector<8x4xf32>
    %1181 = arith.mulf %1180, %1164 : vector<8x4xf32>
    %1182 = vector.broadcast %1159 : vector<1x4xf32> to vector<8x4xf32>
    %1183 = arith.mulf %1182, %1169 : vector<8x4xf32>
    %1184 = arith.addf %1181, %1183 : vector<8x4xf32>
    %1185 = vector.broadcast %1146 : vector<1x4xf32> to vector<8x4xf32>
    %1186 = arith.mulf %1185, %1169 : vector<8x4xf32>
    %1187 = vector.broadcast %1159 : vector<1x4xf32> to vector<8x4xf32>
    %1188 = arith.mulf %1187, %1164 : vector<8x4xf32>
    %1189 = arith.subf %1186, %1188 : vector<8x4xf32>
    %1190 = vector.broadcast %1146 : vector<1x4xf32> to vector<8x4xf32>
    %1191 = arith.mulf %1190, %1174 : vector<8x4xf32>
    %1192 = vector.broadcast %1159 : vector<1x4xf32> to vector<8x4xf32>
    %1193 = arith.mulf %1192, %1179 : vector<8x4xf32>
    %1194 = arith.subf %1191, %1193 : vector<8x4xf32>
    %1195 = vector.broadcast %1146 : vector<1x4xf32> to vector<8x4xf32>
    %1196 = arith.mulf %1195, %1179 : vector<8x4xf32>
    %1197 = vector.broadcast %1159 : vector<1x4xf32> to vector<8x4xf32>
    %1198 = arith.mulf %1197, %1174 : vector<8x4xf32>
    %1199 = arith.addf %1196, %1198 : vector<8x4xf32>
    %1200 = vector.extract_strided_slice %1184 {offsets = [0, 0], sizes = [8, 1], strides = [1, 1]} : vector<8x4xf32> to vector<8x1xf32>
    %1201 = vector.extract_strided_slice %1189 {offsets = [0, 0], sizes = [8, 1], strides = [1, 1]} : vector<8x4xf32> to vector<8x1xf32>
    %1202 = vector.extract_strided_slice %1194 {offsets = [0, 0], sizes = [8, 1], strides = [1, 1]} : vector<8x4xf32> to vector<8x1xf32>
    %1203 = arith.subf %1202, %1200 : vector<8x1xf32>
    %1204 = vector.broadcast %1203 : vector<8x1xf32> to vector<8x16xf32>
    %1205 = vector.broadcast %12 : vector<1x16xf32> to vector<8x16xf32>
    %1206 = arith.mulf %1204, %1205 : vector<8x16xf32>
    %1207 = vector.broadcast %1200 : vector<8x1xf32> to vector<8x16xf32>
    %1208 = arith.addf %1207, %1206 : vector<8x16xf32>
    %1209 = vector.extract_strided_slice %1199 {offsets = [0, 0], sizes = [8, 1], strides = [1, 1]} : vector<8x4xf32> to vector<8x1xf32>
    %1210 = arith.subf %1209, %1201 : vector<8x1xf32>
    %1211 = vector.broadcast %1210 : vector<8x1xf32> to vector<8x16xf32>
    %1212 = vector.broadcast %12 : vector<1x16xf32> to vector<8x16xf32>
    %1213 = arith.mulf %1211, %1212 : vector<8x16xf32>
    %1214 = vector.broadcast %1201 : vector<8x1xf32> to vector<8x16xf32>
    %1215 = arith.addf %1214, %1213 : vector<8x16xf32>
    %1216 = vector.extract_strided_slice %1184 {offsets = [0, 1], sizes = [8, 1], strides = [1, 1]} : vector<8x4xf32> to vector<8x1xf32>
    %1217 = vector.extract_strided_slice %1189 {offsets = [0, 1], sizes = [8, 1], strides = [1, 1]} : vector<8x4xf32> to vector<8x1xf32>
    %1218 = vector.extract_strided_slice %1194 {offsets = [0, 1], sizes = [8, 1], strides = [1, 1]} : vector<8x4xf32> to vector<8x1xf32>
    %1219 = arith.subf %1218, %1216 : vector<8x1xf32>
    %1220 = vector.broadcast %1219 : vector<8x1xf32> to vector<8x16xf32>
    %1221 = vector.broadcast %13 : vector<1x16xf32> to vector<8x16xf32>
    %1222 = arith.mulf %1220, %1221 : vector<8x16xf32>
    %1223 = vector.broadcast %1216 : vector<8x1xf32> to vector<8x16xf32>
    %1224 = arith.addf %1223, %1222 : vector<8x16xf32>
    %1225 = vector.extract_strided_slice %1199 {offsets = [0, 1], sizes = [8, 1], strides = [1, 1]} : vector<8x4xf32> to vector<8x1xf32>
    %1226 = arith.subf %1225, %1217 : vector<8x1xf32>
    %1227 = vector.broadcast %1226 : vector<8x1xf32> to vector<8x16xf32>
    %1228 = vector.broadcast %13 : vector<1x16xf32> to vector<8x16xf32>
    %1229 = arith.mulf %1227, %1228 : vector<8x16xf32>
    %1230 = vector.broadcast %1217 : vector<8x1xf32> to vector<8x16xf32>
    %1231 = arith.addf %1230, %1229 : vector<8x16xf32>
    %1232 = arith.mulf %1208, %1224 : vector<8x16xf32>
    %1233 = arith.mulf %1215, %1231 : vector<8x16xf32>
    %1234 = arith.subf %1232, %1233 : vector<8x16xf32>
    %1235 = arith.mulf %1208, %1231 : vector<8x16xf32>
    %1236 = arith.mulf %1215, %1224 : vector<8x16xf32>
    %1237 = arith.addf %1235, %1236 : vector<8x16xf32>
    %1238 = vector.extract_strided_slice %1184 {offsets = [0, 2], sizes = [8, 1], strides = [1, 1]} : vector<8x4xf32> to vector<8x1xf32>
    %1239 = vector.extract_strided_slice %1189 {offsets = [0, 2], sizes = [8, 1], strides = [1, 1]} : vector<8x4xf32> to vector<8x1xf32>
    %1240 = vector.extract_strided_slice %1194 {offsets = [0, 2], sizes = [8, 1], strides = [1, 1]} : vector<8x4xf32> to vector<8x1xf32>
    %1241 = arith.subf %1240, %1238 : vector<8x1xf32>
    %1242 = vector.broadcast %1241 : vector<8x1xf32> to vector<8x16xf32>
    %1243 = vector.broadcast %14 : vector<1x16xf32> to vector<8x16xf32>
    %1244 = arith.mulf %1242, %1243 : vector<8x16xf32>
    %1245 = vector.broadcast %1238 : vector<8x1xf32> to vector<8x16xf32>
    %1246 = arith.addf %1245, %1244 : vector<8x16xf32>
    %1247 = vector.extract_strided_slice %1199 {offsets = [0, 2], sizes = [8, 1], strides = [1, 1]} : vector<8x4xf32> to vector<8x1xf32>
    %1248 = arith.subf %1247, %1239 : vector<8x1xf32>
    %1249 = vector.broadcast %1248 : vector<8x1xf32> to vector<8x16xf32>
    %1250 = vector.broadcast %14 : vector<1x16xf32> to vector<8x16xf32>
    %1251 = arith.mulf %1249, %1250 : vector<8x16xf32>
    %1252 = vector.broadcast %1239 : vector<8x1xf32> to vector<8x16xf32>
    %1253 = arith.addf %1252, %1251 : vector<8x16xf32>
    %1254 = arith.mulf %1234, %1246 : vector<8x16xf32>
    %1255 = arith.mulf %1237, %1253 : vector<8x16xf32>
    %1256 = arith.subf %1254, %1255 : vector<8x16xf32>
    %1257 = arith.mulf %1234, %1253 : vector<8x16xf32>
    %1258 = arith.mulf %1237, %1246 : vector<8x16xf32>
    %1259 = arith.addf %1257, %1258 : vector<8x16xf32>
    %1260 = vector.extract_strided_slice %1184 {offsets = [0, 3], sizes = [8, 1], strides = [1, 1]} : vector<8x4xf32> to vector<8x1xf32>
    %1261 = vector.extract_strided_slice %1189 {offsets = [0, 3], sizes = [8, 1], strides = [1, 1]} : vector<8x4xf32> to vector<8x1xf32>
    %1262 = vector.extract_strided_slice %1194 {offsets = [0, 3], sizes = [8, 1], strides = [1, 1]} : vector<8x4xf32> to vector<8x1xf32>
    %1263 = arith.subf %1262, %1260 : vector<8x1xf32>
    %1264 = vector.broadcast %1263 : vector<8x1xf32> to vector<8x16xf32>
    %1265 = vector.broadcast %15 : vector<1x16xf32> to vector<8x16xf32>
    %1266 = arith.mulf %1264, %1265 : vector<8x16xf32>
    %1267 = vector.broadcast %1260 : vector<8x1xf32> to vector<8x16xf32>
    %1268 = arith.addf %1267, %1266 : vector<8x16xf32>
    %1269 = vector.extract_strided_slice %1199 {offsets = [0, 3], sizes = [8, 1], strides = [1, 1]} : vector<8x4xf32> to vector<8x1xf32>
    %1270 = arith.subf %1269, %1261 : vector<8x1xf32>
    %1271 = vector.broadcast %1270 : vector<8x1xf32> to vector<8x16xf32>
    %1272 = vector.broadcast %15 : vector<1x16xf32> to vector<8x16xf32>
    %1273 = arith.mulf %1271, %1272 : vector<8x16xf32>
    %1274 = vector.broadcast %1261 : vector<8x1xf32> to vector<8x16xf32>
    %1275 = arith.addf %1274, %1273 : vector<8x16xf32>
    %1276 = arith.mulf %1256, %1268 : vector<8x16xf32>
    %1277 = arith.mulf %1259, %1275 : vector<8x16xf32>
    %1278 = arith.subf %1276, %1277 : vector<8x16xf32>
    %1279 = arith.mulf %1256, %1275 : vector<8x16xf32>
    %1280 = arith.mulf %1259, %1268 : vector<8x16xf32>
    %1281 = arith.addf %1279, %1280 : vector<8x16xf32>
    %cst_229 = arith.constant dense<0.000000e+00> : vector<8x128xf32>
    %1282 = tpu.matmul %1278, %7, %cst_229 {dimension_numbers = #tpu.dot_dimension_numbers<[1], [0], [0], [1], [0, 0, 1, 1], [], []>} : vector<8x16xf32>, vector<16x128xf32>, vector<8x128xf32> -> vector<8x128xf32>
    %cst_230 = arith.constant dense<0.000000e+00> : vector<8x128xf32>
    %1283 = tpu.matmul %1281, %8, %cst_230 {dimension_numbers = #tpu.dot_dimension_numbers<[1], [0], [0], [1], [0, 0, 1, 1], [], []>} : vector<8x16xf32>, vector<16x128xf32>, vector<8x128xf32> -> vector<8x128xf32>
    %1284 = arith.addf %1282, %1283 : vector<8x128xf32>
    %1285 = vector.extract_strided_slice %1284 {offsets = [0, 0], sizes = [8, 64], strides = [1, 1]} : vector<8x128xf32> to vector<8x64xf32>
    %1286 = vector.extract_strided_slice %1284 {offsets = [0, 64], sizes = [8, 64], strides = [1, 1]} : vector<8x128xf32> to vector<8x64xf32>
    %1287 = arith.mulf %1285, %1285 : vector<8x64xf32>
    %1288 = arith.mulf %1286, %1286 : vector<8x64xf32>
    %1289 = arith.addf %1287, %1288 : vector<8x64xf32>
    %cst_231 = arith.constant dense<0.000000e+00> : vector<8x128xf32>
    %1290 = tpu.matmul %1289, %9, %cst_231 {dimension_numbers = #tpu.dot_dimension_numbers<[1], [0], [0], [1], [0, 0, 1, 1], [], []>} : vector<8x64xf32>, vector<64x128xf32>, vector<8x128xf32> -> vector<8x128xf32>
    %1291 = vector.broadcast %10 : vector<1x128xf32> to vector<8x128xf32>
    %1292 = arith.addf %1290, %1291 : vector<8x128xf32>
    %1293 = vector.extract_strided_slice %1292 {offsets = [0, 0], sizes = [8, 32], strides = [1, 1]} : vector<8x128xf32> to vector<8x32xf32>
    %1294 = arith.negf %1293 : vector<8x32xf32>
    %1295 = math.exp %1294 : vector<8x32xf32>
    %cst_232 = arith.constant 1.000000e+00 : f32
    %1296 = vector.broadcast %cst_232 : f32 to vector<8x32xf32>
    %1297 = arith.addf %1296, %1295 : vector<8x32xf32>
    %1298 = arith.divf %1296, %1297 : vector<8x32xf32>
    %1299 = vector.extract_strided_slice %1292 {offsets = [0, 32], sizes = [8, 32], strides = [1, 1]} : vector<8x128xf32> to vector<8x32xf32>
    %1300 = arith.negf %1299 : vector<8x32xf32>
    %1301 = math.exp %1300 : vector<8x32xf32>
    %cst_233 = arith.constant 1.000000e+00 : f32
    %1302 = vector.broadcast %cst_233 : f32 to vector<8x32xf32>
    %1303 = arith.addf %1302, %1301 : vector<8x32xf32>
    %1304 = arith.divf %1302, %1303 : vector<8x32xf32>
    %1305 = vector.extract_strided_slice %1292 {offsets = [0, 64], sizes = [8, 32], strides = [1, 1]} : vector<8x128xf32> to vector<8x32xf32>
    %1306 = math.tanh %1305 : vector<8x32xf32>
    %1307 = vector.extract_strided_slice %1292 {offsets = [0, 96], sizes = [8, 32], strides = [1, 1]} : vector<8x128xf32> to vector<8x32xf32>
    %1308 = arith.negf %1307 : vector<8x32xf32>
    %1309 = math.exp %1308 : vector<8x32xf32>
    %cst_234 = arith.constant 1.000000e+00 : f32
    %1310 = vector.broadcast %cst_234 : f32 to vector<8x32xf32>
    %1311 = arith.addf %1310, %1309 : vector<8x32xf32>
    %1312 = arith.divf %1310, %1311 : vector<8x32xf32>
    %1313 = arith.mulf %1298, %1055 : vector<8x32xf32>
    %1314 = arith.mulf %1304, %1306 : vector<8x32xf32>
    %1315 = arith.addf %1313, %1314 : vector<8x32xf32>
    %1316 = math.tanh %1315 : vector<8x32xf32>
    %1317 = arith.mulf %1312, %1316 : vector<8x32xf32>
    %cst_235 = arith.constant dense<0.000000e+00> : vector<8x4xf32>
    %1318 = tpu.matmul %1317, %6, %cst_235 {dimension_numbers = #tpu.dot_dimension_numbers<[1], [0], [0], [1], [0, 0, 1, 1], [], []>} : vector<8x32xf32>, vector<32x4xf32>, vector<8x4xf32> -> vector<8x4xf32>
    %1319 = vector.extract_strided_slice %5 {offsets = [40, 0], sizes = [8, 4], strides = [1, 1]} : vector<64x4xf32> to vector<8x4xf32>
    %1320 = arith.addf %1318, %1319 : vector<8x4xf32>
    %cst_236 = arith.constant 5.000000e-01 : f32
    %1321 = vector.broadcast %cst_236 : f32 to vector<8x4xf32>
    %1322 = arith.mulf %1321, %1320 : vector<8x4xf32>
    %cst_237 = arith.constant 0.636619746 : f32
    %1323 = vector.broadcast %cst_237 : f32 to vector<8x4xf32>
    %1324 = arith.mulf %1322, %1323 : vector<8x4xf32>
    %cst_238 = arith.constant 5.000000e-01 : f32
    %1325 = vector.broadcast %cst_238 : f32 to vector<8x4xf32>
    %1326 = arith.addf %1324, %1325 : vector<8x4xf32>
    %1327 = arith.fptosi %1326 : vector<8x4xf32> to vector<8x4xi32>
    %1328 = arith.sitofp %1327 : vector<8x4xi32> to vector<8x4xf32>
    %1329 = arith.cmpf olt, %1326, %1328 : vector<8x4xf32>
    %c1_i32_239 = arith.constant 1 : i32
    %1330 = vector.broadcast %c1_i32_239 : i32 to vector<8x4xi32>
    %1331 = arith.subi %1327, %1330 : vector<8x4xi32>
    %1332 = arith.select %1329, %1331, %1327 : vector<8x4xi1>, vector<8x4xi32>
    %1333 = arith.sitofp %1332 : vector<8x4xi32> to vector<8x4xf32>
    %cst_240 = arith.constant 1.57079637 : f32
    %1334 = vector.broadcast %cst_240 : f32 to vector<8x4xf32>
    %1335 = arith.mulf %1333, %1334 : vector<8x4xf32>
    %1336 = arith.subf %1322, %1335 : vector<8x4xf32>
    %c3_i32_241 = arith.constant 3 : i32
    %1337 = vector.broadcast %c3_i32_241 : i32 to vector<8x4xi32>
    %1338 = arith.andi %1332, %1337 : vector<8x4xi32>
    %1339 = arith.mulf %1336, %1336 : vector<8x4xf32>
    %cst_242 = arith.constant 2.75573188E-6 : f32
    %1340 = vector.broadcast %cst_242 : f32 to vector<8x4xf32>
    %1341 = arith.mulf %1339, %1340 : vector<8x4xf32>
    %cst_243 = arith.constant -1.98412701E-4 : f32
    %1342 = vector.broadcast %cst_243 : f32 to vector<8x4xf32>
    %1343 = arith.addf %1342, %1341 : vector<8x4xf32>
    %1344 = arith.mulf %1339, %1343 : vector<8x4xf32>
    %cst_244 = arith.constant 0.00833333377 : f32
    %1345 = vector.broadcast %cst_244 : f32 to vector<8x4xf32>
    %1346 = arith.addf %1345, %1344 : vector<8x4xf32>
    %1347 = arith.mulf %1339, %1346 : vector<8x4xf32>
    %cst_245 = arith.constant -0.166666672 : f32
    %1348 = vector.broadcast %cst_245 : f32 to vector<8x4xf32>
    %1349 = arith.addf %1348, %1347 : vector<8x4xf32>
    %1350 = arith.mulf %1339, %1349 : vector<8x4xf32>
    %cst_246 = arith.constant 1.000000e+00 : f32
    %1351 = vector.broadcast %cst_246 : f32 to vector<8x4xf32>
    %1352 = arith.addf %1351, %1350 : vector<8x4xf32>
    %1353 = arith.mulf %1336, %1352 : vector<8x4xf32>
    %cst_247 = arith.constant 2.48015876E-5 : f32
    %1354 = vector.broadcast %cst_247 : f32 to vector<8x4xf32>
    %1355 = arith.mulf %1339, %1354 : vector<8x4xf32>
    %cst_248 = arith.constant -0.00138888892 : f32
    %1356 = vector.broadcast %cst_248 : f32 to vector<8x4xf32>
    %1357 = arith.addf %1356, %1355 : vector<8x4xf32>
    %1358 = arith.mulf %1339, %1357 : vector<8x4xf32>
    %cst_249 = arith.constant 0.0416666679 : f32
    %1359 = vector.broadcast %cst_249 : f32 to vector<8x4xf32>
    %1360 = arith.addf %1359, %1358 : vector<8x4xf32>
    %1361 = arith.mulf %1339, %1360 : vector<8x4xf32>
    %cst_250 = arith.constant -5.000000e-01 : f32
    %1362 = vector.broadcast %cst_250 : f32 to vector<8x4xf32>
    %1363 = arith.addf %1362, %1361 : vector<8x4xf32>
    %1364 = arith.mulf %1339, %1363 : vector<8x4xf32>
    %cst_251 = arith.constant 1.000000e+00 : f32
    %1365 = vector.broadcast %cst_251 : f32 to vector<8x4xf32>
    %1366 = arith.addf %1365, %1364 : vector<8x4xf32>
    %c0_i32_252 = arith.constant 0 : i32
    %1367 = vector.broadcast %c0_i32_252 : i32 to vector<8x4xi32>
    %1368 = arith.cmpi eq, %1338, %1367 : vector<8x4xi32>
    %c1_i32_253 = arith.constant 1 : i32
    %1369 = vector.broadcast %c1_i32_253 : i32 to vector<8x4xi32>
    %1370 = arith.cmpi eq, %1338, %1369 : vector<8x4xi32>
    %c2_i32_254 = arith.constant 2 : i32
    %1371 = vector.broadcast %c2_i32_254 : i32 to vector<8x4xi32>
    %1372 = arith.cmpi eq, %1338, %1371 : vector<8x4xi32>
    %cst_255 = arith.constant 0.000000e+00 : f32
    %1373 = vector.broadcast %cst_255 : f32 to vector<8x4xf32>
    %1374 = arith.subf %1373, %1353 : vector<8x4xf32>
    %cst_256 = arith.constant 0.000000e+00 : f32
    %1375 = vector.broadcast %cst_256 : f32 to vector<8x4xf32>
    %1376 = arith.subf %1375, %1366 : vector<8x4xf32>
    %1377 = arith.select %1372, %1374, %1376 : vector<8x4xi1>, vector<8x4xf32>
    %1378 = arith.select %1370, %1366, %1377 : vector<8x4xi1>, vector<8x4xf32>
    %1379 = arith.select %1368, %1353, %1378 : vector<8x4xi1>, vector<8x4xf32>
    %cst_257 = arith.constant 0.000000e+00 : f32
    %1380 = vector.broadcast %cst_257 : f32 to vector<8x4xf32>
    %1381 = arith.subf %1380, %1353 : vector<8x4xf32>
    %cst_258 = arith.constant 0.000000e+00 : f32
    %1382 = vector.broadcast %cst_258 : f32 to vector<8x4xf32>
    %1383 = arith.subf %1382, %1366 : vector<8x4xf32>
    %1384 = arith.select %1372, %1383, %1353 : vector<8x4xi1>, vector<8x4xf32>
    %1385 = arith.select %1370, %1381, %1384 : vector<8x4xi1>, vector<8x4xf32>
    %1386 = arith.select %1368, %1366, %1385 : vector<8x4xi1>, vector<8x4xf32>
    %cst_259 = arith.constant 0.707106769 : f32
    %1387 = vector.broadcast %cst_259 : f32 to vector<8x4xf32>
    %1388 = arith.mulf %1386, %1387 : vector<8x4xf32>
    %cst_260 = arith.constant 0.000000e+00 : f32
    %1389 = vector.broadcast %cst_260 : f32 to vector<8x4xf32>
    %1390 = arith.subf %1389, %1379 : vector<8x4xf32>
    %cst_261 = arith.constant 0.707106769 : f32
    %1391 = vector.broadcast %cst_261 : f32 to vector<8x4xf32>
    %1392 = arith.mulf %1390, %1391 : vector<8x4xf32>
    %cst_262 = arith.constant 0.707106769 : f32
    %1393 = vector.broadcast %cst_262 : f32 to vector<8x4xf32>
    %1394 = arith.mulf %1386, %1393 : vector<8x4xf32>
    %cst_263 = arith.constant 0.707106769 : f32
    %1395 = vector.broadcast %cst_263 : f32 to vector<8x4xf32>
    %1396 = arith.mulf %1379, %1395 : vector<8x4xf32>
    %1397 = vector.extract_strided_slice %1320 {offsets = [0, 0], sizes = [1, 4], strides = [1, 1]} : vector<8x4xf32> to vector<1x4xf32>
    %1398 = arith.mulf %1397, %1397 : vector<1x4xf32>
    %cst_264 = arith.constant 1.000000e+00 : f32
    %1399 = vector.broadcast %cst_264 : f32 to vector<1x4xf32>
    %1400 = arith.addf %1399, %1398 : vector<1x4xf32>
    %1401 = math.rsqrt %1400 : vector<1x4xf32>
    %cst_265 = arith.constant 1.000000e+00 : f32
    %1402 = vector.broadcast %cst_265 : f32 to vector<1x4xf32>
    %1403 = arith.addf %1402, %1401 : vector<1x4xf32>
    %cst_266 = arith.constant 5.000000e-01 : f32
    %1404 = vector.broadcast %cst_266 : f32 to vector<1x4xf32>
    %1405 = arith.mulf %1404, %1403 : vector<1x4xf32>
    %1406 = math.sqrt %1405 : vector<1x4xf32>
    %cst_267 = arith.constant 0.000000e+00 : f32
    %1407 = vector.broadcast %cst_267 : f32 to vector<1x4xf32>
    %1408 = arith.cmpf oge, %1397, %1407 : vector<1x4xf32>
    %cst_268 = arith.constant 1.000000e+00 : f32
    %cst_269 = arith.constant -1.000000e+00 : f32
    %1409 = vector.broadcast %cst_268 : f32 to vector<1x4xf32>
    %1410 = vector.broadcast %cst_269 : f32 to vector<1x4xf32>
    %1411 = arith.select %1408, %1409, %1410 : vector<1x4xi1>, vector<1x4xf32>
    %cst_270 = arith.constant 1.000000e+00 : f32
    %1412 = vector.broadcast %cst_270 : f32 to vector<1x4xf32>
    %1413 = arith.subf %1412, %1401 : vector<1x4xf32>
    %cst_271 = arith.constant 5.000000e-01 : f32
    %1414 = vector.broadcast %cst_271 : f32 to vector<1x4xf32>
    %1415 = arith.mulf %1414, %1413 : vector<1x4xf32>
    %cst_272 = arith.constant 0.000000e+00 : f32
    %1416 = vector.broadcast %cst_272 : f32 to vector<1x4xf32>
    %1417 = arith.maximumf %1415, %1416 : vector<1x4xf32>
    %1418 = math.sqrt %1417 : vector<1x4xf32>
    %1419 = arith.mulf %1411, %1418 : vector<1x4xf32>
    %1420 = vector.broadcast %1406 : vector<1x4xf32> to vector<8x4xf32>
    %1421 = arith.mulf %1420, %1388 : vector<8x4xf32>
    %1422 = vector.broadcast %1419 : vector<1x4xf32> to vector<8x4xf32>
    %1423 = arith.mulf %1422, %1394 : vector<8x4xf32>
    %1424 = arith.subf %1421, %1423 : vector<8x4xf32>
    %1425 = vector.broadcast %1406 : vector<1x4xf32> to vector<8x4xf32>
    %1426 = arith.mulf %1425, %1392 : vector<8x4xf32>
    %1427 = vector.broadcast %1419 : vector<1x4xf32> to vector<8x4xf32>
    %1428 = arith.mulf %1427, %1396 : vector<8x4xf32>
    %1429 = arith.subf %1426, %1428 : vector<8x4xf32>
    %1430 = vector.broadcast %1419 : vector<1x4xf32> to vector<8x4xf32>
    %1431 = arith.mulf %1430, %1388 : vector<8x4xf32>
    %1432 = vector.broadcast %1406 : vector<1x4xf32> to vector<8x4xf32>
    %1433 = arith.mulf %1432, %1394 : vector<8x4xf32>
    %1434 = arith.addf %1431, %1433 : vector<8x4xf32>
    %1435 = vector.broadcast %1419 : vector<1x4xf32> to vector<8x4xf32>
    %1436 = arith.mulf %1435, %1392 : vector<8x4xf32>
    %1437 = vector.broadcast %1406 : vector<1x4xf32> to vector<8x4xf32>
    %1438 = arith.mulf %1437, %1396 : vector<8x4xf32>
    %1439 = arith.addf %1436, %1438 : vector<8x4xf32>
    %1440 = vector.broadcast %1406 : vector<1x4xf32> to vector<8x4xf32>
    %1441 = arith.mulf %1440, %1424 : vector<8x4xf32>
    %1442 = vector.broadcast %1419 : vector<1x4xf32> to vector<8x4xf32>
    %1443 = arith.mulf %1442, %1429 : vector<8x4xf32>
    %1444 = arith.addf %1441, %1443 : vector<8x4xf32>
    %1445 = vector.broadcast %1406 : vector<1x4xf32> to vector<8x4xf32>
    %1446 = arith.mulf %1445, %1429 : vector<8x4xf32>
    %1447 = vector.broadcast %1419 : vector<1x4xf32> to vector<8x4xf32>
    %1448 = arith.mulf %1447, %1424 : vector<8x4xf32>
    %1449 = arith.subf %1446, %1448 : vector<8x4xf32>
    %1450 = vector.broadcast %1406 : vector<1x4xf32> to vector<8x4xf32>
    %1451 = arith.mulf %1450, %1434 : vector<8x4xf32>
    %1452 = vector.broadcast %1419 : vector<1x4xf32> to vector<8x4xf32>
    %1453 = arith.mulf %1452, %1439 : vector<8x4xf32>
    %1454 = arith.subf %1451, %1453 : vector<8x4xf32>
    %1455 = vector.broadcast %1406 : vector<1x4xf32> to vector<8x4xf32>
    %1456 = arith.mulf %1455, %1439 : vector<8x4xf32>
    %1457 = vector.broadcast %1419 : vector<1x4xf32> to vector<8x4xf32>
    %1458 = arith.mulf %1457, %1434 : vector<8x4xf32>
    %1459 = arith.addf %1456, %1458 : vector<8x4xf32>
    %1460 = vector.extract_strided_slice %1444 {offsets = [0, 0], sizes = [8, 1], strides = [1, 1]} : vector<8x4xf32> to vector<8x1xf32>
    %1461 = vector.extract_strided_slice %1449 {offsets = [0, 0], sizes = [8, 1], strides = [1, 1]} : vector<8x4xf32> to vector<8x1xf32>
    %1462 = vector.extract_strided_slice %1454 {offsets = [0, 0], sizes = [8, 1], strides = [1, 1]} : vector<8x4xf32> to vector<8x1xf32>
    %1463 = arith.subf %1462, %1460 : vector<8x1xf32>
    %1464 = vector.broadcast %1463 : vector<8x1xf32> to vector<8x16xf32>
    %1465 = vector.broadcast %12 : vector<1x16xf32> to vector<8x16xf32>
    %1466 = arith.mulf %1464, %1465 : vector<8x16xf32>
    %1467 = vector.broadcast %1460 : vector<8x1xf32> to vector<8x16xf32>
    %1468 = arith.addf %1467, %1466 : vector<8x16xf32>
    %1469 = vector.extract_strided_slice %1459 {offsets = [0, 0], sizes = [8, 1], strides = [1, 1]} : vector<8x4xf32> to vector<8x1xf32>
    %1470 = arith.subf %1469, %1461 : vector<8x1xf32>
    %1471 = vector.broadcast %1470 : vector<8x1xf32> to vector<8x16xf32>
    %1472 = vector.broadcast %12 : vector<1x16xf32> to vector<8x16xf32>
    %1473 = arith.mulf %1471, %1472 : vector<8x16xf32>
    %1474 = vector.broadcast %1461 : vector<8x1xf32> to vector<8x16xf32>
    %1475 = arith.addf %1474, %1473 : vector<8x16xf32>
    %1476 = vector.extract_strided_slice %1444 {offsets = [0, 1], sizes = [8, 1], strides = [1, 1]} : vector<8x4xf32> to vector<8x1xf32>
    %1477 = vector.extract_strided_slice %1449 {offsets = [0, 1], sizes = [8, 1], strides = [1, 1]} : vector<8x4xf32> to vector<8x1xf32>
    %1478 = vector.extract_strided_slice %1454 {offsets = [0, 1], sizes = [8, 1], strides = [1, 1]} : vector<8x4xf32> to vector<8x1xf32>
    %1479 = arith.subf %1478, %1476 : vector<8x1xf32>
    %1480 = vector.broadcast %1479 : vector<8x1xf32> to vector<8x16xf32>
    %1481 = vector.broadcast %13 : vector<1x16xf32> to vector<8x16xf32>
    %1482 = arith.mulf %1480, %1481 : vector<8x16xf32>
    %1483 = vector.broadcast %1476 : vector<8x1xf32> to vector<8x16xf32>
    %1484 = arith.addf %1483, %1482 : vector<8x16xf32>
    %1485 = vector.extract_strided_slice %1459 {offsets = [0, 1], sizes = [8, 1], strides = [1, 1]} : vector<8x4xf32> to vector<8x1xf32>
    %1486 = arith.subf %1485, %1477 : vector<8x1xf32>
    %1487 = vector.broadcast %1486 : vector<8x1xf32> to vector<8x16xf32>
    %1488 = vector.broadcast %13 : vector<1x16xf32> to vector<8x16xf32>
    %1489 = arith.mulf %1487, %1488 : vector<8x16xf32>
    %1490 = vector.broadcast %1477 : vector<8x1xf32> to vector<8x16xf32>
    %1491 = arith.addf %1490, %1489 : vector<8x16xf32>
    %1492 = arith.mulf %1468, %1484 : vector<8x16xf32>
    %1493 = arith.mulf %1475, %1491 : vector<8x16xf32>
    %1494 = arith.subf %1492, %1493 : vector<8x16xf32>
    %1495 = arith.mulf %1468, %1491 : vector<8x16xf32>
    %1496 = arith.mulf %1475, %1484 : vector<8x16xf32>
    %1497 = arith.addf %1495, %1496 : vector<8x16xf32>
    %1498 = vector.extract_strided_slice %1444 {offsets = [0, 2], sizes = [8, 1], strides = [1, 1]} : vector<8x4xf32> to vector<8x1xf32>
    %1499 = vector.extract_strided_slice %1449 {offsets = [0, 2], sizes = [8, 1], strides = [1, 1]} : vector<8x4xf32> to vector<8x1xf32>
    %1500 = vector.extract_strided_slice %1454 {offsets = [0, 2], sizes = [8, 1], strides = [1, 1]} : vector<8x4xf32> to vector<8x1xf32>
    %1501 = arith.subf %1500, %1498 : vector<8x1xf32>
    %1502 = vector.broadcast %1501 : vector<8x1xf32> to vector<8x16xf32>
    %1503 = vector.broadcast %14 : vector<1x16xf32> to vector<8x16xf32>
    %1504 = arith.mulf %1502, %1503 : vector<8x16xf32>
    %1505 = vector.broadcast %1498 : vector<8x1xf32> to vector<8x16xf32>
    %1506 = arith.addf %1505, %1504 : vector<8x16xf32>
    %1507 = vector.extract_strided_slice %1459 {offsets = [0, 2], sizes = [8, 1], strides = [1, 1]} : vector<8x4xf32> to vector<8x1xf32>
    %1508 = arith.subf %1507, %1499 : vector<8x1xf32>
    %1509 = vector.broadcast %1508 : vector<8x1xf32> to vector<8x16xf32>
    %1510 = vector.broadcast %14 : vector<1x16xf32> to vector<8x16xf32>
    %1511 = arith.mulf %1509, %1510 : vector<8x16xf32>
    %1512 = vector.broadcast %1499 : vector<8x1xf32> to vector<8x16xf32>
    %1513 = arith.addf %1512, %1511 : vector<8x16xf32>
    %1514 = arith.mulf %1494, %1506 : vector<8x16xf32>
    %1515 = arith.mulf %1497, %1513 : vector<8x16xf32>
    %1516 = arith.subf %1514, %1515 : vector<8x16xf32>
    %1517 = arith.mulf %1494, %1513 : vector<8x16xf32>
    %1518 = arith.mulf %1497, %1506 : vector<8x16xf32>
    %1519 = arith.addf %1517, %1518 : vector<8x16xf32>
    %1520 = vector.extract_strided_slice %1444 {offsets = [0, 3], sizes = [8, 1], strides = [1, 1]} : vector<8x4xf32> to vector<8x1xf32>
    %1521 = vector.extract_strided_slice %1449 {offsets = [0, 3], sizes = [8, 1], strides = [1, 1]} : vector<8x4xf32> to vector<8x1xf32>
    %1522 = vector.extract_strided_slice %1454 {offsets = [0, 3], sizes = [8, 1], strides = [1, 1]} : vector<8x4xf32> to vector<8x1xf32>
    %1523 = arith.subf %1522, %1520 : vector<8x1xf32>
    %1524 = vector.broadcast %1523 : vector<8x1xf32> to vector<8x16xf32>
    %1525 = vector.broadcast %15 : vector<1x16xf32> to vector<8x16xf32>
    %1526 = arith.mulf %1524, %1525 : vector<8x16xf32>
    %1527 = vector.broadcast %1520 : vector<8x1xf32> to vector<8x16xf32>
    %1528 = arith.addf %1527, %1526 : vector<8x16xf32>
    %1529 = vector.extract_strided_slice %1459 {offsets = [0, 3], sizes = [8, 1], strides = [1, 1]} : vector<8x4xf32> to vector<8x1xf32>
    %1530 = arith.subf %1529, %1521 : vector<8x1xf32>
    %1531 = vector.broadcast %1530 : vector<8x1xf32> to vector<8x16xf32>
    %1532 = vector.broadcast %15 : vector<1x16xf32> to vector<8x16xf32>
    %1533 = arith.mulf %1531, %1532 : vector<8x16xf32>
    %1534 = vector.broadcast %1521 : vector<8x1xf32> to vector<8x16xf32>
    %1535 = arith.addf %1534, %1533 : vector<8x16xf32>
    %1536 = arith.mulf %1516, %1528 : vector<8x16xf32>
    %1537 = arith.mulf %1519, %1535 : vector<8x16xf32>
    %1538 = arith.subf %1536, %1537 : vector<8x16xf32>
    %1539 = arith.mulf %1516, %1535 : vector<8x16xf32>
    %1540 = arith.mulf %1519, %1528 : vector<8x16xf32>
    %1541 = arith.addf %1539, %1540 : vector<8x16xf32>
    %cst_273 = arith.constant dense<0.000000e+00> : vector<8x128xf32>
    %1542 = tpu.matmul %1538, %7, %cst_273 {dimension_numbers = #tpu.dot_dimension_numbers<[1], [0], [0], [1], [0, 0, 1, 1], [], []>} : vector<8x16xf32>, vector<16x128xf32>, vector<8x128xf32> -> vector<8x128xf32>
    %cst_274 = arith.constant dense<0.000000e+00> : vector<8x128xf32>
    %1543 = tpu.matmul %1541, %8, %cst_274 {dimension_numbers = #tpu.dot_dimension_numbers<[1], [0], [0], [1], [0, 0, 1, 1], [], []>} : vector<8x16xf32>, vector<16x128xf32>, vector<8x128xf32> -> vector<8x128xf32>
    %1544 = arith.addf %1542, %1543 : vector<8x128xf32>
    %1545 = vector.extract_strided_slice %1544 {offsets = [0, 0], sizes = [8, 64], strides = [1, 1]} : vector<8x128xf32> to vector<8x64xf32>
    %1546 = vector.extract_strided_slice %1544 {offsets = [0, 64], sizes = [8, 64], strides = [1, 1]} : vector<8x128xf32> to vector<8x64xf32>
    %1547 = arith.mulf %1545, %1545 : vector<8x64xf32>
    %1548 = arith.mulf %1546, %1546 : vector<8x64xf32>
    %1549 = arith.addf %1547, %1548 : vector<8x64xf32>
    %cst_275 = arith.constant dense<0.000000e+00> : vector<8x128xf32>
    %1550 = tpu.matmul %1549, %9, %cst_275 {dimension_numbers = #tpu.dot_dimension_numbers<[1], [0], [0], [1], [0, 0, 1, 1], [], []>} : vector<8x64xf32>, vector<64x128xf32>, vector<8x128xf32> -> vector<8x128xf32>
    %1551 = vector.broadcast %10 : vector<1x128xf32> to vector<8x128xf32>
    %1552 = arith.addf %1550, %1551 : vector<8x128xf32>
    %1553 = vector.extract_strided_slice %1552 {offsets = [0, 0], sizes = [8, 32], strides = [1, 1]} : vector<8x128xf32> to vector<8x32xf32>
    %1554 = arith.negf %1553 : vector<8x32xf32>
    %1555 = math.exp %1554 : vector<8x32xf32>
    %cst_276 = arith.constant 1.000000e+00 : f32
    %1556 = vector.broadcast %cst_276 : f32 to vector<8x32xf32>
    %1557 = arith.addf %1556, %1555 : vector<8x32xf32>
    %1558 = arith.divf %1556, %1557 : vector<8x32xf32>
    %1559 = vector.extract_strided_slice %1552 {offsets = [0, 32], sizes = [8, 32], strides = [1, 1]} : vector<8x128xf32> to vector<8x32xf32>
    %1560 = arith.negf %1559 : vector<8x32xf32>
    %1561 = math.exp %1560 : vector<8x32xf32>
    %cst_277 = arith.constant 1.000000e+00 : f32
    %1562 = vector.broadcast %cst_277 : f32 to vector<8x32xf32>
    %1563 = arith.addf %1562, %1561 : vector<8x32xf32>
    %1564 = arith.divf %1562, %1563 : vector<8x32xf32>
    %1565 = vector.extract_strided_slice %1552 {offsets = [0, 64], sizes = [8, 32], strides = [1, 1]} : vector<8x128xf32> to vector<8x32xf32>
    %1566 = math.tanh %1565 : vector<8x32xf32>
    %1567 = vector.extract_strided_slice %1552 {offsets = [0, 96], sizes = [8, 32], strides = [1, 1]} : vector<8x128xf32> to vector<8x32xf32>
    %1568 = arith.negf %1567 : vector<8x32xf32>
    %1569 = math.exp %1568 : vector<8x32xf32>
    %cst_278 = arith.constant 1.000000e+00 : f32
    %1570 = vector.broadcast %cst_278 : f32 to vector<8x32xf32>
    %1571 = arith.addf %1570, %1569 : vector<8x32xf32>
    %1572 = arith.divf %1570, %1571 : vector<8x32xf32>
    %1573 = arith.mulf %1558, %1315 : vector<8x32xf32>
    %1574 = arith.mulf %1564, %1566 : vector<8x32xf32>
    %1575 = arith.addf %1573, %1574 : vector<8x32xf32>
    %1576 = math.tanh %1575 : vector<8x32xf32>
    %1577 = arith.mulf %1572, %1576 : vector<8x32xf32>
    %cst_279 = arith.constant dense<0.000000e+00> : vector<8x4xf32>
    %1578 = tpu.matmul %1577, %6, %cst_279 {dimension_numbers = #tpu.dot_dimension_numbers<[1], [0], [0], [1], [0, 0, 1, 1], [], []>} : vector<8x32xf32>, vector<32x4xf32>, vector<8x4xf32> -> vector<8x4xf32>
    %1579 = vector.extract_strided_slice %5 {offsets = [48, 0], sizes = [8, 4], strides = [1, 1]} : vector<64x4xf32> to vector<8x4xf32>
    %1580 = arith.addf %1578, %1579 : vector<8x4xf32>
    %cst_280 = arith.constant 5.000000e-01 : f32
    %1581 = vector.broadcast %cst_280 : f32 to vector<8x4xf32>
    %1582 = arith.mulf %1581, %1580 : vector<8x4xf32>
    %cst_281 = arith.constant 0.636619746 : f32
    %1583 = vector.broadcast %cst_281 : f32 to vector<8x4xf32>
    %1584 = arith.mulf %1582, %1583 : vector<8x4xf32>
    %cst_282 = arith.constant 5.000000e-01 : f32
    %1585 = vector.broadcast %cst_282 : f32 to vector<8x4xf32>
    %1586 = arith.addf %1584, %1585 : vector<8x4xf32>
    %1587 = arith.fptosi %1586 : vector<8x4xf32> to vector<8x4xi32>
    %1588 = arith.sitofp %1587 : vector<8x4xi32> to vector<8x4xf32>
    %1589 = arith.cmpf olt, %1586, %1588 : vector<8x4xf32>
    %c1_i32_283 = arith.constant 1 : i32
    %1590 = vector.broadcast %c1_i32_283 : i32 to vector<8x4xi32>
    %1591 = arith.subi %1587, %1590 : vector<8x4xi32>
    %1592 = arith.select %1589, %1591, %1587 : vector<8x4xi1>, vector<8x4xi32>
    %1593 = arith.sitofp %1592 : vector<8x4xi32> to vector<8x4xf32>
    %cst_284 = arith.constant 1.57079637 : f32
    %1594 = vector.broadcast %cst_284 : f32 to vector<8x4xf32>
    %1595 = arith.mulf %1593, %1594 : vector<8x4xf32>
    %1596 = arith.subf %1582, %1595 : vector<8x4xf32>
    %c3_i32_285 = arith.constant 3 : i32
    %1597 = vector.broadcast %c3_i32_285 : i32 to vector<8x4xi32>
    %1598 = arith.andi %1592, %1597 : vector<8x4xi32>
    %1599 = arith.mulf %1596, %1596 : vector<8x4xf32>
    %cst_286 = arith.constant 2.75573188E-6 : f32
    %1600 = vector.broadcast %cst_286 : f32 to vector<8x4xf32>
    %1601 = arith.mulf %1599, %1600 : vector<8x4xf32>
    %cst_287 = arith.constant -1.98412701E-4 : f32
    %1602 = vector.broadcast %cst_287 : f32 to vector<8x4xf32>
    %1603 = arith.addf %1602, %1601 : vector<8x4xf32>
    %1604 = arith.mulf %1599, %1603 : vector<8x4xf32>
    %cst_288 = arith.constant 0.00833333377 : f32
    %1605 = vector.broadcast %cst_288 : f32 to vector<8x4xf32>
    %1606 = arith.addf %1605, %1604 : vector<8x4xf32>
    %1607 = arith.mulf %1599, %1606 : vector<8x4xf32>
    %cst_289 = arith.constant -0.166666672 : f32
    %1608 = vector.broadcast %cst_289 : f32 to vector<8x4xf32>
    %1609 = arith.addf %1608, %1607 : vector<8x4xf32>
    %1610 = arith.mulf %1599, %1609 : vector<8x4xf32>
    %cst_290 = arith.constant 1.000000e+00 : f32
    %1611 = vector.broadcast %cst_290 : f32 to vector<8x4xf32>
    %1612 = arith.addf %1611, %1610 : vector<8x4xf32>
    %1613 = arith.mulf %1596, %1612 : vector<8x4xf32>
    %cst_291 = arith.constant 2.48015876E-5 : f32
    %1614 = vector.broadcast %cst_291 : f32 to vector<8x4xf32>
    %1615 = arith.mulf %1599, %1614 : vector<8x4xf32>
    %cst_292 = arith.constant -0.00138888892 : f32
    %1616 = vector.broadcast %cst_292 : f32 to vector<8x4xf32>
    %1617 = arith.addf %1616, %1615 : vector<8x4xf32>
    %1618 = arith.mulf %1599, %1617 : vector<8x4xf32>
    %cst_293 = arith.constant 0.0416666679 : f32
    %1619 = vector.broadcast %cst_293 : f32 to vector<8x4xf32>
    %1620 = arith.addf %1619, %1618 : vector<8x4xf32>
    %1621 = arith.mulf %1599, %1620 : vector<8x4xf32>
    %cst_294 = arith.constant -5.000000e-01 : f32
    %1622 = vector.broadcast %cst_294 : f32 to vector<8x4xf32>
    %1623 = arith.addf %1622, %1621 : vector<8x4xf32>
    %1624 = arith.mulf %1599, %1623 : vector<8x4xf32>
    %cst_295 = arith.constant 1.000000e+00 : f32
    %1625 = vector.broadcast %cst_295 : f32 to vector<8x4xf32>
    %1626 = arith.addf %1625, %1624 : vector<8x4xf32>
    %c0_i32_296 = arith.constant 0 : i32
    %1627 = vector.broadcast %c0_i32_296 : i32 to vector<8x4xi32>
    %1628 = arith.cmpi eq, %1598, %1627 : vector<8x4xi32>
    %c1_i32_297 = arith.constant 1 : i32
    %1629 = vector.broadcast %c1_i32_297 : i32 to vector<8x4xi32>
    %1630 = arith.cmpi eq, %1598, %1629 : vector<8x4xi32>
    %c2_i32_298 = arith.constant 2 : i32
    %1631 = vector.broadcast %c2_i32_298 : i32 to vector<8x4xi32>
    %1632 = arith.cmpi eq, %1598, %1631 : vector<8x4xi32>
    %cst_299 = arith.constant 0.000000e+00 : f32
    %1633 = vector.broadcast %cst_299 : f32 to vector<8x4xf32>
    %1634 = arith.subf %1633, %1613 : vector<8x4xf32>
    %cst_300 = arith.constant 0.000000e+00 : f32
    %1635 = vector.broadcast %cst_300 : f32 to vector<8x4xf32>
    %1636 = arith.subf %1635, %1626 : vector<8x4xf32>
    %1637 = arith.select %1632, %1634, %1636 : vector<8x4xi1>, vector<8x4xf32>
    %1638 = arith.select %1630, %1626, %1637 : vector<8x4xi1>, vector<8x4xf32>
    %1639 = arith.select %1628, %1613, %1638 : vector<8x4xi1>, vector<8x4xf32>
    %cst_301 = arith.constant 0.000000e+00 : f32
    %1640 = vector.broadcast %cst_301 : f32 to vector<8x4xf32>
    %1641 = arith.subf %1640, %1613 : vector<8x4xf32>
    %cst_302 = arith.constant 0.000000e+00 : f32
    %1642 = vector.broadcast %cst_302 : f32 to vector<8x4xf32>
    %1643 = arith.subf %1642, %1626 : vector<8x4xf32>
    %1644 = arith.select %1632, %1643, %1613 : vector<8x4xi1>, vector<8x4xf32>
    %1645 = arith.select %1630, %1641, %1644 : vector<8x4xi1>, vector<8x4xf32>
    %1646 = arith.select %1628, %1626, %1645 : vector<8x4xi1>, vector<8x4xf32>
    %cst_303 = arith.constant 0.707106769 : f32
    %1647 = vector.broadcast %cst_303 : f32 to vector<8x4xf32>
    %1648 = arith.mulf %1646, %1647 : vector<8x4xf32>
    %cst_304 = arith.constant 0.000000e+00 : f32
    %1649 = vector.broadcast %cst_304 : f32 to vector<8x4xf32>
    %1650 = arith.subf %1649, %1639 : vector<8x4xf32>
    %cst_305 = arith.constant 0.707106769 : f32
    %1651 = vector.broadcast %cst_305 : f32 to vector<8x4xf32>
    %1652 = arith.mulf %1650, %1651 : vector<8x4xf32>
    %cst_306 = arith.constant 0.707106769 : f32
    %1653 = vector.broadcast %cst_306 : f32 to vector<8x4xf32>
    %1654 = arith.mulf %1646, %1653 : vector<8x4xf32>
    %cst_307 = arith.constant 0.707106769 : f32
    %1655 = vector.broadcast %cst_307 : f32 to vector<8x4xf32>
    %1656 = arith.mulf %1639, %1655 : vector<8x4xf32>
    %1657 = vector.extract_strided_slice %1580 {offsets = [0, 0], sizes = [1, 4], strides = [1, 1]} : vector<8x4xf32> to vector<1x4xf32>
    %1658 = arith.mulf %1657, %1657 : vector<1x4xf32>
    %cst_308 = arith.constant 1.000000e+00 : f32
    %1659 = vector.broadcast %cst_308 : f32 to vector<1x4xf32>
    %1660 = arith.addf %1659, %1658 : vector<1x4xf32>
    %1661 = math.rsqrt %1660 : vector<1x4xf32>
    %cst_309 = arith.constant 1.000000e+00 : f32
    %1662 = vector.broadcast %cst_309 : f32 to vector<1x4xf32>
    %1663 = arith.addf %1662, %1661 : vector<1x4xf32>
    %cst_310 = arith.constant 5.000000e-01 : f32
    %1664 = vector.broadcast %cst_310 : f32 to vector<1x4xf32>
    %1665 = arith.mulf %1664, %1663 : vector<1x4xf32>
    %1666 = math.sqrt %1665 : vector<1x4xf32>
    %cst_311 = arith.constant 0.000000e+00 : f32
    %1667 = vector.broadcast %cst_311 : f32 to vector<1x4xf32>
    %1668 = arith.cmpf oge, %1657, %1667 : vector<1x4xf32>
    %cst_312 = arith.constant 1.000000e+00 : f32
    %cst_313 = arith.constant -1.000000e+00 : f32
    %1669 = vector.broadcast %cst_312 : f32 to vector<1x4xf32>
    %1670 = vector.broadcast %cst_313 : f32 to vector<1x4xf32>
    %1671 = arith.select %1668, %1669, %1670 : vector<1x4xi1>, vector<1x4xf32>
    %cst_314 = arith.constant 1.000000e+00 : f32
    %1672 = vector.broadcast %cst_314 : f32 to vector<1x4xf32>
    %1673 = arith.subf %1672, %1661 : vector<1x4xf32>
    %cst_315 = arith.constant 5.000000e-01 : f32
    %1674 = vector.broadcast %cst_315 : f32 to vector<1x4xf32>
    %1675 = arith.mulf %1674, %1673 : vector<1x4xf32>
    %cst_316 = arith.constant 0.000000e+00 : f32
    %1676 = vector.broadcast %cst_316 : f32 to vector<1x4xf32>
    %1677 = arith.maximumf %1675, %1676 : vector<1x4xf32>
    %1678 = math.sqrt %1677 : vector<1x4xf32>
    %1679 = arith.mulf %1671, %1678 : vector<1x4xf32>
    %1680 = vector.broadcast %1666 : vector<1x4xf32> to vector<8x4xf32>
    %1681 = arith.mulf %1680, %1648 : vector<8x4xf32>
    %1682 = vector.broadcast %1679 : vector<1x4xf32> to vector<8x4xf32>
    %1683 = arith.mulf %1682, %1654 : vector<8x4xf32>
    %1684 = arith.subf %1681, %1683 : vector<8x4xf32>
    %1685 = vector.broadcast %1666 : vector<1x4xf32> to vector<8x4xf32>
    %1686 = arith.mulf %1685, %1652 : vector<8x4xf32>
    %1687 = vector.broadcast %1679 : vector<1x4xf32> to vector<8x4xf32>
    %1688 = arith.mulf %1687, %1656 : vector<8x4xf32>
    %1689 = arith.subf %1686, %1688 : vector<8x4xf32>
    %1690 = vector.broadcast %1679 : vector<1x4xf32> to vector<8x4xf32>
    %1691 = arith.mulf %1690, %1648 : vector<8x4xf32>
    %1692 = vector.broadcast %1666 : vector<1x4xf32> to vector<8x4xf32>
    %1693 = arith.mulf %1692, %1654 : vector<8x4xf32>
    %1694 = arith.addf %1691, %1693 : vector<8x4xf32>
    %1695 = vector.broadcast %1679 : vector<1x4xf32> to vector<8x4xf32>
    %1696 = arith.mulf %1695, %1652 : vector<8x4xf32>
    %1697 = vector.broadcast %1666 : vector<1x4xf32> to vector<8x4xf32>
    %1698 = arith.mulf %1697, %1656 : vector<8x4xf32>
    %1699 = arith.addf %1696, %1698 : vector<8x4xf32>
    %1700 = vector.broadcast %1666 : vector<1x4xf32> to vector<8x4xf32>
    %1701 = arith.mulf %1700, %1684 : vector<8x4xf32>
    %1702 = vector.broadcast %1679 : vector<1x4xf32> to vector<8x4xf32>
    %1703 = arith.mulf %1702, %1689 : vector<8x4xf32>
    %1704 = arith.addf %1701, %1703 : vector<8x4xf32>
    %1705 = vector.broadcast %1666 : vector<1x4xf32> to vector<8x4xf32>
    %1706 = arith.mulf %1705, %1689 : vector<8x4xf32>
    %1707 = vector.broadcast %1679 : vector<1x4xf32> to vector<8x4xf32>
    %1708 = arith.mulf %1707, %1684 : vector<8x4xf32>
    %1709 = arith.subf %1706, %1708 : vector<8x4xf32>
    %1710 = vector.broadcast %1666 : vector<1x4xf32> to vector<8x4xf32>
    %1711 = arith.mulf %1710, %1694 : vector<8x4xf32>
    %1712 = vector.broadcast %1679 : vector<1x4xf32> to vector<8x4xf32>
    %1713 = arith.mulf %1712, %1699 : vector<8x4xf32>
    %1714 = arith.subf %1711, %1713 : vector<8x4xf32>
    %1715 = vector.broadcast %1666 : vector<1x4xf32> to vector<8x4xf32>
    %1716 = arith.mulf %1715, %1699 : vector<8x4xf32>
    %1717 = vector.broadcast %1679 : vector<1x4xf32> to vector<8x4xf32>
    %1718 = arith.mulf %1717, %1694 : vector<8x4xf32>
    %1719 = arith.addf %1716, %1718 : vector<8x4xf32>
    %1720 = vector.extract_strided_slice %1704 {offsets = [0, 0], sizes = [8, 1], strides = [1, 1]} : vector<8x4xf32> to vector<8x1xf32>
    %1721 = vector.extract_strided_slice %1709 {offsets = [0, 0], sizes = [8, 1], strides = [1, 1]} : vector<8x4xf32> to vector<8x1xf32>
    %1722 = vector.extract_strided_slice %1714 {offsets = [0, 0], sizes = [8, 1], strides = [1, 1]} : vector<8x4xf32> to vector<8x1xf32>
    %1723 = arith.subf %1722, %1720 : vector<8x1xf32>
    %1724 = vector.broadcast %1723 : vector<8x1xf32> to vector<8x16xf32>
    %1725 = vector.broadcast %12 : vector<1x16xf32> to vector<8x16xf32>
    %1726 = arith.mulf %1724, %1725 : vector<8x16xf32>
    %1727 = vector.broadcast %1720 : vector<8x1xf32> to vector<8x16xf32>
    %1728 = arith.addf %1727, %1726 : vector<8x16xf32>
    %1729 = vector.extract_strided_slice %1719 {offsets = [0, 0], sizes = [8, 1], strides = [1, 1]} : vector<8x4xf32> to vector<8x1xf32>
    %1730 = arith.subf %1729, %1721 : vector<8x1xf32>
    %1731 = vector.broadcast %1730 : vector<8x1xf32> to vector<8x16xf32>
    %1732 = vector.broadcast %12 : vector<1x16xf32> to vector<8x16xf32>
    %1733 = arith.mulf %1731, %1732 : vector<8x16xf32>
    %1734 = vector.broadcast %1721 : vector<8x1xf32> to vector<8x16xf32>
    %1735 = arith.addf %1734, %1733 : vector<8x16xf32>
    %1736 = vector.extract_strided_slice %1704 {offsets = [0, 1], sizes = [8, 1], strides = [1, 1]} : vector<8x4xf32> to vector<8x1xf32>
    %1737 = vector.extract_strided_slice %1709 {offsets = [0, 1], sizes = [8, 1], strides = [1, 1]} : vector<8x4xf32> to vector<8x1xf32>
    %1738 = vector.extract_strided_slice %1714 {offsets = [0, 1], sizes = [8, 1], strides = [1, 1]} : vector<8x4xf32> to vector<8x1xf32>
    %1739 = arith.subf %1738, %1736 : vector<8x1xf32>
    %1740 = vector.broadcast %1739 : vector<8x1xf32> to vector<8x16xf32>
    %1741 = vector.broadcast %13 : vector<1x16xf32> to vector<8x16xf32>
    %1742 = arith.mulf %1740, %1741 : vector<8x16xf32>
    %1743 = vector.broadcast %1736 : vector<8x1xf32> to vector<8x16xf32>
    %1744 = arith.addf %1743, %1742 : vector<8x16xf32>
    %1745 = vector.extract_strided_slice %1719 {offsets = [0, 1], sizes = [8, 1], strides = [1, 1]} : vector<8x4xf32> to vector<8x1xf32>
    %1746 = arith.subf %1745, %1737 : vector<8x1xf32>
    %1747 = vector.broadcast %1746 : vector<8x1xf32> to vector<8x16xf32>
    %1748 = vector.broadcast %13 : vector<1x16xf32> to vector<8x16xf32>
    %1749 = arith.mulf %1747, %1748 : vector<8x16xf32>
    %1750 = vector.broadcast %1737 : vector<8x1xf32> to vector<8x16xf32>
    %1751 = arith.addf %1750, %1749 : vector<8x16xf32>
    %1752 = arith.mulf %1728, %1744 : vector<8x16xf32>
    %1753 = arith.mulf %1735, %1751 : vector<8x16xf32>
    %1754 = arith.subf %1752, %1753 : vector<8x16xf32>
    %1755 = arith.mulf %1728, %1751 : vector<8x16xf32>
    %1756 = arith.mulf %1735, %1744 : vector<8x16xf32>
    %1757 = arith.addf %1755, %1756 : vector<8x16xf32>
    %1758 = vector.extract_strided_slice %1704 {offsets = [0, 2], sizes = [8, 1], strides = [1, 1]} : vector<8x4xf32> to vector<8x1xf32>
    %1759 = vector.extract_strided_slice %1709 {offsets = [0, 2], sizes = [8, 1], strides = [1, 1]} : vector<8x4xf32> to vector<8x1xf32>
    %1760 = vector.extract_strided_slice %1714 {offsets = [0, 2], sizes = [8, 1], strides = [1, 1]} : vector<8x4xf32> to vector<8x1xf32>
    %1761 = arith.subf %1760, %1758 : vector<8x1xf32>
    %1762 = vector.broadcast %1761 : vector<8x1xf32> to vector<8x16xf32>
    %1763 = vector.broadcast %14 : vector<1x16xf32> to vector<8x16xf32>
    %1764 = arith.mulf %1762, %1763 : vector<8x16xf32>
    %1765 = vector.broadcast %1758 : vector<8x1xf32> to vector<8x16xf32>
    %1766 = arith.addf %1765, %1764 : vector<8x16xf32>
    %1767 = vector.extract_strided_slice %1719 {offsets = [0, 2], sizes = [8, 1], strides = [1, 1]} : vector<8x4xf32> to vector<8x1xf32>
    %1768 = arith.subf %1767, %1759 : vector<8x1xf32>
    %1769 = vector.broadcast %1768 : vector<8x1xf32> to vector<8x16xf32>
    %1770 = vector.broadcast %14 : vector<1x16xf32> to vector<8x16xf32>
    %1771 = arith.mulf %1769, %1770 : vector<8x16xf32>
    %1772 = vector.broadcast %1759 : vector<8x1xf32> to vector<8x16xf32>
    %1773 = arith.addf %1772, %1771 : vector<8x16xf32>
    %1774 = arith.mulf %1754, %1766 : vector<8x16xf32>
    %1775 = arith.mulf %1757, %1773 : vector<8x16xf32>
    %1776 = arith.subf %1774, %1775 : vector<8x16xf32>
    %1777 = arith.mulf %1754, %1773 : vector<8x16xf32>
    %1778 = arith.mulf %1757, %1766 : vector<8x16xf32>
    %1779 = arith.addf %1777, %1778 : vector<8x16xf32>
    %1780 = vector.extract_strided_slice %1704 {offsets = [0, 3], sizes = [8, 1], strides = [1, 1]} : vector<8x4xf32> to vector<8x1xf32>
    %1781 = vector.extract_strided_slice %1709 {offsets = [0, 3], sizes = [8, 1], strides = [1, 1]} : vector<8x4xf32> to vector<8x1xf32>
    %1782 = vector.extract_strided_slice %1714 {offsets = [0, 3], sizes = [8, 1], strides = [1, 1]} : vector<8x4xf32> to vector<8x1xf32>
    %1783 = arith.subf %1782, %1780 : vector<8x1xf32>
    %1784 = vector.broadcast %1783 : vector<8x1xf32> to vector<8x16xf32>
    %1785 = vector.broadcast %15 : vector<1x16xf32> to vector<8x16xf32>
    %1786 = arith.mulf %1784, %1785 : vector<8x16xf32>
    %1787 = vector.broadcast %1780 : vector<8x1xf32> to vector<8x16xf32>
    %1788 = arith.addf %1787, %1786 : vector<8x16xf32>
    %1789 = vector.extract_strided_slice %1719 {offsets = [0, 3], sizes = [8, 1], strides = [1, 1]} : vector<8x4xf32> to vector<8x1xf32>
    %1790 = arith.subf %1789, %1781 : vector<8x1xf32>
    %1791 = vector.broadcast %1790 : vector<8x1xf32> to vector<8x16xf32>
    %1792 = vector.broadcast %15 : vector<1x16xf32> to vector<8x16xf32>
    %1793 = arith.mulf %1791, %1792 : vector<8x16xf32>
    %1794 = vector.broadcast %1781 : vector<8x1xf32> to vector<8x16xf32>
    %1795 = arith.addf %1794, %1793 : vector<8x16xf32>
    %1796 = arith.mulf %1776, %1788 : vector<8x16xf32>
    %1797 = arith.mulf %1779, %1795 : vector<8x16xf32>
    %1798 = arith.subf %1796, %1797 : vector<8x16xf32>
    %1799 = arith.mulf %1776, %1795 : vector<8x16xf32>
    %1800 = arith.mulf %1779, %1788 : vector<8x16xf32>
    %1801 = arith.addf %1799, %1800 : vector<8x16xf32>
    %cst_317 = arith.constant dense<0.000000e+00> : vector<8x128xf32>
    %1802 = tpu.matmul %1798, %7, %cst_317 {dimension_numbers = #tpu.dot_dimension_numbers<[1], [0], [0], [1], [0, 0, 1, 1], [], []>} : vector<8x16xf32>, vector<16x128xf32>, vector<8x128xf32> -> vector<8x128xf32>
    %cst_318 = arith.constant dense<0.000000e+00> : vector<8x128xf32>
    %1803 = tpu.matmul %1801, %8, %cst_318 {dimension_numbers = #tpu.dot_dimension_numbers<[1], [0], [0], [1], [0, 0, 1, 1], [], []>} : vector<8x16xf32>, vector<16x128xf32>, vector<8x128xf32> -> vector<8x128xf32>
    %1804 = arith.addf %1802, %1803 : vector<8x128xf32>
    %1805 = vector.extract_strided_slice %1804 {offsets = [0, 0], sizes = [8, 64], strides = [1, 1]} : vector<8x128xf32> to vector<8x64xf32>
    %1806 = vector.extract_strided_slice %1804 {offsets = [0, 64], sizes = [8, 64], strides = [1, 1]} : vector<8x128xf32> to vector<8x64xf32>
    %1807 = arith.mulf %1805, %1805 : vector<8x64xf32>
    %1808 = arith.mulf %1806, %1806 : vector<8x64xf32>
    %1809 = arith.addf %1807, %1808 : vector<8x64xf32>
    %cst_319 = arith.constant dense<0.000000e+00> : vector<8x128xf32>
    %1810 = tpu.matmul %1809, %9, %cst_319 {dimension_numbers = #tpu.dot_dimension_numbers<[1], [0], [0], [1], [0, 0, 1, 1], [], []>} : vector<8x64xf32>, vector<64x128xf32>, vector<8x128xf32> -> vector<8x128xf32>
    %1811 = vector.broadcast %10 : vector<1x128xf32> to vector<8x128xf32>
    %1812 = arith.addf %1810, %1811 : vector<8x128xf32>
    %1813 = vector.extract_strided_slice %1812 {offsets = [0, 0], sizes = [8, 32], strides = [1, 1]} : vector<8x128xf32> to vector<8x32xf32>
    %1814 = arith.negf %1813 : vector<8x32xf32>
    %1815 = math.exp %1814 : vector<8x32xf32>
    %cst_320 = arith.constant 1.000000e+00 : f32
    %1816 = vector.broadcast %cst_320 : f32 to vector<8x32xf32>
    %1817 = arith.addf %1816, %1815 : vector<8x32xf32>
    %1818 = arith.divf %1816, %1817 : vector<8x32xf32>
    %1819 = vector.extract_strided_slice %1812 {offsets = [0, 32], sizes = [8, 32], strides = [1, 1]} : vector<8x128xf32> to vector<8x32xf32>
    %1820 = arith.negf %1819 : vector<8x32xf32>
    %1821 = math.exp %1820 : vector<8x32xf32>
    %cst_321 = arith.constant 1.000000e+00 : f32
    %1822 = vector.broadcast %cst_321 : f32 to vector<8x32xf32>
    %1823 = arith.addf %1822, %1821 : vector<8x32xf32>
    %1824 = arith.divf %1822, %1823 : vector<8x32xf32>
    %1825 = vector.extract_strided_slice %1812 {offsets = [0, 64], sizes = [8, 32], strides = [1, 1]} : vector<8x128xf32> to vector<8x32xf32>
    %1826 = math.tanh %1825 : vector<8x32xf32>
    %1827 = vector.extract_strided_slice %1812 {offsets = [0, 96], sizes = [8, 32], strides = [1, 1]} : vector<8x128xf32> to vector<8x32xf32>
    %1828 = arith.negf %1827 : vector<8x32xf32>
    %1829 = math.exp %1828 : vector<8x32xf32>
    %cst_322 = arith.constant 1.000000e+00 : f32
    %1830 = vector.broadcast %cst_322 : f32 to vector<8x32xf32>
    %1831 = arith.addf %1830, %1829 : vector<8x32xf32>
    %1832 = arith.divf %1830, %1831 : vector<8x32xf32>
    %1833 = arith.mulf %1818, %1575 : vector<8x32xf32>
    %1834 = arith.mulf %1824, %1826 : vector<8x32xf32>
    %1835 = arith.addf %1833, %1834 : vector<8x32xf32>
    %1836 = math.tanh %1835 : vector<8x32xf32>
    %1837 = arith.mulf %1832, %1836 : vector<8x32xf32>
    %cst_323 = arith.constant dense<0.000000e+00> : vector<8x4xf32>
    %1838 = tpu.matmul %1837, %6, %cst_323 {dimension_numbers = #tpu.dot_dimension_numbers<[1], [0], [0], [1], [0, 0, 1, 1], [], []>} : vector<8x32xf32>, vector<32x4xf32>, vector<8x4xf32> -> vector<8x4xf32>
    %1839 = vector.extract_strided_slice %5 {offsets = [56, 0], sizes = [8, 4], strides = [1, 1]} : vector<64x4xf32> to vector<8x4xf32>
    %1840 = arith.addf %1838, %1839 : vector<8x4xf32>
    %cst_324 = arith.constant 5.000000e-01 : f32
    %1841 = vector.broadcast %cst_324 : f32 to vector<8x4xf32>
    %1842 = arith.mulf %1841, %1840 : vector<8x4xf32>
    %cst_325 = arith.constant 0.636619746 : f32
    %1843 = vector.broadcast %cst_325 : f32 to vector<8x4xf32>
    %1844 = arith.mulf %1842, %1843 : vector<8x4xf32>
    %cst_326 = arith.constant 5.000000e-01 : f32
    %1845 = vector.broadcast %cst_326 : f32 to vector<8x4xf32>
    %1846 = arith.addf %1844, %1845 : vector<8x4xf32>
    %1847 = arith.fptosi %1846 : vector<8x4xf32> to vector<8x4xi32>
    %1848 = arith.sitofp %1847 : vector<8x4xi32> to vector<8x4xf32>
    %1849 = arith.cmpf olt, %1846, %1848 : vector<8x4xf32>
    %c1_i32_327 = arith.constant 1 : i32
    %1850 = vector.broadcast %c1_i32_327 : i32 to vector<8x4xi32>
    %1851 = arith.subi %1847, %1850 : vector<8x4xi32>
    %1852 = arith.select %1849, %1851, %1847 : vector<8x4xi1>, vector<8x4xi32>
    %1853 = arith.sitofp %1852 : vector<8x4xi32> to vector<8x4xf32>
    %cst_328 = arith.constant 1.57079637 : f32
    %1854 = vector.broadcast %cst_328 : f32 to vector<8x4xf32>
    %1855 = arith.mulf %1853, %1854 : vector<8x4xf32>
    %1856 = arith.subf %1842, %1855 : vector<8x4xf32>
    %c3_i32_329 = arith.constant 3 : i32
    %1857 = vector.broadcast %c3_i32_329 : i32 to vector<8x4xi32>
    %1858 = arith.andi %1852, %1857 : vector<8x4xi32>
    %1859 = arith.mulf %1856, %1856 : vector<8x4xf32>
    %cst_330 = arith.constant 2.75573188E-6 : f32
    %1860 = vector.broadcast %cst_330 : f32 to vector<8x4xf32>
    %1861 = arith.mulf %1859, %1860 : vector<8x4xf32>
    %cst_331 = arith.constant -1.98412701E-4 : f32
    %1862 = vector.broadcast %cst_331 : f32 to vector<8x4xf32>
    %1863 = arith.addf %1862, %1861 : vector<8x4xf32>
    %1864 = arith.mulf %1859, %1863 : vector<8x4xf32>
    %cst_332 = arith.constant 0.00833333377 : f32
    %1865 = vector.broadcast %cst_332 : f32 to vector<8x4xf32>
    %1866 = arith.addf %1865, %1864 : vector<8x4xf32>
    %1867 = arith.mulf %1859, %1866 : vector<8x4xf32>
    %cst_333 = arith.constant -0.166666672 : f32
    %1868 = vector.broadcast %cst_333 : f32 to vector<8x4xf32>
    %1869 = arith.addf %1868, %1867 : vector<8x4xf32>
    %1870 = arith.mulf %1859, %1869 : vector<8x4xf32>
    %cst_334 = arith.constant 1.000000e+00 : f32
    %1871 = vector.broadcast %cst_334 : f32 to vector<8x4xf32>
    %1872 = arith.addf %1871, %1870 : vector<8x4xf32>
    %1873 = arith.mulf %1856, %1872 : vector<8x4xf32>
    %cst_335 = arith.constant 2.48015876E-5 : f32
    %1874 = vector.broadcast %cst_335 : f32 to vector<8x4xf32>
    %1875 = arith.mulf %1859, %1874 : vector<8x4xf32>
    %cst_336 = arith.constant -0.00138888892 : f32
    %1876 = vector.broadcast %cst_336 : f32 to vector<8x4xf32>
    %1877 = arith.addf %1876, %1875 : vector<8x4xf32>
    %1878 = arith.mulf %1859, %1877 : vector<8x4xf32>
    %cst_337 = arith.constant 0.0416666679 : f32
    %1879 = vector.broadcast %cst_337 : f32 to vector<8x4xf32>
    %1880 = arith.addf %1879, %1878 : vector<8x4xf32>
    %1881 = arith.mulf %1859, %1880 : vector<8x4xf32>
    %cst_338 = arith.constant -5.000000e-01 : f32
    %1882 = vector.broadcast %cst_338 : f32 to vector<8x4xf32>
    %1883 = arith.addf %1882, %1881 : vector<8x4xf32>
    %1884 = arith.mulf %1859, %1883 : vector<8x4xf32>
    %cst_339 = arith.constant 1.000000e+00 : f32
    %1885 = vector.broadcast %cst_339 : f32 to vector<8x4xf32>
    %1886 = arith.addf %1885, %1884 : vector<8x4xf32>
    %c0_i32_340 = arith.constant 0 : i32
    %1887 = vector.broadcast %c0_i32_340 : i32 to vector<8x4xi32>
    %1888 = arith.cmpi eq, %1858, %1887 : vector<8x4xi32>
    %c1_i32_341 = arith.constant 1 : i32
    %1889 = vector.broadcast %c1_i32_341 : i32 to vector<8x4xi32>
    %1890 = arith.cmpi eq, %1858, %1889 : vector<8x4xi32>
    %c2_i32_342 = arith.constant 2 : i32
    %1891 = vector.broadcast %c2_i32_342 : i32 to vector<8x4xi32>
    %1892 = arith.cmpi eq, %1858, %1891 : vector<8x4xi32>
    %cst_343 = arith.constant 0.000000e+00 : f32
    %1893 = vector.broadcast %cst_343 : f32 to vector<8x4xf32>
    %1894 = arith.subf %1893, %1873 : vector<8x4xf32>
    %cst_344 = arith.constant 0.000000e+00 : f32
    %1895 = vector.broadcast %cst_344 : f32 to vector<8x4xf32>
    %1896 = arith.subf %1895, %1886 : vector<8x4xf32>
    %1897 = arith.select %1892, %1894, %1896 : vector<8x4xi1>, vector<8x4xf32>
    %1898 = arith.select %1890, %1886, %1897 : vector<8x4xi1>, vector<8x4xf32>
    %1899 = arith.select %1888, %1873, %1898 : vector<8x4xi1>, vector<8x4xf32>
    %cst_345 = arith.constant 0.000000e+00 : f32
    %1900 = vector.broadcast %cst_345 : f32 to vector<8x4xf32>
    %1901 = arith.subf %1900, %1873 : vector<8x4xf32>
    %cst_346 = arith.constant 0.000000e+00 : f32
    %1902 = vector.broadcast %cst_346 : f32 to vector<8x4xf32>
    %1903 = arith.subf %1902, %1886 : vector<8x4xf32>
    %1904 = arith.select %1892, %1903, %1873 : vector<8x4xi1>, vector<8x4xf32>
    %1905 = arith.select %1890, %1901, %1904 : vector<8x4xi1>, vector<8x4xf32>
    %1906 = arith.select %1888, %1886, %1905 : vector<8x4xi1>, vector<8x4xf32>
    %cst_347 = arith.constant 0.707106769 : f32
    %1907 = vector.broadcast %cst_347 : f32 to vector<8x4xf32>
    %1908 = arith.mulf %1906, %1907 : vector<8x4xf32>
    %cst_348 = arith.constant 0.000000e+00 : f32
    %1909 = vector.broadcast %cst_348 : f32 to vector<8x4xf32>
    %1910 = arith.subf %1909, %1899 : vector<8x4xf32>
    %cst_349 = arith.constant 0.707106769 : f32
    %1911 = vector.broadcast %cst_349 : f32 to vector<8x4xf32>
    %1912 = arith.mulf %1910, %1911 : vector<8x4xf32>
    %cst_350 = arith.constant 0.707106769 : f32
    %1913 = vector.broadcast %cst_350 : f32 to vector<8x4xf32>
    %1914 = arith.mulf %1906, %1913 : vector<8x4xf32>
    %cst_351 = arith.constant 0.707106769 : f32
    %1915 = vector.broadcast %cst_351 : f32 to vector<8x4xf32>
    %1916 = arith.mulf %1899, %1915 : vector<8x4xf32>
    %1917 = vector.extract_strided_slice %1840 {offsets = [0, 0], sizes = [1, 4], strides = [1, 1]} : vector<8x4xf32> to vector<1x4xf32>
    %1918 = arith.mulf %1917, %1917 : vector<1x4xf32>
    %cst_352 = arith.constant 1.000000e+00 : f32
    %1919 = vector.broadcast %cst_352 : f32 to vector<1x4xf32>
    %1920 = arith.addf %1919, %1918 : vector<1x4xf32>
    %1921 = math.rsqrt %1920 : vector<1x4xf32>
    %cst_353 = arith.constant 1.000000e+00 : f32
    %1922 = vector.broadcast %cst_353 : f32 to vector<1x4xf32>
    %1923 = arith.addf %1922, %1921 : vector<1x4xf32>
    %cst_354 = arith.constant 5.000000e-01 : f32
    %1924 = vector.broadcast %cst_354 : f32 to vector<1x4xf32>
    %1925 = arith.mulf %1924, %1923 : vector<1x4xf32>
    %1926 = math.sqrt %1925 : vector<1x4xf32>
    %cst_355 = arith.constant 0.000000e+00 : f32
    %1927 = vector.broadcast %cst_355 : f32 to vector<1x4xf32>
    %1928 = arith.cmpf oge, %1917, %1927 : vector<1x4xf32>
    %cst_356 = arith.constant 1.000000e+00 : f32
    %cst_357 = arith.constant -1.000000e+00 : f32
    %1929 = vector.broadcast %cst_356 : f32 to vector<1x4xf32>
    %1930 = vector.broadcast %cst_357 : f32 to vector<1x4xf32>
    %1931 = arith.select %1928, %1929, %1930 : vector<1x4xi1>, vector<1x4xf32>
    %cst_358 = arith.constant 1.000000e+00 : f32
    %1932 = vector.broadcast %cst_358 : f32 to vector<1x4xf32>
    %1933 = arith.subf %1932, %1921 : vector<1x4xf32>
    %cst_359 = arith.constant 5.000000e-01 : f32
    %1934 = vector.broadcast %cst_359 : f32 to vector<1x4xf32>
    %1935 = arith.mulf %1934, %1933 : vector<1x4xf32>
    %cst_360 = arith.constant 0.000000e+00 : f32
    %1936 = vector.broadcast %cst_360 : f32 to vector<1x4xf32>
    %1937 = arith.maximumf %1935, %1936 : vector<1x4xf32>
    %1938 = math.sqrt %1937 : vector<1x4xf32>
    %1939 = arith.mulf %1931, %1938 : vector<1x4xf32>
    %1940 = vector.broadcast %1926 : vector<1x4xf32> to vector<8x4xf32>
    %1941 = arith.mulf %1940, %1908 : vector<8x4xf32>
    %1942 = vector.broadcast %1939 : vector<1x4xf32> to vector<8x4xf32>
    %1943 = arith.mulf %1942, %1914 : vector<8x4xf32>
    %1944 = arith.subf %1941, %1943 : vector<8x4xf32>
    %1945 = vector.broadcast %1926 : vector<1x4xf32> to vector<8x4xf32>
    %1946 = arith.mulf %1945, %1912 : vector<8x4xf32>
    %1947 = vector.broadcast %1939 : vector<1x4xf32> to vector<8x4xf32>
    %1948 = arith.mulf %1947, %1916 : vector<8x4xf32>
    %1949 = arith.subf %1946, %1948 : vector<8x4xf32>
    %1950 = vector.broadcast %1939 : vector<1x4xf32> to vector<8x4xf32>
    %1951 = arith.mulf %1950, %1908 : vector<8x4xf32>
    %1952 = vector.broadcast %1926 : vector<1x4xf32> to vector<8x4xf32>
    %1953 = arith.mulf %1952, %1914 : vector<8x4xf32>
    %1954 = arith.addf %1951, %1953 : vector<8x4xf32>
    %1955 = vector.broadcast %1939 : vector<1x4xf32> to vector<8x4xf32>
    %1956 = arith.mulf %1955, %1912 : vector<8x4xf32>
    %1957 = vector.broadcast %1926 : vector<1x4xf32> to vector<8x4xf32>
    %1958 = arith.mulf %1957, %1916 : vector<8x4xf32>
    %1959 = arith.addf %1956, %1958 : vector<8x4xf32>
    %1960 = vector.broadcast %1926 : vector<1x4xf32> to vector<8x4xf32>
    %1961 = arith.mulf %1960, %1944 : vector<8x4xf32>
    %1962 = vector.broadcast %1939 : vector<1x4xf32> to vector<8x4xf32>
    %1963 = arith.mulf %1962, %1949 : vector<8x4xf32>
    %1964 = arith.addf %1961, %1963 : vector<8x4xf32>
    %1965 = vector.broadcast %1926 : vector<1x4xf32> to vector<8x4xf32>
    %1966 = arith.mulf %1965, %1949 : vector<8x4xf32>
    %1967 = vector.broadcast %1939 : vector<1x4xf32> to vector<8x4xf32>
    %1968 = arith.mulf %1967, %1944 : vector<8x4xf32>
    %1969 = arith.subf %1966, %1968 : vector<8x4xf32>
    %1970 = vector.broadcast %1926 : vector<1x4xf32> to vector<8x4xf32>
    %1971 = arith.mulf %1970, %1954 : vector<8x4xf32>
    %1972 = vector.broadcast %1939 : vector<1x4xf32> to vector<8x4xf32>
    %1973 = arith.mulf %1972, %1959 : vector<8x4xf32>
    %1974 = arith.subf %1971, %1973 : vector<8x4xf32>
    %1975 = vector.broadcast %1926 : vector<1x4xf32> to vector<8x4xf32>
    %1976 = arith.mulf %1975, %1959 : vector<8x4xf32>
    %1977 = vector.broadcast %1939 : vector<1x4xf32> to vector<8x4xf32>
    %1978 = arith.mulf %1977, %1954 : vector<8x4xf32>
    %1979 = arith.addf %1976, %1978 : vector<8x4xf32>
    %1980 = vector.extract_strided_slice %1964 {offsets = [0, 0], sizes = [8, 1], strides = [1, 1]} : vector<8x4xf32> to vector<8x1xf32>
    %1981 = vector.extract_strided_slice %1969 {offsets = [0, 0], sizes = [8, 1], strides = [1, 1]} : vector<8x4xf32> to vector<8x1xf32>
    %1982 = vector.extract_strided_slice %1974 {offsets = [0, 0], sizes = [8, 1], strides = [1, 1]} : vector<8x4xf32> to vector<8x1xf32>
    %1983 = arith.subf %1982, %1980 : vector<8x1xf32>
    %1984 = vector.broadcast %1983 : vector<8x1xf32> to vector<8x16xf32>
    %1985 = vector.broadcast %12 : vector<1x16xf32> to vector<8x16xf32>
    %1986 = arith.mulf %1984, %1985 : vector<8x16xf32>
    %1987 = vector.broadcast %1980 : vector<8x1xf32> to vector<8x16xf32>
    %1988 = arith.addf %1987, %1986 : vector<8x16xf32>
    %1989 = vector.extract_strided_slice %1979 {offsets = [0, 0], sizes = [8, 1], strides = [1, 1]} : vector<8x4xf32> to vector<8x1xf32>
    %1990 = arith.subf %1989, %1981 : vector<8x1xf32>
    %1991 = vector.broadcast %1990 : vector<8x1xf32> to vector<8x16xf32>
    %1992 = vector.broadcast %12 : vector<1x16xf32> to vector<8x16xf32>
    %1993 = arith.mulf %1991, %1992 : vector<8x16xf32>
    %1994 = vector.broadcast %1981 : vector<8x1xf32> to vector<8x16xf32>
    %1995 = arith.addf %1994, %1993 : vector<8x16xf32>
    %1996 = vector.extract_strided_slice %1964 {offsets = [0, 1], sizes = [8, 1], strides = [1, 1]} : vector<8x4xf32> to vector<8x1xf32>
    %1997 = vector.extract_strided_slice %1969 {offsets = [0, 1], sizes = [8, 1], strides = [1, 1]} : vector<8x4xf32> to vector<8x1xf32>
    %1998 = vector.extract_strided_slice %1974 {offsets = [0, 1], sizes = [8, 1], strides = [1, 1]} : vector<8x4xf32> to vector<8x1xf32>
    %1999 = arith.subf %1998, %1996 : vector<8x1xf32>
    %2000 = vector.broadcast %1999 : vector<8x1xf32> to vector<8x16xf32>
    %2001 = vector.broadcast %13 : vector<1x16xf32> to vector<8x16xf32>
    %2002 = arith.mulf %2000, %2001 : vector<8x16xf32>
    %2003 = vector.broadcast %1996 : vector<8x1xf32> to vector<8x16xf32>
    %2004 = arith.addf %2003, %2002 : vector<8x16xf32>
    %2005 = vector.extract_strided_slice %1979 {offsets = [0, 1], sizes = [8, 1], strides = [1, 1]} : vector<8x4xf32> to vector<8x1xf32>
    %2006 = arith.subf %2005, %1997 : vector<8x1xf32>
    %2007 = vector.broadcast %2006 : vector<8x1xf32> to vector<8x16xf32>
    %2008 = vector.broadcast %13 : vector<1x16xf32> to vector<8x16xf32>
    %2009 = arith.mulf %2007, %2008 : vector<8x16xf32>
    %2010 = vector.broadcast %1997 : vector<8x1xf32> to vector<8x16xf32>
    %2011 = arith.addf %2010, %2009 : vector<8x16xf32>
    %2012 = arith.mulf %1988, %2004 : vector<8x16xf32>
    %2013 = arith.mulf %1995, %2011 : vector<8x16xf32>
    %2014 = arith.subf %2012, %2013 : vector<8x16xf32>
    %2015 = arith.mulf %1988, %2011 : vector<8x16xf32>
    %2016 = arith.mulf %1995, %2004 : vector<8x16xf32>
    %2017 = arith.addf %2015, %2016 : vector<8x16xf32>
    %2018 = vector.extract_strided_slice %1964 {offsets = [0, 2], sizes = [8, 1], strides = [1, 1]} : vector<8x4xf32> to vector<8x1xf32>
    %2019 = vector.extract_strided_slice %1969 {offsets = [0, 2], sizes = [8, 1], strides = [1, 1]} : vector<8x4xf32> to vector<8x1xf32>
    %2020 = vector.extract_strided_slice %1974 {offsets = [0, 2], sizes = [8, 1], strides = [1, 1]} : vector<8x4xf32> to vector<8x1xf32>
    %2021 = arith.subf %2020, %2018 : vector<8x1xf32>
    %2022 = vector.broadcast %2021 : vector<8x1xf32> to vector<8x16xf32>
    %2023 = vector.broadcast %14 : vector<1x16xf32> to vector<8x16xf32>
    %2024 = arith.mulf %2022, %2023 : vector<8x16xf32>
    %2025 = vector.broadcast %2018 : vector<8x1xf32> to vector<8x16xf32>
    %2026 = arith.addf %2025, %2024 : vector<8x16xf32>
    %2027 = vector.extract_strided_slice %1979 {offsets = [0, 2], sizes = [8, 1], strides = [1, 1]} : vector<8x4xf32> to vector<8x1xf32>
    %2028 = arith.subf %2027, %2019 : vector<8x1xf32>
    %2029 = vector.broadcast %2028 : vector<8x1xf32> to vector<8x16xf32>
    %2030 = vector.broadcast %14 : vector<1x16xf32> to vector<8x16xf32>
    %2031 = arith.mulf %2029, %2030 : vector<8x16xf32>
    %2032 = vector.broadcast %2019 : vector<8x1xf32> to vector<8x16xf32>
    %2033 = arith.addf %2032, %2031 : vector<8x16xf32>
    %2034 = arith.mulf %2014, %2026 : vector<8x16xf32>
    %2035 = arith.mulf %2017, %2033 : vector<8x16xf32>
    %2036 = arith.subf %2034, %2035 : vector<8x16xf32>
    %2037 = arith.mulf %2014, %2033 : vector<8x16xf32>
    %2038 = arith.mulf %2017, %2026 : vector<8x16xf32>
    %2039 = arith.addf %2037, %2038 : vector<8x16xf32>
    %2040 = vector.extract_strided_slice %1964 {offsets = [0, 3], sizes = [8, 1], strides = [1, 1]} : vector<8x4xf32> to vector<8x1xf32>
    %2041 = vector.extract_strided_slice %1969 {offsets = [0, 3], sizes = [8, 1], strides = [1, 1]} : vector<8x4xf32> to vector<8x1xf32>
    %2042 = vector.extract_strided_slice %1974 {offsets = [0, 3], sizes = [8, 1], strides = [1, 1]} : vector<8x4xf32> to vector<8x1xf32>
    %2043 = arith.subf %2042, %2040 : vector<8x1xf32>
    %2044 = vector.broadcast %2043 : vector<8x1xf32> to vector<8x16xf32>
    %2045 = vector.broadcast %15 : vector<1x16xf32> to vector<8x16xf32>
    %2046 = arith.mulf %2044, %2045 : vector<8x16xf32>
    %2047 = vector.broadcast %2040 : vector<8x1xf32> to vector<8x16xf32>
    %2048 = arith.addf %2047, %2046 : vector<8x16xf32>
    %2049 = vector.extract_strided_slice %1979 {offsets = [0, 3], sizes = [8, 1], strides = [1, 1]} : vector<8x4xf32> to vector<8x1xf32>
    %2050 = arith.subf %2049, %2041 : vector<8x1xf32>
    %2051 = vector.broadcast %2050 : vector<8x1xf32> to vector<8x16xf32>
    %2052 = vector.broadcast %15 : vector<1x16xf32> to vector<8x16xf32>
    %2053 = arith.mulf %2051, %2052 : vector<8x16xf32>
    %2054 = vector.broadcast %2041 : vector<8x1xf32> to vector<8x16xf32>
    %2055 = arith.addf %2054, %2053 : vector<8x16xf32>
    %2056 = arith.mulf %2036, %2048 : vector<8x16xf32>
    %2057 = arith.mulf %2039, %2055 : vector<8x16xf32>
    %2058 = arith.subf %2056, %2057 : vector<8x16xf32>
    %2059 = arith.mulf %2036, %2055 : vector<8x16xf32>
    %2060 = arith.mulf %2039, %2048 : vector<8x16xf32>
    %2061 = arith.addf %2059, %2060 : vector<8x16xf32>
    %cst_361 = arith.constant dense<0.000000e+00> : vector<8x128xf32>
    %2062 = tpu.matmul %2058, %7, %cst_361 {dimension_numbers = #tpu.dot_dimension_numbers<[1], [0], [0], [1], [0, 0, 1, 1], [], []>} : vector<8x16xf32>, vector<16x128xf32>, vector<8x128xf32> -> vector<8x128xf32>
    %cst_362 = arith.constant dense<0.000000e+00> : vector<8x128xf32>
    %2063 = tpu.matmul %2061, %8, %cst_362 {dimension_numbers = #tpu.dot_dimension_numbers<[1], [0], [0], [1], [0, 0, 1, 1], [], []>} : vector<8x16xf32>, vector<16x128xf32>, vector<8x128xf32> -> vector<8x128xf32>
    %2064 = arith.addf %2062, %2063 : vector<8x128xf32>
    %2065 = vector.extract_strided_slice %2064 {offsets = [0, 0], sizes = [8, 64], strides = [1, 1]} : vector<8x128xf32> to vector<8x64xf32>
    %2066 = vector.extract_strided_slice %2064 {offsets = [0, 64], sizes = [8, 64], strides = [1, 1]} : vector<8x128xf32> to vector<8x64xf32>
    %2067 = arith.mulf %2065, %2065 : vector<8x64xf32>
    %2068 = arith.mulf %2066, %2066 : vector<8x64xf32>
    %2069 = arith.addf %2067, %2068 : vector<8x64xf32>
    %cst_363 = arith.constant dense<0.000000e+00> : vector<8x128xf32>
    %2070 = tpu.matmul %2069, %9, %cst_363 {dimension_numbers = #tpu.dot_dimension_numbers<[1], [0], [0], [1], [0, 0, 1, 1], [], []>} : vector<8x64xf32>, vector<64x128xf32>, vector<8x128xf32> -> vector<8x128xf32>
    %2071 = vector.broadcast %10 : vector<1x128xf32> to vector<8x128xf32>
    %2072 = arith.addf %2070, %2071 : vector<8x128xf32>
    %2073 = vector.extract_strided_slice %2072 {offsets = [0, 0], sizes = [8, 32], strides = [1, 1]} : vector<8x128xf32> to vector<8x32xf32>
    %2074 = arith.negf %2073 : vector<8x32xf32>
    %2075 = math.exp %2074 : vector<8x32xf32>
    %cst_364 = arith.constant 1.000000e+00 : f32
    %2076 = vector.broadcast %cst_364 : f32 to vector<8x32xf32>
    %2077 = arith.addf %2076, %2075 : vector<8x32xf32>
    %2078 = arith.divf %2076, %2077 : vector<8x32xf32>
    %2079 = vector.extract_strided_slice %2072 {offsets = [0, 32], sizes = [8, 32], strides = [1, 1]} : vector<8x128xf32> to vector<8x32xf32>
    %2080 = arith.negf %2079 : vector<8x32xf32>
    %2081 = math.exp %2080 : vector<8x32xf32>
    %cst_365 = arith.constant 1.000000e+00 : f32
    %2082 = vector.broadcast %cst_365 : f32 to vector<8x32xf32>
    %2083 = arith.addf %2082, %2081 : vector<8x32xf32>
    %2084 = arith.divf %2082, %2083 : vector<8x32xf32>
    %2085 = vector.extract_strided_slice %2072 {offsets = [0, 64], sizes = [8, 32], strides = [1, 1]} : vector<8x128xf32> to vector<8x32xf32>
    %2086 = math.tanh %2085 : vector<8x32xf32>
    %2087 = vector.extract_strided_slice %2072 {offsets = [0, 96], sizes = [8, 32], strides = [1, 1]} : vector<8x128xf32> to vector<8x32xf32>
    %2088 = arith.negf %2087 : vector<8x32xf32>
    %2089 = math.exp %2088 : vector<8x32xf32>
    %cst_366 = arith.constant 1.000000e+00 : f32
    %2090 = vector.broadcast %cst_366 : f32 to vector<8x32xf32>
    %2091 = arith.addf %2090, %2089 : vector<8x32xf32>
    %2092 = arith.divf %2090, %2091 : vector<8x32xf32>
    %2093 = arith.mulf %2078, %1835 : vector<8x32xf32>
    %2094 = arith.mulf %2084, %2086 : vector<8x32xf32>
    %2095 = arith.addf %2093, %2094 : vector<8x32xf32>
    %2096 = math.tanh %2095 : vector<8x32xf32>
    %2097 = arith.mulf %2092, %2096 : vector<8x32xf32>
    %c0_367 = arith.constant 0 : index
    %c0_368 = arith.constant 0 : index
    %2098 = vector.load %arg9[%c0_367, %c0_368] : memref<32x1xf32, #tpu.memory_space<vmem>>, vector<32x1xf32>
    %cst_369 = arith.constant dense<0.000000e+00> : vector<8x1xf32>
    %2099 = tpu.matmul %2097, %2098, %cst_369 {dimension_numbers = #tpu.dot_dimension_numbers<[1], [0], [0], [1], [0, 0, 1, 1], [], []>} : vector<8x32xf32>, vector<32x1xf32>, vector<8x1xf32> -> vector<8x1xf32>
    %c0_370 = arith.constant 0 : index
    %c0_371 = arith.constant 0 : index
    %2100 = vector.load %arg10[%c0_370, %c0_371] : memref<1x1xf32, #tpu.memory_space<vmem>>, vector<1x1xf32>
    %2101 = vector.broadcast %2100 : vector<1x1xf32> to vector<8x1xf32>
    %2102 = arith.addf %2099, %2101 : vector<8x1xf32>
    %c0_372 = arith.constant 0 : index
    %c0_373 = arith.constant 0 : index
    %2103 = vector.load %arg11[%c0_372, %c0_373] : memref<8x1xf32, #tpu.memory_space<vmem>>, vector<8x1xf32>
    tpu.vector_store %arg11[%c0_372, %c0_373], %2102 {strides = array<i32>} : memref<8x1xf32, #tpu.memory_space<vmem>>, vector<8x1xf32>,
    return
  }
}

</mosaic_0001>

<llo_original>
// kernel: qshallow_regression_lstm_forward.1
$region0: #{qshallow_regression_lstm_forward.1}
  #allocation0 [shape = 'u32[]', space=smem, size = 0x4, offset = 0x4, fixed_abs, tag = 'smem constant byte address 0x4 - core index']
  #allocation1 [shape = 'u32[144,128]{1,0:T(1,128)}', space=vmem, size = 0x12000, scoped, tag = 'internal scratch']
  #allocation2 [shape = 'f32[1,1]{1,0:T(1,128)S(1)}', space=vmem, size = 0x200, scoped, tag = 'scoped memory for qshallow_regression_lstm_forward.1']
  %s0 = inlined_call_operand.vmem [shape: f32[64,8], index: 0, kind: input, shape index: {}]
  %s1 = inlined_call_operand.vmem [shape: f32[32,4], index: 1, kind: input, shape index: {}]
  %s2 = inlined_call_operand.vmem [shape: f32[8,4], index: 2, kind: input, shape index: {}]
  %s3 = inlined_call_operand.vmem [shape: f32[1,4], index: 3, kind: input, shape index: {}]
  %s4 = inlined_call_operand.vmem [shape: f32[16,128], index: 4, kind: input, shape index: {}]
  %s5 = inlined_call_operand.vmem [shape: f32[16,128], index: 5, kind: input, shape index: {}]
  %s6 = inlined_call_operand.vmem [shape: f32[4,16], index: 6, kind: input, shape index: {}]
  %s7 = inlined_call_operand.vmem [shape: f32[64,128], index: 7, kind: input, shape index: {}]
  %s8 = inlined_call_operand.vmem [shape: f32[1,128], index: 8, kind: input, shape index: {}]
  %s9 = inlined_call_operand.vmem [shape: f32[32,1], index: 9, kind: input, shape index: {}]
  %s10 = inlined_call_operand.<no memory space> [shape: f32[1,1], index: 10, kind: input, shape index: {}]
  %s11 = inlined_call_operand.vmem [shape: f32[8,1], index: 11, kind: output, shape index: {}]
  %s12 = sld [smem:[#allocation0]]
  $region54: #{qshallow_regression_lstm_forward.1} parent=0
    _
  %s14 = ssub.s32 1, %s12
  %s15 = scalar_select 0, %s14, %s12
  %v16 = vstv %s10
  %17 = vst [vmem:[#allocation2] sm:$0x1] %v16
  // Predicated region
  $region2: #{qshallow_regression_lstm_forward.1} parent=0 // pred_check
    _
  $region3: #{qshallow_regression_lstm_forward.1} parent=0 // pred_check_branch
    %19 = sbr.rel (0) target = $region5
  $region4: #{qshallow_regression_lstm_forward.1} parent=0 // pred_region
    _
  $region5: #{qshallow_regression_lstm_forward.1} parent=0 // pred_fallthru
    _
  // Predicated region
  $region6: #{qshallow_regression_lstm_forward.1} parent=0 // pred_check
    _
  $region7: #{qshallow_regression_lstm_forward.1} parent=0 // pred_check_branch
    %21 = sbr.rel (0) target = $region9
  $region8: #{qshallow_regression_lstm_forward.1} parent=0 // pred_region
    _
  $region9: #{qshallow_regression_lstm_forward.1} parent=0 // pred_fallthru
    _
  // Predicated region
  $region10: #{qshallow_regression_lstm_forward.1} parent=0 // pred_check
    _
  $region11: #{qshallow_regression_lstm_forward.1} parent=0 // pred_check_branch
    %23 = sbr.rel (0) target = $region13
  $region12: #{qshallow_regression_lstm_forward.1} parent=0 // pred_region
    _
  $region13: #{qshallow_regression_lstm_forward.1} parent=0 // pred_fallthru
    _
  // Predicated region
  $region14: #{qshallow_regression_lstm_forward.1} parent=0 // pred_check
    _
  $region15: #{qshallow_regression_lstm_forward.1} parent=0 // pred_check_branch
    %25 = sbr.rel (0) target = $region17
  $region16: #{qshallow_regression_lstm_forward.1} parent=0 // pred_region
    _
  $region17: #{qshallow_regression_lstm_forward.1} parent=0 // pred_fallthru
    _
  // Predicated region
  $region18: #{qshallow_regression_lstm_forward.1} parent=0 // pred_check
    _
  $region19: #{qshallow_regression_lstm_forward.1} parent=0 // pred_check_branch
    %27 = sbr.rel (0) target = $region21
  $region20: #{qshallow_regression_lstm_forward.1} parent=0 // pred_region
    _
  $region21: #{qshallow_regression_lstm_forward.1} parent=0 // pred_fallthru
    _
  // Predicated region
  $region22: #{qshallow_regression_lstm_forward.1} parent=0 // pred_check
    _
  $region23: #{qshallow_regression_lstm_forward.1} parent=0 // pred_check_branch
    %29 = sbr.rel (0) target = $region25
  $region24: #{qshallow_regression_lstm_forward.1} parent=0 // pred_region
    _
  $region25: #{qshallow_regression_lstm_forward.1} parent=0 // pred_fallthru
    _
  // Predicated region
  $region26: #{qshallow_regression_lstm_forward.1} parent=0 // pred_check
    _
  $region27: #{qshallow_regression_lstm_forward.1} parent=0 // pred_check_branch
    %31 = sbr.rel (0) target = $region29
  $region28: #{qshallow_regression_lstm_forward.1} parent=0 // pred_region
    _
  $region29: #{qshallow_regression_lstm_forward.1} parent=0 // pred_fallthru
    _
  // Predicated region
  $region30: #{qshallow_regression_lstm_forward.1} parent=0 // pred_check
    _
  $region31: #{qshallow_regression_lstm_forward.1} parent=0 // pred_check_branch
    %33 = sbr.rel (0) target = $region33
  $region32: #{qshallow_regression_lstm_forward.1} parent=0 // pred_region
    _
  $region33: #{qshallow_regression_lstm_forward.1} parent=0 // pred_fallthru
    _
  // Predicated region
  $region34: #{qshallow_regression_lstm_forward.1} parent=0 // pred_check
    _
  $region35: #{qshallow_regression_lstm_forward.1} parent=0 // pred_check_branch
    %35 = sbr.rel (0) target = $region37
  $region36: #{qshallow_regression_lstm_forward.1} parent=0 // pred_region
    _
  $region37: #{qshallow_regression_lstm_forward.1} parent=0 // pred_fallthru
    _
  // Predicated region
  $region38: #{qshallow_regression_lstm_forward.1} parent=0 // pred_check
    _
  $region39: #{qshallow_regression_lstm_forward.1} parent=0 // pred_check_branch
    %37 = sbr.rel (0) target = $region41
  $region40: #{qshallow_regression_lstm_forward.1} parent=0 // pred_region
    _
  $region41: #{qshallow_regression_lstm_forward.1} parent=0 // pred_fallthru
    _
  // Predicated region
  $region42: #{qshallow_regression_lstm_forward.1} parent=0 // pred_check
    _
  $region43: #{qshallow_regression_lstm_forward.1} parent=0 // pred_check_branch
    %39 = sbr.rel (0) target = $region45
  $region44: #{qshallow_regression_lstm_forward.1} parent=0 // pred_region
    _
  $region45: #{qshallow_regression_lstm_forward.1} parent=0 // pred_fallthru
    _
  %v40 = vld [vmem:[%s0] sm:$0xff]
  %v41 = vld [vmem:[%s0 + $0x8] sm:$0xff]
  %v42 = vld [vmem:[%s0 + $0x10] sm:$0xff]
  %v43 = vld [vmem:[%s0 + $0x18] sm:$0xff]
  %v44 = vld [vmem:[%s0 + $0x20] sm:$0xff]
  %v45 = vld [vmem:[%s0 + $0x28] sm:$0xff]
  %v46 = vld [vmem:[%s0 + $0x30] sm:$0xff]
  %v47 = vld [vmem:[%s0 + $0x38] sm:$0xff]
  %v48 = vld [vmem:[%s2] sm:$0xff]
  %v49 = vld [vmem:[%s3] sm:$0x1]
  %v51 = vlaneseq
  %v52 = vshrl.u32 %v51, 7
  %v53 = vsub.s32 0, %v52
  %v54 = vrot.slane %v49, %v53
  %vm56 = vcmask 64512
  %v58 = vsel %vm56, %v40, 0
  %v61 = vsel %vm56, %v41, 0
  %v64 = vsel %vm56, %v42, 0
  %v67 = vsel %vm56, %v43, 0
  %v70 = vsel %vm56, %v44, 0
  %v73 = vsel %vm56, %v45, 0
  %v76 = vsel %vm56, %v46, 0
  %v79 = vsel %vm56, %v47, 0
  %81 = vmatprep.subr.mxu0 0.0
  %82 = vmatpush1.msra.mxu0 %v48
  %83 = vmatprep.subr.mxu0 0.0
  %84 = vmatpush1.msra.mxu0 0.0
  %85 = vmatprep.subr.mxu0 0.0
  %86 = vmatpush1.msra.mxu0 0.0
  %87 = vmatprep.subr.mxu0 0.0
  %88 = vmatpush1.msra.mxu0 0.0
  %89 = vmatprep.subr.mxu0 0.0
  %90 = vmatpush1.msra.mxu0 0.0
  %91 = vmatprep.subr.mxu0 0.0
  %92 = vmatpush1.msra.mxu0 0.0
  %93 = vmatprep.subr.mxu0 0.0
  %94 = vmatpush1.msra.mxu0 0.0
  %95 = vmatprep.subr.mxu0 0.0
  %96 = vmatpush1.msra.mxu0 0.0
  %97 = vmatprep.subr.mxu0 0.0
  %98 = vmatpush1.msra.mxu0 0.0
  %99 = vmatprep.subr.mxu0 0.0
  %100 = vmatpush1.msra.mxu0 0.0
  %101 = vmatprep.subr.mxu0 0.0
  %102 = vmatpush1.msra.mxu0 0.0
  %103 = vmatprep.subr.mxu0 0.0
  %104 = vmatpush1.msra.mxu0 0.0
  %105 = vmatprep.subr.mxu0 0.0
  %106 = vmatpush1.msra.mxu0 0.0
  %107 = vmatprep.subr.mxu0 0.0
  %108 = vmatpush1.msra.mxu0 0.0
  %109 = vmatprep.subr.mxu0 0.0
  %110 = vmatpush1.msra.mxu0 0.0
  %111 = vmatprep.subr.mxu0 0.0
  %112 = vmatpush1.msra.mxu0 0.0
  %113 = vmatprep.subr.mxu0 0.0
  %114 = vmatpush1.msra.mxu0 0.0
  %115 = vmatprep.subr.mxu0 0.0
  %116 = vmatpush1.msra.mxu0 0.0
  %117 = vmatprep.subr.mxu0 0.0
  %118 = vmatpush1.msra.mxu0 0.0
  %119 = vmatprep.subr.mxu0 0.0
  %120 = vmatpush1.msra.mxu0 0.0
  %121 = vmatprep.subr.mxu0 0.0
  %122 = vmatpush1.msra.mxu0 0.0
  %123 = vmatprep.subr.mxu0 0.0
  %124 = vmatpush1.msra.mxu0 0.0
  %125 = vmatprep.subr.mxu0 0.0
  %126 = vmatpush1.msra.mxu0 0.0
  %127 = vmatprep.subr.mxu0 0.0
  %128 = vmatpush1.msra.mxu0 0.0
  %129 = vmatprep.subr.mxu0 0.0
  %130 = vmatpush1.msra.mxu0 0.0
  %131 = vmatprep.subr.mxu0 0.0
  %132 = vmatpush1.msra.mxu0 0.0
  %133 = vmatprep.subr.mxu0 0.0
  %134 = vmatpush1.msra.mxu0 0.0
  %135 = vmatprep.subr.mxu0 0.0
  %136 = vmatpush1.msra.mxu0 0.0
  %137 = vmatprep.subr.mxu0 0.0
  %138 = vmatpush1.msra.mxu0 0.0
  %139 = vmatprep.subr.mxu0 0.0
  %140 = vmatpush1.msra.mxu0 0.0
  %141 = vmatprep.subr.mxu0 0.0
  %142 = vmatpush1.msra.mxu0 0.0
  %143 = vmatprep.subr.mxu0 0.0
  %144 = vmatpush1.msra.mxu0 0.0
  %145 = vmatprep.mubr.f32.mxu0 0.0
  %146 = vmatmul.mubr.f32.gmra.mrb[0].mxu0 %v58
  %v147 = vpop.f32.mrb[0].mxu0
  %v148 = vadd.f32 %v54, %v147
  %v149 = vpop.f32.mrb[0].mxu0
  %150 = vmatprep.mubr.f32.mxu0 0.0
  %151 = vmatmul.mubr.f32.gmra.mrb[0].mxu0 %v61
  %v152 = vpop.f32.mrb[0].mxu0
  %v153 = vadd.f32 %v54, %v152
  %v154 = vpop.f32.mrb[0].mxu0
  %155 = vmatprep.mubr.f32.mxu0 0.0
  %156 = vmatmul.mubr.f32.gmra.mrb[0].mxu0 %v64
  %v157 = vpop.f32.mrb[0].mxu0
  %v158 = vadd.f32 %v54, %v157
  %v159 = vpop.f32.mrb[0].mxu0
  %160 = vmatprep.mubr.f32.mxu0 0.0
  %161 = vmatmul.mubr.f32.gmra.mrb[0].mxu0 %v67
  %v162 = vpop.f32.mrb[0].mxu0
  %v163 = vadd.f32 %v54, %v162
  %v164 = vpop.f32.mrb[0].mxu0
  %165 = vmatprep.mubr.f32.mxu0 0.0
  %166 = vmatmul.mubr.f32.gmra.mrb[0].mxu0 %v70
  %v167 = vpop.f32.mrb[0].mxu0
  %v168 = vadd.f32 %v54, %v167
  %v169 = vpop.f32.mrb[0].mxu0
  %170 = vmatprep.mubr.f32.mxu0 0.0
  %171 = vmatmul.mubr.f32.gmra.mrb[0].mxu0 %v73
  %v172 = vpop.f32.mrb[0].mxu0
  %v173 = vadd.f32 %v54, %v172
  %v174 = vpop.f32.mrb[0].mxu0
  %175 = vmatprep.mubr.f32.mxu0 0.0
  %176 = vmatmul.mubr.f32.gmra.mrb[0].mxu0 %v76
  %v177 = vpop.f32.mrb[0].mxu0
  %v178 = vadd.f32 %v54, %v177
  %v179 = vpop.f32.mrb[0].mxu0
  %180 = vmatprep.mubr.f32.mxu0 0.0
  %181 = vmatmul.mubr.f32.gmra.mrb[0].mxu0 %v79
  %v182 = vpop.f32.mrb[0].mxu0
  %v183 = vadd.f32 %v54, %v182
  %v184 = vpop.f32.mrb[0].mxu0
  %185 = vdwg.mxu0
  %v186 = vld [vmem:[%s1] sm:$0xff]
  %v187 = vld [vmem:[%s1 + $0x8] sm:$0xff]
  %v188 = vld [vmem:[%s1 + $0x10] sm:$0xff]
  %v189 = vld [vmem:[%s1 + $0x18] sm:$0xff]
  %v190 = vld [vmem:[%s4] sm:$0xff]
  %v191 = vld [vmem:[%s4 + $0x8] sm:$0xff]
  %v192 = vld [vmem:[%s5] sm:$0xff]
  %v193 = vld [vmem:[%s5 + $0x8] sm:$0xff]
  %v194 = vld [vmem:[%s7] sm:$0xff]
  %v195 = vld [vmem:[%s7 + $0x8] sm:$0xff]
  %v196 = vld [vmem:[%s7 + $0x10] sm:$0xff]
  %v197 = vld [vmem:[%s7 + $0x18] sm:$0xff]
  %v198 = vld [vmem:[%s7 + $0x20] sm:$0xff]
  %v199 = vld [vmem:[%s7 + $0x28] sm:$0xff]
  %v200 = vld [vmem:[%s7 + $0x30] sm:$0xff]
  %v201 = vld [vmem:[%s7 + $0x38] sm:$0xff]
  %v202 = vld [vmem:[%s8] sm:$0x1]
  %v203 = vld [vmem:[%s6] sm:$0xf]
  %vm204 = vcmask 261120
  %v206 = vsel %vm204, 0.0, 0
  %208 = vmatprep.subr.mxu0 0.0
  %209 = vmatpush1.msra.mxu0 %v186
  %210 = vmatprep.subr.mxu0 0.0
  %211 = vmatpush1.msra.mxu0 %v187
  %212 = vmatprep.subr.mxu0 0.0
  %213 = vmatpush1.msra.mxu0 %v188
  %214 = vmatprep.subr.mxu0 0.0
  %215 = vmatpush1.msra.mxu0 %v189
  %216 = vmatprep.subr.mxu0 0.0
  %217 = vmatpush1.msra.mxu0 0.0
  %218 = vmatprep.subr.mxu0 0.0
  %219 = vmatpush1.msra.mxu0 0.0
  %220 = vmatprep.subr.mxu0 0.0
  %221 = vmatpush1.msra.mxu0 0.0
  %222 = vmatprep.subr.mxu0 0.0
  %223 = vmatpush1.msra.mxu0 0.0
  %224 = vmatprep.subr.mxu0 0.0
  %225 = vmatpush1.msra.mxu0 0.0
  %226 = vmatprep.subr.mxu0 0.0
  %227 = vmatpush1.msra.mxu0 0.0
  %228 = vmatprep.subr.mxu0 0.0
  %229 = vmatpush1.msra.mxu0 0.0
  %230 = vmatprep.subr.mxu0 0.0
  %231 = vmatpush1.msra.mxu0 0.0
  %232 = vmatprep.subr.mxu0 0.0
  %233 = vmatpush1.msra.mxu0 0.0
  %234 = vmatprep.subr.mxu0 0.0
  %235 = vmatpush1.msra.mxu0 0.0
  %236 = vmatprep.subr.mxu0 0.0
  %237 = vmatpush1.msra.mxu0 0.0
  %238 = vmatprep.subr.mxu0 0.0
  %239 = vmatpush1.msra.mxu0 0.0
  %240 = vmatprep.subr.mxu0 0.0
  %241 = vmatpush1.msra.mxu0 0.0
  %242 = vmatprep.subr.mxu0 0.0
  %243 = vmatpush1.msra.mxu0 0.0
  %244 = vmatprep.subr.mxu0 0.0
  %245 = vmatpush1.msra.mxu0 0.0
  %246 = vmatprep.subr.mxu0 0.0
  %247 = vmatpush1.msra.mxu0 0.0
  %248 = vmatprep.subr.mxu0 0.0
  %249 = vmatpush1.msra.mxu0 0.0
  %250 = vmatprep.subr.mxu0 0.0
  %251 = vmatpush1.msra.mxu0 0.0
  %252 = vmatprep.subr.mxu0 0.0
  %253 = vmatpush1.msra.mxu0 0.0
  %254 = vmatprep.subr.mxu0 0.0
  %255 = vmatpush1.msra.mxu0 0.0
  %256 = vmatprep.subr.mxu0 0.0
  %257 = vmatpush1.msra.mxu0 0.0
  %258 = vmatprep.subr.mxu0 0.0
  %259 = vmatpush1.msra.mxu0 0.0
  %260 = vmatprep.subr.mxu0 0.0
  %261 = vmatpush1.msra.mxu0 0.0
  %262 = vmatprep.subr.mxu0 0.0
  %263 = vmatpush1.msra.mxu0 0.0
  %264 = vmatprep.subr.mxu0 0.0
  %265 = vmatpush1.msra.mxu0 0.0
  %266 = vmatprep.subr.mxu0 0.0
  %267 = vmatpush1.msra.mxu0 0.0
  %268 = vmatprep.subr.mxu0 0.0
  %269 = vmatpush1.msra.mxu0 0.0
  %270 = vmatprep.subr.mxu0 0.0
  %271 = vmatpush1.msra.mxu0 0.0
  %272 = vmatprep.mubr.f32.mxu0 0.0
  %273 = vmatmul.mubr.f32.gmra.mrb[0].mxu0 %v206
  %v274 = vpop.f32.mrb[0].mxu0
  %v275 = vadd.f32 %v148, %v274
  %v276 = vpop.f32.mrb[0].mxu0
  %277 = vdwg.mxu0
  %v278 = vmul.f32 %v275, 0.5
  %v279 = vmul.f32 %v278, 0.63661975
  %v280 = vadd.f32 %v279, 0.5
  %v281 = vcvt.f32.s32.to.zero.pseudo %v280
  %v282 = vcvt.s32.f32 %v281
  %vm283 = vcmp.lt.f32.partialorder %v280, %v282
  %v284 = vsub.s32 %v281, 1
  %v285 = vsel %vm283, %v284, %v281
  %v286 = vcvt.s32.f32 %v285
  %v287 = vmul.f32 %v286, 1.5707964
  %v288 = vsub.f32 %v278, %v287
  %v289 = vand.u32 %v285, 3
  %v290 = vmul.f32 %v288, %v288
  %v291 = vmul.f32 %v290, 2.7557319e-06
  %v292 = vadd.f32 %v291, -0.0001984127
  %v293 = vmul.f32 %v290, %v292
  %v294 = vadd.f32 %v293, 0.008333334
  %v295 = vmul.f32 %v290, %v294
  %v296 = vadd.f32 %v295, -0.16666667
  %v297 = vmul.f32 %v290, %v296
  %v298 = vadd.f32 %v297, 1.0
  %v299 = vmul.f32 %v288, %v298
  %v300 = vmul.f32 %v290, 2.4801588e-05
  %v301 = vadd.f32 %v300, -0.0013888889
  %v302 = vmul.f32 %v290, %v301
  %v303 = vadd.f32 %v302, 0.041666668
  %v304 = vmul.f32 %v290, %v303
  %v305 = vadd.f32 %v304, -0.5
  %v306 = vmul.f32 %v290, %v305
  %v307 = vadd.f32 %v306, 1.0
  %vm308 = vcmp.eq.s32.totalorder %v289, 0
  %vm309 = vcmp.eq.s32.totalorder %v289, 1
  %vm310 = vcmp.eq.s32.totalorder %v289, 2
  %v311 = vsub.f32 0.0, %v299
  %v312 = vsub.f32 0.0, %v307
  %v313 = vsel %vm310, %v311, %v312
  %v314 = vsel %vm309, %v307, %v313
  %v315 = vsel %vm308, %v299, %v314
  %v316 = vsel %vm310, %v312, %v299
  %v317 = vsel %vm309, %v311, %v316
  %v318 = vsel %vm308, %v307, %v317
  %v319 = vmul.f32 %v318, 0.70710677
  %v320 = vsub.f32 0.0, %v315
  %v321 = vmul.f32 %v320, 0.70710677
  %v322 = vmul.f32 %v315, 0.70710677
  %v323 = vmul.f32 %v275, %v275
  %v324 = vadd.f32 %v323, 1.0
  %v325 = vrsqrt.pop %v324
  %v326 = vadd.f32 %v325, 1.0
  %v327 = vmul.f32 %v326, 0.5
  %v328 = vrsqrt.pop %v327
  %v329 = vmul.f32 %v327, %v328
  %vm330 = vcmp.eq.f32.partialorder %v327, inf
  %v331 = vsel %vm330, %v327, %v329
  %vm332 = vcmp.eq.f32.partialorder %v327, 0.0
  %v333 = vand.u32 %v327, 2147483648
  %v334 = vsel %vm332, %v333, %v331
  %vm335 = vcmp.ge.f32.partialorder %v275, 0.0
  %v336 = vsel %vm335, 1.0, -1.0
  %v337 = vsub.f32 1.0, %v325
  %v338 = vmul.f32 %v337, 0.5
  %v339 = vmax.f32 %v338, 0.0
  %v340 = vrsqrt.pop %v339
  %v341 = vmul.f32 %v339, %v340
  %vm342 = vcmp.eq.f32.partialorder %v339, inf
  %v343 = vsel %vm342, %v339, %v341
  %vm344 = vcmp.eq.f32.partialorder %v339, 0.0
  %v345 = vand.u32 %v339, 2147483648
  %v346 = vsel %vm344, %v345, %v343
  %v347 = vmul.f32 %v336, %v346
  %v348 = vlaneseq
  %v349 = vshrl.u32 %v348, 7
  %v350 = vsub.s32 0, %v349
  %v351 = vrot.slane %v334, %v350
  %v352 = vmul.f32 %v351, %v319
  %v353 = vlaneseq
  %v354 = vshrl.u32 %v353, 7
  %v355 = vsub.s32 0, %v354
  %v356 = vrot.slane %v347, %v355
  %v357 = vmul.f32 %v356, %v319
  %v358 = vsub.f32 %v352, %v357
  %v359 = vmul.f32 %v351, %v321
  %v360 = vmul.f32 %v356, %v322
  %v361 = vsub.f32 %v359, %v360
  %v362 = vadd.f32 %v357, %v352
  %v363 = vmul.f32 %v356, %v321
  %v364 = vmul.f32 %v351, %v322
  %v365 = vadd.f32 %v363, %v364
  %v366 = vmul.f32 %v351, %v358
  %v367 = vmul.f32 %v356, %v361
  %v368 = vadd.f32 %v366, %v367
  %v369 = vmul.f32 %v351, %v361
  %v370 = vmul.f32 %v356, %v358
  %v371 = vsub.f32 %v369, %v370
  %v372 = vmul.f32 %v351, %v362
  %v373 = vmul.f32 %v356, %v365
  %v374 = vsub.f32 %v372, %v373
  %v375 = vmul.f32 %v351, %v365
  %v376 = vmul.f32 %v356, %v362
  %v377 = vadd.f32 %v375, %v376
  %v378 = vsub.f32 %v374, %v368
  %380 = vset.pattern.permute.xlu0 0
  %381 = vperm.xlu0 %380, %v378
  %v382 = vpop.permute.xlu0 %381
  %v384 = vlaneseq
  %v385 = vshrl.u32 %v384, 7
  %v386 = vsub.s32 0, %v385
  %v387 = vrot.slane %v203, %v386
  %v388 = vmul.f32 %v382, %v387
  %390 = vset.pattern.permute.xlu0 0
  %391 = vperm.xlu0 %390, %v368
  %v392 = vpop.permute.xlu0 %391
  %v394 = vadd.f32 %v392, %v388
  %v395 = vsub.f32 %v377, %v371
  %397 = vset.pattern.permute.xlu0 0
  %398 = vperm.xlu0 %397, %v395
  %v399 = vpop.permute.xlu0 %398
  %v401 = vmul.f32 %v399, %v387
  %403 = vset.pattern.permute.xlu0 0
  %404 = vperm.xlu0 %403, %v371
  %v405 = vpop.permute.xlu0 %404
  %v407 = vadd.f32 %v405, %v401
  %408 = vset.pattern.permute.xlu0 1
  %409 = vperm.xlu0 %408, %v378
  %v410 = vpop.permute.xlu0 %409
  %v412 = vlaneseq
  %v413 = vshrl.u32 %v412, 7
  %v414 = vsub.s32 1, %v413
  %v415 = vrot.slane %v203, %v414
  %v416 = vmul.f32 %v410, %v415
  %417 = vset.pattern.permute.xlu0 1
  %418 = vperm.xlu0 %417, %v368
  %v419 = vpop.permute.xlu0 %418
  %v421 = vadd.f32 %v419, %v416
  %422 = vset.pattern.permute.xlu0 1
  %423 = vperm.xlu0 %422, %v395
  %v424 = vpop.permute.xlu0 %423
  %v426 = vmul.f32 %v424, %v415
  %427 = vset.pattern.permute.xlu0 1
  %428 = vperm.xlu0 %427, %v371
  %v429 = vpop.permute.xlu0 %428
  %v431 = vadd.f32 %v429, %v426
  %v432 = vmul.f32 %v394, %v421
  %v433 = vmul.f32 %v407, %v431
  %v434 = vsub.f32 %v432, %v433
  %v435 = vmul.f32 %v394, %v431
  %v436 = vmul.f32 %v407, %v421
  %v437 = vadd.f32 %v435, %v436
  %438 = vset.pattern.permute.xlu0 2
  %439 = vperm.xlu0 %438, %v378
  %v440 = vpop.permute.xlu0 %439
  %v442 = vlaneseq
  %v443 = vshrl.u32 %v442, 7
  %v444 = vsub.s32 2, %v443
  %v445 = vrot.slane %v203, %v444
  %v446 = vmul.f32 %v440, %v445
  %447 = vset.pattern.permute.xlu0 2
  %448 = vperm.xlu0 %447, %v368
  %v449 = vpop.permute.xlu0 %448
  %v451 = vadd.f32 %v449, %v446
  %452 = vset.pattern.permute.xlu0 2
  %453 = vperm.xlu0 %452, %v395
  %v454 = vpop.permute.xlu0 %453
  %v456 = vmul.f32 %v454, %v445
  %457 = vset.pattern.permute.xlu0 2
  %458 = vperm.xlu0 %457, %v371
  %v459 = vpop.permute.xlu0 %458
  %v461 = vadd.f32 %v459, %v456
  %v462 = vmul.f32 %v434, %v451
  %v463 = vmul.f32 %v437, %v461
  %v464 = vsub.f32 %v462, %v463
  %v465 = vmul.f32 %v434, %v461
  %v466 = vmul.f32 %v437, %v451
  %v467 = vadd.f32 %v465, %v466
  %468 = vset.pattern.permute.xlu0 3
  %469 = vperm.xlu0 %468, %v378
  %v470 = vpop.permute.xlu0 %469
  %v472 = vlaneseq
  %v473 = vshrl.u32 %v472, 7
  %v474 = vsub.s32 3, %v473
  %v475 = vrot.slane %v203, %v474
  %v476 = vmul.f32 %v470, %v475
  %477 = vset.pattern.permute.xlu0 3
  %478 = vperm.xlu0 %477, %v368
  %v479 = vpop.permute.xlu0 %478
  %v481 = vadd.f32 %v479, %v476
  %482 = vset.pattern.permute.xlu0 3
  %483 = vperm.xlu0 %482, %v395
  %v484 = vpop.permute.xlu0 %483
  %v486 = vmul.f32 %v484, %v475
  %487 = vset.pattern.permute.xlu0 3
  %488 = vperm.xlu0 %487, %v371
  %v489 = vpop.permute.xlu0 %488
  %v491 = vadd.f32 %v489, %v486
  %v492 = vmul.f32 %v464, %v481
  %v493 = vmul.f32 %v467, %v491
  %v494 = vsub.f32 %v492, %v493
  %v495 = vmul.f32 %v464, %v491
  %v496 = vmul.f32 %v467, %v481
  %v497 = vadd.f32 %v495, %v496
  %vm498 = vcmask 130048
  %v500 = vsel %vm498, %v497, 0
  %502 = vmatprep.subr.mxu0 0.0
  %503 = vmatpush1.msra.mxu0 %v192
  %504 = vmatprep.subr.mxu0 0.0
  %505 = vmatpush1.msra.mxu0 %v193
  %506 = vmatprep.subr.mxu0 0.0
  %507 = vmatpush1.msra.mxu0 0.0
  %508 = vmatprep.subr.mxu0 0.0
  %509 = vmatpush1.msra.mxu0 0.0
  %510 = vmatprep.subr.mxu0 0.0
  %511 = vmatpush1.msra.mxu0 0.0
  %512 = vmatprep.subr.mxu0 0.0
  %513 = vmatpush1.msra.mxu0 0.0
  %514 = vmatprep.subr.mxu0 0.0
  %515 = vmatpush1.msra.mxu0 0.0
  %516 = vmatprep.subr.mxu0 0.0
  %517 = vmatpush1.msra.mxu0 0.0
  %518 = vmatprep.subr.mxu0 0.0
  %519 = vmatpush1.msra.mxu0 0.0
  %520 = vmatprep.subr.mxu0 0.0
  %521 = vmatpush1.msra.mxu0 0.0
  %522 = vmatprep.subr.mxu0 0.0
  %523 = vmatpush1.msra.mxu0 0.0
  %524 = vmatprep.subr.mxu0 0.0
  %525 = vmatpush1.msra.mxu0 0.0
  %526 = vmatprep.subr.mxu0 0.0
  %527 = vmatpush1.msra.mxu0 0.0
  %528 = vmatprep.subr.mxu0 0.0
  %529 = vmatpush1.msra.mxu0 0.0
  %530 = vmatprep.subr.mxu0 0.0
  %531 = vmatpush1.msra.mxu0 0.0
  %532 = vmatprep.subr.mxu0 0.0
  %533 = vmatpush1.msra.mxu0 0.0
  %534 = vmatprep.subr.mxu0 0.0
  %535 = vmatpush1.msra.mxu0 0.0
  %536 = vmatprep.subr.mxu0 0.0
  %537 = vmatpush1.msra.mxu0 0.0
  %538 = vmatprep.subr.mxu0 0.0
  %539 = vmatpush1.msra.mxu0 0.0
  %540 = vmatprep.subr.mxu0 0.0
  %541 = vmatpush1.msra.mxu0 0.0
  %542 = vmatprep.subr.mxu0 0.0
  %543 = vmatpush1.msra.mxu0 0.0
  %544 = vmatprep.subr.mxu0 0.0
  %545 = vmatpush1.msra.mxu0 0.0
  %546 = vmatprep.subr.mxu0 0.0
  %547 = vmatpush1.msra.mxu0 0.0
  %548 = vmatprep.subr.mxu0 0.0
  %549 = vmatpush1.msra.mxu0 0.0
  %550 = vmatprep.subr.mxu0 0.0
  %551 = vmatpush1.msra.mxu0 0.0
  %552 = vmatprep.subr.mxu0 0.0
  %553 = vmatpush1.msra.mxu0 0.0
  %554 = vmatprep.subr.mxu0 0.0
  %555 = vmatpush1.msra.mxu0 0.0
  %556 = vmatprep.subr.mxu0 0.0
  %557 = vmatpush1.msra.mxu0 0.0
  %558 = vmatprep.subr.mxu0 0.0
  %559 = vmatpush1.msra.mxu0 0.0
  %560 = vmatprep.subr.mxu0 0.0
  %561 = vmatpush1.msra.mxu0 0.0
  %562 = vmatprep.subr.mxu0 0.0
  %563 = vmatpush1.msra.mxu0 0.0
  %564 = vmatprep.subr.mxu0 0.0
  %565 = vmatpush1.msra.mxu0 0.0
  %566 = vmatprep.mubr.f32.mxu0 0.0
  %567 = vmatmul.mubr.f32.gmra.mrb[0].mxu0 %v500
  %v568 = vpop.f32.mrb[0].mxu0
  %v569 = vadd.f32 0.0, %v568
  %v570 = vpop.f32.mrb[0].mxu0
  %571 = vdwg.mxu0
  %v573 = vsel %vm498, %v494, 0
  %575 = vmatprep.subr.mxu0 0.0
  %576 = vmatpush1.msra.mxu0 %v190
  %577 = vmatprep.subr.mxu0 0.0
  %578 = vmatpush1.msra.mxu0 %v191
  %579 = vmatprep.subr.mxu0 0.0
  %580 = vmatpush1.msra.mxu0 0.0
  %581 = vmatprep.subr.mxu0 0.0
  %582 = vmatpush1.msra.mxu0 0.0
  %583 = vmatprep.subr.mxu0 0.0
  %584 = vmatpush1.msra.mxu0 0.0
  %585 = vmatprep.subr.mxu0 0.0
  %586 = vmatpush1.msra.mxu0 0.0
  %587 = vmatprep.subr.mxu0 0.0
  %588 = vmatpush1.msra.mxu0 0.0
  %589 = vmatprep.subr.mxu0 0.0
  %590 = vmatpush1.msra.mxu0 0.0
  %591 = vmatprep.subr.mxu0 0.0
  %592 = vmatpush1.msra.mxu0 0.0
  %593 = vmatprep.subr.mxu0 0.0
  %594 = vmatpush1.msra.mxu0 0.0
  %595 = vmatprep.subr.mxu0 0.0
  %596 = vmatpush1.msra.mxu0 0.0
  %597 = vmatprep.subr.mxu0 0.0
  %598 = vmatpush1.msra.mxu0 0.0
  %599 = vmatprep.subr.mxu0 0.0
  %600 = vmatpush1.msra.mxu0 0.0
  %601 = vmatprep.subr.mxu0 0.0
  %602 = vmatpush1.msra.mxu0 0.0
  %603 = vmatprep.subr.mxu0 0.0
  %604 = vmatpush1.msra.mxu0 0.0
  %605 = vmatprep.subr.mxu0 0.0
  %606 = vmatpush1.msra.mxu0 0.0
  %607 = vmatprep.subr.mxu0 0.0
  %608 = vmatpush1.msra.mxu0 0.0
  %609 = vmatprep.subr.mxu0 0.0
  %610 = vmatpush1.msra.mxu0 0.0
  %611 = vmatprep.subr.mxu0 0.0
  %612 = vmatpush1.msra.mxu0 0.0
  %613 = vmatprep.subr.mxu0 0.0
  %614 = vmatpush1.msra.mxu0 0.0
  %615 = vmatprep.subr.mxu0 0.0
  %616 = vmatpush1.msra.mxu0 0.0
  %617 = vmatprep.subr.mxu0 0.0
  %618 = vmatpush1.msra.mxu0 0.0
  %619 = vmatprep.subr.mxu0 0.0
  %620 = vmatpush1.msra.mxu0 0.0
  %621 = vmatprep.subr.mxu0 0.0
  %622 = vmatpush1.msra.mxu0 0.0
  %623 = vmatprep.subr.mxu0 0.0
  %624 = vmatpush1.msra.mxu0 0.0
  %625 = vmatprep.subr.mxu0 0.0
  %626 = vmatpush1.msra.mxu0 0.0
  %627 = vmatprep.subr.mxu0 0.0
  %628 = vmatpush1.msra.mxu0 0.0
  %629 = vmatprep.subr.mxu0 0.0
  %630 = vmatpush1.msra.mxu0 0.0
  %631 = vmatprep.subr.mxu0 0.0
  %632 = vmatpush1.msra.mxu0 0.0
  %633 = vmatprep.subr.mxu0 0.0
  %634 = vmatpush1.msra.mxu0 0.0
  %635 = vmatprep.subr.mxu0 0.0
  %636 = vmatpush1.msra.mxu0 0.0
  %637 = vmatprep.subr.mxu0 0.0
  %638 = vmatpush1.msra.mxu0 0.0
  %639 = vmatprep.mubr.f32.mxu0 0.0
  %640 = vmatmul.mubr.f32.gmra.mrb[0].mxu0 %v573
  %v641 = vpop.f32.mrb[0].mxu0
  %v642 = vadd.f32 %v569, %v641
  %v643 = vpop.f32.mrb[0].mxu0
  %644 = vdwg.mxu0
  %v645 = vmul.f32 %v642, %v642
  %647 = vrot.lane.b32.xlu0 %v645, 64
  %v648 = vpop.permute.xlu0 %647
  %v650 = vadd.f32 %v645, %v648
  %v652 = vlaneseq
  %v653 = vshrl.u32 %v652, 7
  %v654 = vsub.s32 0, %v653
  %v655 = vrot.slane %v202, %v654
  %vm657 = vcmask 523264
  %v659 = vsel %vm657, %v650, 0
  %661 = vmatprep.subr.mxu0 0.0
  %662 = vmatpush1.msra.mxu0 %v194
  %663 = vmatprep.subr.mxu0 0.0
  %664 = vmatpush1.msra.mxu0 %v195
  %665 = vmatprep.subr.mxu0 0.0
  %666 = vmatpush1.msra.mxu0 %v196
  %667 = vmatprep.subr.mxu0 0.0
  %668 = vmatpush1.msra.mxu0 %v197
  %669 = vmatprep.subr.mxu0 0.0
  %670 = vmatpush1.msra.mxu0 %v198
  %671 = vmatprep.subr.mxu0 0.0
  %672 = vmatpush1.msra.mxu0 %v199
  %673 = vmatprep.subr.mxu0 0.0
  %674 = vmatpush1.msra.mxu0 %v200
  %675 = vmatprep.subr.mxu0 0.0
  %676 = vmatpush1.msra.mxu0 %v201
  %677 = vmatprep.subr.mxu0 0.0
  %678 = vmatpush1.msra.mxu0 0.0
  %679 = vmatprep.subr.mxu0 0.0
  %680 = vmatpush1.msra.mxu0 0.0
  %681 = vmatprep.subr.mxu0 0.0
  %682 = vmatpush1.msra.mxu0 0.0
  %683 = vmatprep.subr.mxu0 0.0
  %684 = vmatpush1.msra.mxu0 0.0
  %685 = vmatprep.subr.mxu0 0.0
  %686 = vmatpush1.msra.mxu0 0.0
  %687 = vmatprep.subr.mxu0 0.0
  %688 = vmatpush1.msra.mxu0 0.0
  %689 = vmatprep.subr.mxu0 0.0
  %690 = vmatpush1.msra.mxu0 0.0
  %691 = vmatprep.subr.mxu0 0.0
  %692 = vmatpush1.msra.mxu0 0.0
  %693 = vmatprep.subr.mxu0 0.0
  %694 = vmatpush1.msra.mxu0 0.0
  %695 = vmatprep.subr.mxu0 0.0
  %696 = vmatpush1.msra.mxu0 0.0
  %697 = vmatprep.subr.mxu0 0.0
  %698 = vmatpush1.msra.mxu0 0.0
  %699 = vmatprep.subr.mxu0 0.0
  %700 = vmatpush1.msra.mxu0 0.0
  %701 = vmatprep.subr.mxu0 0.0
  %702 = vmatpush1.msra.mxu0 0.0
  %703 = vmatprep.subr.mxu0 0.0
  %704 = vmatpush1.msra.mxu0 0.0
  %705 = vmatprep.subr.mxu0 0.0
  %706 = vmatpush1.msra.mxu0 0.0
  %707 = vmatprep.subr.mxu0 0.0
  %708 = vmatpush1.msra.mxu0 0.0
  %709 = vmatprep.subr.mxu0 0.0
  %710 = vmatpush1.msra.mxu0 0.0
  %711 = vmatprep.subr.mxu0 0.0
  %712 = vmatpush1.msra.mxu0 0.0
  %713 = vmatprep.subr.mxu0 0.0
  %714 = vmatpush1.msra.mxu0 0.0
  %715 = vmatprep.subr.mxu0 0.0
  %716 = vmatpush1.msra.mxu0 0.0
  %717 = vmatprep.subr.mxu0 0.0
  %718 = vmatpush1.msra.mxu0 0.0
  %719 = vmatprep.subr.mxu0 0.0
  %720 = vmatpush1.msra.mxu0 0.0
  %721 = vmatprep.subr.mxu0 0.0
  %722 = vmatpush1.msra.mxu0 0.0
  %723 = vmatprep.subr.mxu0 0.0
  %724 = vmatpush1.msra.mxu0 0.0
  %725 = vmatprep.mubr.f32.mxu0 0.0
  %726 = vmatmul.mubr.f32.gmra.mrb[0].mxu0 %v659
  %v727 = vpop.f32.mrb[0].mxu0
  %v728 = vadd.f32 %v655, %v727
  %v729 = vpop.f32.mrb[0].mxu0
  %730 = vdwg.mxu0
  %v731 = vxor.u32 %v728, 2147483648
  %v732 = vmul.f32 %v731, 1.442695
  %v733 = vpow.pop %v732
  %v734 = vadd.f32 %v733, 1.0
  %v735 = vrcp.pop %v734
  %v736 = vmul.f32 1.0, %v735
  %v737 = vtanh.pop %v728
  %v738 = vmul.f32 %v736, 0.0
  %740 = vrot.lane.b32.xlu0 %v737, 96
  %v741 = vpop.permute.xlu0 %740
  %v743 = vmul.f32 %v736, %v741
  %745 = vrot.lane.b32.xlu0 %v743, 96
  %v746 = vpop.permute.xlu0 %745
  %v748 = vadd.f32 %v738, %v746
  %v749 = vtanh.pop %v748
  %751 = vrot.lane.b32.xlu0 %v749, 96
  %v752 = vpop.permute.xlu0 %751
  %v754 = vmul.f32 %v736, %v752
  %756 = vrot.lane.b32.xlu0 %v754, 32
  %v757 = vpop.permute.xlu0 %756
  %v758 = vsel %vm204, %v757, 0
  %760 = vmatprep.subr.mxu0 0.0
  %761 = vmatpush1.msra.mxu0 %v186
  %762 = vmatprep.subr.mxu0 0.0
  %763 = vmatpush1.msra.mxu0 %v187
  %764 = vmatprep.subr.mxu0 0.0
  %765 = vmatpush1.msra.mxu0 %v188
  %766 = vmatprep.subr.mxu0 0.0
  %767 = vmatpush1.msra.mxu0 %v189
  %768 = vmatprep.subr.mxu0 0.0
  %769 = vmatpush1.msra.mxu0 0.0
  %770 = vmatprep.subr.mxu0 0.0
  %771 = vmatpush1.msra.mxu0 0.0
  %772 = vmatprep.subr.mxu0 0.0
  %773 = vmatpush1.msra.mxu0 0.0
  %774 = vmatprep.subr.mxu0 0.0
  %775 = vmatpush1.msra.mxu0 0.0
  %776 = vmatprep.subr.mxu0 0.0
  %777 = vmatpush1.msra.mxu0 0.0
  %778 = vmatprep.subr.mxu0 0.0
  %779 = vmatpush1.msra.mxu0 0.0
  %780 = vmatprep.subr.mxu0 0.0
  %781 = vmatpush1.msra.mxu0 0.0
  %782 = vmatprep.subr.mxu0 0.0
  %783 = vmatpush1.msra.mxu0 0.0
  %784 = vmatprep.subr.mxu0 0.0
  %785 = vmatpush1.msra.mxu0 0.0
  %786 = vmatprep.subr.mxu0 0.0
  %787 = vmatpush1.msra.mxu0 0.0
  %788 = vmatprep.subr.mxu0 0.0
  %789 = vmatpush1.msra.mxu0 0.0
  %790 = vmatprep.subr.mxu0 0.0
  %791 = vmatpush1.msra.mxu0 0.0
  %792 = vmatprep.subr.mxu0 0.0
  %793 = vmatpush1.msra.mxu0 0.0
  %794 = vmatprep.subr.mxu0 0.0
  %795 = vmatpush1.msra.mxu0 0.0
  %796 = vmatprep.subr.mxu0 0.0
  %797 = vmatpush1.msra.mxu0 0.0
  %798 = vmatprep.subr.mxu0 0.0
  %799 = vmatpush1.msra.mxu0 0.0
  %800 = vmatprep.subr.mxu0 0.0
  %801 = vmatpush1.msra.mxu0 0.0
  %802 = vmatprep.subr.mxu0 0.0
  %803 = vmatpush1.msra.mxu0 0.0
  %804 = vmatprep.subr.mxu0 0.0
  %805 = vmatpush1.msra.mxu0 0.0
  %806 = vmatprep.subr.mxu0 0.0
  %807 = vmatpush1.msra.mxu0 0.0
  %808 = vmatprep.subr.mxu0 0.0
  %809 = vmatpush1.msra.mxu0 0.0
  %810 = vmatprep.subr.mxu0 0.0
  %811 = vmatpush1.msra.mxu0 0.0
  %812 = vmatprep.subr.mxu0 0.0
  %813 = vmatpush1.msra.mxu0 0.0
  %814 = vmatprep.subr.mxu0 0.0
  %815 = vmatpush1.msra.mxu0 0.0
  %816 = vmatprep.subr.mxu0 0.0
  %817 = vmatpush1.msra.mxu0 0.0
  %818 = vmatprep.subr.mxu0 0.0
  %819 = vmatpush1.msra.mxu0 0.0
  %820 = vmatprep.subr.mxu0 0.0
  %821 = vmatpush1.msra.mxu0 0.0
  %822 = vmatprep.subr.mxu0 0.0
  %823 = vmatpush1.msra.mxu0 0.0
  %824 = vmatprep.mubr.f32.mxu0 0.0
  %825 = vmatmul.mubr.f32.gmra.mrb[0].mxu0 %v758
  %v826 = vpop.f32.mrb[0].mxu0
  %v827 = vadd.f32 %v153, %v826
  %v828 = vpop.f32.mrb[0].mxu0
  %829 = vdwg.mxu0
  %v830 = vmul.f32 %v827, 0.5
  %v831 = vmul.f32 %v830, 0.63661975
  %v832 = vadd.f32 %v831, 0.5
  %v833 = vcvt.f32.s32.to.zero.pseudo %v832
  %v834 = vcvt.s32.f32 %v833
  %vm835 = vcmp.lt.f32.partialorder %v832, %v834
  %v836 = vsub.s32 %v833, 1
  %v837 = vsel %vm835, %v836, %v833
  %v838 = vcvt.s32.f32 %v837
  %v839 = vmul.f32 %v838, 1.5707964
  %v840 = vsub.f32 %v830, %v839
  %v841 = vand.u32 %v837, 3
  %v842 = vmul.f32 %v840, %v840
  %v843 = vmul.f32 %v842, 2.7557319e-06
  %v844 = vadd.f32 %v843, -0.0001984127
  %v845 = vmul.f32 %v842, %v844
  %v846 = vadd.f32 %v845, 0.008333334
  %v847 = vmul.f32 %v842, %v846
  %v848 = vadd.f32 %v847, -0.16666667
  %v849 = vmul.f32 %v842, %v848
  %v850 = vadd.f32 %v849, 1.0
  %v851 = vmul.f32 %v840, %v850
  %v852 = vmul.f32 %v842, 2.4801588e-05
  %v853 = vadd.f32 %v852, -0.0013888889
  %v854 = vmul.f32 %v842, %v853
  %v855 = vadd.f32 %v854, 0.041666668
  %v856 = vmul.f32 %v842, %v855
  %v857 = vadd.f32 %v856, -0.5
  %v858 = vmul.f32 %v842, %v857
  %v859 = vadd.f32 %v858, 1.0
  %vm860 = vcmp.eq.s32.totalorder %v841, 0
  %vm861 = vcmp.eq.s32.totalorder %v841, 1
  %vm862 = vcmp.eq.s32.totalorder %v841, 2
  %v863 = vsub.f32 0.0, %v851
  %v864 = vsub.f32 0.0, %v859
  %v865 = vsel %vm862, %v863, %v864
  %v866 = vsel %vm861, %v859, %v865
  %v867 = vsel %vm860, %v851, %v866
  %v868 = vsel %vm862, %v864, %v851
  %v869 = vsel %vm861, %v863, %v868
  %v870 = vsel %vm860, %v859, %v869
  %v871 = vmul.f32 %v870, 0.70710677
  %v872 = vsub.f32 0.0, %v867
  %v873 = vmul.f32 %v872, 0.70710677
  %v874 = vmul.f32 %v867, 0.70710677
  %v875 = vmul.f32 %v827, %v827
  %v876 = vadd.f32 %v875, 1.0
  %v877 = vrsqrt.pop %v876
  %v878 = vadd.f32 %v877, 1.0
  %v879 = vmul.f32 %v878, 0.5
  %v880 = vrsqrt.pop %v879
  %v881 = vmul.f32 %v879, %v880
  %vm882 = vcmp.eq.f32.partialorder %v879, inf
  %v883 = vsel %vm882, %v879, %v881
  %vm884 = vcmp.eq.f32.partialorder %v879, 0.0
  %v885 = vand.u32 %v879, 2147483648
  %v886 = vsel %vm884, %v885, %v883
  %vm887 = vcmp.ge.f32.partialorder %v827, 0.0
  %v888 = vsel %vm887, 1.0, -1.0
  %v889 = vsub.f32 1.0, %v877
  %v890 = vmul.f32 %v889, 0.5
  %v891 = vmax.f32 %v890, 0.0
  %v892 = vrsqrt.pop %v891
  %v893 = vmul.f32 %v891, %v892
  %vm894 = vcmp.eq.f32.partialorder %v891, inf
  %v895 = vsel %vm894, %v891, %v893
  %vm896 = vcmp.eq.f32.partialorder %v891, 0.0
  %v897 = vand.u32 %v891, 2147483648
  %v898 = vsel %vm896, %v897, %v895
  %v899 = vmul.f32 %v888, %v898
  %v900 = vlaneseq
  %v901 = vshrl.u32 %v900, 7
  %v902 = vsub.s32 0, %v901
  %v903 = vrot.slane %v886, %v902
  %v904 = vmul.f32 %v903, %v871
  %v905 = vlaneseq
  %v906 = vshrl.u32 %v905, 7
  %v907 = vsub.s32 0, %v906
  %v908 = vrot.slane %v899, %v907
  %v909 = vmul.f32 %v908, %v871
  %v910 = vsub.f32 %v904, %v909
  %v911 = vmul.f32 %v903, %v873
  %v912 = vmul.f32 %v908, %v874
  %v913 = vsub.f32 %v911, %v912
  %v914 = vadd.f32 %v909, %v904
  %v915 = vmul.f32 %v908, %v873
  %v916 = vmul.f32 %v903, %v874
  %v917 = vadd.f32 %v915, %v916
  %v918 = vmul.f32 %v903, %v910
  %v919 = vmul.f32 %v908, %v913
  %v920 = vadd.f32 %v918, %v919
  %v921 = vmul.f32 %v903, %v913
  %v922 = vmul.f32 %v908, %v910
  %v923 = vsub.f32 %v921, %v922
  %v924 = vmul.f32 %v903, %v914
  %v925 = vmul.f32 %v908, %v917
  %v926 = vsub.f32 %v924, %v925
  %v927 = vmul.f32 %v903, %v917
  %v928 = vmul.f32 %v908, %v914
  %v929 = vadd.f32 %v927, %v928
  %v930 = vsub.f32 %v926, %v920
  %932 = vset.pattern.permute.xlu0 0
  %933 = vperm.xlu0 %932, %v930
  %v934 = vpop.permute.xlu0 %933
  %v936 = vmul.f32 %v934, %v387
  %938 = vset.pattern.permute.xlu0 0
  %939 = vperm.xlu0 %938, %v920
  %v940 = vpop.permute.xlu0 %939
  %v942 = vadd.f32 %v940, %v936
  %v943 = vsub.f32 %v929, %v923
  %945 = vset.pattern.permute.xlu0 0
  %946 = vperm.xlu0 %945, %v943
  %v947 = vpop.permute.xlu0 %946
  %v949 = vmul.f32 %v947, %v387
  %951 = vset.pattern.permute.xlu0 0
  %952 = vperm.xlu0 %951, %v923
  %v953 = vpop.permute.xlu0 %952
  %v955 = vadd.f32 %v953, %v949
  %956 = vset.pattern.permute.xlu0 1
  %957 = vperm.xlu0 %956, %v930
  %v958 = vpop.permute.xlu0 %957
  %v960 = vmul.f32 %v958, %v415
  %961 = vset.pattern.permute.xlu0 1
  %962 = vperm.xlu0 %961, %v920
  %v963 = vpop.permute.xlu0 %962
  %v965 = vadd.f32 %v963, %v960
  %966 = vset.pattern.permute.xlu0 1
  %967 = vperm.xlu0 %966, %v943
  %v968 = vpop.permute.xlu0 %967
  %v970 = vmul.f32 %v968, %v415
  %971 = vset.pattern.permute.xlu0 1
  %972 = vperm.xlu0 %971, %v923
  %v973 = vpop.permute.xlu0 %972
  %v975 = vadd.f32 %v973, %v970
  %v976 = vmul.f32 %v942, %v965
  %v977 = vmul.f32 %v955, %v975
  %v978 = vsub.f32 %v976, %v977
  %v979 = vmul.f32 %v942, %v975
  %v980 = vmul.f32 %v955, %v965
  %v981 = vadd.f32 %v979, %v980
  %982 = vset.pattern.permute.xlu0 2
  %983 = vperm.xlu0 %982, %v930
  %v984 = vpop.permute.xlu0 %983
  %v986 = vmul.f32 %v984, %v445
  %987 = vset.pattern.permute.xlu0 2
  %988 = vperm.xlu0 %987, %v920
  %v989 = vpop.permute.xlu0 %988
  %v991 = vadd.f32 %v989, %v986
  %992 = vset.pattern.permute.xlu0 2
  %993 = vperm.xlu0 %992, %v943
  %v994 = vpop.permute.xlu0 %993
  %v996 = vmul.f32 %v994, %v445
  %997 = vset.pattern.permute.xlu0 2
  %998 = vperm.xlu0 %997, %v923
  %v999 = vpop.permute.xlu0 %998
  %v1001 = vadd.f32 %v999, %v996
  %v1002 = vmul.f32 %v978, %v991
  %v1003 = vmul.f32 %v981, %v1001
  %v1004 = vsub.f32 %v1002, %v1003
  %v1005 = vmul.f32 %v978, %v1001
  %v1006 = vmul.f32 %v981, %v991
  %v1007 = vadd.f32 %v1005, %v1006
  %1008 = vset.pattern.permute.xlu0 3
  %1009 = vperm.xlu0 %1008, %v930
  %v1010 = vpop.permute.xlu0 %1009
  %v1012 = vmul.f32 %v1010, %v475
  %1013 = vset.pattern.permute.xlu0 3
  %1014 = vperm.xlu0 %1013, %v920
  %v1015 = vpop.permute.xlu0 %1014
  %v1017 = vadd.f32 %v1015, %v1012
  %1018 = vset.pattern.permute.xlu0 3
  %1019 = vperm.xlu0 %1018, %v943
  %v1020 = vpop.permute.xlu0 %1019
  %v1022 = vmul.f32 %v1020, %v475
  %1023 = vset.pattern.permute.xlu0 3
  %1024 = vperm.xlu0 %1023, %v923
  %v1025 = vpop.permute.xlu0 %1024
  %v1027 = vadd.f32 %v1025, %v1022
  %v1028 = vmul.f32 %v1004, %v1017
  %v1029 = vmul.f32 %v1007, %v1027
  %v1030 = vsub.f32 %v1028, %v1029
  %v1031 = vmul.f32 %v1004, %v1027
  %v1032 = vmul.f32 %v1007, %v1017
  %v1033 = vadd.f32 %v1031, %v1032
  %v1035 = vsel %vm498, %v1033, 0
  %1037 = vmatprep.subr.mxu0 0.0
  %1038 = vmatpush1.msra.mxu0 %v192
  %1039 = vmatprep.subr.mxu0 0.0
  %1040 = vmatpush1.msra.mxu0 %v193
  %1041 = vmatprep.subr.mxu0 0.0
  %1042 = vmatpush1.msra.mxu0 0.0
  %1043 = vmatprep.subr.mxu0 0.0
  %1044 = vmatpush1.msra.mxu0 0.0
  %1045 = vmatprep.subr.mxu0 0.0
  %1046 = vmatpush1.msra.mxu0 0.0
  %1047 = vmatprep.subr.mxu0 0.0
  %1048 = vmatpush1.msra.mxu0 0.0
  %1049 = vmatprep.subr.mxu0 0.0
  %1050 = vmatpush1.msra.mxu0 0.0
  %1051 = vmatprep.subr.mxu0 0.0
  %1052 = vmatpush1.msra.mxu0 0.0
  %1053 = vmatprep.subr.mxu0 0.0
  %1054 = vmatpush1.msra.mxu0 0.0
  %1055 = vmatprep.subr.mxu0 0.0
  %1056 = vmatpush1.msra.mxu0 0.0
  %1057 = vmatprep.subr.mxu0 0.0
  %1058 = vmatpush1.msra.mxu0 0.0
  %1059 = vmatprep.subr.mxu0 0.0
  %1060 = vmatpush1.msra.mxu0 0.0
  %1061 = vmatprep.subr.mxu0 0.0
  %1062 = vmatpush1.msra.mxu0 0.0
  %1063 = vmatprep.subr.mxu0 0.0
  %1064 = vmatpush1.msra.mxu0 0.0
  %1065 = vmatprep.subr.mxu0 0.0
  %1066 = vmatpush1.msra.mxu0 0.0
  %1067 = vmatprep.subr.mxu0 0.0
  %1068 = vmatpush1.msra.mxu0 0.0
  %1069 = vmatprep.subr.mxu0 0.0
  %1070 = vmatpush1.msra.mxu0 0.0
  %1071 = vmatprep.subr.mxu0 0.0
  %1072 = vmatpush1.msra.mxu0 0.0
  %1073 = vmatprep.subr.mxu0 0.0
  %1074 = vmatpush1.msra.mxu0 0.0
  %1075 = vmatprep.subr.mxu0 0.0
  %1076 = vmatpush1.msra.mxu0 0.0
  %1077 = vmatprep.subr.mxu0 0.0
  %1078 = vmatpush1.msra.mxu0 0.0
  %1079 = vmatprep.subr.mxu0 0.0
  %1080 = vmatpush1.msra.mxu0 0.0
  %1081 = vmatprep.subr.mxu0 0.0
  %1082 = vmatpush1.msra.mxu0 0.0
  %1083 = vmatprep.subr.mxu0 0.0
  %1084 = vmatpush1.msra.mxu0 0.0
  %1085 = vmatprep.subr.mxu0 0.0
  %1086 = vmatpush1.msra.mxu0 0.0
  %1087 = vmatprep.subr.mxu0 0.0
  %1088 = vmatpush1.msra.mxu0 0.0
  %1089 = vmatprep.subr.mxu0 0.0
  %1090 = vmatpush1.msra.mxu0 0.0
  %1091 = vmatprep.subr.mxu0 0.0
  %1092 = vmatpush1.msra.mxu0 0.0
  %1093 = vmatprep.subr.mxu0 0.0
  %1094 = vmatpush1.msra.mxu0 0.0
  %1095 = vmatprep.subr.mxu0 0.0
  %1096 = vmatpush1.msra.mxu0 0.0
  %1097 = vmatprep.subr.mxu0 0.0
  %1098 = vmatpush1.msra.mxu0 0.0
  %1099 = vmatprep.subr.mxu0 0.0
  %1100 = vmatpush1.msra.mxu0 0.0
  %1101 = vmatprep.mubr.f32.mxu0 0.0
  %1102 = vmatmul.mubr.f32.gmra.mrb[0].mxu0 %v1035
  %v1103 = vpop.f32.mrb[0].mxu0
  %v1104 = vadd.f32 0.0, %v1103
  %v1105 = vpop.f32.mrb[0].mxu0
  %1106 = vdwg.mxu0
  %v1108 = vsel %vm498, %v1030, 0
  %1110 = vmatprep.subr.mxu0 0.0
  %1111 = vmatpush1.msra.mxu0 %v190
  %1112 = vmatprep.subr.mxu0 0.0
  %1113 = vmatpush1.msra.mxu0 %v191
  %1114 = vmatprep.subr.mxu0 0.0
  %1115 = vmatpush1.msra.mxu0 0.0
  %1116 = vmatprep.subr.mxu0 0.0
  %1117 = vmatpush1.msra.mxu0 0.0
  %1118 = vmatprep.subr.mxu0 0.0
  %1119 = vmatpush1.msra.mxu0 0.0
  %1120 = vmatprep.subr.mxu0 0.0
  %1121 = vmatpush1.msra.mxu0 0.0
  %1122 = vmatprep.subr.mxu0 0.0
  %1123 = vmatpush1.msra.mxu0 0.0
  %1124 = vmatprep.subr.mxu0 0.0
  %1125 = vmatpush1.msra.mxu0 0.0
  %1126 = vmatprep.subr.mxu0 0.0
  %1127 = vmatpush1.msra.mxu0 0.0
  %1128 = vmatprep.subr.mxu0 0.0
  %1129 = vmatpush1.msra.mxu0 0.0
  %1130 = vmatprep.subr.mxu0 0.0
  %1131 = vmatpush1.msra.mxu0 0.0
  %1132 = vmatprep.subr.mxu0 0.0
  %1133 = vmatpush1.msra.mxu0 0.0
  %1134 = vmatprep.subr.mxu0 0.0
  %1135 = vmatpush1.msra.mxu0 0.0
  %1136 = vmatprep.subr.mxu0 0.0
  %1137 = vmatpush1.msra.mxu0 0.0
  %1138 = vmatprep.subr.mxu0 0.0
  %1139 = vmatpush1.msra.mxu0 0.0
  %1140 = vmatprep.subr.mxu0 0.0
  %1141 = vmatpush1.msra.mxu0 0.0
  %1142 = vmatprep.subr.mxu0 0.0
  %1143 = vmatpush1.msra.mxu0 0.0
  %1144 = vmatprep.subr.mxu0 0.0
  %1145 = vmatpush1.msra.mxu0 0.0
  %1146 = vmatprep.subr.mxu0 0.0
  %1147 = vmatpush1.msra.mxu0 0.0
  %1148 = vmatprep.subr.mxu0 0.0
  %1149 = vmatpush1.msra.mxu0 0.0
  %1150 = vmatprep.subr.mxu0 0.0
  %1151 = vmatpush1.msra.mxu0 0.0
  %1152 = vmatprep.subr.mxu0 0.0
  %1153 = vmatpush1.msra.mxu0 0.0
  %1154 = vmatprep.subr.mxu0 0.0
  %1155 = vmatpush1.msra.mxu0 0.0
  %1156 = vmatprep.subr.mxu0 0.0
  %1157 = vmatpush1.msra.mxu0 0.0
  %1158 = vmatprep.subr.mxu0 0.0
  %1159 = vmatpush1.msra.mxu0 0.0
  %1160 = vmatprep.subr.mxu0 0.0
  %1161 = vmatpush1.msra.mxu0 0.0
  %1162 = vmatprep.subr.mxu0 0.0
  %1163 = vmatpush1.msra.mxu0 0.0
  %1164 = vmatprep.subr.mxu0 0.0
  %1165 = vmatpush1.msra.mxu0 0.0
  %1166 = vmatprep.subr.mxu0 0.0
  %1167 = vmatpush1.msra.mxu0 0.0
  %1168 = vmatprep.subr.mxu0 0.0
  %1169 = vmatpush1.msra.mxu0 0.0
  %1170 = vmatprep.subr.mxu0 0.0
  %1171 = vmatpush1.msra.mxu0 0.0
  %1172 = vmatprep.subr.mxu0 0.0
  %1173 = vmatpush1.msra.mxu0 0.0
  %1174 = vmatprep.mubr.f32.mxu0 0.0
  %1175 = vmatmul.mubr.f32.gmra.mrb[0].mxu0 %v1108
  %v1176 = vpop.f32.mrb[0].mxu0
  %v1177 = vadd.f32 %v1104, %v1176
  %v1178 = vpop.f32.mrb[0].mxu0
  %1179 = vdwg.mxu0
  %v1180 = vmul.f32 %v1177, %v1177
  %1182 = vrot.lane.b32.xlu0 %v1180, 64
  %v1183 = vpop.permute.xlu0 %1182
  %v1185 = vadd.f32 %v1180, %v1183
  %v1187 = vsel %vm657, %v1185, 0
  %1189 = vmatprep.subr.mxu0 0.0
  %1190 = vmatpush1.msra.mxu0 %v194
  %1191 = vmatprep.subr.mxu0 0.0
  %1192 = vmatpush1.msra.mxu0 %v195
  %1193 = vmatprep.subr.mxu0 0.0
  %1194 = vmatpush1.msra.mxu0 %v196
  %1195 = vmatprep.subr.mxu0 0.0
  %1196 = vmatpush1.msra.mxu0 %v197
  %1197 = vmatprep.subr.mxu0 0.0
  %1198 = vmatpush1.msra.mxu0 %v198
  %1199 = vmatprep.subr.mxu0 0.0
  %1200 = vmatpush1.msra.mxu0 %v199
  %1201 = vmatprep.subr.mxu0 0.0
  %1202 = vmatpush1.msra.mxu0 %v200
  %1203 = vmatprep.subr.mxu0 0.0
  %1204 = vmatpush1.msra.mxu0 %v201
  %1205 = vmatprep.subr.mxu0 0.0
  %1206 = vmatpush1.msra.mxu0 0.0
  %1207 = vmatprep.subr.mxu0 0.0
  %1208 = vmatpush1.msra.mxu0 0.0
  %1209 = vmatprep.subr.mxu0 0.0
  %1210 = vmatpush1.msra.mxu0 0.0
  %1211 = vmatprep.subr.mxu0 0.0
  %1212 = vmatpush1.msra.mxu0 0.0
  %1213 = vmatprep.subr.mxu0 0.0
  %1214 = vmatpush1.msra.mxu0 0.0
  %1215 = vmatprep.subr.mxu0 0.0
  %1216 = vmatpush1.msra.mxu0 0.0
  %1217 = vmatprep.subr.mxu0 0.0
  %1218 = vmatpush1.msra.mxu0 0.0
  %1219 = vmatprep.subr.mxu0 0.0
  %1220 = vmatpush1.msra.mxu0 0.0
  %1221 = vmatprep.subr.mxu0 0.0
  %1222 = vmatpush1.msra.mxu0 0.0
  %1223 = vmatprep.subr.mxu0 0.0
  %1224 = vmatpush1.msra.mxu0 0.0
  %1225 = vmatprep.subr.mxu0 0.0
  %1226 = vmatpush1.msra.mxu0 0.0
  %1227 = vmatprep.subr.mxu0 0.0
  %1228 = vmatpush1.msra.mxu0 0.0
  %1229 = vmatprep.subr.mxu0 0.0
  %1230 = vmatpush1.msra.mxu0 0.0
  %1231 = vmatprep.subr.mxu0 0.0
  %1232 = vmatpush1.msra.mxu0 0.0
  %1233 = vmatprep.subr.mxu0 0.0
  %1234 = vmatpush1.msra.mxu0 0.0
  %1235 = vmatprep.subr.mxu0 0.0
  %1236 = vmatpush1.msra.mxu0 0.0
  %1237 = vmatprep.subr.mxu0 0.0
  %1238 = vmatpush1.msra.mxu0 0.0
  %1239 = vmatprep.subr.mxu0 0.0
  %1240 = vmatpush1.msra.mxu0 0.0
  %1241 = vmatprep.subr.mxu0 0.0
  %1242 = vmatpush1.msra.mxu0 0.0
  %1243 = vmatprep.subr.mxu0 0.0
  %1244 = vmatpush1.msra.mxu0 0.0
  %1245 = vmatprep.subr.mxu0 0.0
  %1246 = vmatpush1.msra.mxu0 0.0
  %1247 = vmatprep.subr.mxu0 0.0
  %1248 = vmatpush1.msra.mxu0 0.0
  %1249 = vmatprep.subr.mxu0 0.0
  %1250 = vmatpush1.msra.mxu0 0.0
  %1251 = vmatprep.subr.mxu0 0.0
  %1252 = vmatpush1.msra.mxu0 0.0
  %1253 = vmatprep.mubr.f32.mxu0 0.0
  %1254 = vmatmul.mubr.f32.gmra.mrb[0].mxu0 %v1187
  %v1255 = vpop.f32.mrb[0].mxu0
  %v1256 = vadd.f32 %v655, %v1255
  %v1257 = vpop.f32.mrb[0].mxu0
  %1258 = vdwg.mxu0
  %v1259 = vxor.u32 %v1256, 2147483648
  %v1260 = vmul.f32 %v1259, 1.442695
  %v1261 = vpow.pop %v1260
  %v1262 = vadd.f32 %v1261, 1.0
  %v1263 = vrcp.pop %v1262
  %v1264 = vmul.f32 1.0, %v1263
  %v1265 = vtanh.pop %v1256
  %v1266 = vmul.f32 %v1264, %v748
  %1268 = vrot.lane.b32.xlu0 %v1265, 96
  %v1269 = vpop.permute.xlu0 %1268
  %v1271 = vmul.f32 %v1264, %v1269
  %1273 = vrot.lane.b32.xlu0 %v1271, 96
  %v1274 = vpop.permute.xlu0 %1273
  %v1276 = vadd.f32 %v1266, %v1274
  %v1277 = vtanh.pop %v1276
  %1279 = vrot.lane.b32.xlu0 %v1277, 96
  %v1280 = vpop.permute.xlu0 %1279
  %v1282 = vmul.f32 %v1264, %v1280
  %1284 = vrot.lane.b32.xlu0 %v1282, 32
  %v1285 = vpop.permute.xlu0 %1284
  %v1286 = vsel %vm204, %v1285, 0
  %1288 = vmatprep.subr.mxu0 0.0
  %1289 = vmatpush1.msra.mxu0 %v186
  %1290 = vmatprep.subr.mxu0 0.0
  %1291 = vmatpush1.msra.mxu0 %v187
  %1292 = vmatprep.subr.mxu0 0.0
  %1293 = vmatpush1.msra.mxu0 %v188
  %1294 = vmatprep.subr.mxu0 0.0
  %1295 = vmatpush1.msra.mxu0 %v189
  %1296 = vmatprep.subr.mxu0 0.0
  %1297 = vmatpush1.msra.mxu0 0.0
  %1298 = vmatprep.subr.mxu0 0.0
  %1299 = vmatpush1.msra.mxu0 0.0
  %1300 = vmatprep.subr.mxu0 0.0
  %1301 = vmatpush1.msra.mxu0 0.0
  %1302 = vmatprep.subr.mxu0 0.0
  %1303 = vmatpush1.msra.mxu0 0.0
  %1304 = vmatprep.subr.mxu0 0.0
  %1305 = vmatpush1.msra.mxu0 0.0
  %1306 = vmatprep.subr.mxu0 0.0
  %1307 = vmatpush1.msra.mxu0 0.0
  %1308 = vmatprep.subr.mxu0 0.0
  %1309 = vmatpush1.msra.mxu0 0.0
  %1310 = vmatprep.subr.mxu0 0.0
  %1311 = vmatpush1.msra.mxu0 0.0
  %1312 = vmatprep.subr.mxu0 0.0
  %1313 = vmatpush1.msra.mxu0 0.0
  %1314 = vmatprep.subr.mxu0 0.0
  %1315 = vmatpush1.msra.mxu0 0.0
  %1316 = vmatprep.subr.mxu0 0.0
  %1317 = vmatpush1.msra.mxu0 0.0
  %1318 = vmatprep.subr.mxu0 0.0
  %1319 = vmatpush1.msra.mxu0 0.0
  %1320 = vmatprep.subr.mxu0 0.0
  %1321 = vmatpush1.msra.mxu0 0.0
  %1322 = vmatprep.subr.mxu0 0.0
  %1323 = vmatpush1.msra.mxu0 0.0
  %1324 = vmatprep.subr.mxu0 0.0
  %1325 = vmatpush1.msra.mxu0 0.0
  %1326 = vmatprep.subr.mxu0 0.0
  %1327 = vmatpush1.msra.mxu0 0.0
  %1328 = vmatprep.subr.mxu0 0.0
  %1329 = vmatpush1.msra.mxu0 0.0
  %1330 = vmatprep.subr.mxu0 0.0
  %1331 = vmatpush1.msra.mxu0 0.0
  %1332 = vmatprep.subr.mxu0 0.0
  %1333 = vmatpush1.msra.mxu0 0.0
  %1334 = vmatprep.subr.mxu0 0.0
  %1335 = vmatpush1.msra.mxu0 0.0
  %1336 = vmatprep.subr.mxu0 0.0
  %1337 = vmatpush1.msra.mxu0 0.0
  %1338 = vmatprep.subr.mxu0 0.0
  %1339 = vmatpush1.msra.mxu0 0.0
  %1340 = vmatprep.subr.mxu0 0.0
  %1341 = vmatpush1.msra.mxu0 0.0
  %1342 = vmatprep.subr.mxu0 0.0
  %1343 = vmatpush1.msra.mxu0 0.0
  %1344 = vmatprep.subr.mxu0 0.0
  %1345 = vmatpush1.msra.mxu0 0.0
  %1346 = vmatprep.subr.mxu0 0.0
  %1347 = vmatpush1.msra.mxu0 0.0
  %1348 = vmatprep.subr.mxu0 0.0
  %1349 = vmatpush1.msra.mxu0 0.0
  %1350 = vmatprep.subr.mxu0 0.0
  %1351 = vmatpush1.msra.mxu0 0.0
  %1352 = vmatprep.mubr.f32.mxu0 0.0
  %1353 = vmatmul.mubr.f32.gmra.mrb[0].mxu0 %v1286
  %v1354 = vpop.f32.mrb[0].mxu0
  %v1355 = vadd.f32 %v158, %v1354
  %v1356 = vpop.f32.mrb[0].mxu0
  %1357 = vdwg.mxu0
  %v1358 = vmul.f32 %v1355, 0.5
  %v1359 = vmul.f32 %v1358, 0.63661975
  %v1360 = vadd.f32 %v1359, 0.5
  %v1361 = vcvt.f32.s32.to.zero.pseudo %v1360
  %v1362 = vcvt.s32.f32 %v1361
  %vm1363 = vcmp.lt.f32.partialorder %v1360, %v1362
  %v1364 = vsub.s32 %v1361, 1
  %v1365 = vsel %vm1363, %v1364, %v1361
  %v1366 = vcvt.s32.f32 %v1365
  %v1367 = vmul.f32 %v1366, 1.5707964
  %v1368 = vsub.f32 %v1358, %v1367
  %v1369 = vand.u32 %v1365, 3
  %v1370 = vmul.f32 %v1368, %v1368
  %v1371 = vmul.f32 %v1370, 2.7557319e-06
  %v1372 = vadd.f32 %v1371, -0.0001984127
  %v1373 = vmul.f32 %v1370, %v1372
  %v1374 = vadd.f32 %v1373, 0.008333334
  %v1375 = vmul.f32 %v1370, %v1374
  %v1376 = vadd.f32 %v1375, -0.16666667
  %v1377 = vmul.f32 %v1370, %v1376
  %v1378 = vadd.f32 %v1377, 1.0
  %v1379 = vmul.f32 %v1368, %v1378
  %v1380 = vmul.f32 %v1370, 2.4801588e-05
  %v1381 = vadd.f32 %v1380, -0.0013888889
  %v1382 = vmul.f32 %v1370, %v1381
  %v1383 = vadd.f32 %v1382, 0.041666668
  %v1384 = vmul.f32 %v1370, %v1383
  %v1385 = vadd.f32 %v1384, -0.5
  %v1386 = vmul.f32 %v1370, %v1385
  %v1387 = vadd.f32 %v1386, 1.0
  %vm1388 = vcmp.eq.s32.totalorder %v1369, 0
  %vm1389 = vcmp.eq.s32.totalorder %v1369, 1
  %vm1390 = vcmp.eq.s32.totalorder %v1369, 2
  %v1391 = vsub.f32 0.0, %v1379
  %v1392 = vsub.f32 0.0, %v1387
  %v1393 = vsel %vm1390, %v1391, %v1392
  %v1394 = vsel %vm1389, %v1387, %v1393
  %v1395 = vsel %vm1388, %v1379, %v1394
  %v1396 = vsel %vm1390, %v1392, %v1379
  %v1397 = vsel %vm1389, %v1391, %v1396
  %v1398 = vsel %vm1388, %v1387, %v1397
  %v1399 = vmul.f32 %v1398, 0.70710677
  %v1400 = vsub.f32 0.0, %v1395
  %v1401 = vmul.f32 %v1400, 0.70710677
  %v1402 = vmul.f32 %v1395, 0.70710677
  %v1403 = vmul.f32 %v1355, %v1355
  %v1404 = vadd.f32 %v1403, 1.0
  %v1405 = vrsqrt.pop %v1404
  %v1406 = vadd.f32 %v1405, 1.0
  %v1407 = vmul.f32 %v1406, 0.5
  %v1408 = vrsqrt.pop %v1407
  %v1409 = vmul.f32 %v1407, %v1408
  %vm1410 = vcmp.eq.f32.partialorder %v1407, inf
  %v1411 = vsel %vm1410, %v1407, %v1409
  %vm1412 = vcmp.eq.f32.partialorder %v1407, 0.0
  %v1413 = vand.u32 %v1407, 2147483648
  %v1414 = vsel %vm1412, %v1413, %v1411
  %vm1415 = vcmp.ge.f32.partialorder %v1355, 0.0
  %v1416 = vsel %vm1415, 1.0, -1.0
  %v1417 = vsub.f32 1.0, %v1405
  %v1418 = vmul.f32 %v1417, 0.5
  %v1419 = vmax.f32 %v1418, 0.0
  %v1420 = vrsqrt.pop %v1419
  %v1421 = vmul.f32 %v1419, %v1420
  %vm1422 = vcmp.eq.f32.partialorder %v1419, inf
  %v1423 = vsel %vm1422, %v1419, %v1421
  %vm1424 = vcmp.eq.f32.partialorder %v1419, 0.0
  %v1425 = vand.u32 %v1419, 2147483648
  %v1426 = vsel %vm1424, %v1425, %v1423
  %v1427 = vmul.f32 %v1416, %v1426
  %v1428 = vlaneseq
  %v1429 = vshrl.u32 %v1428, 7
  %v1430 = vsub.s32 0, %v1429
  %v1431 = vrot.slane %v1414, %v1430
  %v1432 = vmul.f32 %v1431, %v1399
  %v1433 = vlaneseq
  %v1434 = vshrl.u32 %v1433, 7
  %v1435 = vsub.s32 0, %v1434
  %v1436 = vrot.slane %v1427, %v1435
  %v1437 = vmul.f32 %v1436, %v1399
  %v1438 = vsub.f32 %v1432, %v1437
  %v1439 = vmul.f32 %v1431, %v1401
  %v1440 = vmul.f32 %v1436, %v1402
  %v1441 = vsub.f32 %v1439, %v1440
  %v1442 = vadd.f32 %v1437, %v1432
  %v1443 = vmul.f32 %v1436, %v1401
  %v1444 = vmul.f32 %v1431, %v1402
  %v1445 = vadd.f32 %v1443, %v1444
  %v1446 = vmul.f32 %v1431, %v1438
  %v1447 = vmul.f32 %v1436, %v1441
  %v1448 = vadd.f32 %v1446, %v1447
  %v1449 = vmul.f32 %v1431, %v1441
  %v1450 = vmul.f32 %v1436, %v1438
  %v1451 = vsub.f32 %v1449, %v1450
  %v1452 = vmul.f32 %v1431, %v1442
  %v1453 = vmul.f32 %v1436, %v1445
  %v1454 = vsub.f32 %v1452, %v1453
  %v1455 = vmul.f32 %v1431, %v1445
  %v1456 = vmul.f32 %v1436, %v1442
  %v1457 = vadd.f32 %v1455, %v1456
  %v1458 = vsub.f32 %v1454, %v1448
  %1460 = vset.pattern.permute.xlu0 0
  %1461 = vperm.xlu0 %1460, %v1458
  %v1462 = vpop.permute.xlu0 %1461
  %v1464 = vmul.f32 %v1462, %v387
  %1466 = vset.pattern.permute.xlu0 0
  %1467 = vperm.xlu0 %1466, %v1448
  %v1468 = vpop.permute.xlu0 %1467
  %v1470 = vadd.f32 %v1468, %v1464
  %v1471 = vsub.f32 %v1457, %v1451
  %1473 = vset.pattern.permute.xlu0 0
  %1474 = vperm.xlu0 %1473, %v1471
  %v1475 = vpop.permute.xlu0 %1474
  %v1477 = vmul.f32 %v1475, %v387
  %1479 = vset.pattern.permute.xlu0 0
  %1480 = vperm.xlu0 %1479, %v1451
  %v1481 = vpop.permute.xlu0 %1480
  %v1483 = vadd.f32 %v1481, %v1477
  %1484 = vset.pattern.permute.xlu0 1
  %1485 = vperm.xlu0 %1484, %v1458
  %v1486 = vpop.permute.xlu0 %1485
  %v1488 = vmul.f32 %v1486, %v415
  %1489 = vset.pattern.permute.xlu0 1
  %1490 = vperm.xlu0 %1489, %v1448
  %v1491 = vpop.permute.xlu0 %1490
  %v1493 = vadd.f32 %v1491, %v1488
  %1494 = vset.pattern.permute.xlu0 1
  %1495 = vperm.xlu0 %1494, %v1471
  %v1496 = vpop.permute.xlu0 %1495
  %v1498 = vmul.f32 %v1496, %v415
  %1499 = vset.pattern.permute.xlu0 1
  %1500 = vperm.xlu0 %1499, %v1451
  %v1501 = vpop.permute.xlu0 %1500
  %v1503 = vadd.f32 %v1501, %v1498
  %v1504 = vmul.f32 %v1470, %v1493
  %v1505 = vmul.f32 %v1483, %v1503
  %v1506 = vsub.f32 %v1504, %v1505
  %v1507 = vmul.f32 %v1470, %v1503
  %v1508 = vmul.f32 %v1483, %v1493
  %v1509 = vadd.f32 %v1507, %v1508
  %1510 = vset.pattern.permute.xlu0 2
  %1511 = vperm.xlu0 %1510, %v1458
  %v1512 = vpop.permute.xlu0 %1511
  %v1514 = vmul.f32 %v1512, %v445
  %1515 = vset.pattern.permute.xlu0 2
  %1516 = vperm.xlu0 %1515, %v1448
  %v1517 = vpop.permute.xlu0 %1516
  %v1519 = vadd.f32 %v1517, %v1514
  %1520 = vset.pattern.permute.xlu0 2
  %1521 = vperm.xlu0 %1520, %v1471
  %v1522 = vpop.permute.xlu0 %1521
  %v1524 = vmul.f32 %v1522, %v445
  %1525 = vset.pattern.permute.xlu0 2
  %1526 = vperm.xlu0 %1525, %v1451
  %v1527 = vpop.permute.xlu0 %1526
  %v1529 = vadd.f32 %v1527, %v1524
  %v1530 = vmul.f32 %v1506, %v1519
  %v1531 = vmul.f32 %v1509, %v1529
  %v1532 = vsub.f32 %v1530, %v1531
  %v1533 = vmul.f32 %v1506, %v1529
  %v1534 = vmul.f32 %v1509, %v1519
  %v1535 = vadd.f32 %v1533, %v1534
  %1536 = vset.pattern.permute.xlu0 3
  %1537 = vperm.xlu0 %1536, %v1458
  %v1538 = vpop.permute.xlu0 %1537
  %v1540 = vmul.f32 %v1538, %v475
  %1541 = vset.pattern.permute.xlu0 3
  %1542 = vperm.xlu0 %1541, %v1448
  %v1543 = vpop.permute.xlu0 %1542
  %v1545 = vadd.f32 %v1543, %v1540
  %1546 = vset.pattern.permute.xlu0 3
  %1547 = vperm.xlu0 %1546, %v1471
  %v1548 = vpop.permute.xlu0 %1547
  %v1550 = vmul.f32 %v1548, %v475
  %1551 = vset.pattern.permute.xlu0 3
  %1552 = vperm.xlu0 %1551, %v1451
  %v1553 = vpop.permute.xlu0 %1552
  %v1555 = vadd.f32 %v1553, %v1550
  %v1556 = vmul.f32 %v1532, %v1545
  %v1557 = vmul.f32 %v1535, %v1555
  %v1558 = vsub.f32 %v1556, %v1557
  %v1559 = vmul.f32 %v1532, %v1555
  %v1560 = vmul.f32 %v1535, %v1545
  %v1561 = vadd.f32 %v1559, %v1560
  %v1563 = vsel %vm498, %v1561, 0
  %1565 = vmatprep.subr.mxu0 0.0
  %1566 = vmatpush1.msra.mxu0 %v192
  %1567 = vmatprep.subr.mxu0 0.0
  %1568 = vmatpush1.msra.mxu0 %v193
  %1569 = vmatprep.subr.mxu0 0.0
  %1570 = vmatpush1.msra.mxu0 0.0
  %1571 = vmatprep.subr.mxu0 0.0
  %1572 = vmatpush1.msra.mxu0 0.0
  %1573 = vmatprep.subr.mxu0 0.0
  %1574 = vmatpush1.msra.mxu0 0.0
  %1575 = vmatprep.subr.mxu0 0.0
  %1576 = vmatpush1.msra.mxu0 0.0
  %1577 = vmatprep.subr.mxu0 0.0
  %1578 = vmatpush1.msra.mxu0 0.0
  %1579 = vmatprep.subr.mxu0 0.0
  %1580 = vmatpush1.msra.mxu0 0.0
  %1581 = vmatprep.subr.mxu0 0.0
  %1582 = vmatpush1.msra.mxu0 0.0
  %1583 = vmatprep.subr.mxu0 0.0
  %1584 = vmatpush1.msra.mxu0 0.0
  %1585 = vmatprep.subr.mxu0 0.0
  %1586 = vmatpush1.msra.mxu0 0.0
  %1587 = vmatprep.subr.mxu0 0.0
  %1588 = vmatpush1.msra.mxu0 0.0
  %1589 = vmatprep.subr.mxu0 0.0
  %1590 = vmatpush1.msra.mxu0 0.0
  %1591 = vmatprep.subr.mxu0 0.0
  %1592 = vmatpush1.msra.mxu0 0.0
  %1593 = vmatprep.subr.mxu0 0.0
  %1594 = vmatpush1.msra.mxu0 0.0
  %1595 = vmatprep.subr.mxu0 0.0
  %1596 = vmatpush1.msra.mxu0 0.0
  %1597 = vmatprep.subr.mxu0 0.0
  %1598 = vmatpush1.msra.mxu0 0.0
  %1599 = vmatprep.subr.mxu0 0.0
  %1600 = vmatpush1.msra.mxu0 0.0
  %1601 = vmatprep.subr.mxu0 0.0
  %1602 = vmatpush1.msra.mxu0 0.0
  %1603 = vmatprep.subr.mxu0 0.0
  %1604 = vmatpush1.msra.mxu0 0.0
  %1605 = vmatprep.subr.mxu0 0.0
  %1606 = vmatpush1.msra.mxu0 0.0
  %1607 = vmatprep.subr.mxu0 0.0
  %1608 = vmatpush1.msra.mxu0 0.0
  %1609 = vmatprep.subr.mxu0 0.0
  %1610 = vmatpush1.msra.mxu0 0.0
  %1611 = vmatprep.subr.mxu0 0.0
  %1612 = vmatpush1.msra.mxu0 0.0
  %1613 = vmatprep.subr.mxu0 0.0
  %1614 = vmatpush1.msra.mxu0 0.0
  %1615 = vmatprep.subr.mxu0 0.0
  %1616 = vmatpush1.msra.mxu0 0.0
  %1617 = vmatprep.subr.mxu0 0.0
  %1618 = vmatpush1.msra.mxu0 0.0
  %1619 = vmatprep.subr.mxu0 0.0
  %1620 = vmatpush1.msra.mxu0 0.0
  %1621 = vmatprep.subr.mxu0 0.0
  %1622 = vmatpush1.msra.mxu0 0.0
  %1623 = vmatprep.subr.mxu0 0.0
  %1624 = vmatpush1.msra.mxu0 0.0
  %1625 = vmatprep.subr.mxu0 0.0
  %1626 = vmatpush1.msra.mxu0 0.0
  %1627 = vmatprep.subr.mxu0 0.0
  %1628 = vmatpush1.msra.mxu0 0.0
  %1629 = vmatprep.mubr.f32.mxu0 0.0
  %1630 = vmatmul.mubr.f32.gmra.mrb[0].mxu0 %v1563
  %v1631 = vpop.f32.mrb[0].mxu0
  %v1632 = vadd.f32 0.0, %v1631
  %v1633 = vpop.f32.mrb[0].mxu0
  %1634 = vdwg.mxu0
  %v1636 = vsel %vm498, %v1558, 0
  %1638 = vmatprep.subr.mxu0 0.0
  %1639 = vmatpush1.msra.mxu0 %v190
  %1640 = vmatprep.subr.mxu0 0.0
  %1641 = vmatpush1.msra.mxu0 %v191
  %1642 = vmatprep.subr.mxu0 0.0
  %1643 = vmatpush1.msra.mxu0 0.0
  %1644 = vmatprep.subr.mxu0 0.0
  %1645 = vmatpush1.msra.mxu0 0.0
  %1646 = vmatprep.subr.mxu0 0.0
  %1647 = vmatpush1.msra.mxu0 0.0
  %1648 = vmatprep.subr.mxu0 0.0
  %1649 = vmatpush1.msra.mxu0 0.0
  %1650 = vmatprep.subr.mxu0 0.0
  %1651 = vmatpush1.msra.mxu0 0.0
  %1652 = vmatprep.subr.mxu0 0.0
  %1653 = vmatpush1.msra.mxu0 0.0
  %1654 = vmatprep.subr.mxu0 0.0
  %1655 = vmatpush1.msra.mxu0 0.0
  %1656 = vmatprep.subr.mxu0 0.0
  %1657 = vmatpush1.msra.mxu0 0.0
  %1658 = vmatprep.subr.mxu0 0.0
  %1659 = vmatpush1.msra.mxu0 0.0
  %1660 = vmatprep.subr.mxu0 0.0
  %1661 = vmatpush1.msra.mxu0 0.0
  %1662 = vmatprep.subr.mxu0 0.0
  %1663 = vmatpush1.msra.mxu0 0.0
  %1664 = vmatprep.subr.mxu0 0.0
  %1665 = vmatpush1.msra.mxu0 0.0
  %1666 = vmatprep.subr.mxu0 0.0
  %1667 = vmatpush1.msra.mxu0 0.0
  %1668 = vmatprep.subr.mxu0 0.0
  %1669 = vmatpush1.msra.mxu0 0.0
  %1670 = vmatprep.subr.mxu0 0.0
  %1671 = vmatpush1.msra.mxu0 0.0
  %1672 = vmatprep.subr.mxu0 0.0
  %1673 = vmatpush1.msra.mxu0 0.0
  %1674 = vmatprep.subr.mxu0 0.0
  %1675 = vmatpush1.msra.mxu0 0.0
  %1676 = vmatprep.subr.mxu0 0.0
  %1677 = vmatpush1.msra.mxu0 0.0
  %1678 = vmatprep.subr.mxu0 0.0
  %1679 = vmatpush1.msra.mxu0 0.0
  %1680 = vmatprep.subr.mxu0 0.0
  %1681 = vmatpush1.msra.mxu0 0.0
  %1682 = vmatprep.subr.mxu0 0.0
  %1683 = vmatpush1.msra.mxu0 0.0
  %1684 = vmatprep.subr.mxu0 0.0
  %1685 = vmatpush1.msra.mxu0 0.0
  %1686 = vmatprep.subr.mxu0 0.0
  %1687 = vmatpush1.msra.mxu0 0.0
  %1688 = vmatprep.subr.mxu0 0.0
  %1689 = vmatpush1.msra.mxu0 0.0
  %1690 = vmatprep.subr.mxu0 0.0
  %1691 = vmatpush1.msra.mxu0 0.0
  %1692 = vmatprep.subr.mxu0 0.0
  %1693 = vmatpush1.msra.mxu0 0.0
  %1694 = vmatprep.subr.mxu0 0.0
  %1695 = vmatpush1.msra.mxu0 0.0
  %1696 = vmatprep.subr.mxu0 0.0
  %1697 = vmatpush1.msra.mxu0 0.0
  %1698 = vmatprep.subr.mxu0 0.0
  %1699 = vmatpush1.msra.mxu0 0.0
  %1700 = vmatprep.subr.mxu0 0.0
  %1701 = vmatpush1.msra.mxu0 0.0
  %1702 = vmatprep.mubr.f32.mxu0 0.0
  %1703 = vmatmul.mubr.f32.gmra.mrb[0].mxu0 %v1636
  %v1704 = vpop.f32.mrb[0].mxu0
  %v1705 = vadd.f32 %v1632, %v1704
  %v1706 = vpop.f32.mrb[0].mxu0
  %1707 = vdwg.mxu0
  %v1708 = vmul.f32 %v1705, %v1705
  %1710 = vrot.lane.b32.xlu0 %v1708, 64
  %v1711 = vpop.permute.xlu0 %1710
  %v1713 = vadd.f32 %v1708, %v1711
  %v1715 = vsel %vm657, %v1713, 0
  %1717 = vmatprep.subr.mxu0 0.0
  %1718 = vmatpush1.msra.mxu0 %v194
  %1719 = vmatprep.subr.mxu0 0.0
  %1720 = vmatpush1.msra.mxu0 %v195
  %1721 = vmatprep.subr.mxu0 0.0
  %1722 = vmatpush1.msra.mxu0 %v196
  %1723 = vmatprep.subr.mxu0 0.0
  %1724 = vmatpush1.msra.mxu0 %v197
  %1725 = vmatprep.subr.mxu0 0.0
  %1726 = vmatpush1.msra.mxu0 %v198
  %1727 = vmatprep.subr.mxu0 0.0
  %1728 = vmatpush1.msra.mxu0 %v199
  %1729 = vmatprep.subr.mxu0 0.0
  %1730 = vmatpush1.msra.mxu0 %v200
  %1731 = vmatprep.subr.mxu0 0.0
  %1732 = vmatpush1.msra.mxu0 %v201
  %1733 = vmatprep.subr.mxu0 0.0
  %1734 = vmatpush1.msra.mxu0 0.0
  %1735 = vmatprep.subr.mxu0 0.0
  %1736 = vmatpush1.msra.mxu0 0.0
  %1737 = vmatprep.subr.mxu0 0.0
  %1738 = vmatpush1.msra.mxu0 0.0
  %1739 = vmatprep.subr.mxu0 0.0
  %1740 = vmatpush1.msra.mxu0 0.0
  %1741 = vmatprep.subr.mxu0 0.0
  %1742 = vmatpush1.msra.mxu0 0.0
  %1743 = vmatprep.subr.mxu0 0.0
  %1744 = vmatpush1.msra.mxu0 0.0
  %1745 = vmatprep.subr.mxu0 0.0
  %1746 = vmatpush1.msra.mxu0 0.0
  %1747 = vmatprep.subr.mxu0 0.0
  %1748 = vmatpush1.msra.mxu0 0.0
  %1749 = vmatprep.subr.mxu0 0.0
  %1750 = vmatpush1.msra.mxu0 0.0
  %1751 = vmatprep.subr.mxu0 0.0
  %1752 = vmatpush1.msra.mxu0 0.0
  %1753 = vmatprep.subr.mxu0 0.0
  %1754 = vmatpush1.msra.mxu0 0.0
  %1755 = vmatprep.subr.mxu0 0.0
  %1756 = vmatpush1.msra.mxu0 0.0
  %1757 = vmatprep.subr.mxu0 0.0
  %1758 = vmatpush1.msra.mxu0 0.0
  %1759 = vmatprep.subr.mxu0 0.0
  %1760 = vmatpush1.msra.mxu0 0.0
  %1761 = vmatprep.subr.mxu0 0.0
  %1762 = vmatpush1.msra.mxu0 0.0
  %1763 = vmatprep.subr.mxu0 0.0
  %1764 = vmatpush1.msra.mxu0 0.0
  %1765 = vmatprep.subr.mxu0 0.0
  %1766 = vmatpush1.msra.mxu0 0.0
  %1767 = vmatprep.subr.mxu0 0.0
  %1768 = vmatpush1.msra.mxu0 0.0
  %1769 = vmatprep.subr.mxu0 0.0
  %1770 = vmatpush1.msra.mxu0 0.0
  %1771 = vmatprep.subr.mxu0 0.0
  %1772 = vmatpush1.msra.mxu0 0.0
  %1773 = vmatprep.subr.mxu0 0.0
  %1774 = vmatpush1.msra.mxu0 0.0
  %1775 = vmatprep.subr.mxu0 0.0
  %1776 = vmatpush1.msra.mxu0 0.0
  %1777 = vmatprep.subr.mxu0 0.0
  %1778 = vmatpush1.msra.mxu0 0.0
  %1779 = vmatprep.subr.mxu0 0.0
  %1780 = vmatpush1.msra.mxu0 0.0
  %1781 = vmatprep.mubr.f32.mxu0 0.0
  %1782 = vmatmul.mubr.f32.gmra.mrb[0].mxu0 %v1715
  %v1783 = vpop.f32.mrb[0].mxu0
  %v1784 = vadd.f32 %v655, %v1783
  %v1785 = vpop.f32.mrb[0].mxu0
  %1786 = vdwg.mxu0
  %v1787 = vxor.u32 %v1784, 2147483648
  %v1788 = vmul.f32 %v1787, 1.442695
  %v1789 = vpow.pop %v1788
  %v1790 = vadd.f32 %v1789, 1.0
  %v1791 = vrcp.pop %v1790
  %v1792 = vmul.f32 1.0, %v1791
  %v1793 = vtanh.pop %v1784
  %v1794 = vmul.f32 %v1792, %v1276
  %1796 = vrot.lane.b32.xlu0 %v1793, 96
  %v1797 = vpop.permute.xlu0 %1796
  %v1799 = vmul.f32 %v1792, %v1797
  %1801 = vrot.lane.b32.xlu0 %v1799, 96
  %v1802 = vpop.permute.xlu0 %1801
  %v1804 = vadd.f32 %v1794, %v1802
  %v1805 = vtanh.pop %v1804
  %1807 = vrot.lane.b32.xlu0 %v1805, 96
  %v1808 = vpop.permute.xlu0 %1807
  %v1810 = vmul.f32 %v1792, %v1808
  %1812 = vrot.lane.b32.xlu0 %v1810, 32
  %v1813 = vpop.permute.xlu0 %1812
  %v1814 = vsel %vm204, %v1813, 0
  %1816 = vmatprep.subr.mxu0 0.0
  %1817 = vmatpush1.msra.mxu0 %v186
  %1818 = vmatprep.subr.mxu0 0.0
  %1819 = vmatpush1.msra.mxu0 %v187
  %1820 = vmatprep.subr.mxu0 0.0
  %1821 = vmatpush1.msra.mxu0 %v188
  %1822 = vmatprep.subr.mxu0 0.0
  %1823 = vmatpush1.msra.mxu0 %v189
  %1824 = vmatprep.subr.mxu0 0.0
  %1825 = vmatpush1.msra.mxu0 0.0
  %1826 = vmatprep.subr.mxu0 0.0
  %1827 = vmatpush1.msra.mxu0 0.0
  %1828 = vmatprep.subr.mxu0 0.0
  %1829 = vmatpush1.msra.mxu0 0.0
  %1830 = vmatprep.subr.mxu0 0.0
  %1831 = vmatpush1.msra.mxu0 0.0
  %1832 = vmatprep.subr.mxu0 0.0
  %1833 = vmatpush1.msra.mxu0 0.0
  %1834 = vmatprep.subr.mxu0 0.0
  %1835 = vmatpush1.msra.mxu0 0.0
  %1836 = vmatprep.subr.mxu0 0.0
  %1837 = vmatpush1.msra.mxu0 0.0
  %1838 = vmatprep.subr.mxu0 0.0
  %1839 = vmatpush1.msra.mxu0 0.0
  %1840 = vmatprep.subr.mxu0 0.0
  %1841 = vmatpush1.msra.mxu0 0.0
  %1842 = vmatprep.subr.mxu0 0.0
  %1843 = vmatpush1.msra.mxu0 0.0
  %1844 = vmatprep.subr.mxu0 0.0
  %1845 = vmatpush1.msra.mxu0 0.0
  %1846 = vmatprep.subr.mxu0 0.0
  %1847 = vmatpush1.msra.mxu0 0.0
  %1848 = vmatprep.subr.mxu0 0.0
  %1849 = vmatpush1.msra.mxu0 0.0
  %1850 = vmatprep.subr.mxu0 0.0
  %1851 = vmatpush1.msra.mxu0 0.0
  %1852 = vmatprep.subr.mxu0 0.0
  %1853 = vmatpush1.msra.mxu0 0.0
  %1854 = vmatprep.subr.mxu0 0.0
  %1855 = vmatpush1.msra.mxu0 0.0
  %1856 = vmatprep.subr.mxu0 0.0
  %1857 = vmatpush1.msra.mxu0 0.0
  %1858 = vmatprep.subr.mxu0 0.0
  %1859 = vmatpush1.msra.mxu0 0.0
  %1860 = vmatprep.subr.mxu0 0.0
  %1861 = vmatpush1.msra.mxu0 0.0
  %1862 = vmatprep.subr.mxu0 0.0
  %1863 = vmatpush1.msra.mxu0 0.0
  %1864 = vmatprep.subr.mxu0 0.0
  %1865 = vmatpush1.msra.mxu0 0.0
  %1866 = vmatprep.subr.mxu0 0.0
  %1867 = vmatpush1.msra.mxu0 0.0
  %1868 = vmatprep.subr.mxu0 0.0
  %1869 = vmatpush1.msra.mxu0 0.0
  %1870 = vmatprep.subr.mxu0 0.0
  %1871 = vmatpush1.msra.mxu0 0.0
  %1872 = vmatprep.subr.mxu0 0.0
  %1873 = vmatpush1.msra.mxu0 0.0
  %1874 = vmatprep.subr.mxu0 0.0
  %1875 = vmatpush1.msra.mxu0 0.0
  %1876 = vmatprep.subr.mxu0 0.0
  %1877 = vmatpush1.msra.mxu0 0.0
  %1878 = vmatprep.subr.mxu0 0.0
  %1879 = vmatpush1.msra.mxu0 0.0
  %1880 = vmatprep.mubr.f32.mxu0 0.0
  %1881 = vmatmul.mubr.f32.gmra.mrb[0].mxu0 %v1814
  %v1882 = vpop.f32.mrb[0].mxu0
  %v1883 = vadd.f32 %v163, %v1882
  %v1884 = vpop.f32.mrb[0].mxu0
  %1885 = vdwg.mxu0
  %v1886 = vmul.f32 %v1883, 0.5
  %v1887 = vmul.f32 %v1886, 0.63661975
  %v1888 = vadd.f32 %v1887, 0.5
  %v1889 = vcvt.f32.s32.to.zero.pseudo %v1888
  %v1890 = vcvt.s32.f32 %v1889
  %vm1891 = vcmp.lt.f32.partialorder %v1888, %v1890
  %v1892 = vsub.s32 %v1889, 1
  %v1893 = vsel %vm1891, %v1892, %v1889
  %v1894 = vcvt.s32.f32 %v1893
  %v1895 = vmul.f32 %v1894, 1.5707964
  %v1896 = vsub.f32 %v1886, %v1895
  %v1897 = vand.u32 %v1893, 3
  %v1898 = vmul.f32 %v1896, %v1896
  %v1899 = vmul.f32 %v1898, 2.7557319e-06
  %v1900 = vadd.f32 %v1899, -0.0001984127
  %v1901 = vmul.f32 %v1898, %v1900
  %v1902 = vadd.f32 %v1901, 0.008333334
  %v1903 = vmul.f32 %v1898, %v1902
  %v1904 = vadd.f32 %v1903, -0.16666667
  %v1905 = vmul.f32 %v1898, %v1904
  %v1906 = vadd.f32 %v1905, 1.0
  %v1907 = vmul.f32 %v1896, %v1906
  %v1908 = vmul.f32 %v1898, 2.4801588e-05
  %v1909 = vadd.f32 %v1908, -0.0013888889
  %v1910 = vmul.f32 %v1898, %v1909
  %v1911 = vadd.f32 %v1910, 0.041666668
  %v1912 = vmul.f32 %v1898, %v1911
  %v1913 = vadd.f32 %v1912, -0.5
  %v1914 = vmul.f32 %v1898, %v1913
  %v1915 = vadd.f32 %v1914, 1.0
  %vm1916 = vcmp.eq.s32.totalorder %v1897, 0
  %vm1917 = vcmp.eq.s32.totalorder %v1897, 1
  %vm1918 = vcmp.eq.s32.totalorder %v1897, 2
  %v1919 = vsub.f32 0.0, %v1907
  %v1920 = vsub.f32 0.0, %v1915
  %v1921 = vsel %vm1918, %v1919, %v1920
  %v1922 = vsel %vm1917, %v1915, %v1921
  %v1923 = vsel %vm1916, %v1907, %v1922
  %v1924 = vsel %vm1918, %v1920, %v1907
  %v1925 = vsel %vm1917, %v1919, %v1924
  %v1926 = vsel %vm1916, %v1915, %v1925
  %v1927 = vmul.f32 %v1926, 0.70710677
  %v1928 = vsub.f32 0.0, %v1923
  %v1929 = vmul.f32 %v1928, 0.70710677
  %v1930 = vmul.f32 %v1923, 0.70710677
  %v1931 = vmul.f32 %v1883, %v1883
  %v1932 = vadd.f32 %v1931, 1.0
  %v1933 = vrsqrt.pop %v1932
  %v1934 = vadd.f32 %v1933, 1.0
  %v1935 = vmul.f32 %v1934, 0.5
  %v1936 = vrsqrt.pop %v1935
  %v1937 = vmul.f32 %v1935, %v1936
  %vm1938 = vcmp.eq.f32.partialorder %v1935, inf
  %v1939 = vsel %vm1938, %v1935, %v1937
  %vm1940 = vcmp.eq.f32.partialorder %v1935, 0.0
  %v1941 = vand.u32 %v1935, 2147483648
  %v1942 = vsel %vm1940, %v1941, %v1939
  %vm1943 = vcmp.ge.f32.partialorder %v1883, 0.0
  %v1944 = vsel %vm1943, 1.0, -1.0
  %v1945 = vsub.f32 1.0, %v1933
  %v1946 = vmul.f32 %v1945, 0.5
  %v1947 = vmax.f32 %v1946, 0.0
  %v1948 = vrsqrt.pop %v1947
  %v1949 = vmul.f32 %v1947, %v1948
  %vm1950 = vcmp.eq.f32.partialorder %v1947, inf
  %v1951 = vsel %vm1950, %v1947, %v1949
  %vm1952 = vcmp.eq.f32.partialorder %v1947, 0.0
  %v1953 = vand.u32 %v1947, 2147483648
  %v1954 = vsel %vm1952, %v1953, %v1951
  %v1955 = vmul.f32 %v1944, %v1954
  %v1956 = vlaneseq
  %v1957 = vshrl.u32 %v1956, 7
  %v1958 = vsub.s32 0, %v1957
  %v1959 = vrot.slane %v1942, %v1958
  %v1960 = vmul.f32 %v1959, %v1927
  %v1961 = vlaneseq
  %v1962 = vshrl.u32 %v1961, 7
  %v1963 = vsub.s32 0, %v1962
  %v1964 = vrot.slane %v1955, %v1963
  %v1965 = vmul.f32 %v1964, %v1927
  %v1966 = vsub.f32 %v1960, %v1965
  %v1967 = vmul.f32 %v1959, %v1929
  %v1968 = vmul.f32 %v1964, %v1930
  %v1969 = vsub.f32 %v1967, %v1968
  %v1970 = vadd.f32 %v1965, %v1960
  %v1971 = vmul.f32 %v1964, %v1929
  %v1972 = vmul.f32 %v1959, %v1930
  %v1973 = vadd.f32 %v1971, %v1972
  %v1974 = vmul.f32 %v1959, %v1966
  %v1975 = vmul.f32 %v1964, %v1969
  %v1976 = vadd.f32 %v1974, %v1975
  %v1977 = vmul.f32 %v1959, %v1969
  %v1978 = vmul.f32 %v1964, %v1966
  %v1979 = vsub.f32 %v1977, %v1978
  %v1980 = vmul.f32 %v1959, %v1970
  %v1981 = vmul.f32 %v1964, %v1973
  %v1982 = vsub.f32 %v1980, %v1981
  %v1983 = vmul.f32 %v1959, %v1973
  %v1984 = vmul.f32 %v1964, %v1970
  %v1985 = vadd.f32 %v1983, %v1984
  %v1986 = vsub.f32 %v1982, %v1976
  %1988 = vset.pattern.permute.xlu0 0
  %1989 = vperm.xlu0 %1988, %v1986
  %v1990 = vpop.permute.xlu0 %1989
  %v1992 = vmul.f32 %v1990, %v387
  %1994 = vset.pattern.permute.xlu0 0
  %1995 = vperm.xlu0 %1994, %v1976
  %v1996 = vpop.permute.xlu0 %1995
  %v1998 = vadd.f32 %v1996, %v1992
  %v1999 = vsub.f32 %v1985, %v1979
  %2001 = vset.pattern.permute.xlu0 0
  %2002 = vperm.xlu0 %2001, %v1999
  %v2003 = vpop.permute.xlu0 %2002
  %v2005 = vmul.f32 %v2003, %v387
  %2007 = vset.pattern.permute.xlu0 0
  %2008 = vperm.xlu0 %2007, %v1979
  %v2009 = vpop.permute.xlu0 %2008
  %v2011 = vadd.f32 %v2009, %v2005
  %2012 = vset.pattern.permute.xlu0 1
  %2013 = vperm.xlu0 %2012, %v1986
  %v2014 = vpop.permute.xlu0 %2013
  %v2016 = vmul.f32 %v2014, %v415
  %2017 = vset.pattern.permute.xlu0 1
  %2018 = vperm.xlu0 %2017, %v1976
  %v2019 = vpop.permute.xlu0 %2018
  %v2021 = vadd.f32 %v2019, %v2016
  %2022 = vset.pattern.permute.xlu0 1
  %2023 = vperm.xlu0 %2022, %v1999
  %v2024 = vpop.permute.xlu0 %2023
  %v2026 = vmul.f32 %v2024, %v415
  %2027 = vset.pattern.permute.xlu0 1
  %2028 = vperm.xlu0 %2027, %v1979
  %v2029 = vpop.permute.xlu0 %2028
  %v2031 = vadd.f32 %v2029, %v2026
  %v2032 = vmul.f32 %v1998, %v2021
  %v2033 = vmul.f32 %v2011, %v2031
  %v2034 = vsub.f32 %v2032, %v2033
  %v2035 = vmul.f32 %v1998, %v2031
  %v2036 = vmul.f32 %v2011, %v2021
  %v2037 = vadd.f32 %v2035, %v2036
  %2038 = vset.pattern.permute.xlu0 2
  %2039 = vperm.xlu0 %2038, %v1986
  %v2040 = vpop.permute.xlu0 %2039
  %v2042 = vmul.f32 %v2040, %v445
  %2043 = vset.pattern.permute.xlu0 2
  %2044 = vperm.xlu0 %2043, %v1976
  %v2045 = vpop.permute.xlu0 %2044
  %v2047 = vadd.f32 %v2045, %v2042
  %2048 = vset.pattern.permute.xlu0 2
  %2049 = vperm.xlu0 %2048, %v1999
  %v2050 = vpop.permute.xlu0 %2049
  %v2052 = vmul.f32 %v2050, %v445
  %2053 = vset.pattern.permute.xlu0 2
  %2054 = vperm.xlu0 %2053, %v1979
  %v2055 = vpop.permute.xlu0 %2054
  %v2057 = vadd.f32 %v2055, %v2052
  %v2058 = vmul.f32 %v2034, %v2047
  %v2059 = vmul.f32 %v2037, %v2057
  %v2060 = vsub.f32 %v2058, %v2059
  %v2061 = vmul.f32 %v2034, %v2057
  %v2062 = vmul.f32 %v2037, %v2047
  %v2063 = vadd.f32 %v2061, %v2062
  %2064 = vset.pattern.permute.xlu0 3
  %2065 = vperm.xlu0 %2064, %v1986
  %v2066 = vpop.permute.xlu0 %2065
  %v2068 = vmul.f32 %v2066, %v475
  %2069 = vset.pattern.permute.xlu0 3
  %2070 = vperm.xlu0 %2069, %v1976
  %v2071 = vpop.permute.xlu0 %2070
  %v2073 = vadd.f32 %v2071, %v2068
  %2074 = vset.pattern.permute.xlu0 3
  %2075 = vperm.xlu0 %2074, %v1999
  %v2076 = vpop.permute.xlu0 %2075
  %v2078 = vmul.f32 %v2076, %v475
  %2079 = vset.pattern.permute.xlu0 3
  %2080 = vperm.xlu0 %2079, %v1979
  %v2081 = vpop.permute.xlu0 %2080
  %v2083 = vadd.f32 %v2081, %v2078
  %v2084 = vmul.f32 %v2060, %v2073
  %v2085 = vmul.f32 %v2063, %v2083
  %v2086 = vsub.f32 %v2084, %v2085
  %v2087 = vmul.f32 %v2060, %v2083
  %v2088 = vmul.f32 %v2063, %v2073
  %v2089 = vadd.f32 %v2087, %v2088
  %v2091 = vsel %vm498, %v2089, 0
  %2093 = vmatprep.subr.mxu0 0.0
  %2094 = vmatpush1.msra.mxu0 %v192
  %2095 = vmatprep.subr.mxu0 0.0
  %2096 = vmatpush1.msra.mxu0 %v193
  %2097 = vmatprep.subr.mxu0 0.0
  %2098 = vmatpush1.msra.mxu0 0.0
  %2099 = vmatprep.subr.mxu0 0.0
  %2100 = vmatpush1.msra.mxu0 0.0
  %2101 = vmatprep.subr.mxu0 0.0
  %2102 = vmatpush1.msra.mxu0 0.0
  %2103 = vmatprep.subr.mxu0 0.0
  %2104 = vmatpush1.msra.mxu0 0.0
  %2105 = vmatprep.subr.mxu0 0.0
  %2106 = vmatpush1.msra.mxu0 0.0
  %2107 = vmatprep.subr.mxu0 0.0
  %2108 = vmatpush1.msra.mxu0 0.0
  %2109 = vmatprep.subr.mxu0 0.0
  %2110 = vmatpush1.msra.mxu0 0.0
  %2111 = vmatprep.subr.mxu0 0.0
  %2112 = vmatpush1.msra.mxu0 0.0
  %2113 = vmatprep.subr.mxu0 0.0
  %2114 = vmatpush1.msra.mxu0 0.0
  %2115 = vmatprep.subr.mxu0 0.0
  %2116 = vmatpush1.msra.mxu0 0.0
  %2117 = vmatprep.subr.mxu0 0.0
  %2118 = vmatpush1.msra.mxu0 0.0
  %2119 = vmatprep.subr.mxu0 0.0
  %2120 = vmatpush1.msra.mxu0 0.0
  %2121 = vmatprep.subr.mxu0 0.0
  %2122 = vmatpush1.msra.mxu0 0.0
  %2123 = vmatprep.subr.mxu0 0.0
  %2124 = vmatpush1.msra.mxu0 0.0
  %2125 = vmatprep.subr.mxu0 0.0
  %2126 = vmatpush1.msra.mxu0 0.0
  %2127 = vmatprep.subr.mxu0 0.0
  %2128 = vmatpush1.msra.mxu0 0.0
  %2129 = vmatprep.subr.mxu0 0.0
  %2130 = vmatpush1.msra.mxu0 0.0
  %2131 = vmatprep.subr.mxu0 0.0
  %2132 = vmatpush1.msra.mxu0 0.0
  %2133 = vmatprep.subr.mxu0 0.0
  %2134 = vmatpush1.msra.mxu0 0.0
  %2135 = vmatprep.subr.mxu0 0.0
  %2136 = vmatpush1.msra.mxu0 0.0
  %2137 = vmatprep.subr.mxu0 0.0
  %2138 = vmatpush1.msra.mxu0 0.0
  %2139 = vmatprep.subr.mxu0 0.0
  %2140 = vmatpush1.msra.mxu0 0.0
  %2141 = vmatprep.subr.mxu0 0.0
  %2142 = vmatpush1.msra.mxu0 0.0
  %2143 = vmatprep.subr.mxu0 0.0
  %2144 = vmatpush1.msra.mxu0 0.0
  %2145 = vmatprep.subr.mxu0 0.0
  %2146 = vmatpush1.msra.mxu0 0.0
  %2147 = vmatprep.subr.mxu0 0.0
  %2148 = vmatpush1.msra.mxu0 0.0
  %2149 = vmatprep.subr.mxu0 0.0
  %2150 = vmatpush1.msra.mxu0 0.0
  %2151 = vmatprep.subr.mxu0 0.0
  %2152 = vmatpush1.msra.mxu0 0.0
  %2153 = vmatprep.subr.mxu0 0.0
  %2154 = vmatpush1.msra.mxu0 0.0
  %2155 = vmatprep.subr.mxu0 0.0
  %2156 = vmatpush1.msra.mxu0 0.0
  %2157 = vmatprep.mubr.f32.mxu0 0.0
  %2158 = vmatmul.mubr.f32.gmra.mrb[0].mxu0 %v2091
  %v2159 = vpop.f32.mrb[0].mxu0
  %v2160 = vadd.f32 0.0, %v2159
  %v2161 = vpop.f32.mrb[0].mxu0
  %2162 = vdwg.mxu0
  %v2164 = vsel %vm498, %v2086, 0
  %2166 = vmatprep.subr.mxu0 0.0
  %2167 = vmatpush1.msra.mxu0 %v190
  %2168 = vmatprep.subr.mxu0 0.0
  %2169 = vmatpush1.msra.mxu0 %v191
  %2170 = vmatprep.subr.mxu0 0.0
  %2171 = vmatpush1.msra.mxu0 0.0
  %2172 = vmatprep.subr.mxu0 0.0
  %2173 = vmatpush1.msra.mxu0 0.0
  %2174 = vmatprep.subr.mxu0 0.0
  %2175 = vmatpush1.msra.mxu0 0.0
  %2176 = vmatprep.subr.mxu0 0.0
  %2177 = vmatpush1.msra.mxu0 0.0
  %2178 = vmatprep.subr.mxu0 0.0
  %2179 = vmatpush1.msra.mxu0 0.0
  %2180 = vmatprep.subr.mxu0 0.0
  %2181 = vmatpush1.msra.mxu0 0.0
  %2182 = vmatprep.subr.mxu0 0.0
  %2183 = vmatpush1.msra.mxu0 0.0
  %2184 = vmatprep.subr.mxu0 0.0
  %2185 = vmatpush1.msra.mxu0 0.0
  %2186 = vmatprep.subr.mxu0 0.0
  %2187 = vmatpush1.msra.mxu0 0.0
  %2188 = vmatprep.subr.mxu0 0.0
  %2189 = vmatpush1.msra.mxu0 0.0
  %2190 = vmatprep.subr.mxu0 0.0
  %2191 = vmatpush1.msra.mxu0 0.0
  %2192 = vmatprep.subr.mxu0 0.0
  %2193 = vmatpush1.msra.mxu0 0.0
  %2194 = vmatprep.subr.mxu0 0.0
  %2195 = vmatpush1.msra.mxu0 0.0
  %2196 = vmatprep.subr.mxu0 0.0
  %2197 = vmatpush1.msra.mxu0 0.0
  %2198 = vmatprep.subr.mxu0 0.0
  %2199 = vmatpush1.msra.mxu0 0.0
  %2200 = vmatprep.subr.mxu0 0.0
  %2201 = vmatpush1.msra.mxu0 0.0
  %2202 = vmatprep.subr.mxu0 0.0
  %2203 = vmatpush1.msra.mxu0 0.0
  %2204 = vmatprep.subr.mxu0 0.0
  %2205 = vmatpush1.msra.mxu0 0.0
  %2206 = vmatprep.subr.mxu0 0.0
  %2207 = vmatpush1.msra.mxu0 0.0
  %2208 = vmatprep.subr.mxu0 0.0
  %2209 = vmatpush1.msra.mxu0 0.0
  %2210 = vmatprep.subr.mxu0 0.0
  %2211 = vmatpush1.msra.mxu0 0.0
  %2212 = vmatprep.subr.mxu0 0.0
  %2213 = vmatpush1.msra.mxu0 0.0
  %2214 = vmatprep.subr.mxu0 0.0
  %2215 = vmatpush1.msra.mxu0 0.0
  %2216 = vmatprep.subr.mxu0 0.0
  %2217 = vmatpush1.msra.mxu0 0.0
  %2218 = vmatprep.subr.mxu0 0.0
  %2219 = vmatpush1.msra.mxu0 0.0
  %2220 = vmatprep.subr.mxu0 0.0
  %2221 = vmatpush1.msra.mxu0 0.0
  %2222 = vmatprep.subr.mxu0 0.0
  %2223 = vmatpush1.msra.mxu0 0.0
  %2224 = vmatprep.subr.mxu0 0.0
  %2225 = vmatpush1.msra.mxu0 0.0
  %2226 = vmatprep.subr.mxu0 0.0
  %2227 = vmatpush1.msra.mxu0 0.0
  %2228 = vmatprep.subr.mxu0 0.0
  %2229 = vmatpush1.msra.mxu0 0.0
  %2230 = vmatprep.mubr.f32.mxu0 0.0
  %2231 = vmatmul.mubr.f32.gmra.mrb[0].mxu0 %v2164
  %v2232 = vpop.f32.mrb[0].mxu0
  %v2233 = vadd.f32 %v2160, %v2232
  %v2234 = vpop.f32.mrb[0].mxu0
  %2235 = vdwg.mxu0
  %v2236 = vmul.f32 %v2233, %v2233
  %2238 = vrot.lane.b32.xlu0 %v2236, 64
  %v2239 = vpop.permute.xlu0 %2238
  %v2241 = vadd.f32 %v2236, %v2239
  %v2243 = vsel %vm657, %v2241, 0
  %2245 = vmatprep.subr.mxu0 0.0
  %2246 = vmatpush1.msra.mxu0 %v194
  %2247 = vmatprep.subr.mxu0 0.0
  %2248 = vmatpush1.msra.mxu0 %v195
  %2249 = vmatprep.subr.mxu0 0.0
  %2250 = vmatpush1.msra.mxu0 %v196
  %2251 = vmatprep.subr.mxu0 0.0
  %2252 = vmatpush1.msra.mxu0 %v197
  %2253 = vmatprep.subr.mxu0 0.0
  %2254 = vmatpush1.msra.mxu0 %v198
  %2255 = vmatprep.subr.mxu0 0.0
  %2256 = vmatpush1.msra.mxu0 %v199
  %2257 = vmatprep.subr.mxu0 0.0
  %2258 = vmatpush1.msra.mxu0 %v200
  %2259 = vmatprep.subr.mxu0 0.0
  %2260 = vmatpush1.msra.mxu0 %v201
  %2261 = vmatprep.subr.mxu0 0.0
  %2262 = vmatpush1.msra.mxu0 0.0
  %2263 = vmatprep.subr.mxu0 0.0
  %2264 = vmatpush1.msra.mxu0 0.0
  %2265 = vmatprep.subr.mxu0 0.0
  %2266 = vmatpush1.msra.mxu0 0.0
  %2267 = vmatprep.subr.mxu0 0.0
  %2268 = vmatpush1.msra.mxu0 0.0
  %2269 = vmatprep.subr.mxu0 0.0
  %2270 = vmatpush1.msra.mxu0 0.0
  %2271 = vmatprep.subr.mxu0 0.0
  %2272 = vmatpush1.msra.mxu0 0.0
  %2273 = vmatprep.subr.mxu0 0.0
  %2274 = vmatpush1.msra.mxu0 0.0
  %2275 = vmatprep.subr.mxu0 0.0
  %2276 = vmatpush1.msra.mxu0 0.0
  %2277 = vmatprep.subr.mxu0 0.0
  %2278 = vmatpush1.msra.mxu0 0.0
  %2279 = vmatprep.subr.mxu0 0.0
  %2280 = vmatpush1.msra.mxu0 0.0
  %2281 = vmatprep.subr.mxu0 0.0
  %2282 = vmatpush1.msra.mxu0 0.0
  %2283 = vmatprep.subr.mxu0 0.0
  %2284 = vmatpush1.msra.mxu0 0.0
  %2285 = vmatprep.subr.mxu0 0.0
  %2286 = vmatpush1.msra.mxu0 0.0
  %2287 = vmatprep.subr.mxu0 0.0
  %2288 = vmatpush1.msra.mxu0 0.0
  %2289 = vmatprep.subr.mxu0 0.0
  %2290 = vmatpush1.msra.mxu0 0.0
  %2291 = vmatprep.subr.mxu0 0.0
  %2292 = vmatpush1.msra.mxu0 0.0
  %2293 = vmatprep.subr.mxu0 0.0
  %2294 = vmatpush1.msra.mxu0 0.0
  %2295 = vmatprep.subr.mxu0 0.0
  %2296 = vmatpush1.msra.mxu0 0.0
  %2297 = vmatprep.subr.mxu0 0.0
  %2298 = vmatpush1.msra.mxu0 0.0
  %2299 = vmatprep.subr.mxu0 0.0
  %2300 = vmatpush1.msra.mxu0 0.0
  %2301 = vmatprep.subr.mxu0 0.0
  %2302 = vmatpush1.msra.mxu0 0.0
  %2303 = vmatprep.subr.mxu0 0.0
  %2304 = vmatpush1.msra.mxu0 0.0
  %2305 = vmatprep.subr.mxu0 0.0
  %2306 = vmatpush1.msra.mxu0 0.0
  %2307 = vmatprep.subr.mxu0 0.0
  %2308 = vmatpush1.msra.mxu0 0.0
  %2309 = vmatprep.mubr.f32.mxu0 0.0
  %2310 = vmatmul.mubr.f32.gmra.mrb[0].mxu0 %v2243
  %v2311 = vpop.f32.mrb[0].mxu0
  %v2312 = vadd.f32 %v655, %v2311
  %v2313 = vpop.f32.mrb[0].mxu0
  %2314 = vdwg.mxu0
  %v2315 = vxor.u32 %v2312, 2147483648
  %v2316 = vmul.f32 %v2315, 1.442695
  %v2317 = vpow.pop %v2316
  %v2318 = vadd.f32 %v2317, 1.0
  %v2319 = vrcp.pop %v2318
  %v2320 = vmul.f32 1.0, %v2319
  %v2321 = vtanh.pop %v2312
  %v2322 = vmul.f32 %v2320, %v1804
  %2324 = vrot.lane.b32.xlu0 %v2321, 96
  %v2325 = vpop.permute.xlu0 %2324
  %v2327 = vmul.f32 %v2320, %v2325
  %2329 = vrot.lane.b32.xlu0 %v2327, 96
  %v2330 = vpop.permute.xlu0 %2329
  %v2332 = vadd.f32 %v2322, %v2330
  %v2333 = vtanh.pop %v2332
  %2335 = vrot.lane.b32.xlu0 %v2333, 96
  %v2336 = vpop.permute.xlu0 %2335
  %v2338 = vmul.f32 %v2320, %v2336
  %2340 = vrot.lane.b32.xlu0 %v2338, 32
  %v2341 = vpop.permute.xlu0 %2340
  %v2342 = vsel %vm204, %v2341, 0
  %2344 = vmatprep.subr.mxu0 0.0
  %2345 = vmatpush1.msra.mxu0 %v186
  %2346 = vmatprep.subr.mxu0 0.0
  %2347 = vmatpush1.msra.mxu0 %v187
  %2348 = vmatprep.subr.mxu0 0.0
  %2349 = vmatpush1.msra.mxu0 %v188
  %2350 = vmatprep.subr.mxu0 0.0
  %2351 = vmatpush1.msra.mxu0 %v189
  %2352 = vmatprep.subr.mxu0 0.0
  %2353 = vmatpush1.msra.mxu0 0.0
  %2354 = vmatprep.subr.mxu0 0.0
  %2355 = vmatpush1.msra.mxu0 0.0
  %2356 = vmatprep.subr.mxu0 0.0
  %2357 = vmatpush1.msra.mxu0 0.0
  %2358 = vmatprep.subr.mxu0 0.0
  %2359 = vmatpush1.msra.mxu0 0.0
  %2360 = vmatprep.subr.mxu0 0.0
  %2361 = vmatpush1.msra.mxu0 0.0
  %2362 = vmatprep.subr.mxu0 0.0
  %2363 = vmatpush1.msra.mxu0 0.0
  %2364 = vmatprep.subr.mxu0 0.0
  %2365 = vmatpush1.msra.mxu0 0.0
  %2366 = vmatprep.subr.mxu0 0.0
  %2367 = vmatpush1.msra.mxu0 0.0
  %2368 = vmatprep.subr.mxu0 0.0
  %2369 = vmatpush1.msra.mxu0 0.0
  %2370 = vmatprep.subr.mxu0 0.0
  %2371 = vmatpush1.msra.mxu0 0.0
  %2372 = vmatprep.subr.mxu0 0.0
  %2373 = vmatpush1.msra.mxu0 0.0
  %2374 = vmatprep.subr.mxu0 0.0
  %2375 = vmatpush1.msra.mxu0 0.0
  %2376 = vmatprep.subr.mxu0 0.0
  %2377 = vmatpush1.msra.mxu0 0.0
  %2378 = vmatprep.subr.mxu0 0.0
  %2379 = vmatpush1.msra.mxu0 0.0
  %2380 = vmatprep.subr.mxu0 0.0
  %2381 = vmatpush1.msra.mxu0 0.0
  %2382 = vmatprep.subr.mxu0 0.0
  %2383 = vmatpush1.msra.mxu0 0.0
  %2384 = vmatprep.subr.mxu0 0.0
  %2385 = vmatpush1.msra.mxu0 0.0
  %2386 = vmatprep.subr.mxu0 0.0
  %2387 = vmatpush1.msra.mxu0 0.0
  %2388 = vmatprep.subr.mxu0 0.0
  %2389 = vmatpush1.msra.mxu0 0.0
  %2390 = vmatprep.subr.mxu0 0.0
  %2391 = vmatpush1.msra.mxu0 0.0
  %2392 = vmatprep.subr.mxu0 0.0
  %2393 = vmatpush1.msra.mxu0 0.0
  %2394 = vmatprep.subr.mxu0 0.0
  %2395 = vmatpush1.msra.mxu0 0.0
  %2396 = vmatprep.subr.mxu0 0.0
  %2397 = vmatpush1.msra.mxu0 0.0
  %2398 = vmatprep.subr.mxu0 0.0
  %2399 = vmatpush1.msra.mxu0 0.0
  %2400 = vmatprep.subr.mxu0 0.0
  %2401 = vmatpush1.msra.mxu0 0.0
  %2402 = vmatprep.subr.mxu0 0.0
  %2403 = vmatpush1.msra.mxu0 0.0
  %2404 = vmatprep.subr.mxu0 0.0
  %2405 = vmatpush1.msra.mxu0 0.0
  %2406 = vmatprep.subr.mxu0 0.0
  %2407 = vmatpush1.msra.mxu0 0.0
  %2408 = vmatprep.mubr.f32.mxu0 0.0
  %2409 = vmatmul.mubr.f32.gmra.mrb[0].mxu0 %v2342
  %v2410 = vpop.f32.mrb[0].mxu0
  %v2411 = vadd.f32 %v168, %v2410
  %v2412 = vpop.f32.mrb[0].mxu0
  %2413 = vdwg.mxu0
  %v2414 = vmul.f32 %v2411, 0.5
  %v2415 = vmul.f32 %v2414, 0.63661975
  %v2416 = vadd.f32 %v2415, 0.5
  %v2417 = vcvt.f32.s32.to.zero.pseudo %v2416
  %v2418 = vcvt.s32.f32 %v2417
  %vm2419 = vcmp.lt.f32.partialorder %v2416, %v2418
  %v2420 = vsub.s32 %v2417, 1
  %v2421 = vsel %vm2419, %v2420, %v2417
  %v2422 = vcvt.s32.f32 %v2421
  %v2423 = vmul.f32 %v2422, 1.5707964
  %v2424 = vsub.f32 %v2414, %v2423
  %v2425 = vand.u32 %v2421, 3
  %v2426 = vmul.f32 %v2424, %v2424
  %v2427 = vmul.f32 %v2426, 2.7557319e-06
  %v2428 = vadd.f32 %v2427, -0.0001984127
  %v2429 = vmul.f32 %v2426, %v2428
  %v2430 = vadd.f32 %v2429, 0.008333334
  %v2431 = vmul.f32 %v2426, %v2430
  %v2432 = vadd.f32 %v2431, -0.16666667
  %v2433 = vmul.f32 %v2426, %v2432
  %v2434 = vadd.f32 %v2433, 1.0
  %v2435 = vmul.f32 %v2424, %v2434
  %v2436 = vmul.f32 %v2426, 2.4801588e-05
  %v2437 = vadd.f32 %v2436, -0.0013888889
  %v2438 = vmul.f32 %v2426, %v2437
  %v2439 = vadd.f32 %v2438, 0.041666668
  %v2440 = vmul.f32 %v2426, %v2439
  %v2441 = vadd.f32 %v2440, -0.5
  %v2442 = vmul.f32 %v2426, %v2441
  %v2443 = vadd.f32 %v2442, 1.0
  %vm2444 = vcmp.eq.s32.totalorder %v2425, 0
  %vm2445 = vcmp.eq.s32.totalorder %v2425, 1
  %vm2446 = vcmp.eq.s32.totalorder %v2425, 2
  %v2447 = vsub.f32 0.0, %v2435
  %v2448 = vsub.f32 0.0, %v2443
  %v2449 = vsel %vm2446, %v2447, %v2448
  %v2450 = vsel %vm2445, %v2443, %v2449
  %v2451 = vsel %vm2444, %v2435, %v2450
  %v2452 = vsel %vm2446, %v2448, %v2435
  %v2453 = vsel %vm2445, %v2447, %v2452
  %v2454 = vsel %vm2444, %v2443, %v2453
  %v2455 = vmul.f32 %v2454, 0.70710677
  %v2456 = vsub.f32 0.0, %v2451
  %v2457 = vmul.f32 %v2456, 0.70710677
  %v2458 = vmul.f32 %v2451, 0.70710677
  %v2459 = vmul.f32 %v2411, %v2411
  %v2460 = vadd.f32 %v2459, 1.0
  %v2461 = vrsqrt.pop %v2460
  %v2462 = vadd.f32 %v2461, 1.0
  %v2463 = vmul.f32 %v2462, 0.5
  %v2464 = vrsqrt.pop %v2463
  %v2465 = vmul.f32 %v2463, %v2464
  %vm2466 = vcmp.eq.f32.partialorder %v2463, inf
  %v2467 = vsel %vm2466, %v2463, %v2465
  %vm2468 = vcmp.eq.f32.partialorder %v2463, 0.0
  %v2469 = vand.u32 %v2463, 2147483648
  %v2470 = vsel %vm2468, %v2469, %v2467
  %vm2471 = vcmp.ge.f32.partialorder %v2411, 0.0
  %v2472 = vsel %vm2471, 1.0, -1.0
  %v2473 = vsub.f32 1.0, %v2461
  %v2474 = vmul.f32 %v2473, 0.5
  %v2475 = vmax.f32 %v2474, 0.0
  %v2476 = vrsqrt.pop %v2475
  %v2477 = vmul.f32 %v2475, %v2476
  %vm2478 = vcmp.eq.f32.partialorder %v2475, inf
  %v2479 = vsel %vm2478, %v2475, %v2477
  %vm2480 = vcmp.eq.f32.partialorder %v2475, 0.0
  %v2481 = vand.u32 %v2475, 2147483648
  %v2482 = vsel %vm2480, %v2481, %v2479
  %v2483 = vmul.f32 %v2472, %v2482
  %v2484 = vlaneseq
  %v2485 = vshrl.u32 %v2484, 7
  %v2486 = vsub.s32 0, %v2485
  %v2487 = vrot.slane %v2470, %v2486
  %v2488 = vmul.f32 %v2487, %v2455
  %v2489 = vlaneseq
  %v2490 = vshrl.u32 %v2489, 7
  %v2491 = vsub.s32 0, %v2490
  %v2492 = vrot.slane %v2483, %v2491
  %v2493 = vmul.f32 %v2492, %v2455
  %v2494 = vsub.f32 %v2488, %v2493
  %v2495 = vmul.f32 %v2487, %v2457
  %v2496 = vmul.f32 %v2492, %v2458
  %v2497 = vsub.f32 %v2495, %v2496
  %v2498 = vadd.f32 %v2493, %v2488
  %v2499 = vmul.f32 %v2492, %v2457
  %v2500 = vmul.f32 %v2487, %v2458
  %v2501 = vadd.f32 %v2499, %v2500
  %v2502 = vmul.f32 %v2487, %v2494
  %v2503 = vmul.f32 %v2492, %v2497
  %v2504 = vadd.f32 %v2502, %v2503
  %v2505 = vmul.f32 %v2487, %v2497
  %v2506 = vmul.f32 %v2492, %v2494
  %v2507 = vsub.f32 %v2505, %v2506
  %v2508 = vmul.f32 %v2487, %v2498
  %v2509 = vmul.f32 %v2492, %v2501
  %v2510 = vsub.f32 %v2508, %v2509
  %v2511 = vmul.f32 %v2487, %v2501
  %v2512 = vmul.f32 %v2492, %v2498
  %v2513 = vadd.f32 %v2511, %v2512
  %v2514 = vsub.f32 %v2510, %v2504
  %2516 = vset.pattern.permute.xlu0 0
  %2517 = vperm.xlu0 %2516, %v2514
  %v2518 = vpop.permute.xlu0 %2517
  %v2520 = vmul.f32 %v2518, %v387
  %2522 = vset.pattern.permute.xlu0 0
  %2523 = vperm.xlu0 %2522, %v2504
  %v2524 = vpop.permute.xlu0 %2523
  %v2526 = vadd.f32 %v2524, %v2520
  %v2527 = vsub.f32 %v2513, %v2507
  %2529 = vset.pattern.permute.xlu0 0
  %2530 = vperm.xlu0 %2529, %v2527
  %v2531 = vpop.permute.xlu0 %2530
  %v2533 = vmul.f32 %v2531, %v387
  %2535 = vset.pattern.permute.xlu0 0
  %2536 = vperm.xlu0 %2535, %v2507
  %v2537 = vpop.permute.xlu0 %2536
  %v2539 = vadd.f32 %v2537, %v2533
  %2540 = vset.pattern.permute.xlu0 1
  %2541 = vperm.xlu0 %2540, %v2514
  %v2542 = vpop.permute.xlu0 %2541
  %v2544 = vmul.f32 %v2542, %v415
  %2545 = vset.pattern.permute.xlu0 1
  %2546 = vperm.xlu0 %2545, %v2504
  %v2547 = vpop.permute.xlu0 %2546
  %v2549 = vadd.f32 %v2547, %v2544
  %2550 = vset.pattern.permute.xlu0 1
  %2551 = vperm.xlu0 %2550, %v2527
  %v2552 = vpop.permute.xlu0 %2551
  %v2554 = vmul.f32 %v2552, %v415
  %2555 = vset.pattern.permute.xlu0 1
  %2556 = vperm.xlu0 %2555, %v2507
  %v2557 = vpop.permute.xlu0 %2556
  %v2559 = vadd.f32 %v2557, %v2554
  %v2560 = vmul.f32 %v2526, %v2549
  %v2561 = vmul.f32 %v2539, %v2559
  %v2562 = vsub.f32 %v2560, %v2561
  %v2563 = vmul.f32 %v2526, %v2559
  %v2564 = vmul.f32 %v2539, %v2549
  %v2565 = vadd.f32 %v2563, %v2564
  %2566 = vset.pattern.permute.xlu0 2
  %2567 = vperm.xlu0 %2566, %v2514
  %v2568 = vpop.permute.xlu0 %2567
  %v2570 = vmul.f32 %v2568, %v445
  %2571 = vset.pattern.permute.xlu0 2
  %2572 = vperm.xlu0 %2571, %v2504
  %v2573 = vpop.permute.xlu0 %2572
  %v2575 = vadd.f32 %v2573, %v2570
  %2576 = vset.pattern.permute.xlu0 2
  %2577 = vperm.xlu0 %2576, %v2527
  %v2578 = vpop.permute.xlu0 %2577
  %v2580 = vmul.f32 %v2578, %v445
  %2581 = vset.pattern.permute.xlu0 2
  %2582 = vperm.xlu0 %2581, %v2507
  %v2583 = vpop.permute.xlu0 %2582
  %v2585 = vadd.f32 %v2583, %v2580
  %v2586 = vmul.f32 %v2562, %v2575
  %v2587 = vmul.f32 %v2565, %v2585
  %v2588 = vsub.f32 %v2586, %v2587
  %v2589 = vmul.f32 %v2562, %v2585
  %v2590 = vmul.f32 %v2565, %v2575
  %v2591 = vadd.f32 %v2589, %v2590
  %2592 = vset.pattern.permute.xlu0 3
  %2593 = vperm.xlu0 %2592, %v2514
  %v2594 = vpop.permute.xlu0 %2593
  %v2596 = vmul.f32 %v2594, %v475
  %2597 = vset.pattern.permute.xlu0 3
  %2598 = vperm.xlu0 %2597, %v2504
  %v2599 = vpop.permute.xlu0 %2598
  %v2601 = vadd.f32 %v2599, %v2596
  %2602 = vset.pattern.permute.xlu0 3
  %2603 = vperm.xlu0 %2602, %v2527
  %v2604 = vpop.permute.xlu0 %2603
  %v2606 = vmul.f32 %v2604, %v475
  %2607 = vset.pattern.permute.xlu0 3
  %2608 = vperm.xlu0 %2607, %v2507
  %v2609 = vpop.permute.xlu0 %2608
  %v2611 = vadd.f32 %v2609, %v2606
  %v2612 = vmul.f32 %v2588, %v2601
  %v2613 = vmul.f32 %v2591, %v2611
  %v2614 = vsub.f32 %v2612, %v2613
  %v2615 = vmul.f32 %v2588, %v2611
  %v2616 = vmul.f32 %v2591, %v2601
  %v2617 = vadd.f32 %v2615, %v2616
  %v2619 = vsel %vm498, %v2617, 0
  %2621 = vmatprep.subr.mxu0 0.0
  %2622 = vmatpush1.msra.mxu0 %v192
  %2623 = vmatprep.subr.mxu0 0.0
  %2624 = vmatpush1.msra.mxu0 %v193
  %2625 = vmatprep.subr.mxu0 0.0
  %2626 = vmatpush1.msra.mxu0 0.0
  %2627 = vmatprep.subr.mxu0 0.0
  %2628 = vmatpush1.msra.mxu0 0.0
  %2629 = vmatprep.subr.mxu0 0.0
  %2630 = vmatpush1.msra.mxu0 0.0
  %2631 = vmatprep.subr.mxu0 0.0
  %2632 = vmatpush1.msra.mxu0 0.0
  %2633 = vmatprep.subr.mxu0 0.0
  %2634 = vmatpush1.msra.mxu0 0.0
  %2635 = vmatprep.subr.mxu0 0.0
  %2636 = vmatpush1.msra.mxu0 0.0
  %2637 = vmatprep.subr.mxu0 0.0
  %2638 = vmatpush1.msra.mxu0 0.0
  %2639 = vmatprep.subr.mxu0 0.0
  %2640 = vmatpush1.msra.mxu0 0.0
  %2641 = vmatprep.subr.mxu0 0.0
  %2642 = vmatpush1.msra.mxu0 0.0
  %2643 = vmatprep.subr.mxu0 0.0
  %2644 = vmatpush1.msra.mxu0 0.0
  %2645 = vmatprep.subr.mxu0 0.0
  %2646 = vmatpush1.msra.mxu0 0.0
  %2647 = vmatprep.subr.mxu0 0.0
  %2648 = vmatpush1.msra.mxu0 0.0
  %2649 = vmatprep.subr.mxu0 0.0
  %2650 = vmatpush1.msra.mxu0 0.0
  %2651 = vmatprep.subr.mxu0 0.0
  %2652 = vmatpush1.msra.mxu0 0.0
  %2653 = vmatprep.subr.mxu0 0.0
  %2654 = vmatpush1.msra.mxu0 0.0
  %2655 = vmatprep.subr.mxu0 0.0
  %2656 = vmatpush1.msra.mxu0 0.0
  %2657 = vmatprep.subr.mxu0 0.0
  %2658 = vmatpush1.msra.mxu0 0.0
  %2659 = vmatprep.subr.mxu0 0.0
  %2660 = vmatpush1.msra.mxu0 0.0
  %2661 = vmatprep.subr.mxu0 0.0
  %2662 = vmatpush1.msra.mxu0 0.0
  %2663 = vmatprep.subr.mxu0 0.0
  %2664 = vmatpush1.msra.mxu0 0.0
  %2665 = vmatprep.subr.mxu0 0.0
  %2666 = vmatpush1.msra.mxu0 0.0
  %2667 = vmatprep.subr.mxu0 0.0
  %2668 = vmatpush1.msra.mxu0 0.0
  %2669 = vmatprep.subr.mxu0 0.0
  %2670 = vmatpush1.msra.mxu0 0.0
  %2671 = vmatprep.subr.mxu0 0.0
  %2672 = vmatpush1.msra.mxu0 0.0
  %2673 = vmatprep.subr.mxu0 0.0
  %2674 = vmatpush1.msra.mxu0 0.0
  %2675 = vmatprep.subr.mxu0 0.0
  %2676 = vmatpush1.msra.mxu0 0.0
  %2677 = vmatprep.subr.mxu0 0.0
  %2678 = vmatpush1.msra.mxu0 0.0
  %2679 = vmatprep.subr.mxu0 0.0
  %2680 = vmatpush1.msra.mxu0 0.0
  %2681 = vmatprep.subr.mxu0 0.0
  %2682 = vmatpush1.msra.mxu0 0.0
  %2683 = vmatprep.subr.mxu0 0.0
  %2684 = vmatpush1.msra.mxu0 0.0
  %2685 = vmatprep.mubr.f32.mxu0 0.0
  %2686 = vmatmul.mubr.f32.gmra.mrb[0].mxu0 %v2619
  %v2687 = vpop.f32.mrb[0].mxu0
  %v2688 = vadd.f32 0.0, %v2687
  %v2689 = vpop.f32.mrb[0].mxu0
  %2690 = vdwg.mxu0
  %v2692 = vsel %vm498, %v2614, 0
  %2694 = vmatprep.subr.mxu0 0.0
  %2695 = vmatpush1.msra.mxu0 %v190
  %2696 = vmatprep.subr.mxu0 0.0
  %2697 = vmatpush1.msra.mxu0 %v191
  %2698 = vmatprep.subr.mxu0 0.0
  %2699 = vmatpush1.msra.mxu0 0.0
  %2700 = vmatprep.subr.mxu0 0.0
  %2701 = vmatpush1.msra.mxu0 0.0
  %2702 = vmatprep.subr.mxu0 0.0
  %2703 = vmatpush1.msra.mxu0 0.0
  %2704 = vmatprep.subr.mxu0 0.0
  %2705 = vmatpush1.msra.mxu0 0.0
  %2706 = vmatprep.subr.mxu0 0.0
  %2707 = vmatpush1.msra.mxu0 0.0
  %2708 = vmatprep.subr.mxu0 0.0
  %2709 = vmatpush1.msra.mxu0 0.0
  %2710 = vmatprep.subr.mxu0 0.0
  %2711 = vmatpush1.msra.mxu0 0.0
  %2712 = vmatprep.subr.mxu0 0.0
  %2713 = vmatpush1.msra.mxu0 0.0
  %2714 = vmatprep.subr.mxu0 0.0
  %2715 = vmatpush1.msra.mxu0 0.0
  %2716 = vmatprep.subr.mxu0 0.0
  %2717 = vmatpush1.msra.mxu0 0.0
  %2718 = vmatprep.subr.mxu0 0.0
  %2719 = vmatpush1.msra.mxu0 0.0
  %2720 = vmatprep.subr.mxu0 0.0
  %2721 = vmatpush1.msra.mxu0 0.0
  %2722 = vmatprep.subr.mxu0 0.0
  %2723 = vmatpush1.msra.mxu0 0.0
  %2724 = vmatprep.subr.mxu0 0.0
  %2725 = vmatpush1.msra.mxu0 0.0
  %2726 = vmatprep.subr.mxu0 0.0
  %2727 = vmatpush1.msra.mxu0 0.0
  %2728 = vmatprep.subr.mxu0 0.0
  %2729 = vmatpush1.msra.mxu0 0.0
  %2730 = vmatprep.subr.mxu0 0.0
  %2731 = vmatpush1.msra.mxu0 0.0
  %2732 = vmatprep.subr.mxu0 0.0
  %2733 = vmatpush1.msra.mxu0 0.0
  %2734 = vmatprep.subr.mxu0 0.0
  %2735 = vmatpush1.msra.mxu0 0.0
  %2736 = vmatprep.subr.mxu0 0.0
  %2737 = vmatpush1.msra.mxu0 0.0
  %2738 = vmatprep.subr.mxu0 0.0
  %2739 = vmatpush1.msra.mxu0 0.0
  %2740 = vmatprep.subr.mxu0 0.0
  %2741 = vmatpush1.msra.mxu0 0.0
  %2742 = vmatprep.subr.mxu0 0.0
  %2743 = vmatpush1.msra.mxu0 0.0
  %2744 = vmatprep.subr.mxu0 0.0
  %2745 = vmatpush1.msra.mxu0 0.0
  %2746 = vmatprep.subr.mxu0 0.0
  %2747 = vmatpush1.msra.mxu0 0.0
  %2748 = vmatprep.subr.mxu0 0.0
  %2749 = vmatpush1.msra.mxu0 0.0
  %2750 = vmatprep.subr.mxu0 0.0
  %2751 = vmatpush1.msra.mxu0 0.0
  %2752 = vmatprep.subr.mxu0 0.0
  %2753 = vmatpush1.msra.mxu0 0.0
  %2754 = vmatprep.subr.mxu0 0.0
  %2755 = vmatpush1.msra.mxu0 0.0
  %2756 = vmatprep.subr.mxu0 0.0
  %2757 = vmatpush1.msra.mxu0 0.0
  %2758 = vmatprep.mubr.f32.mxu0 0.0
  %2759 = vmatmul.mubr.f32.gmra.mrb[0].mxu0 %v2692
  %v2760 = vpop.f32.mrb[0].mxu0
  %v2761 = vadd.f32 %v2688, %v2760
  %v2762 = vpop.f32.mrb[0].mxu0
  %2763 = vdwg.mxu0
  %v2764 = vmul.f32 %v2761, %v2761
  %2766 = vrot.lane.b32.xlu0 %v2764, 64
  %v2767 = vpop.permute.xlu0 %2766
  %v2769 = vadd.f32 %v2764, %v2767
  %v2771 = vsel %vm657, %v2769, 0
  %2773 = vmatprep.subr.mxu0 0.0
  %2774 = vmatpush1.msra.mxu0 %v194
  %2775 = vmatprep.subr.mxu0 0.0
  %2776 = vmatpush1.msra.mxu0 %v195
  %2777 = vmatprep.subr.mxu0 0.0
  %2778 = vmatpush1.msra.mxu0 %v196
  %2779 = vmatprep.subr.mxu0 0.0
  %2780 = vmatpush1.msra.mxu0 %v197
  %2781 = vmatprep.subr.mxu0 0.0
  %2782 = vmatpush1.msra.mxu0 %v198
  %2783 = vmatprep.subr.mxu0 0.0
  %2784 = vmatpush1.msra.mxu0 %v199
  %2785 = vmatprep.subr.mxu0 0.0
  %2786 = vmatpush1.msra.mxu0 %v200
  %2787 = vmatprep.subr.mxu0 0.0
  %2788 = vmatpush1.msra.mxu0 %v201
  %2789 = vmatprep.subr.mxu0 0.0
  %2790 = vmatpush1.msra.mxu0 0.0
  %2791 = vmatprep.subr.mxu0 0.0
  %2792 = vmatpush1.msra.mxu0 0.0
  %2793 = vmatprep.subr.mxu0 0.0
  %2794 = vmatpush1.msra.mxu0 0.0
  %2795 = vmatprep.subr.mxu0 0.0
  %2796 = vmatpush1.msra.mxu0 0.0
  %2797 = vmatprep.subr.mxu0 0.0
  %2798 = vmatpush1.msra.mxu0 0.0
  %2799 = vmatprep.subr.mxu0 0.0
  %2800 = vmatpush1.msra.mxu0 0.0
  %2801 = vmatprep.subr.mxu0 0.0
  %2802 = vmatpush1.msra.mxu0 0.0
  %2803 = vmatprep.subr.mxu0 0.0
  %2804 = vmatpush1.msra.mxu0 0.0
  %2805 = vmatprep.subr.mxu0 0.0
  %2806 = vmatpush1.msra.mxu0 0.0
  %2807 = vmatprep.subr.mxu0 0.0
  %2808 = vmatpush1.msra.mxu0 0.0
  %2809 = vmatprep.subr.mxu0 0.0
  %2810 = vmatpush1.msra.mxu0 0.0
  %2811 = vmatprep.subr.mxu0 0.0
  %2812 = vmatpush1.msra.mxu0 0.0
  %2813 = vmatprep.subr.mxu0 0.0
  %2814 = vmatpush1.msra.mxu0 0.0
  %2815 = vmatprep.subr.mxu0 0.0
  %2816 = vmatpush1.msra.mxu0 0.0
  %2817 = vmatprep.subr.mxu0 0.0
  %2818 = vmatpush1.msra.mxu0 0.0
  %2819 = vmatprep.subr.mxu0 0.0
  %2820 = vmatpush1.msra.mxu0 0.0
  %2821 = vmatprep.subr.mxu0 0.0
  %2822 = vmatpush1.msra.mxu0 0.0
  %2823 = vmatprep.subr.mxu0 0.0
  %2824 = vmatpush1.msra.mxu0 0.0
  %2825 = vmatprep.subr.mxu0 0.0
  %2826 = vmatpush1.msra.mxu0 0.0
  %2827 = vmatprep.subr.mxu0 0.0
  %2828 = vmatpush1.msra.mxu0 0.0
  %2829 = vmatprep.subr.mxu0 0.0
  %2830 = vmatpush1.msra.mxu0 0.0
  %2831 = vmatprep.subr.mxu0 0.0
  %2832 = vmatpush1.msra.mxu0 0.0
  %2833 = vmatprep.subr.mxu0 0.0
  %2834 = vmatpush1.msra.mxu0 0.0
  %2835 = vmatprep.subr.mxu0 0.0
  %2836 = vmatpush1.msra.mxu0 0.0
  %2837 = vmatprep.mubr.f32.mxu0 0.0
  %2838 = vmatmul.mubr.f32.gmra.mrb[0].mxu0 %v2771
  %v2839 = vpop.f32.mrb[0].mxu0
  %v2840 = vadd.f32 %v655, %v2839
  %v2841 = vpop.f32.mrb[0].mxu0
  %2842 = vdwg.mxu0
  %v2843 = vxor.u32 %v2840, 2147483648
  %v2844 = vmul.f32 %v2843, 1.442695
  %v2845 = vpow.pop %v2844
  %v2846 = vadd.f32 %v2845, 1.0
  %v2847 = vrcp.pop %v2846
  %v2848 = vmul.f32 1.0, %v2847
  %v2849 = vtanh.pop %v2840
  %v2850 = vmul.f32 %v2848, %v2332
  %2852 = vrot.lane.b32.xlu0 %v2849, 96
  %v2853 = vpop.permute.xlu0 %2852
  %v2855 = vmul.f32 %v2848, %v2853
  %2857 = vrot.lane.b32.xlu0 %v2855, 96
  %v2858 = vpop.permute.xlu0 %2857
  %v2860 = vadd.f32 %v2850, %v2858
  %v2861 = vtanh.pop %v2860
  %2863 = vrot.lane.b32.xlu0 %v2861, 96
  %v2864 = vpop.permute.xlu0 %2863
  %v2866 = vmul.f32 %v2848, %v2864
  %2868 = vrot.lane.b32.xlu0 %v2866, 32
  %v2869 = vpop.permute.xlu0 %2868
  %v2870 = vsel %vm204, %v2869, 0
  %2872 = vmatprep.subr.mxu0 0.0
  %2873 = vmatpush1.msra.mxu0 %v186
  %2874 = vmatprep.subr.mxu0 0.0
  %2875 = vmatpush1.msra.mxu0 %v187
  %2876 = vmatprep.subr.mxu0 0.0
  %2877 = vmatpush1.msra.mxu0 %v188
  %2878 = vmatprep.subr.mxu0 0.0
  %2879 = vmatpush1.msra.mxu0 %v189
  %2880 = vmatprep.subr.mxu0 0.0
  %2881 = vmatpush1.msra.mxu0 0.0
  %2882 = vmatprep.subr.mxu0 0.0
  %2883 = vmatpush1.msra.mxu0 0.0
  %2884 = vmatprep.subr.mxu0 0.0
  %2885 = vmatpush1.msra.mxu0 0.0
  %2886 = vmatprep.subr.mxu0 0.0
  %2887 = vmatpush1.msra.mxu0 0.0
  %2888 = vmatprep.subr.mxu0 0.0
  %2889 = vmatpush1.msra.mxu0 0.0
  %2890 = vmatprep.subr.mxu0 0.0
  %2891 = vmatpush1.msra.mxu0 0.0
  %2892 = vmatprep.subr.mxu0 0.0
  %2893 = vmatpush1.msra.mxu0 0.0
  %2894 = vmatprep.subr.mxu0 0.0
  %2895 = vmatpush1.msra.mxu0 0.0
  %2896 = vmatprep.subr.mxu0 0.0
  %2897 = vmatpush1.msra.mxu0 0.0
  %2898 = vmatprep.subr.mxu0 0.0
  %2899 = vmatpush1.msra.mxu0 0.0
  %2900 = vmatprep.subr.mxu0 0.0
  %2901 = vmatpush1.msra.mxu0 0.0
  %2902 = vmatprep.subr.mxu0 0.0
  %2903 = vmatpush1.msra.mxu0 0.0
  %2904 = vmatprep.subr.mxu0 0.0
  %2905 = vmatpush1.msra.mxu0 0.0
  %2906 = vmatprep.subr.mxu0 0.0
  %2907 = vmatpush1.msra.mxu0 0.0
  %2908 = vmatprep.subr.mxu0 0.0
  %2909 = vmatpush1.msra.mxu0 0.0
  %2910 = vmatprep.subr.mxu0 0.0
  %2911 = vmatpush1.msra.mxu0 0.0
  %2912 = vmatprep.subr.mxu0 0.0
  %2913 = vmatpush1.msra.mxu0 0.0
  %2914 = vmatprep.subr.mxu0 0.0
  %2915 = vmatpush1.msra.mxu0 0.0
  %2916 = vmatprep.subr.mxu0 0.0
  %2917 = vmatpush1.msra.mxu0 0.0
  %2918 = vmatprep.subr.mxu0 0.0
  %2919 = vmatpush1.msra.mxu0 0.0
  %2920 = vmatprep.subr.mxu0 0.0
  %2921 = vmatpush1.msra.mxu0 0.0
  %2922 = vmatprep.subr.mxu0 0.0
  %2923 = vmatpush1.msra.mxu0 0.0
  %2924 = vmatprep.subr.mxu0 0.0
  %2925 = vmatpush1.msra.mxu0 0.0
  %2926 = vmatprep.subr.mxu0 0.0
  %2927 = vmatpush1.msra.mxu0 0.0
  %2928 = vmatprep.subr.mxu0 0.0
  %2929 = vmatpush1.msra.mxu0 0.0
  %2930 = vmatprep.subr.mxu0 0.0
  %2931 = vmatpush1.msra.mxu0 0.0
  %2932 = vmatprep.subr.mxu0 0.0
  %2933 = vmatpush1.msra.mxu0 0.0
  %2934 = vmatprep.subr.mxu0 0.0
  %2935 = vmatpush1.msra.mxu0 0.0
  %2936 = vmatprep.mubr.f32.mxu0 0.0
  %2937 = vmatmul.mubr.f32.gmra.mrb[0].mxu0 %v2870
  %v2938 = vpop.f32.mrb[0].mxu0
  %v2939 = vadd.f32 %v173, %v2938
  %v2940 = vpop.f32.mrb[0].mxu0
  %2941 = vdwg.mxu0
  %v2942 = vmul.f32 %v2939, 0.5
  %v2943 = vmul.f32 %v2942, 0.63661975
  %v2944 = vadd.f32 %v2943, 0.5
  %v2945 = vcvt.f32.s32.to.zero.pseudo %v2944
  %v2946 = vcvt.s32.f32 %v2945
  %vm2947 = vcmp.lt.f32.partialorder %v2944, %v2946
  %v2948 = vsub.s32 %v2945, 1
  %v2949 = vsel %vm2947, %v2948, %v2945
  %v2950 = vcvt.s32.f32 %v2949
  %v2951 = vmul.f32 %v2950, 1.5707964
  %v2952 = vsub.f32 %v2942, %v2951
  %v2953 = vand.u32 %v2949, 3
  %v2954 = vmul.f32 %v2952, %v2952
  %v2955 = vmul.f32 %v2954, 2.7557319e-06
  %v2956 = vadd.f32 %v2955, -0.0001984127
  %v2957 = vmul.f32 %v2954, %v2956
  %v2958 = vadd.f32 %v2957, 0.008333334
  %v2959 = vmul.f32 %v2954, %v2958
  %v2960 = vadd.f32 %v2959, -0.16666667
  %v2961 = vmul.f32 %v2954, %v2960
  %v2962 = vadd.f32 %v2961, 1.0
  %v2963 = vmul.f32 %v2952, %v2962
  %v2964 = vmul.f32 %v2954, 2.4801588e-05
  %v2965 = vadd.f32 %v2964, -0.0013888889
  %v2966 = vmul.f32 %v2954, %v2965
  %v2967 = vadd.f32 %v2966, 0.041666668
  %v2968 = vmul.f32 %v2954, %v2967
  %v2969 = vadd.f32 %v2968, -0.5
  %v2970 = vmul.f32 %v2954, %v2969
  %v2971 = vadd.f32 %v2970, 1.0
  %vm2972 = vcmp.eq.s32.totalorder %v2953, 0
  %vm2973 = vcmp.eq.s32.totalorder %v2953, 1
  %vm2974 = vcmp.eq.s32.totalorder %v2953, 2
  %v2975 = vsub.f32 0.0, %v2963
  %v2976 = vsub.f32 0.0, %v2971
  %v2977 = vsel %vm2974, %v2975, %v2976
  %v2978 = vsel %vm2973, %v2971, %v2977
  %v2979 = vsel %vm2972, %v2963, %v2978
  %v2980 = vsel %vm2974, %v2976, %v2963
  %v2981 = vsel %vm2973, %v2975, %v2980
  %v2982 = vsel %vm2972, %v2971, %v2981
  %v2983 = vmul.f32 %v2982, 0.70710677
  %v2984 = vsub.f32 0.0, %v2979
  %v2985 = vmul.f32 %v2984, 0.70710677
  %v2986 = vmul.f32 %v2979, 0.70710677
  %v2987 = vmul.f32 %v2939, %v2939
  %v2988 = vadd.f32 %v2987, 1.0
  %v2989 = vrsqrt.pop %v2988
  %v2990 = vadd.f32 %v2989, 1.0
  %v2991 = vmul.f32 %v2990, 0.5
  %v2992 = vrsqrt.pop %v2991
  %v2993 = vmul.f32 %v2991, %v2992
  %vm2994 = vcmp.eq.f32.partialorder %v2991, inf
  %v2995 = vsel %vm2994, %v2991, %v2993
  %vm2996 = vcmp.eq.f32.partialorder %v2991, 0.0
  %v2997 = vand.u32 %v2991, 2147483648
  %v2998 = vsel %vm2996, %v2997, %v2995
  %vm2999 = vcmp.ge.f32.partialorder %v2939, 0.0
  %v3000 = vsel %vm2999, 1.0, -1.0
  %v3001 = vsub.f32 1.0, %v2989
  %v3002 = vmul.f32 %v3001, 0.5
  %v3003 = vmax.f32 %v3002, 0.0
  %v3004 = vrsqrt.pop %v3003
  %v3005 = vmul.f32 %v3003, %v3004
  %vm3006 = vcmp.eq.f32.partialorder %v3003, inf
  %v3007 = vsel %vm3006, %v3003, %v3005
  %vm3008 = vcmp.eq.f32.partialorder %v3003, 0.0
  %v3009 = vand.u32 %v3003, 2147483648
  %v3010 = vsel %vm3008, %v3009, %v3007
  %v3011 = vmul.f32 %v3000, %v3010
  %v3012 = vlaneseq
  %v3013 = vshrl.u32 %v3012, 7
  %v3014 = vsub.s32 0, %v3013
  %v3015 = vrot.slane %v2998, %v3014
  %v3016 = vmul.f32 %v3015, %v2983
  %v3017 = vlaneseq
  %v3018 = vshrl.u32 %v3017, 7
  %v3019 = vsub.s32 0, %v3018
  %v3020 = vrot.slane %v3011, %v3019
  %v3021 = vmul.f32 %v3020, %v2983
  %v3022 = vsub.f32 %v3016, %v3021
  %v3023 = vmul.f32 %v3015, %v2985
  %v3024 = vmul.f32 %v3020, %v2986
  %v3025 = vsub.f32 %v3023, %v3024
  %v3026 = vadd.f32 %v3021, %v3016
  %v3027 = vmul.f32 %v3020, %v2985
  %v3028 = vmul.f32 %v3015, %v2986
  %v3029 = vadd.f32 %v3027, %v3028
  %v3030 = vmul.f32 %v3015, %v3022
  %v3031 = vmul.f32 %v3020, %v3025
  %v3032 = vadd.f32 %v3030, %v3031
  %v3033 = vmul.f32 %v3015, %v3025
  %v3034 = vmul.f32 %v3020, %v3022
  %v3035 = vsub.f32 %v3033, %v3034
  %v3036 = vmul.f32 %v3015, %v3026
  %v3037 = vmul.f32 %v3020, %v3029
  %v3038 = vsub.f32 %v3036, %v3037
  %v3039 = vmul.f32 %v3015, %v3029
  %v3040 = vmul.f32 %v3020, %v3026
  %v3041 = vadd.f32 %v3039, %v3040
  %v3042 = vsub.f32 %v3038, %v3032
  %3044 = vset.pattern.permute.xlu0 0
  %3045 = vperm.xlu0 %3044, %v3042
  %v3046 = vpop.permute.xlu0 %3045
  %v3048 = vmul.f32 %v3046, %v387
  %3050 = vset.pattern.permute.xlu0 0
  %3051 = vperm.xlu0 %3050, %v3032
  %v3052 = vpop.permute.xlu0 %3051
  %v3054 = vadd.f32 %v3052, %v3048
  %v3055 = vsub.f32 %v3041, %v3035
  %3057 = vset.pattern.permute.xlu0 0
  %3058 = vperm.xlu0 %3057, %v3055
  %v3059 = vpop.permute.xlu0 %3058
  %v3061 = vmul.f32 %v3059, %v387
  %3063 = vset.pattern.permute.xlu0 0
  %3064 = vperm.xlu0 %3063, %v3035
  %v3065 = vpop.permute.xlu0 %3064
  %v3067 = vadd.f32 %v3065, %v3061
  %3068 = vset.pattern.permute.xlu0 1
  %3069 = vperm.xlu0 %3068, %v3042
  %v3070 = vpop.permute.xlu0 %3069
  %v3072 = vmul.f32 %v3070, %v415
  %3073 = vset.pattern.permute.xlu0 1
  %3074 = vperm.xlu0 %3073, %v3032
  %v3075 = vpop.permute.xlu0 %3074
  %v3077 = vadd.f32 %v3075, %v3072
  %3078 = vset.pattern.permute.xlu0 1
  %3079 = vperm.xlu0 %3078, %v3055
  %v3080 = vpop.permute.xlu0 %3079
  %v3082 = vmul.f32 %v3080, %v415
  %3083 = vset.pattern.permute.xlu0 1
  %3084 = vperm.xlu0 %3083, %v3035
  %v3085 = vpop.permute.xlu0 %3084
  %v3087 = vadd.f32 %v3085, %v3082
  %v3088 = vmul.f32 %v3054, %v3077
  %v3089 = vmul.f32 %v3067, %v3087
  %v3090 = vsub.f32 %v3088, %v3089
  %v3091 = vmul.f32 %v3054, %v3087
  %v3092 = vmul.f32 %v3067, %v3077
  %v3093 = vadd.f32 %v3091, %v3092
  %3094 = vset.pattern.permute.xlu0 2
  %3095 = vperm.xlu0 %3094, %v3042
  %v3096 = vpop.permute.xlu0 %3095
  %v3098 = vmul.f32 %v3096, %v445
  %3099 = vset.pattern.permute.xlu0 2
  %3100 = vperm.xlu0 %3099, %v3032
  %v3101 = vpop.permute.xlu0 %3100
  %v3103 = vadd.f32 %v3101, %v3098
  %3104 = vset.pattern.permute.xlu0 2
  %3105 = vperm.xlu0 %3104, %v3055
  %v3106 = vpop.permute.xlu0 %3105
  %v3108 = vmul.f32 %v3106, %v445
  %3109 = vset.pattern.permute.xlu0 2
  %3110 = vperm.xlu0 %3109, %v3035
  %v3111 = vpop.permute.xlu0 %3110
  %v3113 = vadd.f32 %v3111, %v3108
  %v3114 = vmul.f32 %v3090, %v3103
  %v3115 = vmul.f32 %v3093, %v3113
  %v3116 = vsub.f32 %v3114, %v3115
  %v3117 = vmul.f32 %v3090, %v3113
  %v3118 = vmul.f32 %v3093, %v3103
  %v3119 = vadd.f32 %v3117, %v3118
  %3120 = vset.pattern.permute.xlu0 3
  %3121 = vperm.xlu0 %3120, %v3042
  %v3122 = vpop.permute.xlu0 %3121
  %v3124 = vmul.f32 %v3122, %v475
  %3125 = vset.pattern.permute.xlu0 3
  %3126 = vperm.xlu0 %3125, %v3032
  %v3127 = vpop.permute.xlu0 %3126
  %v3129 = vadd.f32 %v3127, %v3124
  %3130 = vset.pattern.permute.xlu0 3
  %3131 = vperm.xlu0 %3130, %v3055
  %v3132 = vpop.permute.xlu0 %3131
  %v3134 = vmul.f32 %v3132, %v475
  %3135 = vset.pattern.permute.xlu0 3
  %3136 = vperm.xlu0 %3135, %v3035
  %v3137 = vpop.permute.xlu0 %3136
  %v3139 = vadd.f32 %v3137, %v3134
  %v3140 = vmul.f32 %v3116, %v3129
  %v3141 = vmul.f32 %v3119, %v3139
  %v3142 = vsub.f32 %v3140, %v3141
  %v3143 = vmul.f32 %v3116, %v3139
  %v3144 = vmul.f32 %v3119, %v3129
  %v3145 = vadd.f32 %v3143, %v3144
  %v3147 = vsel %vm498, %v3145, 0
  %3149 = vmatprep.subr.mxu0 0.0
  %3150 = vmatpush1.msra.mxu0 %v192
  %3151 = vmatprep.subr.mxu0 0.0
  %3152 = vmatpush1.msra.mxu0 %v193
  %3153 = vmatprep.subr.mxu0 0.0
  %3154 = vmatpush1.msra.mxu0 0.0
  %3155 = vmatprep.subr.mxu0 0.0
  %3156 = vmatpush1.msra.mxu0 0.0
  %3157 = vmatprep.subr.mxu0 0.0
  %3158 = vmatpush1.msra.mxu0 0.0
  %3159 = vmatprep.subr.mxu0 0.0
  %3160 = vmatpush1.msra.mxu0 0.0
  %3161 = vmatprep.subr.mxu0 0.0
  %3162 = vmatpush1.msra.mxu0 0.0
  %3163 = vmatprep.subr.mxu0 0.0
  %3164 = vmatpush1.msra.mxu0 0.0
  %3165 = vmatprep.subr.mxu0 0.0
  %3166 = vmatpush1.msra.mxu0 0.0
  %3167 = vmatprep.subr.mxu0 0.0
  %3168 = vmatpush1.msra.mxu0 0.0
  %3169 = vmatprep.subr.mxu0 0.0
  %3170 = vmatpush1.msra.mxu0 0.0
  %3171 = vmatprep.subr.mxu0 0.0
  %3172 = vmatpush1.msra.mxu0 0.0
  %3173 = vmatprep.subr.mxu0 0.0
  %3174 = vmatpush1.msra.mxu0 0.0
  %3175 = vmatprep.subr.mxu0 0.0
  %3176 = vmatpush1.msra.mxu0 0.0
  %3177 = vmatprep.subr.mxu0 0.0
  %3178 = vmatpush1.msra.mxu0 0.0
  %3179 = vmatprep.subr.mxu0 0.0
  %3180 = vmatpush1.msra.mxu0 0.0
  %3181 = vmatprep.subr.mxu0 0.0
  %3182 = vmatpush1.msra.mxu0 0.0
  %3183 = vmatprep.subr.mxu0 0.0
  %3184 = vmatpush1.msra.mxu0 0.0
  %3185 = vmatprep.subr.mxu0 0.0
  %3186 = vmatpush1.msra.mxu0 0.0
  %3187 = vmatprep.subr.mxu0 0.0
  %3188 = vmatpush1.msra.mxu0 0.0
  %3189 = vmatprep.subr.mxu0 0.0
  %3190 = vmatpush1.msra.mxu0 0.0
  %3191 = vmatprep.subr.mxu0 0.0
  %3192 = vmatpush1.msra.mxu0 0.0
  %3193 = vmatprep.subr.mxu0 0.0
  %3194 = vmatpush1.msra.mxu0 0.0
  %3195 = vmatprep.subr.mxu0 0.0
  %3196 = vmatpush1.msra.mxu0 0.0
  %3197 = vmatprep.subr.mxu0 0.0
  %3198 = vmatpush1.msra.mxu0 0.0
  %3199 = vmatprep.subr.mxu0 0.0
  %3200 = vmatpush1.msra.mxu0 0.0
  %3201 = vmatprep.subr.mxu0 0.0
  %3202 = vmatpush1.msra.mxu0 0.0
  %3203 = vmatprep.subr.mxu0 0.0
  %3204 = vmatpush1.msra.mxu0 0.0
  %3205 = vmatprep.subr.mxu0 0.0
  %3206 = vmatpush1.msra.mxu0 0.0
  %3207 = vmatprep.subr.mxu0 0.0
  %3208 = vmatpush1.msra.mxu0 0.0
  %3209 = vmatprep.subr.mxu0 0.0
  %3210 = vmatpush1.msra.mxu0 0.0
  %3211 = vmatprep.subr.mxu0 0.0
  %3212 = vmatpush1.msra.mxu0 0.0
  %3213 = vmatprep.mubr.f32.mxu0 0.0
  %3214 = vmatmul.mubr.f32.gmra.mrb[0].mxu0 %v3147
  %v3215 = vpop.f32.mrb[0].mxu0
  %v3216 = vadd.f32 0.0, %v3215
  %v3217 = vpop.f32.mrb[0].mxu0
  %3218 = vdwg.mxu0
  %v3220 = vsel %vm498, %v3142, 0
  %3222 = vmatprep.subr.mxu0 0.0
  %3223 = vmatpush1.msra.mxu0 %v190
  %3224 = vmatprep.subr.mxu0 0.0
  %3225 = vmatpush1.msra.mxu0 %v191
  %3226 = vmatprep.subr.mxu0 0.0
  %3227 = vmatpush1.msra.mxu0 0.0
  %3228 = vmatprep.subr.mxu0 0.0
  %3229 = vmatpush1.msra.mxu0 0.0
  %3230 = vmatprep.subr.mxu0 0.0
  %3231 = vmatpush1.msra.mxu0 0.0
  %3232 = vmatprep.subr.mxu0 0.0
  %3233 = vmatpush1.msra.mxu0 0.0
  %3234 = vmatprep.subr.mxu0 0.0
  %3235 = vmatpush1.msra.mxu0 0.0
  %3236 = vmatprep.subr.mxu0 0.0
  %3237 = vmatpush1.msra.mxu0 0.0
  %3238 = vmatprep.subr.mxu0 0.0
  %3239 = vmatpush1.msra.mxu0 0.0
  %3240 = vmatprep.subr.mxu0 0.0
  %3241 = vmatpush1.msra.mxu0 0.0
  %3242 = vmatprep.subr.mxu0 0.0
  %3243 = vmatpush1.msra.mxu0 0.0
  %3244 = vmatprep.subr.mxu0 0.0
  %3245 = vmatpush1.msra.mxu0 0.0
  %3246 = vmatprep.subr.mxu0 0.0
  %3247 = vmatpush1.msra.mxu0 0.0
  %3248 = vmatprep.subr.mxu0 0.0
  %3249 = vmatpush1.msra.mxu0 0.0
  %3250 = vmatprep.subr.mxu0 0.0
  %3251 = vmatpush1.msra.mxu0 0.0
  %3252 = vmatprep.subr.mxu0 0.0
  %3253 = vmatpush1.msra.mxu0 0.0
  %3254 = vmatprep.subr.mxu0 0.0
  %3255 = vmatpush1.msra.mxu0 0.0
  %3256 = vmatprep.subr.mxu0 0.0
  %3257 = vmatpush1.msra.mxu0 0.0
  %3258 = vmatprep.subr.mxu0 0.0
  %3259 = vmatpush1.msra.mxu0 0.0
  %3260 = vmatprep.subr.mxu0 0.0
  %3261 = vmatpush1.msra.mxu0 0.0
  %3262 = vmatprep.subr.mxu0 0.0
  %3263 = vmatpush1.msra.mxu0 0.0
  %3264 = vmatprep.subr.mxu0 0.0
  %3265 = vmatpush1.msra.mxu0 0.0
  %3266 = vmatprep.subr.mxu0 0.0
  %3267 = vmatpush1.msra.mxu0 0.0
  %3268 = vmatprep.subr.mxu0 0.0
  %3269 = vmatpush1.msra.mxu0 0.0
  %3270 = vmatprep.subr.mxu0 0.0
  %3271 = vmatpush1.msra.mxu0 0.0
  %3272 = vmatprep.subr.mxu0 0.0
  %3273 = vmatpush1.msra.mxu0 0.0
  %3274 = vmatprep.subr.mxu0 0.0
  %3275 = vmatpush1.msra.mxu0 0.0
  %3276 = vmatprep.subr.mxu0 0.0
  %3277 = vmatpush1.msra.mxu0 0.0
  %3278 = vmatprep.subr.mxu0 0.0
  %3279 = vmatpush1.msra.mxu0 0.0
  %3280 = vmatprep.subr.mxu0 0.0
  %3281 = vmatpush1.msra.mxu0 0.0
  %3282 = vmatprep.subr.mxu0 0.0
  %3283 = vmatpush1.msra.mxu0 0.0
  %3284 = vmatprep.subr.mxu0 0.0
  %3285 = vmatpush1.msra.mxu0 0.0
  %3286 = vmatprep.mubr.f32.mxu0 0.0
  %3287 = vmatmul.mubr.f32.gmra.mrb[0].mxu0 %v3220
  %v3288 = vpop.f32.mrb[0].mxu0
  %v3289 = vadd.f32 %v3216, %v3288
  %v3290 = vpop.f32.mrb[0].mxu0
  %3291 = vdwg.mxu0
  %v3292 = vmul.f32 %v3289, %v3289
  %3294 = vrot.lane.b32.xlu0 %v3292, 64
  %v3295 = vpop.permute.xlu0 %3294
  %v3297 = vadd.f32 %v3292, %v3295
  %v3299 = vsel %vm657, %v3297, 0
  %3301 = vmatprep.subr.mxu0 0.0
  %3302 = vmatpush1.msra.mxu0 %v194
  %3303 = vmatprep.subr.mxu0 0.0
  %3304 = vmatpush1.msra.mxu0 %v195
  %3305 = vmatprep.subr.mxu0 0.0
  %3306 = vmatpush1.msra.mxu0 %v196
  %3307 = vmatprep.subr.mxu0 0.0
  %3308 = vmatpush1.msra.mxu0 %v197
  %3309 = vmatprep.subr.mxu0 0.0
  %3310 = vmatpush1.msra.mxu0 %v198
  %3311 = vmatprep.subr.mxu0 0.0
  %3312 = vmatpush1.msra.mxu0 %v199
  %3313 = vmatprep.subr.mxu0 0.0
  %3314 = vmatpush1.msra.mxu0 %v200
  %3315 = vmatprep.subr.mxu0 0.0
  %3316 = vmatpush1.msra.mxu0 %v201
  %3317 = vmatprep.subr.mxu0 0.0
  %3318 = vmatpush1.msra.mxu0 0.0
  %3319 = vmatprep.subr.mxu0 0.0
  %3320 = vmatpush1.msra.mxu0 0.0
  %3321 = vmatprep.subr.mxu0 0.0
  %3322 = vmatpush1.msra.mxu0 0.0
  %3323 = vmatprep.subr.mxu0 0.0
  %3324 = vmatpush1.msra.mxu0 0.0
  %3325 = vmatprep.subr.mxu0 0.0
  %3326 = vmatpush1.msra.mxu0 0.0
  %3327 = vmatprep.subr.mxu0 0.0
  %3328 = vmatpush1.msra.mxu0 0.0
  %3329 = vmatprep.subr.mxu0 0.0
  %3330 = vmatpush1.msra.mxu0 0.0
  %3331 = vmatprep.subr.mxu0 0.0
  %3332 = vmatpush1.msra.mxu0 0.0
  %3333 = vmatprep.subr.mxu0 0.0
  %3334 = vmatpush1.msra.mxu0 0.0
  %3335 = vmatprep.subr.mxu0 0.0
  %3336 = vmatpush1.msra.mxu0 0.0
  %3337 = vmatprep.subr.mxu0 0.0
  %3338 = vmatpush1.msra.mxu0 0.0
  %3339 = vmatprep.subr.mxu0 0.0
  %3340 = vmatpush1.msra.mxu0 0.0
  %3341 = vmatprep.subr.mxu0 0.0
  %3342 = vmatpush1.msra.mxu0 0.0
  %3343 = vmatprep.subr.mxu0 0.0
  %3344 = vmatpush1.msra.mxu0 0.0
  %3345 = vmatprep.subr.mxu0 0.0
  %3346 = vmatpush1.msra.mxu0 0.0
  %3347 = vmatprep.subr.mxu0 0.0
  %3348 = vmatpush1.msra.mxu0 0.0
  %3349 = vmatprep.subr.mxu0 0.0
  %3350 = vmatpush1.msra.mxu0 0.0
  %3351 = vmatprep.subr.mxu0 0.0
  %3352 = vmatpush1.msra.mxu0 0.0
  %3353 = vmatprep.subr.mxu0 0.0
  %3354 = vmatpush1.msra.mxu0 0.0
  %3355 = vmatprep.subr.mxu0 0.0
  %3356 = vmatpush1.msra.mxu0 0.0
  %3357 = vmatprep.subr.mxu0 0.0
  %3358 = vmatpush1.msra.mxu0 0.0
  %3359 = vmatprep.subr.mxu0 0.0
  %3360 = vmatpush1.msra.mxu0 0.0
  %3361 = vmatprep.subr.mxu0 0.0
  %3362 = vmatpush1.msra.mxu0 0.0
  %3363 = vmatprep.subr.mxu0 0.0
  %3364 = vmatpush1.msra.mxu0 0.0
  %3365 = vmatprep.mubr.f32.mxu0 0.0
  %3366 = vmatmul.mubr.f32.gmra.mrb[0].mxu0 %v3299
  %v3367 = vpop.f32.mrb[0].mxu0
  %v3368 = vadd.f32 %v655, %v3367
  %v3369 = vpop.f32.mrb[0].mxu0
  %3370 = vdwg.mxu0
  %v3371 = vxor.u32 %v3368, 2147483648
  %v3372 = vmul.f32 %v3371, 1.442695
  %v3373 = vpow.pop %v3372
  %v3374 = vadd.f32 %v3373, 1.0
  %v3375 = vrcp.pop %v3374
  %v3376 = vmul.f32 1.0, %v3375
  %v3377 = vtanh.pop %v3368
  %v3378 = vmul.f32 %v3376, %v2860
  %3380 = vrot.lane.b32.xlu0 %v3377, 96
  %v3381 = vpop.permute.xlu0 %3380
  %v3383 = vmul.f32 %v3376, %v3381
  %3385 = vrot.lane.b32.xlu0 %v3383, 96
  %v3386 = vpop.permute.xlu0 %3385
  %v3388 = vadd.f32 %v3378, %v3386
  %v3389 = vtanh.pop %v3388
  %3391 = vrot.lane.b32.xlu0 %v3389, 96
  %v3392 = vpop.permute.xlu0 %3391
  %v3394 = vmul.f32 %v3376, %v3392
  %3396 = vrot.lane.b32.xlu0 %v3394, 32
  %v3397 = vpop.permute.xlu0 %3396
  %v3398 = vsel %vm204, %v3397, 0
  %3400 = vmatprep.subr.mxu0 0.0
  %3401 = vmatpush1.msra.mxu0 %v186
  %3402 = vmatprep.subr.mxu0 0.0
  %3403 = vmatpush1.msra.mxu0 %v187
  %3404 = vmatprep.subr.mxu0 0.0
  %3405 = vmatpush1.msra.mxu0 %v188
  %3406 = vmatprep.subr.mxu0 0.0
  %3407 = vmatpush1.msra.mxu0 %v189
  %3408 = vmatprep.subr.mxu0 0.0
  %3409 = vmatpush1.msra.mxu0 0.0
  %3410 = vmatprep.subr.mxu0 0.0
  %3411 = vmatpush1.msra.mxu0 0.0
  %3412 = vmatprep.subr.mxu0 0.0
  %3413 = vmatpush1.msra.mxu0 0.0
  %3414 = vmatprep.subr.mxu0 0.0
  %3415 = vmatpush1.msra.mxu0 0.0
  %3416 = vmatprep.subr.mxu0 0.0
  %3417 = vmatpush1.msra.mxu0 0.0
  %3418 = vmatprep.subr.mxu0 0.0
  %3419 = vmatpush1.msra.mxu0 0.0
  %3420 = vmatprep.subr.mxu0 0.0
  %3421 = vmatpush1.msra.mxu0 0.0
  %3422 = vmatprep.subr.mxu0 0.0
  %3423 = vmatpush1.msra.mxu0 0.0
  %3424 = vmatprep.subr.mxu0 0.0
  %3425 = vmatpush1.msra.mxu0 0.0
  %3426 = vmatprep.subr.mxu0 0.0
  %3427 = vmatpush1.msra.mxu0 0.0
  %3428 = vmatprep.subr.mxu0 0.0
  %3429 = vmatpush1.msra.mxu0 0.0
  %3430 = vmatprep.subr.mxu0 0.0
  %3431 = vmatpush1.msra.mxu0 0.0
  %3432 = vmatprep.subr.mxu0 0.0
  %3433 = vmatpush1.msra.mxu0 0.0
  %3434 = vmatprep.subr.mxu0 0.0
  %3435 = vmatpush1.msra.mxu0 0.0
  %3436 = vmatprep.subr.mxu0 0.0
  %3437 = vmatpush1.msra.mxu0 0.0
  %3438 = vmatprep.subr.mxu0 0.0
  %3439 = vmatpush1.msra.mxu0 0.0
  %3440 = vmatprep.subr.mxu0 0.0
  %3441 = vmatpush1.msra.mxu0 0.0
  %3442 = vmatprep.subr.mxu0 0.0
  %3443 = vmatpush1.msra.mxu0 0.0
  %3444 = vmatprep.subr.mxu0 0.0
  %3445 = vmatpush1.msra.mxu0 0.0
  %3446 = vmatprep.subr.mxu0 0.0
  %3447 = vmatpush1.msra.mxu0 0.0
  %3448 = vmatprep.subr.mxu0 0.0
  %3449 = vmatpush1.msra.mxu0 0.0
  %3450 = vmatprep.subr.mxu0 0.0
  %3451 = vmatpush1.msra.mxu0 0.0
  %3452 = vmatprep.subr.mxu0 0.0
  %3453 = vmatpush1.msra.mxu0 0.0
  %3454 = vmatprep.subr.mxu0 0.0
  %3455 = vmatpush1.msra.mxu0 0.0
  %3456 = vmatprep.subr.mxu0 0.0
  %3457 = vmatpush1.msra.mxu0 0.0
  %3458 = vmatprep.subr.mxu0 0.0
  %3459 = vmatpush1.msra.mxu0 0.0
  %3460 = vmatprep.subr.mxu0 0.0
  %3461 = vmatpush1.msra.mxu0 0.0
  %3462 = vmatprep.subr.mxu0 0.0
  %3463 = vmatpush1.msra.mxu0 0.0
  %3464 = vmatprep.mubr.f32.mxu0 0.0
  %3465 = vmatmul.mubr.f32.gmra.mrb[0].mxu0 %v3398
  %v3466 = vpop.f32.mrb[0].mxu0
  %v3467 = vadd.f32 %v178, %v3466
  %v3468 = vpop.f32.mrb[0].mxu0
  %3469 = vdwg.mxu0
  %v3470 = vmul.f32 %v3467, 0.5
  %v3471 = vmul.f32 %v3470, 0.63661975
  %v3472 = vadd.f32 %v3471, 0.5
  %v3473 = vcvt.f32.s32.to.zero.pseudo %v3472
  %v3474 = vcvt.s32.f32 %v3473
  %vm3475 = vcmp.lt.f32.partialorder %v3472, %v3474
  %v3476 = vsub.s32 %v3473, 1
  %v3477 = vsel %vm3475, %v3476, %v3473
  %v3478 = vcvt.s32.f32 %v3477
  %v3479 = vmul.f32 %v3478, 1.5707964
  %v3480 = vsub.f32 %v3470, %v3479
  %v3481 = vand.u32 %v3477, 3
  %v3482 = vmul.f32 %v3480, %v3480
  %v3483 = vmul.f32 %v3482, 2.7557319e-06
  %v3484 = vadd.f32 %v3483, -0.0001984127
  %v3485 = vmul.f32 %v3482, %v3484
  %v3486 = vadd.f32 %v3485, 0.008333334
  %v3487 = vmul.f32 %v3482, %v3486
  %v3488 = vadd.f32 %v3487, -0.16666667
  %v3489 = vmul.f32 %v3482, %v3488
  %v3490 = vadd.f32 %v3489, 1.0
  %v3491 = vmul.f32 %v3480, %v3490
  %v3492 = vmul.f32 %v3482, 2.4801588e-05
  %v3493 = vadd.f32 %v3492, -0.0013888889
  %v3494 = vmul.f32 %v3482, %v3493
  %v3495 = vadd.f32 %v3494, 0.041666668
  %v3496 = vmul.f32 %v3482, %v3495
  %v3497 = vadd.f32 %v3496, -0.5
  %v3498 = vmul.f32 %v3482, %v3497
  %v3499 = vadd.f32 %v3498, 1.0
  %vm3500 = vcmp.eq.s32.totalorder %v3481, 0
  %vm3501 = vcmp.eq.s32.totalorder %v3481, 1
  %vm3502 = vcmp.eq.s32.totalorder %v3481, 2
  %v3503 = vsub.f32 0.0, %v3491
  %v3504 = vsub.f32 0.0, %v3499
  %v3505 = vsel %vm3502, %v3503, %v3504
  %v3506 = vsel %vm3501, %v3499, %v3505
  %v3507 = vsel %vm3500, %v3491, %v3506
  %v3508 = vsel %vm3502, %v3504, %v3491
  %v3509 = vsel %vm3501, %v3503, %v3508
  %v3510 = vsel %vm3500, %v3499, %v3509
  %v3511 = vmul.f32 %v3510, 0.70710677
  %v3512 = vsub.f32 0.0, %v3507
  %v3513 = vmul.f32 %v3512, 0.70710677
  %v3514 = vmul.f32 %v3507, 0.70710677
  %v3515 = vmul.f32 %v3467, %v3467
  %v3516 = vadd.f32 %v3515, 1.0
  %v3517 = vrsqrt.pop %v3516
  %v3518 = vadd.f32 %v3517, 1.0
  %v3519 = vmul.f32 %v3518, 0.5
  %v3520 = vrsqrt.pop %v3519
  %v3521 = vmul.f32 %v3519, %v3520
  %vm3522 = vcmp.eq.f32.partialorder %v3519, inf
  %v3523 = vsel %vm3522, %v3519, %v3521
  %vm3524 = vcmp.eq.f32.partialorder %v3519, 0.0
  %v3525 = vand.u32 %v3519, 2147483648
  %v3526 = vsel %vm3524, %v3525, %v3523
  %vm3527 = vcmp.ge.f32.partialorder %v3467, 0.0
  %v3528 = vsel %vm3527, 1.0, -1.0
  %v3529 = vsub.f32 1.0, %v3517
  %v3530 = vmul.f32 %v3529, 0.5
  %v3531 = vmax.f32 %v3530, 0.0
  %v3532 = vrsqrt.pop %v3531
  %v3533 = vmul.f32 %v3531, %v3532
  %vm3534 = vcmp.eq.f32.partialorder %v3531, inf
  %v3535 = vsel %vm3534, %v3531, %v3533
  %vm3536 = vcmp.eq.f32.partialorder %v3531, 0.0
  %v3537 = vand.u32 %v3531, 2147483648
  %v3538 = vsel %vm3536, %v3537, %v3535
  %v3539 = vmul.f32 %v3528, %v3538
  %v3540 = vlaneseq
  %v3541 = vshrl.u32 %v3540, 7
  %v3542 = vsub.s32 0, %v3541
  %v3543 = vrot.slane %v3526, %v3542
  %v3544 = vmul.f32 %v3543, %v3511
  %v3545 = vlaneseq
  %v3546 = vshrl.u32 %v3545, 7
  %v3547 = vsub.s32 0, %v3546
  %v3548 = vrot.slane %v3539, %v3547
  %v3549 = vmul.f32 %v3548, %v3511
  %v3550 = vsub.f32 %v3544, %v3549
  %v3551 = vmul.f32 %v3543, %v3513
  %v3552 = vmul.f32 %v3548, %v3514
  %v3553 = vsub.f32 %v3551, %v3552
  %v3554 = vadd.f32 %v3549, %v3544
  %v3555 = vmul.f32 %v3548, %v3513
  %v3556 = vmul.f32 %v3543, %v3514
  %v3557 = vadd.f32 %v3555, %v3556
  %v3558 = vmul.f32 %v3543, %v3550
  %v3559 = vmul.f32 %v3548, %v3553
  %v3560 = vadd.f32 %v3558, %v3559
  %v3561 = vmul.f32 %v3543, %v3553
  %v3562 = vmul.f32 %v3548, %v3550
  %v3563 = vsub.f32 %v3561, %v3562
  %v3564 = vmul.f32 %v3543, %v3554
  %v3565 = vmul.f32 %v3548, %v3557
  %v3566 = vsub.f32 %v3564, %v3565
  %v3567 = vmul.f32 %v3543, %v3557
  %v3568 = vmul.f32 %v3548, %v3554
  %v3569 = vadd.f32 %v3567, %v3568
  %v3570 = vsub.f32 %v3566, %v3560
  %3572 = vset.pattern.permute.xlu0 0
  %3573 = vperm.xlu0 %3572, %v3570
  %v3574 = vpop.permute.xlu0 %3573
  %v3576 = vmul.f32 %v3574, %v387
  %3578 = vset.pattern.permute.xlu0 0
  %3579 = vperm.xlu0 %3578, %v3560
  %v3580 = vpop.permute.xlu0 %3579
  %v3582 = vadd.f32 %v3580, %v3576
  %v3583 = vsub.f32 %v3569, %v3563
  %3585 = vset.pattern.permute.xlu0 0
  %3586 = vperm.xlu0 %3585, %v3583
  %v3587 = vpop.permute.xlu0 %3586
  %v3589 = vmul.f32 %v3587, %v387
  %3591 = vset.pattern.permute.xlu0 0
  %3592 = vperm.xlu0 %3591, %v3563
  %v3593 = vpop.permute.xlu0 %3592
  %v3595 = vadd.f32 %v3593, %v3589
  %3596 = vset.pattern.permute.xlu0 1
  %3597 = vperm.xlu0 %3596, %v3570
  %v3598 = vpop.permute.xlu0 %3597
  %v3600 = vmul.f32 %v3598, %v415
  %3601 = vset.pattern.permute.xlu0 1
  %3602 = vperm.xlu0 %3601, %v3560
  %v3603 = vpop.permute.xlu0 %3602
  %v3605 = vadd.f32 %v3603, %v3600
  %3606 = vset.pattern.permute.xlu0 1
  %3607 = vperm.xlu0 %3606, %v3583
  %v3608 = vpop.permute.xlu0 %3607
  %v3610 = vmul.f32 %v3608, %v415
  %3611 = vset.pattern.permute.xlu0 1
  %3612 = vperm.xlu0 %3611, %v3563
  %v3613 = vpop.permute.xlu0 %3612
  %v3615 = vadd.f32 %v3613, %v3610
  %v3616 = vmul.f32 %v3582, %v3605
  %v3617 = vmul.f32 %v3595, %v3615
  %v3618 = vsub.f32 %v3616, %v3617
  %v3619 = vmul.f32 %v3582, %v3615
  %v3620 = vmul.f32 %v3595, %v3605
  %v3621 = vadd.f32 %v3619, %v3620
  %3622 = vset.pattern.permute.xlu0 2
  %3623 = vperm.xlu0 %3622, %v3570
  %v3624 = vpop.permute.xlu0 %3623
  %v3626 = vmul.f32 %v3624, %v445
  %3627 = vset.pattern.permute.xlu0 2
  %3628 = vperm.xlu0 %3627, %v3560
  %v3629 = vpop.permute.xlu0 %3628
  %v3631 = vadd.f32 %v3629, %v3626
  %3632 = vset.pattern.permute.xlu0 2
  %3633 = vperm.xlu0 %3632, %v3583
  %v3634 = vpop.permute.xlu0 %3633
  %v3636 = vmul.f32 %v3634, %v445
  %3637 = vset.pattern.permute.xlu0 2
  %3638 = vperm.xlu0 %3637, %v3563
  %v3639 = vpop.permute.xlu0 %3638
  %v3641 = vadd.f32 %v3639, %v3636
  %v3642 = vmul.f32 %v3618, %v3631
  %v3643 = vmul.f32 %v3621, %v3641
  %v3644 = vsub.f32 %v3642, %v3643
  %v3645 = vmul.f32 %v3618, %v3641
  %v3646 = vmul.f32 %v3621, %v3631
  %v3647 = vadd.f32 %v3645, %v3646
  %3648 = vset.pattern.permute.xlu0 3
  %3649 = vperm.xlu0 %3648, %v3570
  %v3650 = vpop.permute.xlu0 %3649
  %v3652 = vmul.f32 %v3650, %v475
  %3653 = vset.pattern.permute.xlu0 3
  %3654 = vperm.xlu0 %3653, %v3560
  %v3655 = vpop.permute.xlu0 %3654
  %v3657 = vadd.f32 %v3655, %v3652
  %3658 = vset.pattern.permute.xlu0 3
  %3659 = vperm.xlu0 %3658, %v3583
  %v3660 = vpop.permute.xlu0 %3659
  %v3662 = vmul.f32 %v3660, %v475
  %3663 = vset.pattern.permute.xlu0 3
  %3664 = vperm.xlu0 %3663, %v3563
  %v3665 = vpop.permute.xlu0 %3664
  %v3667 = vadd.f32 %v3665, %v3662
  %v3668 = vmul.f32 %v3644, %v3657
  %v3669 = vmul.f32 %v3647, %v3667
  %v3670 = vsub.f32 %v3668, %v3669
  %v3671 = vmul.f32 %v3644, %v3667
  %v3672 = vmul.f32 %v3647, %v3657
  %v3673 = vadd.f32 %v3671, %v3672
  %v3675 = vsel %vm498, %v3673, 0
  %3677 = vmatprep.subr.mxu0 0.0
  %3678 = vmatpush1.msra.mxu0 %v192
  %3679 = vmatprep.subr.mxu0 0.0
  %3680 = vmatpush1.msra.mxu0 %v193
  %3681 = vmatprep.subr.mxu0 0.0
  %3682 = vmatpush1.msra.mxu0 0.0
  %3683 = vmatprep.subr.mxu0 0.0
  %3684 = vmatpush1.msra.mxu0 0.0
  %3685 = vmatprep.subr.mxu0 0.0
  %3686 = vmatpush1.msra.mxu0 0.0
  %3687 = vmatprep.subr.mxu0 0.0
  %3688 = vmatpush1.msra.mxu0 0.0
  %3689 = vmatprep.subr.mxu0 0.0
  %3690 = vmatpush1.msra.mxu0 0.0
  %3691 = vmatprep.subr.mxu0 0.0
  %3692 = vmatpush1.msra.mxu0 0.0
  %3693 = vmatprep.subr.mxu0 0.0
  %3694 = vmatpush1.msra.mxu0 0.0
  %3695 = vmatprep.subr.mxu0 0.0
  %3696 = vmatpush1.msra.mxu0 0.0
  %3697 = vmatprep.subr.mxu0 0.0
  %3698 = vmatpush1.msra.mxu0 0.0
  %3699 = vmatprep.subr.mxu0 0.0
  %3700 = vmatpush1.msra.mxu0 0.0
  %3701 = vmatprep.subr.mxu0 0.0
  %3702 = vmatpush1.msra.mxu0 0.0
  %3703 = vmatprep.subr.mxu0 0.0
  %3704 = vmatpush1.msra.mxu0 0.0
  %3705 = vmatprep.subr.mxu0 0.0
  %3706 = vmatpush1.msra.mxu0 0.0
  %3707 = vmatprep.subr.mxu0 0.0
  %3708 = vmatpush1.msra.mxu0 0.0
  %3709 = vmatprep.subr.mxu0 0.0
  %3710 = vmatpush1.msra.mxu0 0.0
  %3711 = vmatprep.subr.mxu0 0.0
  %3712 = vmatpush1.msra.mxu0 0.0
  %3713 = vmatprep.subr.mxu0 0.0
  %3714 = vmatpush1.msra.mxu0 0.0
  %3715 = vmatprep.subr.mxu0 0.0
  %3716 = vmatpush1.msra.mxu0 0.0
  %3717 = vmatprep.subr.mxu0 0.0
  %3718 = vmatpush1.msra.mxu0 0.0
  %3719 = vmatprep.subr.mxu0 0.0
  %3720 = vmatpush1.msra.mxu0 0.0
  %3721 = vmatprep.subr.mxu0 0.0
  %3722 = vmatpush1.msra.mxu0 0.0
  %3723 = vmatprep.subr.mxu0 0.0
  %3724 = vmatpush1.msra.mxu0 0.0
  %3725 = vmatprep.subr.mxu0 0.0
  %3726 = vmatpush1.msra.mxu0 0.0
  %3727 = vmatprep.subr.mxu0 0.0
  %3728 = vmatpush1.msra.mxu0 0.0
  %3729 = vmatprep.subr.mxu0 0.0
  %3730 = vmatpush1.msra.mxu0 0.0
  %3731 = vmatprep.subr.mxu0 0.0
  %3732 = vmatpush1.msra.mxu0 0.0
  %3733 = vmatprep.subr.mxu0 0.0
  %3734 = vmatpush1.msra.mxu0 0.0
  %3735 = vmatprep.subr.mxu0 0.0
  %3736 = vmatpush1.msra.mxu0 0.0
  %3737 = vmatprep.subr.mxu0 0.0
  %3738 = vmatpush1.msra.mxu0 0.0
  %3739 = vmatprep.subr.mxu0 0.0
  %3740 = vmatpush1.msra.mxu0 0.0
  %3741 = vmatprep.mubr.f32.mxu0 0.0
  %3742 = vmatmul.mubr.f32.gmra.mrb[0].mxu0 %v3675
  %v3743 = vpop.f32.mrb[0].mxu0
  %v3744 = vadd.f32 0.0, %v3743
  %v3745 = vpop.f32.mrb[0].mxu0
  %3746 = vdwg.mxu0
  %v3748 = vsel %vm498, %v3670, 0
  %3750 = vmatprep.subr.mxu0 0.0
  %3751 = vmatpush1.msra.mxu0 %v190
  %3752 = vmatprep.subr.mxu0 0.0
  %3753 = vmatpush1.msra.mxu0 %v191
  %3754 = vmatprep.subr.mxu0 0.0
  %3755 = vmatpush1.msra.mxu0 0.0
  %3756 = vmatprep.subr.mxu0 0.0
  %3757 = vmatpush1.msra.mxu0 0.0
  %3758 = vmatprep.subr.mxu0 0.0
  %3759 = vmatpush1.msra.mxu0 0.0
  %3760 = vmatprep.subr.mxu0 0.0
  %3761 = vmatpush1.msra.mxu0 0.0
  %3762 = vmatprep.subr.mxu0 0.0
  %3763 = vmatpush1.msra.mxu0 0.0
  %3764 = vmatprep.subr.mxu0 0.0
  %3765 = vmatpush1.msra.mxu0 0.0
  %3766 = vmatprep.subr.mxu0 0.0
  %3767 = vmatpush1.msra.mxu0 0.0
  %3768 = vmatprep.subr.mxu0 0.0
  %3769 = vmatpush1.msra.mxu0 0.0
  %3770 = vmatprep.subr.mxu0 0.0
  %3771 = vmatpush1.msra.mxu0 0.0
  %3772 = vmatprep.subr.mxu0 0.0
  %3773 = vmatpush1.msra.mxu0 0.0
  %3774 = vmatprep.subr.mxu0 0.0
  %3775 = vmatpush1.msra.mxu0 0.0
  %3776 = vmatprep.subr.mxu0 0.0
  %3777 = vmatpush1.msra.mxu0 0.0
  %3778 = vmatprep.subr.mxu0 0.0
  %3779 = vmatpush1.msra.mxu0 0.0
  %3780 = vmatprep.subr.mxu0 0.0
  %3781 = vmatpush1.msra.mxu0 0.0
  %3782 = vmatprep.subr.mxu0 0.0
  %3783 = vmatpush1.msra.mxu0 0.0
  %3784 = vmatprep.subr.mxu0 0.0
  %3785 = vmatpush1.msra.mxu0 0.0
  %3786 = vmatprep.subr.mxu0 0.0
  %3787 = vmatpush1.msra.mxu0 0.0
  %3788 = vmatprep.subr.mxu0 0.0
  %3789 = vmatpush1.msra.mxu0 0.0
  %3790 = vmatprep.subr.mxu0 0.0
  %3791 = vmatpush1.msra.mxu0 0.0
  %3792 = vmatprep.subr.mxu0 0.0
  %3793 = vmatpush1.msra.mxu0 0.0
  %3794 = vmatprep.subr.mxu0 0.0
  %3795 = vmatpush1.msra.mxu0 0.0
  %3796 = vmatprep.subr.mxu0 0.0
  %3797 = vmatpush1.msra.mxu0 0.0
  %3798 = vmatprep.subr.mxu0 0.0
  %3799 = vmatpush1.msra.mxu0 0.0
  %3800 = vmatprep.subr.mxu0 0.0
  %3801 = vmatpush1.msra.mxu0 0.0
  %3802 = vmatprep.subr.mxu0 0.0
  %3803 = vmatpush1.msra.mxu0 0.0
  %3804 = vmatprep.subr.mxu0 0.0
  %3805 = vmatpush1.msra.mxu0 0.0
  %3806 = vmatprep.subr.mxu0 0.0
  %3807 = vmatpush1.msra.mxu0 0.0
  %3808 = vmatprep.subr.mxu0 0.0
  %3809 = vmatpush1.msra.mxu0 0.0
  %3810 = vmatprep.subr.mxu0 0.0
  %3811 = vmatpush1.msra.mxu0 0.0
  %3812 = vmatprep.subr.mxu0 0.0
  %3813 = vmatpush1.msra.mxu0 0.0
  %3814 = vmatprep.mubr.f32.mxu0 0.0
  %3815 = vmatmul.mubr.f32.gmra.mrb[0].mxu0 %v3748
  %v3816 = vpop.f32.mrb[0].mxu0
  %v3817 = vadd.f32 %v3744, %v3816
  %v3818 = vpop.f32.mrb[0].mxu0
  %3819 = vdwg.mxu0
  %v3820 = vmul.f32 %v3817, %v3817
  %3822 = vrot.lane.b32.xlu0 %v3820, 64
  %v3823 = vpop.permute.xlu0 %3822
  %v3825 = vadd.f32 %v3820, %v3823
  %v3827 = vsel %vm657, %v3825, 0
  %3829 = vmatprep.subr.mxu0 0.0
  %3830 = vmatpush1.msra.mxu0 %v194
  %3831 = vmatprep.subr.mxu0 0.0
  %3832 = vmatpush1.msra.mxu0 %v195
  %3833 = vmatprep.subr.mxu0 0.0
  %3834 = vmatpush1.msra.mxu0 %v196
  %3835 = vmatprep.subr.mxu0 0.0
  %3836 = vmatpush1.msra.mxu0 %v197
  %3837 = vmatprep.subr.mxu0 0.0
  %3838 = vmatpush1.msra.mxu0 %v198
  %3839 = vmatprep.subr.mxu0 0.0
  %3840 = vmatpush1.msra.mxu0 %v199
  %3841 = vmatprep.subr.mxu0 0.0
  %3842 = vmatpush1.msra.mxu0 %v200
  %3843 = vmatprep.subr.mxu0 0.0
  %3844 = vmatpush1.msra.mxu0 %v201
  %3845 = vmatprep.subr.mxu0 0.0
  %3846 = vmatpush1.msra.mxu0 0.0
  %3847 = vmatprep.subr.mxu0 0.0
  %3848 = vmatpush1.msra.mxu0 0.0
  %3849 = vmatprep.subr.mxu0 0.0
  %3850 = vmatpush1.msra.mxu0 0.0
  %3851 = vmatprep.subr.mxu0 0.0
  %3852 = vmatpush1.msra.mxu0 0.0
  %3853 = vmatprep.subr.mxu0 0.0
  %3854 = vmatpush1.msra.mxu0 0.0
  %3855 = vmatprep.subr.mxu0 0.0
  %3856 = vmatpush1.msra.mxu0 0.0
  %3857 = vmatprep.subr.mxu0 0.0
  %3858 = vmatpush1.msra.mxu0 0.0
  %3859 = vmatprep.subr.mxu0 0.0
  %3860 = vmatpush1.msra.mxu0 0.0
  %3861 = vmatprep.subr.mxu0 0.0
  %3862 = vmatpush1.msra.mxu0 0.0
  %3863 = vmatprep.subr.mxu0 0.0
  %3864 = vmatpush1.msra.mxu0 0.0
  %3865 = vmatprep.subr.mxu0 0.0
  %3866 = vmatpush1.msra.mxu0 0.0
  %3867 = vmatprep.subr.mxu0 0.0
  %3868 = vmatpush1.msra.mxu0 0.0
  %3869 = vmatprep.subr.mxu0 0.0
  %3870 = vmatpush1.msra.mxu0 0.0
  %3871 = vmatprep.subr.mxu0 0.0
  %3872 = vmatpush1.msra.mxu0 0.0
  %3873 = vmatprep.subr.mxu0 0.0
  %3874 = vmatpush1.msra.mxu0 0.0
  %3875 = vmatprep.subr.mxu0 0.0
  %3876 = vmatpush1.msra.mxu0 0.0
  %3877 = vmatprep.subr.mxu0 0.0
  %3878 = vmatpush1.msra.mxu0 0.0
  %3879 = vmatprep.subr.mxu0 0.0
  %3880 = vmatpush1.msra.mxu0 0.0
  %3881 = vmatprep.subr.mxu0 0.0
  %3882 = vmatpush1.msra.mxu0 0.0
  %3883 = vmatprep.subr.mxu0 0.0
  %3884 = vmatpush1.msra.mxu0 0.0
  %3885 = vmatprep.subr.mxu0 0.0
  %3886 = vmatpush1.msra.mxu0 0.0
  %3887 = vmatprep.subr.mxu0 0.0
  %3888 = vmatpush1.msra.mxu0 0.0
  %3889 = vmatprep.subr.mxu0 0.0
  %3890 = vmatpush1.msra.mxu0 0.0
  %3891 = vmatprep.subr.mxu0 0.0
  %3892 = vmatpush1.msra.mxu0 0.0
  %3893 = vmatprep.mubr.f32.mxu0 0.0
  %3894 = vmatmul.mubr.f32.gmra.mrb[0].mxu0 %v3827
  %v3895 = vpop.f32.mrb[0].mxu0
  %v3896 = vadd.f32 %v655, %v3895
  %v3897 = vpop.f32.mrb[0].mxu0
  %3898 = vdwg.mxu0
  %v3899 = vxor.u32 %v3896, 2147483648
  %v3900 = vmul.f32 %v3899, 1.442695
  %v3901 = vpow.pop %v3900
  %v3902 = vadd.f32 %v3901, 1.0
  %v3903 = vrcp.pop %v3902
  %v3904 = vmul.f32 1.0, %v3903
  %v3905 = vtanh.pop %v3896
  %v3906 = vmul.f32 %v3904, %v3388
  %3908 = vrot.lane.b32.xlu0 %v3905, 96
  %v3909 = vpop.permute.xlu0 %3908
  %v3911 = vmul.f32 %v3904, %v3909
  %3913 = vrot.lane.b32.xlu0 %v3911, 96
  %v3914 = vpop.permute.xlu0 %3913
  %v3916 = vadd.f32 %v3906, %v3914
  %v3917 = vtanh.pop %v3916
  %3919 = vrot.lane.b32.xlu0 %v3917, 96
  %v3920 = vpop.permute.xlu0 %3919
  %v3922 = vmul.f32 %v3904, %v3920
  %3924 = vrot.lane.b32.xlu0 %v3922, 32
  %v3925 = vpop.permute.xlu0 %3924
  %v3926 = vsel %vm204, %v3925, 0
  %3928 = vmatprep.subr.mxu0 0.0
  %3929 = vmatpush1.msra.mxu0 %v186
  %3930 = vmatprep.subr.mxu0 0.0
  %3931 = vmatpush1.msra.mxu0 %v187
  %3932 = vmatprep.subr.mxu0 0.0
  %3933 = vmatpush1.msra.mxu0 %v188
  %3934 = vmatprep.subr.mxu0 0.0
  %3935 = vmatpush1.msra.mxu0 %v189
  %3936 = vmatprep.subr.mxu0 0.0
  %3937 = vmatpush1.msra.mxu0 0.0
  %3938 = vmatprep.subr.mxu0 0.0
  %3939 = vmatpush1.msra.mxu0 0.0
  %3940 = vmatprep.subr.mxu0 0.0
  %3941 = vmatpush1.msra.mxu0 0.0
  %3942 = vmatprep.subr.mxu0 0.0
  %3943 = vmatpush1.msra.mxu0 0.0
  %3944 = vmatprep.subr.mxu0 0.0
  %3945 = vmatpush1.msra.mxu0 0.0
  %3946 = vmatprep.subr.mxu0 0.0
  %3947 = vmatpush1.msra.mxu0 0.0
  %3948 = vmatprep.subr.mxu0 0.0
  %3949 = vmatpush1.msra.mxu0 0.0
  %3950 = vmatprep.subr.mxu0 0.0
  %3951 = vmatpush1.msra.mxu0 0.0
  %3952 = vmatprep.subr.mxu0 0.0
  %3953 = vmatpush1.msra.mxu0 0.0
  %3954 = vmatprep.subr.mxu0 0.0
  %3955 = vmatpush1.msra.mxu0 0.0
  %3956 = vmatprep.subr.mxu0 0.0
  %3957 = vmatpush1.msra.mxu0 0.0
  %3958 = vmatprep.subr.mxu0 0.0
  %3959 = vmatpush1.msra.mxu0 0.0
  %3960 = vmatprep.subr.mxu0 0.0
  %3961 = vmatpush1.msra.mxu0 0.0
  %3962 = vmatprep.subr.mxu0 0.0
  %3963 = vmatpush1.msra.mxu0 0.0
  %3964 = vmatprep.subr.mxu0 0.0
  %3965 = vmatpush1.msra.mxu0 0.0
  %3966 = vmatprep.subr.mxu0 0.0
  %3967 = vmatpush1.msra.mxu0 0.0
  %3968 = vmatprep.subr.mxu0 0.0
  %3969 = vmatpush1.msra.mxu0 0.0
  %3970 = vmatprep.subr.mxu0 0.0
  %3971 = vmatpush1.msra.mxu0 0.0
  %3972 = vmatprep.subr.mxu0 0.0
  %3973 = vmatpush1.msra.mxu0 0.0
  %3974 = vmatprep.subr.mxu0 0.0
  %3975 = vmatpush1.msra.mxu0 0.0
  %3976 = vmatprep.subr.mxu0 0.0
  %3977 = vmatpush1.msra.mxu0 0.0
  %3978 = vmatprep.subr.mxu0 0.0
  %3979 = vmatpush1.msra.mxu0 0.0
  %3980 = vmatprep.subr.mxu0 0.0
  %3981 = vmatpush1.msra.mxu0 0.0
  %3982 = vmatprep.subr.mxu0 0.0
  %3983 = vmatpush1.msra.mxu0 0.0
  %3984 = vmatprep.subr.mxu0 0.0
  %3985 = vmatpush1.msra.mxu0 0.0
  %3986 = vmatprep.subr.mxu0 0.0
  %3987 = vmatpush1.msra.mxu0 0.0
  %3988 = vmatprep.subr.mxu0 0.0
  %3989 = vmatpush1.msra.mxu0 0.0
  %3990 = vmatprep.subr.mxu0 0.0
  %3991 = vmatpush1.msra.mxu0 0.0
  %3992 = vmatprep.mubr.f32.mxu0 0.0
  %3993 = vmatmul.mubr.f32.gmra.mrb[0].mxu0 %v3926
  %v3994 = vpop.f32.mrb[0].mxu0
  %v3995 = vadd.f32 %v183, %v3994
  %v3996 = vpop.f32.mrb[0].mxu0
  %3997 = vdwg.mxu0
  %v3998 = vmul.f32 %v3995, 0.5
  %v3999 = vmul.f32 %v3998, 0.63661975
  %v4000 = vadd.f32 %v3999, 0.5
  %v4001 = vcvt.f32.s32.to.zero.pseudo %v4000
  %v4002 = vcvt.s32.f32 %v4001
  %vm4003 = vcmp.lt.f32.partialorder %v4000, %v4002
  %v4004 = vsub.s32 %v4001, 1
  %v4005 = vsel %vm4003, %v4004, %v4001
  %v4006 = vcvt.s32.f32 %v4005
  %v4007 = vmul.f32 %v4006, 1.5707964
  %v4008 = vsub.f32 %v3998, %v4007
  %v4009 = vand.u32 %v4005, 3
  %v4010 = vmul.f32 %v4008, %v4008
  %v4011 = vmul.f32 %v4010, 2.7557319e-06
  %v4012 = vadd.f32 %v4011, -0.0001984127
  %v4013 = vmul.f32 %v4010, %v4012
  %v4014 = vadd.f32 %v4013, 0.008333334
  %v4015 = vmul.f32 %v4010, %v4014
  %v4016 = vadd.f32 %v4015, -0.16666667
  %v4017 = vmul.f32 %v4010, %v4016
  %v4018 = vadd.f32 %v4017, 1.0
  %v4019 = vmul.f32 %v4008, %v4018
  %v4020 = vmul.f32 %v4010, 2.4801588e-05
  %v4021 = vadd.f32 %v4020, -0.0013888889
  %v4022 = vmul.f32 %v4010, %v4021
  %v4023 = vadd.f32 %v4022, 0.041666668
  %v4024 = vmul.f32 %v4010, %v4023
  %v4025 = vadd.f32 %v4024, -0.5
  %v4026 = vmul.f32 %v4010, %v4025
  %v4027 = vadd.f32 %v4026, 1.0
  %vm4028 = vcmp.eq.s32.totalorder %v4009, 0
  %vm4029 = vcmp.eq.s32.totalorder %v4009, 1
  %vm4030 = vcmp.eq.s32.totalorder %v4009, 2
  %v4031 = vsub.f32 0.0, %v4019
  %v4032 = vsub.f32 0.0, %v4027
  %v4033 = vsel %vm4030, %v4031, %v4032
  %v4034 = vsel %vm4029, %v4027, %v4033
  %v4035 = vsel %vm4028, %v4019, %v4034
  %v4036 = vsel %vm4030, %v4032, %v4019
  %v4037 = vsel %vm4029, %v4031, %v4036
  %v4038 = vsel %vm4028, %v4027, %v4037
  %v4039 = vmul.f32 %v4038, 0.70710677
  %v4040 = vsub.f32 0.0, %v4035
  %v4041 = vmul.f32 %v4040, 0.70710677
  %v4042 = vmul.f32 %v4035, 0.70710677
  %v4043 = vmul.f32 %v3995, %v3995
  %v4044 = vadd.f32 %v4043, 1.0
  %v4045 = vrsqrt.pop %v4044
  %v4046 = vadd.f32 %v4045, 1.0
  %v4047 = vmul.f32 %v4046, 0.5
  %v4048 = vrsqrt.pop %v4047
  %v4049 = vmul.f32 %v4047, %v4048
  %vm4050 = vcmp.eq.f32.partialorder %v4047, inf
  %v4051 = vsel %vm4050, %v4047, %v4049
  %vm4052 = vcmp.eq.f32.partialorder %v4047, 0.0
  %v4053 = vand.u32 %v4047, 2147483648
  %v4054 = vsel %vm4052, %v4053, %v4051
  %vm4055 = vcmp.ge.f32.partialorder %v3995, 0.0
  %v4056 = vsel %vm4055, 1.0, -1.0
  %v4057 = vsub.f32 1.0, %v4045
  %v4058 = vmul.f32 %v4057, 0.5
  %v4059 = vmax.f32 %v4058, 0.0
  %v4060 = vrsqrt.pop %v4059
  %v4061 = vmul.f32 %v4059, %v4060
  %vm4062 = vcmp.eq.f32.partialorder %v4059, inf
  %v4063 = vsel %vm4062, %v4059, %v4061
  %vm4064 = vcmp.eq.f32.partialorder %v4059, 0.0
  %v4065 = vand.u32 %v4059, 2147483648
  %v4066 = vsel %vm4064, %v4065, %v4063
  %v4067 = vmul.f32 %v4056, %v4066
  %v4068 = vlaneseq
  %v4069 = vshrl.u32 %v4068, 7
  %v4070 = vsub.s32 0, %v4069
  %v4071 = vrot.slane %v4054, %v4070
  %v4072 = vmul.f32 %v4071, %v4039
  %v4073 = vlaneseq
  %v4074 = vshrl.u32 %v4073, 7
  %v4075 = vsub.s32 0, %v4074
  %v4076 = vrot.slane %v4067, %v4075
  %v4077 = vmul.f32 %v4076, %v4039
  %v4078 = vsub.f32 %v4072, %v4077
  %v4079 = vmul.f32 %v4071, %v4041
  %v4080 = vmul.f32 %v4076, %v4042
  %v4081 = vsub.f32 %v4079, %v4080
  %v4082 = vadd.f32 %v4077, %v4072
  %v4083 = vmul.f32 %v4076, %v4041
  %v4084 = vmul.f32 %v4071, %v4042
  %v4085 = vadd.f32 %v4083, %v4084
  %v4086 = vmul.f32 %v4071, %v4078
  %v4087 = vmul.f32 %v4076, %v4081
  %v4088 = vadd.f32 %v4086, %v4087
  %v4089 = vmul.f32 %v4071, %v4081
  %v4090 = vmul.f32 %v4076, %v4078
  %v4091 = vsub.f32 %v4089, %v4090
  %v4092 = vmul.f32 %v4071, %v4082
  %v4093 = vmul.f32 %v4076, %v4085
  %v4094 = vsub.f32 %v4092, %v4093
  %v4095 = vmul.f32 %v4071, %v4085
  %v4096 = vmul.f32 %v4076, %v4082
  %v4097 = vadd.f32 %v4095, %v4096
  %v4098 = vsub.f32 %v4094, %v4088
  %4100 = vset.pattern.permute.xlu0 0
  %4101 = vperm.xlu0 %4100, %v4098
  %v4102 = vpop.permute.xlu0 %4101
  %v4104 = vmul.f32 %v4102, %v387
  %4106 = vset.pattern.permute.xlu0 0
  %4107 = vperm.xlu0 %4106, %v4088
  %v4108 = vpop.permute.xlu0 %4107
  %v4110 = vadd.f32 %v4108, %v4104
  %v4111 = vsub.f32 %v4097, %v4091
  %4113 = vset.pattern.permute.xlu0 0
  %4114 = vperm.xlu0 %4113, %v4111
  %v4115 = vpop.permute.xlu0 %4114
  %v4117 = vmul.f32 %v4115, %v387
  %4119 = vset.pattern.permute.xlu0 0
  %4120 = vperm.xlu0 %4119, %v4091
  %v4121 = vpop.permute.xlu0 %4120
  %v4123 = vadd.f32 %v4121, %v4117
  %4124 = vset.pattern.permute.xlu0 1
  %4125 = vperm.xlu0 %4124, %v4098
  %v4126 = vpop.permute.xlu0 %4125
  %v4128 = vmul.f32 %v4126, %v415
  %4129 = vset.pattern.permute.xlu0 1
  %4130 = vperm.xlu0 %4129, %v4088
  %v4131 = vpop.permute.xlu0 %4130
  %v4133 = vadd.f32 %v4131, %v4128
  %4134 = vset.pattern.permute.xlu0 1
  %4135 = vperm.xlu0 %4134, %v4111
  %v4136 = vpop.permute.xlu0 %4135
  %v4138 = vmul.f32 %v4136, %v415
  %4139 = vset.pattern.permute.xlu0 1
  %4140 = vperm.xlu0 %4139, %v4091
  %v4141 = vpop.permute.xlu0 %4140
  %v4143 = vadd.f32 %v4141, %v4138
  %v4144 = vmul.f32 %v4110, %v4133
  %v4145 = vmul.f32 %v4123, %v4143
  %v4146 = vsub.f32 %v4144, %v4145
  %v4147 = vmul.f32 %v4110, %v4143
  %v4148 = vmul.f32 %v4123, %v4133
  %v4149 = vadd.f32 %v4147, %v4148
  %4150 = vset.pattern.permute.xlu0 2
  %4151 = vperm.xlu0 %4150, %v4098
  %v4152 = vpop.permute.xlu0 %4151
  %v4154 = vmul.f32 %v4152, %v445
  %4155 = vset.pattern.permute.xlu0 2
  %4156 = vperm.xlu0 %4155, %v4088
  %v4157 = vpop.permute.xlu0 %4156
  %v4159 = vadd.f32 %v4157, %v4154
  %4160 = vset.pattern.permute.xlu0 2
  %4161 = vperm.xlu0 %4160, %v4111
  %v4162 = vpop.permute.xlu0 %4161
  %v4164 = vmul.f32 %v4162, %v445
  %4165 = vset.pattern.permute.xlu0 2
  %4166 = vperm.xlu0 %4165, %v4091
  %v4167 = vpop.permute.xlu0 %4166
  %v4169 = vadd.f32 %v4167, %v4164
  %v4170 = vmul.f32 %v4146, %v4159
  %v4171 = vmul.f32 %v4149, %v4169
  %v4172 = vsub.f32 %v4170, %v4171
  %v4173 = vmul.f32 %v4146, %v4169
  %v4174 = vmul.f32 %v4149, %v4159
  %v4175 = vadd.f32 %v4173, %v4174
  %4176 = vset.pattern.permute.xlu0 3
  %4177 = vperm.xlu0 %4176, %v4098
  %v4178 = vpop.permute.xlu0 %4177
  %v4180 = vmul.f32 %v4178, %v475
  %4181 = vset.pattern.permute.xlu0 3
  %4182 = vperm.xlu0 %4181, %v4088
  %v4183 = vpop.permute.xlu0 %4182
  %v4185 = vadd.f32 %v4183, %v4180
  %4186 = vset.pattern.permute.xlu0 3
  %4187 = vperm.xlu0 %4186, %v4111
  %v4188 = vpop.permute.xlu0 %4187
  %v4190 = vmul.f32 %v4188, %v475
  %4191 = vset.pattern.permute.xlu0 3
  %4192 = vperm.xlu0 %4191, %v4091
  %v4193 = vpop.permute.xlu0 %4192
  %v4195 = vadd.f32 %v4193, %v4190
  %v4196 = vmul.f32 %v4172, %v4185
  %v4197 = vmul.f32 %v4175, %v4195
  %v4198 = vsub.f32 %v4196, %v4197
  %v4199 = vmul.f32 %v4172, %v4195
  %v4200 = vmul.f32 %v4175, %v4185
  %v4201 = vadd.f32 %v4199, %v4200
  %v4203 = vsel %vm498, %v4201, 0
  %4205 = vmatprep.subr.mxu0 0.0
  %4206 = vmatpush1.msra.mxu0 %v192
  %4207 = vmatprep.subr.mxu0 0.0
  %4208 = vmatpush1.msra.mxu0 %v193
  %4209 = vmatprep.subr.mxu0 0.0
  %4210 = vmatpush1.msra.mxu0 0.0
  %4211 = vmatprep.subr.mxu0 0.0
  %4212 = vmatpush1.msra.mxu0 0.0
  %4213 = vmatprep.subr.mxu0 0.0
  %4214 = vmatpush1.msra.mxu0 0.0
  %4215 = vmatprep.subr.mxu0 0.0
  %4216 = vmatpush1.msra.mxu0 0.0
  %4217 = vmatprep.subr.mxu0 0.0
  %4218 = vmatpush1.msra.mxu0 0.0
  %4219 = vmatprep.subr.mxu0 0.0
  %4220 = vmatpush1.msra.mxu0 0.0
  %4221 = vmatprep.subr.mxu0 0.0
  %4222 = vmatpush1.msra.mxu0 0.0
  %4223 = vmatprep.subr.mxu0 0.0
  %4224 = vmatpush1.msra.mxu0 0.0
  %4225 = vmatprep.subr.mxu0 0.0
  %4226 = vmatpush1.msra.mxu0 0.0
  %4227 = vmatprep.subr.mxu0 0.0
  %4228 = vmatpush1.msra.mxu0 0.0
  %4229 = vmatprep.subr.mxu0 0.0
  %4230 = vmatpush1.msra.mxu0 0.0
  %4231 = vmatprep.subr.mxu0 0.0
  %4232 = vmatpush1.msra.mxu0 0.0
  %4233 = vmatprep.subr.mxu0 0.0
  %4234 = vmatpush1.msra.mxu0 0.0
  %4235 = vmatprep.subr.mxu0 0.0
  %4236 = vmatpush1.msra.mxu0 0.0
  %4237 = vmatprep.subr.mxu0 0.0
  %4238 = vmatpush1.msra.mxu0 0.0
  %4239 = vmatprep.subr.mxu0 0.0
  %4240 = vmatpush1.msra.mxu0 0.0
  %4241 = vmatprep.subr.mxu0 0.0
  %4242 = vmatpush1.msra.mxu0 0.0
  %4243 = vmatprep.subr.mxu0 0.0
  %4244 = vmatpush1.msra.mxu0 0.0
  %4245 = vmatprep.subr.mxu0 0.0
  %4246 = vmatpush1.msra.mxu0 0.0
  %4247 = vmatprep.subr.mxu0 0.0
  %4248 = vmatpush1.msra.mxu0 0.0
  %4249 = vmatprep.subr.mxu0 0.0
  %4250 = vmatpush1.msra.mxu0 0.0
  %4251 = vmatprep.subr.mxu0 0.0
  %4252 = vmatpush1.msra.mxu0 0.0
  %4253 = vmatprep.subr.mxu0 0.0
  %4254 = vmatpush1.msra.mxu0 0.0
  %4255 = vmatprep.subr.mxu0 0.0
  %4256 = vmatpush1.msra.mxu0 0.0
  %4257 = vmatprep.subr.mxu0 0.0
  %4258 = vmatpush1.msra.mxu0 0.0
  %4259 = vmatprep.subr.mxu0 0.0
  %4260 = vmatpush1.msra.mxu0 0.0
  %4261 = vmatprep.subr.mxu0 0.0
  %4262 = vmatpush1.msra.mxu0 0.0
  %4263 = vmatprep.subr.mxu0 0.0
  %4264 = vmatpush1.msra.mxu0 0.0
  %4265 = vmatprep.subr.mxu0 0.0
  %4266 = vmatpush1.msra.mxu0 0.0
  %4267 = vmatprep.subr.mxu0 0.0
  %4268 = vmatpush1.msra.mxu0 0.0
  %4269 = vmatprep.mubr.f32.mxu0 0.0
  %4270 = vmatmul.mubr.f32.gmra.mrb[0].mxu0 %v4203
  %v4271 = vpop.f32.mrb[0].mxu0
  %v4272 = vadd.f32 0.0, %v4271
  %v4273 = vpop.f32.mrb[0].mxu0
  %4274 = vdwg.mxu0
  %v4276 = vsel %vm498, %v4198, 0
  %4278 = vmatprep.subr.mxu0 0.0
  %4279 = vmatpush1.msra.mxu0 %v190
  %4280 = vmatprep.subr.mxu0 0.0
  %4281 = vmatpush1.msra.mxu0 %v191
  %4282 = vmatprep.subr.mxu0 0.0
  %4283 = vmatpush1.msra.mxu0 0.0
  %4284 = vmatprep.subr.mxu0 0.0
  %4285 = vmatpush1.msra.mxu0 0.0
  %4286 = vmatprep.subr.mxu0 0.0
  %4287 = vmatpush1.msra.mxu0 0.0
  %4288 = vmatprep.subr.mxu0 0.0
  %4289 = vmatpush1.msra.mxu0 0.0
  %4290 = vmatprep.subr.mxu0 0.0
  %4291 = vmatpush1.msra.mxu0 0.0
  %4292 = vmatprep.subr.mxu0 0.0
  %4293 = vmatpush1.msra.mxu0 0.0
  %4294 = vmatprep.subr.mxu0 0.0
  %4295 = vmatpush1.msra.mxu0 0.0
  %4296 = vmatprep.subr.mxu0 0.0
  %4297 = vmatpush1.msra.mxu0 0.0
  %4298 = vmatprep.subr.mxu0 0.0
  %4299 = vmatpush1.msra.mxu0 0.0
  %4300 = vmatprep.subr.mxu0 0.0
  %4301 = vmatpush1.msra.mxu0 0.0
  %4302 = vmatprep.subr.mxu0 0.0
  %4303 = vmatpush1.msra.mxu0 0.0
  %4304 = vmatprep.subr.mxu0 0.0
  %4305 = vmatpush1.msra.mxu0 0.0
  %4306 = vmatprep.subr.mxu0 0.0
  %4307 = vmatpush1.msra.mxu0 0.0
  %4308 = vmatprep.subr.mxu0 0.0
  %4309 = vmatpush1.msra.mxu0 0.0
  %4310 = vmatprep.subr.mxu0 0.0
  %4311 = vmatpush1.msra.mxu0 0.0
  %4312 = vmatprep.subr.mxu0 0.0
  %4313 = vmatpush1.msra.mxu0 0.0
  %4314 = vmatprep.subr.mxu0 0.0
  %4315 = vmatpush1.msra.mxu0 0.0
  %4316 = vmatprep.subr.mxu0 0.0
  %4317 = vmatpush1.msra.mxu0 0.0
  %4318 = vmatprep.subr.mxu0 0.0
  %4319 = vmatpush1.msra.mxu0 0.0
  %4320 = vmatprep.subr.mxu0 0.0
  %4321 = vmatpush1.msra.mxu0 0.0
  %4322 = vmatprep.subr.mxu0 0.0
  %4323 = vmatpush1.msra.mxu0 0.0
  %4324 = vmatprep.subr.mxu0 0.0
  %4325 = vmatpush1.msra.mxu0 0.0
  %4326 = vmatprep.subr.mxu0 0.0
  %4327 = vmatpush1.msra.mxu0 0.0
  %4328 = vmatprep.subr.mxu0 0.0
  %4329 = vmatpush1.msra.mxu0 0.0
  %4330 = vmatprep.subr.mxu0 0.0
  %4331 = vmatpush1.msra.mxu0 0.0
  %4332 = vmatprep.subr.mxu0 0.0
  %4333 = vmatpush1.msra.mxu0 0.0
  %4334 = vmatprep.subr.mxu0 0.0
  %4335 = vmatpush1.msra.mxu0 0.0
  %4336 = vmatprep.subr.mxu0 0.0
  %4337 = vmatpush1.msra.mxu0 0.0
  %4338 = vmatprep.subr.mxu0 0.0
  %4339 = vmatpush1.msra.mxu0 0.0
  %4340 = vmatprep.subr.mxu0 0.0
  %4341 = vmatpush1.msra.mxu0 0.0
  %4342 = vmatprep.mubr.f32.mxu0 0.0
  %4343 = vmatmul.mubr.f32.gmra.mrb[0].mxu0 %v4276
  %v4344 = vpop.f32.mrb[0].mxu0
  %v4345 = vadd.f32 %v4272, %v4344
  %v4346 = vpop.f32.mrb[0].mxu0
  %4347 = vdwg.mxu0
  %v4348 = vmul.f32 %v4345, %v4345
  %4350 = vrot.lane.b32.xlu0 %v4348, 64
  %v4351 = vpop.permute.xlu0 %4350
  %v4353 = vadd.f32 %v4348, %v4351
  %v4355 = vsel %vm657, %v4353, 0
  %4357 = vmatprep.subr.mxu0 0.0
  %4358 = vmatpush1.msra.mxu0 %v194
  %4359 = vmatprep.subr.mxu0 0.0
  %4360 = vmatpush1.msra.mxu0 %v195
  %4361 = vmatprep.subr.mxu0 0.0
  %4362 = vmatpush1.msra.mxu0 %v196
  %4363 = vmatprep.subr.mxu0 0.0
  %4364 = vmatpush1.msra.mxu0 %v197
  %4365 = vmatprep.subr.mxu0 0.0
  %4366 = vmatpush1.msra.mxu0 %v198
  %4367 = vmatprep.subr.mxu0 0.0
  %4368 = vmatpush1.msra.mxu0 %v199
  %4369 = vmatprep.subr.mxu0 0.0
  %4370 = vmatpush1.msra.mxu0 %v200
  %4371 = vmatprep.subr.mxu0 0.0
  %4372 = vmatpush1.msra.mxu0 %v201
  %4373 = vmatprep.subr.mxu0 0.0
  %4374 = vmatpush1.msra.mxu0 0.0
  %4375 = vmatprep.subr.mxu0 0.0
  %4376 = vmatpush1.msra.mxu0 0.0
  %4377 = vmatprep.subr.mxu0 0.0
  %4378 = vmatpush1.msra.mxu0 0.0
  %4379 = vmatprep.subr.mxu0 0.0
  %4380 = vmatpush1.msra.mxu0 0.0
  %4381 = vmatprep.subr.mxu0 0.0
  %4382 = vmatpush1.msra.mxu0 0.0
  %4383 = vmatprep.subr.mxu0 0.0
  %4384 = vmatpush1.msra.mxu0 0.0
  %4385 = vmatprep.subr.mxu0 0.0
  %4386 = vmatpush1.msra.mxu0 0.0
  %4387 = vmatprep.subr.mxu0 0.0
  %4388 = vmatpush1.msra.mxu0 0.0
  %4389 = vmatprep.subr.mxu0 0.0
  %4390 = vmatpush1.msra.mxu0 0.0
  %4391 = vmatprep.subr.mxu0 0.0
  %4392 = vmatpush1.msra.mxu0 0.0
  %4393 = vmatprep.subr.mxu0 0.0
  %4394 = vmatpush1.msra.mxu0 0.0
  %4395 = vmatprep.subr.mxu0 0.0
  %4396 = vmatpush1.msra.mxu0 0.0
  %4397 = vmatprep.subr.mxu0 0.0
  %4398 = vmatpush1.msra.mxu0 0.0
  %4399 = vmatprep.subr.mxu0 0.0
  %4400 = vmatpush1.msra.mxu0 0.0
  %4401 = vmatprep.subr.mxu0 0.0
  %4402 = vmatpush1.msra.mxu0 0.0
  %4403 = vmatprep.subr.mxu0 0.0
  %4404 = vmatpush1.msra.mxu0 0.0
  %4405 = vmatprep.subr.mxu0 0.0
  %4406 = vmatpush1.msra.mxu0 0.0
  %4407 = vmatprep.subr.mxu0 0.0
  %4408 = vmatpush1.msra.mxu0 0.0
  %4409 = vmatprep.subr.mxu0 0.0
  %4410 = vmatpush1.msra.mxu0 0.0
  %4411 = vmatprep.subr.mxu0 0.0
  %4412 = vmatpush1.msra.mxu0 0.0
  %4413 = vmatprep.subr.mxu0 0.0
  %4414 = vmatpush1.msra.mxu0 0.0
  %4415 = vmatprep.subr.mxu0 0.0
  %4416 = vmatpush1.msra.mxu0 0.0
  %4417 = vmatprep.subr.mxu0 0.0
  %4418 = vmatpush1.msra.mxu0 0.0
  %4419 = vmatprep.subr.mxu0 0.0
  %4420 = vmatpush1.msra.mxu0 0.0
  %4421 = vmatprep.mubr.f32.mxu0 0.0
  %4422 = vmatmul.mubr.f32.gmra.mrb[0].mxu0 %v4355
  %v4423 = vpop.f32.mrb[0].mxu0
  %v4424 = vadd.f32 %v655, %v4423
  %v4425 = vpop.f32.mrb[0].mxu0
  %4426 = vdwg.mxu0
  %v4427 = vxor.u32 %v4424, 2147483648
  %v4428 = vmul.f32 %v4427, 1.442695
  %v4429 = vpow.pop %v4428
  %v4430 = vadd.f32 %v4429, 1.0
  %v4431 = vrcp.pop %v4430
  %v4432 = vmul.f32 1.0, %v4431
  %v4433 = vtanh.pop %v4424
  %v4434 = vmul.f32 %v4432, %v3916
  %4436 = vrot.lane.b32.xlu0 %v4433, 96
  %v4437 = vpop.permute.xlu0 %4436
  %v4439 = vmul.f32 %v4432, %v4437
  %4441 = vrot.lane.b32.xlu0 %v4439, 96
  %v4442 = vpop.permute.xlu0 %4441
  %v4444 = vadd.f32 %v4434, %v4442
  %v4445 = vtanh.pop %v4444
  %4447 = vrot.lane.b32.xlu0 %v4445, 96
  %v4448 = vpop.permute.xlu0 %4447
  %v4450 = vmul.f32 %v4432, %v4448
  %v4451 = vld [vmem:[%s9] sm:$0xff]
  %v4452 = vld [vmem:[%s9 + $0x8] sm:$0xff]
  %v4453 = vld [vmem:[%s9 + $0x10] sm:$0xff]
  %v4454 = vld [vmem:[%s9 + $0x18] sm:$0xff]
  %v4455 = vld [vmem:[#allocation2] sm:$0x1]
  %v4457 = vlaneseq
  %v4458 = vshrl.u32 %v4457, 7
  %v4459 = vsub.s32 0, %v4458
  %v4460 = vrot.slane %v4455, %v4459
  %4463 = vrot.lane.b32.xlu0 %v4450, 32
  %v4464 = vpop.permute.xlu0 %4463
  %v4465 = vsel %vm204, %v4464, 0
  %4467 = vmatprep.subr.mxu0 0.0
  %4468 = vmatpush1.msra.mxu0 %v4451
  %4469 = vmatprep.subr.mxu0 0.0
  %4470 = vmatpush1.msra.mxu0 %v4452
  %4471 = vmatprep.subr.mxu0 0.0
  %4472 = vmatpush1.msra.mxu0 %v4453
  %4473 = vmatprep.subr.mxu0 0.0
  %4474 = vmatpush1.msra.mxu0 %v4454
  %4475 = vmatprep.subr.mxu0 0.0
  %4476 = vmatpush1.msra.mxu0 0.0
  %4477 = vmatprep.subr.mxu0 0.0
  %4478 = vmatpush1.msra.mxu0 0.0
  %4479 = vmatprep.subr.mxu0 0.0
  %4480 = vmatpush1.msra.mxu0 0.0
  %4481 = vmatprep.subr.mxu0 0.0
  %4482 = vmatpush1.msra.mxu0 0.0
  %4483 = vmatprep.subr.mxu0 0.0
  %4484 = vmatpush1.msra.mxu0 0.0
  %4485 = vmatprep.subr.mxu0 0.0
  %4486 = vmatpush1.msra.mxu0 0.0
  %4487 = vmatprep.subr.mxu0 0.0
  %4488 = vmatpush1.msra.mxu0 0.0
  %4489 = vmatprep.subr.mxu0 0.0
  %4490 = vmatpush1.msra.mxu0 0.0
  %4491 = vmatprep.subr.mxu0 0.0
  %4492 = vmatpush1.msra.mxu0 0.0
  %4493 = vmatprep.subr.mxu0 0.0
  %4494 = vmatpush1.msra.mxu0 0.0
  %4495 = vmatprep.subr.mxu0 0.0
  %4496 = vmatpush1.msra.mxu0 0.0
  %4497 = vmatprep.subr.mxu0 0.0
  %4498 = vmatpush1.msra.mxu0 0.0
  %4499 = vmatprep.subr.mxu0 0.0
  %4500 = vmatpush1.msra.mxu0 0.0
  %4501 = vmatprep.subr.mxu0 0.0
  %4502 = vmatpush1.msra.mxu0 0.0
  %4503 = vmatprep.subr.mxu0 0.0
  %4504 = vmatpush1.msra.mxu0 0.0
  %4505 = vmatprep.subr.mxu0 0.0
  %4506 = vmatpush1.msra.mxu0 0.0
  %4507 = vmatprep.subr.mxu0 0.0
  %4508 = vmatpush1.msra.mxu0 0.0
  %4509 = vmatprep.subr.mxu0 0.0
  %4510 = vmatpush1.msra.mxu0 0.0
  %4511 = vmatprep.subr.mxu0 0.0
  %4512 = vmatpush1.msra.mxu0 0.0
  %4513 = vmatprep.subr.mxu0 0.0
  %4514 = vmatpush1.msra.mxu0 0.0
  %4515 = vmatprep.subr.mxu0 0.0
  %4516 = vmatpush1.msra.mxu0 0.0
  %4517 = vmatprep.subr.mxu0 0.0
  %4518 = vmatpush1.msra.mxu0 0.0
  %4519 = vmatprep.subr.mxu0 0.0
  %4520 = vmatpush1.msra.mxu0 0.0
  %4521 = vmatprep.subr.mxu0 0.0
  %4522 = vmatpush1.msra.mxu0 0.0
  %4523 = vmatprep.subr.mxu0 0.0
  %4524 = vmatpush1.msra.mxu0 0.0
  %4525 = vmatprep.subr.mxu0 0.0
  %4526 = vmatpush1.msra.mxu0 0.0
  %4527 = vmatprep.subr.mxu0 0.0
  %4528 = vmatpush1.msra.mxu0 0.0
  %4529 = vmatprep.subr.mxu0 0.0
  %4530 = vmatpush1.msra.mxu0 0.0
  %4531 = vmatprep.mubr.f32.mxu0 0.0
  %4532 = vmatmul.mubr.f32.gmra.mrb[0].mxu0 %v4465
  %v4533 = vpop.f32.mrb[0].mxu0
  %v4534 = vadd.f32 %v4460, %v4533
  %v4535 = vpop.f32.mrb[0].mxu0
  %4536 = vdwg.mxu0
  %vm4537 = vcmask 7168
  %4538 = vst.msk [vmem:[%s11] sm:$0xff] %vm4537, %v4534
  // Predicated region
  $region46: #{qshallow_regression_lstm_forward.1} parent=0 // pred_check
    _
  $region47: #{qshallow_regression_lstm_forward.1} parent=0 // pred_check_branch
    %4540 = sbr.rel (0) target = $region49
  $region48: #{qshallow_regression_lstm_forward.1} parent=0 // pred_region
    _
  $region49: #{qshallow_regression_lstm_forward.1} parent=0 // pred_fallthru
    _
  // Predicated region
  $region50: #{qshallow_regression_lstm_forward.1} parent=0 // pred_check
    _
  $region51: #{qshallow_regression_lstm_forward.1} parent=0 // pred_check_branch
    %4542 = sbr.rel (0) target = $region53
  $region52: #{qshallow_regression_lstm_forward.1} parent=0 // pred_region
    _
  $region53: #{qshallow_regression_lstm_forward.1} parent=0 // pred_fallthru
    _

</llo_original>
